<compile_context>
chip_gen: v7x
topology: tpu7x:2x2x1
jax: 0.10.0
libtpu: 0.0.40
codegen_flags: <defaults>
</compile_context>

<pallas_src>
import jax
import jax.numpy as jnp
from jax import lax
from jax.experimental import pallas as pl
from jax.experimental.pallas import tpu as pltpu


def _divisors(n):
    return [d for d in range(1, n + 1) if n % d == 0]


# ----------------------------------------------------------------------------
# Fused Pallas kernel
# ----------------------------------------------------------------------------
def _make_fused_kernel(C, F1, F2, TILE_R, L, Wp, W):
    FT = F1 + F2
    L2 = L - 2

    def kernel(x_ref,      # (1, 1, C, TILE_R+2, L) bf16  packed halo row tile
               wconv_ref,  # (FT, C*9) f32 SMEM  fused 3x3 conv weights
               bconv_ref,  # (FT,)     f32 SMEM  fused conv bias
               w1x1_ref,   # (F2,)     f32 SMEM  loc 1x1-conv weights
               b1x1_ref,   # (1,)      f32 SMEM  loc 1x1-conv bias
               wfc_ref,    # (F1,)     f32 SMEM  counting FC weights
               cnt_ref,    # (1,1,1,1) f32       per-(image,row-tile) partial
               loc_ref):   # (1, TILE_R, L2) f32 packed localization tile
        # Lanes of the packed layout that are real image columns (per-group
        # right-padding columns are masked out of the pooling sum).
        col = lax.broadcasted_iota(jnp.int32, (TILE_R, L2), 1)
        valid = (col % Wp) < W

        def conv_block(f0, nf):
            # Direct 3x3 conv for features [f0, f0+nf) on the VPU: tile rows on
            # sublanes, G packed padded rows on lanes (lane-dense vregs).
            accs = [jnp.full((TILE_R, L2), bconv_ref[f0 + j], jnp.float32)
                    for j in range(nf)]
            for c in range(C):
                for di in range(3):
                    # One aligned slab load + bf16->f32 cast per (c, di); dj
                    # shifts are derived in-register (lane shift, XLU slack).
                    slab = x_ref[0, 0, c, pl.ds(di, TILE_R), :].astype(jnp.float32)
                    for dj in range(3):
                        xs = slab[:, dj:dj + L2]
                        k = c * 9 + di * 3 + dj
                        for j in range(nf):
                            accs[j] = accs[j] + wconv_ref[f0 + j, k] * xs
            return [jnp.maximum(a, 0.0) for a in accs]

        # ---- counting head: ReLU -> masked spatial sum -> FC weights --------
        # Only the per-tile partial is produced here; the final mean + bias is
        # a tiny XLA reduce, which keeps the row-tile grid axis "parallel".
        feats_cnt = conv_block(0, F1)
        partial = jnp.float32(0.0)
        for j in range(F1):
            partial = partial + wfc_ref[j] * jnp.sum(
                jnp.where(valid, feats_cnt[j], 0.0))
        cnt_ref[...] = jnp.broadcast_to(partial, (1, 1, 1, 1)).astype(cnt_ref.dtype)

        # ---- localization head: ReLU -> 1x1 conv epilogue --------------------
        feats_loc = conv_block(F1, F2)
        loc = jnp.full((TILE_R, L2), b1x1_ref[0], jnp.float32)
        for j in range(F2):
            loc = loc + w1x1_ref[j] * feats_loc[j]
        loc_ref[0] = loc.astype(loc_ref.dtype)

    return kernel


# ----------------------------------------------------------------------------
# CombinedModel forward (wrapper: layout plumbing + the single pallas_call)
# ----------------------------------------------------------------------------
def combined_model_forward(params, x):
    """x: [N, C, H, W] float32 -> (counting:[N,1], localization:[N,1,H,W])."""
    N, C, H, W = x.shape
    F1 = params["cnt_conv_w"].shape[0]
    F2 = params["loc_conv1_w"].shape[0]
    FT = F1 + F2
    Wp = W + 2

    # ---- generation-aware VMEM budget ------------------------------------
    try:
        vmem_cap = int(getattr(pltpu.get_tpu_info(), "vmem_capacity_bytes",
                               64 << 20))
    except Exception:
        vmem_cap = 64 << 20                      # conservative (v7x per-core)
    budget = max(vmem_cap // 3, 4 << 20)

    # ---- lane-dense packed geometry ---------------------------------------
    # Pack G padded rows side by side along lanes so vregs are dense even when
    # W < 128; G = 1 (plain spatial layout) once W+2 >= 128.
    G = next((d for d in _divisors(H) if d * Wp >= 128), H)
    Hg = H // G
    L = G * Wp
    L2 = L - 2

    # Row tile: largest divisor of Hg that fits the budget and keeps the output
    # block's second-minor dim legal (multiple of 8, or the full extent Hg).
    per_row = 2 * 2 * C * L + 2 * 4 * L2 + 4 * (FT + 8) * L
    cands = [d for d in _divisors(Hg) if d % 8 == 0 or d == Hg]
    feas = [d for d in cands if (d + 2) * per_row <= budget]
    TILE_R = max(feas) if feas else min(cands)
    R_TILES = Hg // TILE_R

    # ---- build the packed, per-tile halo input (pure XLA layout plumbing) --
    xpad = jnp.pad(x, ((0, 0), (0, 0), (1, 1), (1, 1)))
    tiles = []
    for t in range(R_TILES):
        segs = [xpad[:, :, g * Hg + t * TILE_R: g * Hg + t * TILE_R + TILE_R + 2, :]
                for g in range(G)]
        tiles.append(jnp.stack(segs, axis=3))            # [N,C,TILE_R+2,G,Wp]
    xt = jnp.stack(tiles, axis=1)                         # [N,T,C,TILE_R+2,G,Wp]
    xt = xt.reshape(N, R_TILES, C, TILE_R + 2, L).astype(jnp.bfloat16)

    # ---- fuse the two 3x3 convs into one weight table (image read once) ----
    w_conv = jnp.concatenate(
        [params["cnt_conv_w"].reshape(F1, C * 9),
         params["loc_conv1_w"].reshape(F2, C * 9)], axis=0).astype(jnp.float32)
    b_conv = jnp.concatenate(
        [params["cnt_conv_b"], params["loc_conv1_b"]]).astype(jnp.float32)
    w_1x1 = params["loc_conv2_w"].reshape(F2).astype(jnp.float32)
    b_1x1 = params["loc_conv2_b"].reshape(1).astype(jnp.float32)
    w_fc = params["cnt_fc_w"].reshape(F1).astype(jnp.float32)

    # ---- declared VMEM limit tracks the real tile footprint ----------------
    in_tile = C * (TILE_R + 2) * L * 2
    loc_tile = TILE_R * L2 * 4
    work = (FT + 8) * TILE_R * L * 4
    footprint = 2 * in_tile + 2 * loc_tile + work + (1 << 16)
    vmem_limit = int(min(max(2 * footprint, 4 << 20), max(budget, 4 << 20)))

    smem = pl.BlockSpec(memory_space=pltpu.MemorySpace.SMEM)
    grid_spec = pltpu.PrefetchScalarGridSpec(
        num_scalar_prefetch=0,
        grid=(N, R_TILES),
        in_specs=[
            pl.BlockSpec((1, 1, C, TILE_R + 2, L),
                         lambda n, t: (n, t, 0, 0, 0)),
            smem, smem, smem, smem, smem,
        ],
        out_specs=[
            pl.BlockSpec((1, 1, 1, 1), lambda n, t: (n, t, 0, 0)),
            pl.BlockSpec((1, TILE_R, L2), lambda n, t: (n, t, 0)),
        ],
    )

    cnt_part, loc_packed = pl.pallas_call(
        _make_fused_kernel(C, F1, F2, TILE_R, L, Wp, W),
        grid_spec=grid_spec,
        out_shape=(jax.ShapeDtypeStruct((N, R_TILES, 1, 1), jnp.float32),
                   jax.ShapeDtypeStruct((N, Hg, L2), jnp.float32)),
        compiler_params=pltpu.CompilerParams(
            dimension_semantics=("parallel", "parallel"),
            vmem_limit_bytes=vmem_limit),
    )(xt, w_conv, b_conv, w_1x1, b_1x1, w_fc)

    # ---- tiny epilogues in XLA ---------------------------------------------
    cnt = cnt_part.reshape(N, R_TILES).sum(axis=1, keepdims=True) / float(H * W)
    cnt = cnt + params["cnt_fc_b"].reshape(1, 1)                       # [N,1]

    loc = jnp.stack([loc_packed[:, :, g * Wp: g * Wp + W] for g in range(G)],
                    axis=1)                                            # [N,G,Hg,W]
    loc = loc.reshape(N, H, W)[:, None, :, :]                          # [N,1,H,W]
    return cnt, loc


# ----------------------------------------------------------------------------
# Parameters (synthetic, deterministic)
# ----------------------------------------------------------------------------
def init_params(key, C, F1, F2):
    ks = jax.random.split(key, 6)
    p = {}
    # counting model
    p["cnt_conv_w"] = 0.1 * jax.random.normal(ks[0], (F1, C, 3, 3), jnp.float32)
    p["cnt_conv_b"] = 0.1 * jax.random.normal(ks[1], (F1,), jnp.float32)
    p["cnt_fc_w"]   = 0.1 * jax.random.normal(ks[2], (F1, 1), jnp.float32)
    p["cnt_fc_b"]   = 0.1 * jax.random.normal(ks[3], (1,), jnp.float32)
    # localization model
    p["loc_conv1_w"] = 0.1 * jax.random.normal(ks[4], (F2, C, 3, 3), jnp.float32)
    p["loc_conv1_b"] = jnp.zeros((F2,), jnp.float32)
    p["loc_conv2_w"] = 0.1 * jax.random.normal(ks[5], (1, F2, 1, 1), jnp.float32)
    p["loc_conv2_b"] = jnp.zeros((1,), jnp.float32)
    return p


# ----------------------------------------------------------------------------
# Pure-JAX reference (same math / same bf16 input quantization, no Pallas)
# ----------------------------------------------------------------------------
def _im2col_ref(x_nchw, kh, kw, pad):
    N, C, H, W = x_nchw.shape
    xp = jnp.pad(x_nchw, ((0, 0), (0, 0), (pad, pad), (pad, pad)))
    cols = []
    for di in range(kh):
        for dj in range(kw):
            cols.append(xp[:, :, di:di + H, dj:dj + W])            # [N,C,H,W]
    patches = jnp.stack(cols, axis=2)                              # [N,C,kh*kw,H,W]
    patches = patches.reshape(N, C * kh * kw, H, W)
    patches = jnp.transpose(patches, (0, 2, 3, 1))                 # [N,H,W,C*kh*kw]
    return patches.reshape(N * H * W, C * kh * kw)


def _w_to_matrix(w_oihw):
    F = w_oihw.shape[0]
    return jnp.transpose(w_oihw.reshape(F, -1), (1, 0))            # [C*KH*KW, F]


def reference_forward(params, x):
    N, C, H, W = x.shape
    hp = lax.Precision.HIGHEST
    xq = x.astype(jnp.bfloat16).astype(jnp.float32)   # same operand quantization
    patches = _im2col_ref(xq, 3, 3, pad=1)
    w1 = _w_to_matrix(params["cnt_conv_w"])
    feat = jnp.maximum(jnp.dot(patches, w1, precision=hp)
                       + params["cnt_conv_b"][None, :], 0.0)
    pooled = feat.reshape(N, H * W, -1).mean(axis=1)
    cnt = jnp.dot(pooled, params["cnt_fc_w"], precision=hp) + params["cnt_fc_b"][None, :]
    w2 = _w_to_matrix(params["loc_conv1_w"])
    h1 = jnp.maximum(jnp.dot(patches, w2, precision=hp)
                     + params["loc_conv1_b"][None, :], 0.0)
    w3 = _w_to_matrix(params["loc_conv2_w"])
    h2 = jnp.dot(h1, w3, precision=hp) + params["loc_conv2_b"][None, :]
    loc = jnp.transpose(h2.reshape(N, H, W, 1), (0, 3, 1, 2))
    return cnt, loc


if __name__ == "__main__":
    # TODO(synk): CombinedModel accepts arbitrary submodules; small synthetic
    # conv counting/localization heads stand in for them here.
    key = jax.random.PRNGKey(0)
    k_x, k_p = jax.random.split(key)

    N, C, H, W = 2, 4, 16, 16
    F1, F2 = 8, 8
    x = jax.random.normal(k_x, (N, C, H, W), jnp.float32)
    params = init_params(k_p, C, F1, F2)

    cnt, loc = jax.jit(combined_model_forward)(params, x)
    jax.block_until_ready((cnt, loc))

    cnt_ref, loc_ref = reference_forward(params, x)
    assert cnt.shape == (N, 1) and loc.shape == (N, 1, H, W)
    assert jnp.allclose(cnt, cnt_ref, rtol=1e-3, atol=1e-3)
    assert jnp.allclose(loc, loc_ref, rtol=1e-3, atol=1e-3)

    print("KERNEL_OK")
</pallas_src>

<mosaic_0001>
module attributes {stable_mosaic.version = 11 : i64} {
  func.func @kernel(%arg0: i32, %arg1: i32, %arg2: memref<1x1x4x4x144xbf16, #tpu.memory_space<vmem>>, %arg3: memref<16x36xf32, #tpu.memory_space<smem>>, %arg4: memref<16xf32, #tpu.memory_space<smem>>, %arg5: memref<8xf32, #tpu.memory_space<smem>>, %arg6: memref<1xf32, #tpu.memory_space<smem>>, %arg7: memref<8xf32, #tpu.memory_space<smem>>, %arg8: memref<1x1x1x1xf32, #tpu.memory_space<vmem>>, %arg9: memref<1x2x142xf32, #tpu.memory_space<vmem>>) attributes {dimension_semantics = [#tpu.dimension_semantics<parallel>, #tpu.dimension_semantics<parallel>], iteration_bounds = array<i64: 2, 1>, scalar_prefetch = 0 : i64, scratch_operands = 0 : i64, tpu.core_type = #tpu.core_type<tc>, window_params = [{transform_indices = @transform_0, window_bounds = array<i64: 1, 1, 4, 4, 144>}, {transform_indices = @transform_1, window_bounds = array<i64: 16, 36>}, {transform_indices = @transform_2, window_bounds = array<i64: 16>}, {transform_indices = @transform_3, window_bounds = array<i64: 8>}, {transform_indices = @transform_4, window_bounds = array<i64: 1>}, {transform_indices = @transform_5, window_bounds = array<i64: 8>}, {transform_indices = @transform_6, window_bounds = array<i64: 1, 1, 1, 1>}, {transform_indices = @transform_7, window_bounds = array<i64: 1, 2, 142>}]} {
    %0 = tpu.iota {dimensions = array<i32: 1>} : vector<2x142xi32>
    %c18_i32 = arith.constant 18 : i32
    %c0_i32 = arith.constant 0 : i32
    %1 = arith.cmpi eq, %c18_i32, %c0_i32 : i32
    %c1_i32 = arith.constant 1 : i32
    %2 = arith.select %1, %c1_i32, %c18_i32 : i32
    %3 = vector.broadcast %2 : i32 to vector<2x142xi32>
    %4 = arith.remsi %0, %3 : vector<2x142xi32>
    %c0_i32_0 = arith.constant 0 : i32
    %5 = vector.broadcast %c0_i32_0 : i32 to vector<2x142xi32>
    %6 = arith.cmpi ne, %4, %5 : vector<2x142xi32>
    %c0_i32_1 = arith.constant 0 : i32
    %7 = vector.broadcast %c0_i32_1 : i32 to vector<2x142xi32>
    %8 = arith.cmpi slt, %4, %7 : vector<2x142xi32>
    %c0_i32_2 = arith.constant 0 : i32
    %9 = arith.cmpi slt, %2, %c0_i32_2 : i32
    %10 = vector.broadcast %9 : i1 to vector<2x142xi1>
    %11 = vector.broadcast %10 : vector<2x142xi1> to vector<2x142xi1>
    %12 = arith.xori %8, %11 : vector<2x142xi1>
    %13 = arith.andi %12, %6 : vector<2x142xi1>
    %14 = vector.broadcast %2 : i32 to vector<2x142xi32>
    %15 = arith.addi %4, %14 : vector<2x142xi32>
    %16 = arith.select %13, %15, %4 : vector<2x142xi1>, vector<2x142xi32>
    %c16_i32 = arith.constant 16 : i32
    %17 = vector.broadcast %c16_i32 : i32 to vector<2x142xi32>
    %18 = arith.cmpi slt, %16, %17 : vector<2x142xi32>
    %c0 = arith.constant 0 : index
    %19 = memref.load %arg4[%c0] : memref<16xf32, #tpu.memory_space<smem>>
    %20 = vector.broadcast %19 : f32 to vector<2x142xf32>
    %c1 = arith.constant 1 : index
    %21 = memref.load %arg4[%c1] : memref<16xf32, #tpu.memory_space<smem>>
    %22 = vector.broadcast %21 : f32 to vector<2x142xf32>
    %c2 = arith.constant 2 : index
    %23 = memref.load %arg4[%c2] : memref<16xf32, #tpu.memory_space<smem>>
    %24 = vector.broadcast %23 : f32 to vector<2x142xf32>
    %c3 = arith.constant 3 : index
    %25 = memref.load %arg4[%c3] : memref<16xf32, #tpu.memory_space<smem>>
    %26 = vector.broadcast %25 : f32 to vector<2x142xf32>
    %c4 = arith.constant 4 : index
    %27 = memref.load %arg4[%c4] : memref<16xf32, #tpu.memory_space<smem>>
    %28 = vector.broadcast %27 : f32 to vector<2x142xf32>
    %c5 = arith.constant 5 : index
    %29 = memref.load %arg4[%c5] : memref<16xf32, #tpu.memory_space<smem>>
    %30 = vector.broadcast %29 : f32 to vector<2x142xf32>
    %c6 = arith.constant 6 : index
    %31 = memref.load %arg4[%c6] : memref<16xf32, #tpu.memory_space<smem>>
    %32 = vector.broadcast %31 : f32 to vector<2x142xf32>
    %c7 = arith.constant 7 : index
    %33 = memref.load %arg4[%c7] : memref<16xf32, #tpu.memory_space<smem>>
    %34 = vector.broadcast %33 : f32 to vector<2x142xf32>
    %c0_3 = arith.constant 0 : index
    %c0_4 = arith.constant 0 : index
    %c0_5 = arith.constant 0 : index
    %c0_6 = arith.constant 0 : index
    %c0_7 = arith.constant 0 : index
    %35 = vector.load %arg2[%c0_3, %c0_4, %c0_5, %c0_6, %c0_7] : memref<1x1x4x4x144xbf16, #tpu.memory_space<vmem>>, vector<1x1x1x2x144xbf16>
    %36 = vector.shape_cast %35 : vector<1x1x1x2x144xbf16> to vector<2x144xbf16>
    %37 = arith.extf %36 : vector<2x144xbf16> to vector<2x144xf32>
    %38 = vector.extract_strided_slice %37 {offsets = [0, 0], sizes = [2, 142], strides = [1, 1]} : vector<2x144xf32> to vector<2x142xf32>
    %c0_8 = arith.constant 0 : index
    %c0_9 = arith.constant 0 : index
    %39 = memref.load %arg3[%c0_8, %c0_9] : memref<16x36xf32, #tpu.memory_space<smem>>
    %40 = vector.broadcast %39 : f32 to vector<2x142xf32>
    %41 = arith.mulf %40, %38 : vector<2x142xf32>
    %42 = arith.addf %20, %41 : vector<2x142xf32>
    %c1_10 = arith.constant 1 : index
    %c0_11 = arith.constant 0 : index
    %43 = memref.load %arg3[%c1_10, %c0_11] : memref<16x36xf32, #tpu.memory_space<smem>>
    %44 = vector.broadcast %43 : f32 to vector<2x142xf32>
    %45 = arith.mulf %44, %38 : vector<2x142xf32>
    %46 = arith.addf %22, %45 : vector<2x142xf32>
    %c2_12 = arith.constant 2 : index
    %c0_13 = arith.constant 0 : index
    %47 = memref.load %arg3[%c2_12, %c0_13] : memref<16x36xf32, #tpu.memory_space<smem>>
    %48 = vector.broadcast %47 : f32 to vector<2x142xf32>
    %49 = arith.mulf %48, %38 : vector<2x142xf32>
    %50 = arith.addf %24, %49 : vector<2x142xf32>
    %c3_14 = arith.constant 3 : index
    %c0_15 = arith.constant 0 : index
    %51 = memref.load %arg3[%c3_14, %c0_15] : memref<16x36xf32, #tpu.memory_space<smem>>
    %52 = vector.broadcast %51 : f32 to vector<2x142xf32>
    %53 = arith.mulf %52, %38 : vector<2x142xf32>
    %54 = arith.addf %26, %53 : vector<2x142xf32>
    %c4_16 = arith.constant 4 : index
    %c0_17 = arith.constant 0 : index
    %55 = memref.load %arg3[%c4_16, %c0_17] : memref<16x36xf32, #tpu.memory_space<smem>>
    %56 = vector.broadcast %55 : f32 to vector<2x142xf32>
    %57 = arith.mulf %56, %38 : vector<2x142xf32>
    %58 = arith.addf %28, %57 : vector<2x142xf32>
    %c5_18 = arith.constant 5 : index
    %c0_19 = arith.constant 0 : index
    %59 = memref.load %arg3[%c5_18, %c0_19] : memref<16x36xf32, #tpu.memory_space<smem>>
    %60 = vector.broadcast %59 : f32 to vector<2x142xf32>
    %61 = arith.mulf %60, %38 : vector<2x142xf32>
    %62 = arith.addf %30, %61 : vector<2x142xf32>
    %c6_20 = arith.constant 6 : index
    %c0_21 = arith.constant 0 : index
    %63 = memref.load %arg3[%c6_20, %c0_21] : memref<16x36xf32, #tpu.memory_space<smem>>
    %64 = vector.broadcast %63 : f32 to vector<2x142xf32>
    %65 = arith.mulf %64, %38 : vector<2x142xf32>
    %66 = arith.addf %32, %65 : vector<2x142xf32>
    %c7_22 = arith.constant 7 : index
    %c0_23 = arith.constant 0 : index
    %67 = memref.load %arg3[%c7_22, %c0_23] : memref<16x36xf32, #tpu.memory_space<smem>>
    %68 = vector.broadcast %67 : f32 to vector<2x142xf32>
    %69 = arith.mulf %68, %38 : vector<2x142xf32>
    %70 = arith.addf %34, %69 : vector<2x142xf32>
    %71 = vector.extract_strided_slice %37 {offsets = [0, 1], sizes = [2, 142], strides = [1, 1]} : vector<2x144xf32> to vector<2x142xf32>
    %c0_24 = arith.constant 0 : index
    %c1_25 = arith.constant 1 : index
    %72 = memref.load %arg3[%c0_24, %c1_25] : memref<16x36xf32, #tpu.memory_space<smem>>
    %73 = vector.broadcast %72 : f32 to vector<2x142xf32>
    %74 = arith.mulf %73, %71 : vector<2x142xf32>
    %75 = arith.addf %42, %74 : vector<2x142xf32>
    %c1_26 = arith.constant 1 : index
    %c1_27 = arith.constant 1 : index
    %76 = memref.load %arg3[%c1_26, %c1_27] : memref<16x36xf32, #tpu.memory_space<smem>>
    %77 = vector.broadcast %76 : f32 to vector<2x142xf32>
    %78 = arith.mulf %77, %71 : vector<2x142xf32>
    %79 = arith.addf %46, %78 : vector<2x142xf32>
    %c2_28 = arith.constant 2 : index
    %c1_29 = arith.constant 1 : index
    %80 = memref.load %arg3[%c2_28, %c1_29] : memref<16x36xf32, #tpu.memory_space<smem>>
    %81 = vector.broadcast %80 : f32 to vector<2x142xf32>
    %82 = arith.mulf %81, %71 : vector<2x142xf32>
    %83 = arith.addf %50, %82 : vector<2x142xf32>
    %c3_30 = arith.constant 3 : index
    %c1_31 = arith.constant 1 : index
    %84 = memref.load %arg3[%c3_30, %c1_31] : memref<16x36xf32, #tpu.memory_space<smem>>
    %85 = vector.broadcast %84 : f32 to vector<2x142xf32>
    %86 = arith.mulf %85, %71 : vector<2x142xf32>
    %87 = arith.addf %54, %86 : vector<2x142xf32>
    %c4_32 = arith.constant 4 : index
    %c1_33 = arith.constant 1 : index
    %88 = memref.load %arg3[%c4_32, %c1_33] : memref<16x36xf32, #tpu.memory_space<smem>>
    %89 = vector.broadcast %88 : f32 to vector<2x142xf32>
    %90 = arith.mulf %89, %71 : vector<2x142xf32>
    %91 = arith.addf %58, %90 : vector<2x142xf32>
    %c5_34 = arith.constant 5 : index
    %c1_35 = arith.constant 1 : index
    %92 = memref.load %arg3[%c5_34, %c1_35] : memref<16x36xf32, #tpu.memory_space<smem>>
    %93 = vector.broadcast %92 : f32 to vector<2x142xf32>
    %94 = arith.mulf %93, %71 : vector<2x142xf32>
    %95 = arith.addf %62, %94 : vector<2x142xf32>
    %c6_36 = arith.constant 6 : index
    %c1_37 = arith.constant 1 : index
    %96 = memref.load %arg3[%c6_36, %c1_37] : memref<16x36xf32, #tpu.memory_space<smem>>
    %97 = vector.broadcast %96 : f32 to vector<2x142xf32>
    %98 = arith.mulf %97, %71 : vector<2x142xf32>
    %99 = arith.addf %66, %98 : vector<2x142xf32>
    %c7_38 = arith.constant 7 : index
    %c1_39 = arith.constant 1 : index
    %100 = memref.load %arg3[%c7_38, %c1_39] : memref<16x36xf32, #tpu.memory_space<smem>>
    %101 = vector.broadcast %100 : f32 to vector<2x142xf32>
    %102 = arith.mulf %101, %71 : vector<2x142xf32>
    %103 = arith.addf %70, %102 : vector<2x142xf32>
    %104 = vector.extract_strided_slice %37 {offsets = [0, 2], sizes = [2, 142], strides = [1, 1]} : vector<2x144xf32> to vector<2x142xf32>
    %c0_40 = arith.constant 0 : index
    %c2_41 = arith.constant 2 : index
    %105 = memref.load %arg3[%c0_40, %c2_41] : memref<16x36xf32, #tpu.memory_space<smem>>
    %106 = vector.broadcast %105 : f32 to vector<2x142xf32>
    %107 = arith.mulf %106, %104 : vector<2x142xf32>
    %108 = arith.addf %75, %107 : vector<2x142xf32>
    %c1_42 = arith.constant 1 : index
    %c2_43 = arith.constant 2 : index
    %109 = memref.load %arg3[%c1_42, %c2_43] : memref<16x36xf32, #tpu.memory_space<smem>>
    %110 = vector.broadcast %109 : f32 to vector<2x142xf32>
    %111 = arith.mulf %110, %104 : vector<2x142xf32>
    %112 = arith.addf %79, %111 : vector<2x142xf32>
    %c2_44 = arith.constant 2 : index
    %c2_45 = arith.constant 2 : index
    %113 = memref.load %arg3[%c2_44, %c2_45] : memref<16x36xf32, #tpu.memory_space<smem>>
    %114 = vector.broadcast %113 : f32 to vector<2x142xf32>
    %115 = arith.mulf %114, %104 : vector<2x142xf32>
    %116 = arith.addf %83, %115 : vector<2x142xf32>
    %c3_46 = arith.constant 3 : index
    %c2_47 = arith.constant 2 : index
    %117 = memref.load %arg3[%c3_46, %c2_47] : memref<16x36xf32, #tpu.memory_space<smem>>
    %118 = vector.broadcast %117 : f32 to vector<2x142xf32>
    %119 = arith.mulf %118, %104 : vector<2x142xf32>
    %120 = arith.addf %87, %119 : vector<2x142xf32>
    %c4_48 = arith.constant 4 : index
    %c2_49 = arith.constant 2 : index
    %121 = memref.load %arg3[%c4_48, %c2_49] : memref<16x36xf32, #tpu.memory_space<smem>>
    %122 = vector.broadcast %121 : f32 to vector<2x142xf32>
    %123 = arith.mulf %122, %104 : vector<2x142xf32>
    %124 = arith.addf %91, %123 : vector<2x142xf32>
    %c5_50 = arith.constant 5 : index
    %c2_51 = arith.constant 2 : index
    %125 = memref.load %arg3[%c5_50, %c2_51] : memref<16x36xf32, #tpu.memory_space<smem>>
    %126 = vector.broadcast %125 : f32 to vector<2x142xf32>
    %127 = arith.mulf %126, %104 : vector<2x142xf32>
    %128 = arith.addf %95, %127 : vector<2x142xf32>
    %c6_52 = arith.constant 6 : index
    %c2_53 = arith.constant 2 : index
    %129 = memref.load %arg3[%c6_52, %c2_53] : memref<16x36xf32, #tpu.memory_space<smem>>
    %130 = vector.broadcast %129 : f32 to vector<2x142xf32>
    %131 = arith.mulf %130, %104 : vector<2x142xf32>
    %132 = arith.addf %99, %131 : vector<2x142xf32>
    %c7_54 = arith.constant 7 : index
    %c2_55 = arith.constant 2 : index
    %133 = memref.load %arg3[%c7_54, %c2_55] : memref<16x36xf32, #tpu.memory_space<smem>>
    %134 = vector.broadcast %133 : f32 to vector<2x142xf32>
    %135 = arith.mulf %134, %104 : vector<2x142xf32>
    %136 = arith.addf %103, %135 : vector<2x142xf32>
    %c0_56 = arith.constant 0 : index
    %c0_57 = arith.constant 0 : index
    %c0_58 = arith.constant 0 : index
    %c1_59 = arith.constant 1 : index
    %c0_60 = arith.constant 0 : index
    %137 = vector.load %arg2[%c0_56, %c0_57, %c0_58, %c1_59, %c0_60] : memref<1x1x4x4x144xbf16, #tpu.memory_space<vmem>>, vector<1x1x1x2x144xbf16>
    %138 = vector.shape_cast %137 : vector<1x1x1x2x144xbf16> to vector<2x144xbf16>
    %139 = arith.extf %138 : vector<2x144xbf16> to vector<2x144xf32>
    %140 = vector.extract_strided_slice %139 {offsets = [0, 0], sizes = [2, 142], strides = [1, 1]} : vector<2x144xf32> to vector<2x142xf32>
    %c0_61 = arith.constant 0 : index
    %c3_62 = arith.constant 3 : index
    %141 = memref.load %arg3[%c0_61, %c3_62] : memref<16x36xf32, #tpu.memory_space<smem>>
    %142 = vector.broadcast %141 : f32 to vector<2x142xf32>
    %143 = arith.mulf %142, %140 : vector<2x142xf32>
    %144 = arith.addf %108, %143 : vector<2x142xf32>
    %c1_63 = arith.constant 1 : index
    %c3_64 = arith.constant 3 : index
    %145 = memref.load %arg3[%c1_63, %c3_64] : memref<16x36xf32, #tpu.memory_space<smem>>
    %146 = vector.broadcast %145 : f32 to vector<2x142xf32>
    %147 = arith.mulf %146, %140 : vector<2x142xf32>
    %148 = arith.addf %112, %147 : vector<2x142xf32>
    %c2_65 = arith.constant 2 : index
    %c3_66 = arith.constant 3 : index
    %149 = memref.load %arg3[%c2_65, %c3_66] : memref<16x36xf32, #tpu.memory_space<smem>>
    %150 = vector.broadcast %149 : f32 to vector<2x142xf32>
    %151 = arith.mulf %150, %140 : vector<2x142xf32>
    %152 = arith.addf %116, %151 : vector<2x142xf32>
    %c3_67 = arith.constant 3 : index
    %c3_68 = arith.constant 3 : index
    %153 = memref.load %arg3[%c3_67, %c3_68] : memref<16x36xf32, #tpu.memory_space<smem>>
    %154 = vector.broadcast %153 : f32 to vector<2x142xf32>
    %155 = arith.mulf %154, %140 : vector<2x142xf32>
    %156 = arith.addf %120, %155 : vector<2x142xf32>
    %c4_69 = arith.constant 4 : index
    %c3_70 = arith.constant 3 : index
    %157 = memref.load %arg3[%c4_69, %c3_70] : memref<16x36xf32, #tpu.memory_space<smem>>
    %158 = vector.broadcast %157 : f32 to vector<2x142xf32>
    %159 = arith.mulf %158, %140 : vector<2x142xf32>
    %160 = arith.addf %124, %159 : vector<2x142xf32>
    %c5_71 = arith.constant 5 : index
    %c3_72 = arith.constant 3 : index
    %161 = memref.load %arg3[%c5_71, %c3_72] : memref<16x36xf32, #tpu.memory_space<smem>>
    %162 = vector.broadcast %161 : f32 to vector<2x142xf32>
    %163 = arith.mulf %162, %140 : vector<2x142xf32>
    %164 = arith.addf %128, %163 : vector<2x142xf32>
    %c6_73 = arith.constant 6 : index
    %c3_74 = arith.constant 3 : index
    %165 = memref.load %arg3[%c6_73, %c3_74] : memref<16x36xf32, #tpu.memory_space<smem>>
    %166 = vector.broadcast %165 : f32 to vector<2x142xf32>
    %167 = arith.mulf %166, %140 : vector<2x142xf32>
    %168 = arith.addf %132, %167 : vector<2x142xf32>
    %c7_75 = arith.constant 7 : index
    %c3_76 = arith.constant 3 : index
    %169 = memref.load %arg3[%c7_75, %c3_76] : memref<16x36xf32, #tpu.memory_space<smem>>
    %170 = vector.broadcast %169 : f32 to vector<2x142xf32>
    %171 = arith.mulf %170, %140 : vector<2x142xf32>
    %172 = arith.addf %136, %171 : vector<2x142xf32>
    %173 = vector.extract_strided_slice %139 {offsets = [0, 1], sizes = [2, 142], strides = [1, 1]} : vector<2x144xf32> to vector<2x142xf32>
    %c0_77 = arith.constant 0 : index
    %c4_78 = arith.constant 4 : index
    %174 = memref.load %arg3[%c0_77, %c4_78] : memref<16x36xf32, #tpu.memory_space<smem>>
    %175 = vector.broadcast %174 : f32 to vector<2x142xf32>
    %176 = arith.mulf %175, %173 : vector<2x142xf32>
    %177 = arith.addf %144, %176 : vector<2x142xf32>
    %c1_79 = arith.constant 1 : index
    %c4_80 = arith.constant 4 : index
    %178 = memref.load %arg3[%c1_79, %c4_80] : memref<16x36xf32, #tpu.memory_space<smem>>
    %179 = vector.broadcast %178 : f32 to vector<2x142xf32>
    %180 = arith.mulf %179, %173 : vector<2x142xf32>
    %181 = arith.addf %148, %180 : vector<2x142xf32>
    %c2_81 = arith.constant 2 : index
    %c4_82 = arith.constant 4 : index
    %182 = memref.load %arg3[%c2_81, %c4_82] : memref<16x36xf32, #tpu.memory_space<smem>>
    %183 = vector.broadcast %182 : f32 to vector<2x142xf32>
    %184 = arith.mulf %183, %173 : vector<2x142xf32>
    %185 = arith.addf %152, %184 : vector<2x142xf32>
    %c3_83 = arith.constant 3 : index
    %c4_84 = arith.constant 4 : index
    %186 = memref.load %arg3[%c3_83, %c4_84] : memref<16x36xf32, #tpu.memory_space<smem>>
    %187 = vector.broadcast %186 : f32 to vector<2x142xf32>
    %188 = arith.mulf %187, %173 : vector<2x142xf32>
    %189 = arith.addf %156, %188 : vector<2x142xf32>
    %c4_85 = arith.constant 4 : index
    %c4_86 = arith.constant 4 : index
    %190 = memref.load %arg3[%c4_85, %c4_86] : memref<16x36xf32, #tpu.memory_space<smem>>
    %191 = vector.broadcast %190 : f32 to vector<2x142xf32>
    %192 = arith.mulf %191, %173 : vector<2x142xf32>
    %193 = arith.addf %160, %192 : vector<2x142xf32>
    %c5_87 = arith.constant 5 : index
    %c4_88 = arith.constant 4 : index
    %194 = memref.load %arg3[%c5_87, %c4_88] : memref<16x36xf32, #tpu.memory_space<smem>>
    %195 = vector.broadcast %194 : f32 to vector<2x142xf32>
    %196 = arith.mulf %195, %173 : vector<2x142xf32>
    %197 = arith.addf %164, %196 : vector<2x142xf32>
    %c6_89 = arith.constant 6 : index
    %c4_90 = arith.constant 4 : index
    %198 = memref.load %arg3[%c6_89, %c4_90] : memref<16x36xf32, #tpu.memory_space<smem>>
    %199 = vector.broadcast %198 : f32 to vector<2x142xf32>
    %200 = arith.mulf %199, %173 : vector<2x142xf32>
    %201 = arith.addf %168, %200 : vector<2x142xf32>
    %c7_91 = arith.constant 7 : index
    %c4_92 = arith.constant 4 : index
    %202 = memref.load %arg3[%c7_91, %c4_92] : memref<16x36xf32, #tpu.memory_space<smem>>
    %203 = vector.broadcast %202 : f32 to vector<2x142xf32>
    %204 = arith.mulf %203, %173 : vector<2x142xf32>
    %205 = arith.addf %172, %204 : vector<2x142xf32>
    %206 = vector.extract_strided_slice %139 {offsets = [0, 2], sizes = [2, 142], strides = [1, 1]} : vector<2x144xf32> to vector<2x142xf32>
    %c0_93 = arith.constant 0 : index
    %c5_94 = arith.constant 5 : index
    %207 = memref.load %arg3[%c0_93, %c5_94] : memref<16x36xf32, #tpu.memory_space<smem>>
    %208 = vector.broadcast %207 : f32 to vector<2x142xf32>
    %209 = arith.mulf %208, %206 : vector<2x142xf32>
    %210 = arith.addf %177, %209 : vector<2x142xf32>
    %c1_95 = arith.constant 1 : index
    %c5_96 = arith.constant 5 : index
    %211 = memref.load %arg3[%c1_95, %c5_96] : memref<16x36xf32, #tpu.memory_space<smem>>
    %212 = vector.broadcast %211 : f32 to vector<2x142xf32>
    %213 = arith.mulf %212, %206 : vector<2x142xf32>
    %214 = arith.addf %181, %213 : vector<2x142xf32>
    %c2_97 = arith.constant 2 : index
    %c5_98 = arith.constant 5 : index
    %215 = memref.load %arg3[%c2_97, %c5_98] : memref<16x36xf32, #tpu.memory_space<smem>>
    %216 = vector.broadcast %215 : f32 to vector<2x142xf32>
    %217 = arith.mulf %216, %206 : vector<2x142xf32>
    %218 = arith.addf %185, %217 : vector<2x142xf32>
    %c3_99 = arith.constant 3 : index
    %c5_100 = arith.constant 5 : index
    %219 = memref.load %arg3[%c3_99, %c5_100] : memref<16x36xf32, #tpu.memory_space<smem>>
    %220 = vector.broadcast %219 : f32 to vector<2x142xf32>
    %221 = arith.mulf %220, %206 : vector<2x142xf32>
    %222 = arith.addf %189, %221 : vector<2x142xf32>
    %c4_101 = arith.constant 4 : index
    %c5_102 = arith.constant 5 : index
    %223 = memref.load %arg3[%c4_101, %c5_102] : memref<16x36xf32, #tpu.memory_space<smem>>
    %224 = vector.broadcast %223 : f32 to vector<2x142xf32>
    %225 = arith.mulf %224, %206 : vector<2x142xf32>
    %226 = arith.addf %193, %225 : vector<2x142xf32>
    %c5_103 = arith.constant 5 : index
    %c5_104 = arith.constant 5 : index
    %227 = memref.load %arg3[%c5_103, %c5_104] : memref<16x36xf32, #tpu.memory_space<smem>>
    %228 = vector.broadcast %227 : f32 to vector<2x142xf32>
    %229 = arith.mulf %228, %206 : vector<2x142xf32>
    %230 = arith.addf %197, %229 : vector<2x142xf32>
    %c6_105 = arith.constant 6 : index
    %c5_106 = arith.constant 5 : index
    %231 = memref.load %arg3[%c6_105, %c5_106] : memref<16x36xf32, #tpu.memory_space<smem>>
    %232 = vector.broadcast %231 : f32 to vector<2x142xf32>
    %233 = arith.mulf %232, %206 : vector<2x142xf32>
    %234 = arith.addf %201, %233 : vector<2x142xf32>
    %c7_107 = arith.constant 7 : index
    %c5_108 = arith.constant 5 : index
    %235 = memref.load %arg3[%c7_107, %c5_108] : memref<16x36xf32, #tpu.memory_space<smem>>
    %236 = vector.broadcast %235 : f32 to vector<2x142xf32>
    %237 = arith.mulf %236, %206 : vector<2x142xf32>
    %238 = arith.addf %205, %237 : vector<2x142xf32>
    %c0_109 = arith.constant 0 : index
    %c0_110 = arith.constant 0 : index
    %c0_111 = arith.constant 0 : index
    %c2_112 = arith.constant 2 : index
    %c0_113 = arith.constant 0 : index
    %239 = vector.load %arg2[%c0_109, %c0_110, %c0_111, %c2_112, %c0_113] : memref<1x1x4x4x144xbf16, #tpu.memory_space<vmem>>, vector<1x1x1x2x144xbf16>
    %240 = vector.shape_cast %239 : vector<1x1x1x2x144xbf16> to vector<2x144xbf16>
    %241 = arith.extf %240 : vector<2x144xbf16> to vector<2x144xf32>
    %242 = vector.extract_strided_slice %241 {offsets = [0, 0], sizes = [2, 142], strides = [1, 1]} : vector<2x144xf32> to vector<2x142xf32>
    %c0_114 = arith.constant 0 : index
    %c6_115 = arith.constant 6 : index
    %243 = memref.load %arg3[%c0_114, %c6_115] : memref<16x36xf32, #tpu.memory_space<smem>>
    %244 = vector.broadcast %243 : f32 to vector<2x142xf32>
    %245 = arith.mulf %244, %242 : vector<2x142xf32>
    %246 = arith.addf %210, %245 : vector<2x142xf32>
    %c1_116 = arith.constant 1 : index
    %c6_117 = arith.constant 6 : index
    %247 = memref.load %arg3[%c1_116, %c6_117] : memref<16x36xf32, #tpu.memory_space<smem>>
    %248 = vector.broadcast %247 : f32 to vector<2x142xf32>
    %249 = arith.mulf %248, %242 : vector<2x142xf32>
    %250 = arith.addf %214, %249 : vector<2x142xf32>
    %c2_118 = arith.constant 2 : index
    %c6_119 = arith.constant 6 : index
    %251 = memref.load %arg3[%c2_118, %c6_119] : memref<16x36xf32, #tpu.memory_space<smem>>
    %252 = vector.broadcast %251 : f32 to vector<2x142xf32>
    %253 = arith.mulf %252, %242 : vector<2x142xf32>
    %254 = arith.addf %218, %253 : vector<2x142xf32>
    %c3_120 = arith.constant 3 : index
    %c6_121 = arith.constant 6 : index
    %255 = memref.load %arg3[%c3_120, %c6_121] : memref<16x36xf32, #tpu.memory_space<smem>>
    %256 = vector.broadcast %255 : f32 to vector<2x142xf32>
    %257 = arith.mulf %256, %242 : vector<2x142xf32>
    %258 = arith.addf %222, %257 : vector<2x142xf32>
    %c4_122 = arith.constant 4 : index
    %c6_123 = arith.constant 6 : index
    %259 = memref.load %arg3[%c4_122, %c6_123] : memref<16x36xf32, #tpu.memory_space<smem>>
    %260 = vector.broadcast %259 : f32 to vector<2x142xf32>
    %261 = arith.mulf %260, %242 : vector<2x142xf32>
    %262 = arith.addf %226, %261 : vector<2x142xf32>
    %c5_124 = arith.constant 5 : index
    %c6_125 = arith.constant 6 : index
    %263 = memref.load %arg3[%c5_124, %c6_125] : memref<16x36xf32, #tpu.memory_space<smem>>
    %264 = vector.broadcast %263 : f32 to vector<2x142xf32>
    %265 = arith.mulf %264, %242 : vector<2x142xf32>
    %266 = arith.addf %230, %265 : vector<2x142xf32>
    %c6_126 = arith.constant 6 : index
    %c6_127 = arith.constant 6 : index
    %267 = memref.load %arg3[%c6_126, %c6_127] : memref<16x36xf32, #tpu.memory_space<smem>>
    %268 = vector.broadcast %267 : f32 to vector<2x142xf32>
    %269 = arith.mulf %268, %242 : vector<2x142xf32>
    %270 = arith.addf %234, %269 : vector<2x142xf32>
    %c7_128 = arith.constant 7 : index
    %c6_129 = arith.constant 6 : index
    %271 = memref.load %arg3[%c7_128, %c6_129] : memref<16x36xf32, #tpu.memory_space<smem>>
    %272 = vector.broadcast %271 : f32 to vector<2x142xf32>
    %273 = arith.mulf %272, %242 : vector<2x142xf32>
    %274 = arith.addf %238, %273 : vector<2x142xf32>
    %275 = vector.extract_strided_slice %241 {offsets = [0, 1], sizes = [2, 142], strides = [1, 1]} : vector<2x144xf32> to vector<2x142xf32>
    %c0_130 = arith.constant 0 : index
    %c7_131 = arith.constant 7 : index
    %276 = memref.load %arg3[%c0_130, %c7_131] : memref<16x36xf32, #tpu.memory_space<smem>>
    %277 = vector.broadcast %276 : f32 to vector<2x142xf32>
    %278 = arith.mulf %277, %275 : vector<2x142xf32>
    %279 = arith.addf %246, %278 : vector<2x142xf32>
    %c1_132 = arith.constant 1 : index
    %c7_133 = arith.constant 7 : index
    %280 = memref.load %arg3[%c1_132, %c7_133] : memref<16x36xf32, #tpu.memory_space<smem>>
    %281 = vector.broadcast %280 : f32 to vector<2x142xf32>
    %282 = arith.mulf %281, %275 : vector<2x142xf32>
    %283 = arith.addf %250, %282 : vector<2x142xf32>
    %c2_134 = arith.constant 2 : index
    %c7_135 = arith.constant 7 : index
    %284 = memref.load %arg3[%c2_134, %c7_135] : memref<16x36xf32, #tpu.memory_space<smem>>
    %285 = vector.broadcast %284 : f32 to vector<2x142xf32>
    %286 = arith.mulf %285, %275 : vector<2x142xf32>
    %287 = arith.addf %254, %286 : vector<2x142xf32>
    %c3_136 = arith.constant 3 : index
    %c7_137 = arith.constant 7 : index
    %288 = memref.load %arg3[%c3_136, %c7_137] : memref<16x36xf32, #tpu.memory_space<smem>>
    %289 = vector.broadcast %288 : f32 to vector<2x142xf32>
    %290 = arith.mulf %289, %275 : vector<2x142xf32>
    %291 = arith.addf %258, %290 : vector<2x142xf32>
    %c4_138 = arith.constant 4 : index
    %c7_139 = arith.constant 7 : index
    %292 = memref.load %arg3[%c4_138, %c7_139] : memref<16x36xf32, #tpu.memory_space<smem>>
    %293 = vector.broadcast %292 : f32 to vector<2x142xf32>
    %294 = arith.mulf %293, %275 : vector<2x142xf32>
    %295 = arith.addf %262, %294 : vector<2x142xf32>
    %c5_140 = arith.constant 5 : index
    %c7_141 = arith.constant 7 : index
    %296 = memref.load %arg3[%c5_140, %c7_141] : memref<16x36xf32, #tpu.memory_space<smem>>
    %297 = vector.broadcast %296 : f32 to vector<2x142xf32>
    %298 = arith.mulf %297, %275 : vector<2x142xf32>
    %299 = arith.addf %266, %298 : vector<2x142xf32>
    %c6_142 = arith.constant 6 : index
    %c7_143 = arith.constant 7 : index
    %300 = memref.load %arg3[%c6_142, %c7_143] : memref<16x36xf32, #tpu.memory_space<smem>>
    %301 = vector.broadcast %300 : f32 to vector<2x142xf32>
    %302 = arith.mulf %301, %275 : vector<2x142xf32>
    %303 = arith.addf %270, %302 : vector<2x142xf32>
    %c7_144 = arith.constant 7 : index
    %c7_145 = arith.constant 7 : index
    %304 = memref.load %arg3[%c7_144, %c7_145] : memref<16x36xf32, #tpu.memory_space<smem>>
    %305 = vector.broadcast %304 : f32 to vector<2x142xf32>
    %306 = arith.mulf %305, %275 : vector<2x142xf32>
    %307 = arith.addf %274, %306 : vector<2x142xf32>
    %308 = vector.extract_strided_slice %241 {offsets = [0, 2], sizes = [2, 142], strides = [1, 1]} : vector<2x144xf32> to vector<2x142xf32>
    %c0_146 = arith.constant 0 : index
    %c8 = arith.constant 8 : index
    %309 = memref.load %arg3[%c0_146, %c8] : memref<16x36xf32, #tpu.memory_space<smem>>
    %310 = vector.broadcast %309 : f32 to vector<2x142xf32>
    %311 = arith.mulf %310, %308 : vector<2x142xf32>
    %312 = arith.addf %279, %311 : vector<2x142xf32>
    %c1_147 = arith.constant 1 : index
    %c8_148 = arith.constant 8 : index
    %313 = memref.load %arg3[%c1_147, %c8_148] : memref<16x36xf32, #tpu.memory_space<smem>>
    %314 = vector.broadcast %313 : f32 to vector<2x142xf32>
    %315 = arith.mulf %314, %308 : vector<2x142xf32>
    %316 = arith.addf %283, %315 : vector<2x142xf32>
    %c2_149 = arith.constant 2 : index
    %c8_150 = arith.constant 8 : index
    %317 = memref.load %arg3[%c2_149, %c8_150] : memref<16x36xf32, #tpu.memory_space<smem>>
    %318 = vector.broadcast %317 : f32 to vector<2x142xf32>
    %319 = arith.mulf %318, %308 : vector<2x142xf32>
    %320 = arith.addf %287, %319 : vector<2x142xf32>
    %c3_151 = arith.constant 3 : index
    %c8_152 = arith.constant 8 : index
    %321 = memref.load %arg3[%c3_151, %c8_152] : memref<16x36xf32, #tpu.memory_space<smem>>
    %322 = vector.broadcast %321 : f32 to vector<2x142xf32>
    %323 = arith.mulf %322, %308 : vector<2x142xf32>
    %324 = arith.addf %291, %323 : vector<2x142xf32>
    %c4_153 = arith.constant 4 : index
    %c8_154 = arith.constant 8 : index
    %325 = memref.load %arg3[%c4_153, %c8_154] : memref<16x36xf32, #tpu.memory_space<smem>>
    %326 = vector.broadcast %325 : f32 to vector<2x142xf32>
    %327 = arith.mulf %326, %308 : vector<2x142xf32>
    %328 = arith.addf %295, %327 : vector<2x142xf32>
    %c5_155 = arith.constant 5 : index
    %c8_156 = arith.constant 8 : index
    %329 = memref.load %arg3[%c5_155, %c8_156] : memref<16x36xf32, #tpu.memory_space<smem>>
    %330 = vector.broadcast %329 : f32 to vector<2x142xf32>
    %331 = arith.mulf %330, %308 : vector<2x142xf32>
    %332 = arith.addf %299, %331 : vector<2x142xf32>
    %c6_157 = arith.constant 6 : index
    %c8_158 = arith.constant 8 : index
    %333 = memref.load %arg3[%c6_157, %c8_158] : memref<16x36xf32, #tpu.memory_space<smem>>
    %334 = vector.broadcast %333 : f32 to vector<2x142xf32>
    %335 = arith.mulf %334, %308 : vector<2x142xf32>
    %336 = arith.addf %303, %335 : vector<2x142xf32>
    %c7_159 = arith.constant 7 : index
    %c8_160 = arith.constant 8 : index
    %337 = memref.load %arg3[%c7_159, %c8_160] : memref<16x36xf32, #tpu.memory_space<smem>>
    %338 = vector.broadcast %337 : f32 to vector<2x142xf32>
    %339 = arith.mulf %338, %308 : vector<2x142xf32>
    %340 = arith.addf %307, %339 : vector<2x142xf32>
    %c0_161 = arith.constant 0 : index
    %c0_162 = arith.constant 0 : index
    %c1_163 = arith.constant 1 : index
    %c0_164 = arith.constant 0 : index
    %c0_165 = arith.constant 0 : index
    %341 = vector.load %arg2[%c0_161, %c0_162, %c1_163, %c0_164, %c0_165] : memref<1x1x4x4x144xbf16, #tpu.memory_space<vmem>>, vector<1x1x1x2x144xbf16>
    %342 = vector.shape_cast %341 : vector<1x1x1x2x144xbf16> to vector<2x144xbf16>
    %343 = arith.extf %342 : vector<2x144xbf16> to vector<2x144xf32>
    %344 = vector.extract_strided_slice %343 {offsets = [0, 0], sizes = [2, 142], strides = [1, 1]} : vector<2x144xf32> to vector<2x142xf32>
    %c0_166 = arith.constant 0 : index
    %c9 = arith.constant 9 : index
    %345 = memref.load %arg3[%c0_166, %c9] : memref<16x36xf32, #tpu.memory_space<smem>>
    %346 = vector.broadcast %345 : f32 to vector<2x142xf32>
    %347 = arith.mulf %346, %344 : vector<2x142xf32>
    %348 = arith.addf %312, %347 : vector<2x142xf32>
    %c1_167 = arith.constant 1 : index
    %c9_168 = arith.constant 9 : index
    %349 = memref.load %arg3[%c1_167, %c9_168] : memref<16x36xf32, #tpu.memory_space<smem>>
    %350 = vector.broadcast %349 : f32 to vector<2x142xf32>
    %351 = arith.mulf %350, %344 : vector<2x142xf32>
    %352 = arith.addf %316, %351 : vector<2x142xf32>
    %c2_169 = arith.constant 2 : index
    %c9_170 = arith.constant 9 : index
    %353 = memref.load %arg3[%c2_169, %c9_170] : memref<16x36xf32, #tpu.memory_space<smem>>
    %354 = vector.broadcast %353 : f32 to vector<2x142xf32>
    %355 = arith.mulf %354, %344 : vector<2x142xf32>
    %356 = arith.addf %320, %355 : vector<2x142xf32>
    %c3_171 = arith.constant 3 : index
    %c9_172 = arith.constant 9 : index
    %357 = memref.load %arg3[%c3_171, %c9_172] : memref<16x36xf32, #tpu.memory_space<smem>>
    %358 = vector.broadcast %357 : f32 to vector<2x142xf32>
    %359 = arith.mulf %358, %344 : vector<2x142xf32>
    %360 = arith.addf %324, %359 : vector<2x142xf32>
    %c4_173 = arith.constant 4 : index
    %c9_174 = arith.constant 9 : index
    %361 = memref.load %arg3[%c4_173, %c9_174] : memref<16x36xf32, #tpu.memory_space<smem>>
    %362 = vector.broadcast %361 : f32 to vector<2x142xf32>
    %363 = arith.mulf %362, %344 : vector<2x142xf32>
    %364 = arith.addf %328, %363 : vector<2x142xf32>
    %c5_175 = arith.constant 5 : index
    %c9_176 = arith.constant 9 : index
    %365 = memref.load %arg3[%c5_175, %c9_176] : memref<16x36xf32, #tpu.memory_space<smem>>
    %366 = vector.broadcast %365 : f32 to vector<2x142xf32>
    %367 = arith.mulf %366, %344 : vector<2x142xf32>
    %368 = arith.addf %332, %367 : vector<2x142xf32>
    %c6_177 = arith.constant 6 : index
    %c9_178 = arith.constant 9 : index
    %369 = memref.load %arg3[%c6_177, %c9_178] : memref<16x36xf32, #tpu.memory_space<smem>>
    %370 = vector.broadcast %369 : f32 to vector<2x142xf32>
    %371 = arith.mulf %370, %344 : vector<2x142xf32>
    %372 = arith.addf %336, %371 : vector<2x142xf32>
    %c7_179 = arith.constant 7 : index
    %c9_180 = arith.constant 9 : index
    %373 = memref.load %arg3[%c7_179, %c9_180] : memref<16x36xf32, #tpu.memory_space<smem>>
    %374 = vector.broadcast %373 : f32 to vector<2x142xf32>
    %375 = arith.mulf %374, %344 : vector<2x142xf32>
    %376 = arith.addf %340, %375 : vector<2x142xf32>
    %377 = vector.extract_strided_slice %343 {offsets = [0, 1], sizes = [2, 142], strides = [1, 1]} : vector<2x144xf32> to vector<2x142xf32>
    %c0_181 = arith.constant 0 : index
    %c10 = arith.constant 10 : index
    %378 = memref.load %arg3[%c0_181, %c10] : memref<16x36xf32, #tpu.memory_space<smem>>
    %379 = vector.broadcast %378 : f32 to vector<2x142xf32>
    %380 = arith.mulf %379, %377 : vector<2x142xf32>
    %381 = arith.addf %348, %380 : vector<2x142xf32>
    %c1_182 = arith.constant 1 : index
    %c10_183 = arith.constant 10 : index
    %382 = memref.load %arg3[%c1_182, %c10_183] : memref<16x36xf32, #tpu.memory_space<smem>>
    %383 = vector.broadcast %382 : f32 to vector<2x142xf32>
    %384 = arith.mulf %383, %377 : vector<2x142xf32>
    %385 = arith.addf %352, %384 : vector<2x142xf32>
    %c2_184 = arith.constant 2 : index
    %c10_185 = arith.constant 10 : index
    %386 = memref.load %arg3[%c2_184, %c10_185] : memref<16x36xf32, #tpu.memory_space<smem>>
    %387 = vector.broadcast %386 : f32 to vector<2x142xf32>
    %388 = arith.mulf %387, %377 : vector<2x142xf32>
    %389 = arith.addf %356, %388 : vector<2x142xf32>
    %c3_186 = arith.constant 3 : index
    %c10_187 = arith.constant 10 : index
    %390 = memref.load %arg3[%c3_186, %c10_187] : memref<16x36xf32, #tpu.memory_space<smem>>
    %391 = vector.broadcast %390 : f32 to vector<2x142xf32>
    %392 = arith.mulf %391, %377 : vector<2x142xf32>
    %393 = arith.addf %360, %392 : vector<2x142xf32>
    %c4_188 = arith.constant 4 : index
    %c10_189 = arith.constant 10 : index
    %394 = memref.load %arg3[%c4_188, %c10_189] : memref<16x36xf32, #tpu.memory_space<smem>>
    %395 = vector.broadcast %394 : f32 to vector<2x142xf32>
    %396 = arith.mulf %395, %377 : vector<2x142xf32>
    %397 = arith.addf %364, %396 : vector<2x142xf32>
    %c5_190 = arith.constant 5 : index
    %c10_191 = arith.constant 10 : index
    %398 = memref.load %arg3[%c5_190, %c10_191] : memref<16x36xf32, #tpu.memory_space<smem>>
    %399 = vector.broadcast %398 : f32 to vector<2x142xf32>
    %400 = arith.mulf %399, %377 : vector<2x142xf32>
    %401 = arith.addf %368, %400 : vector<2x142xf32>
    %c6_192 = arith.constant 6 : index
    %c10_193 = arith.constant 10 : index
    %402 = memref.load %arg3[%c6_192, %c10_193] : memref<16x36xf32, #tpu.memory_space<smem>>
    %403 = vector.broadcast %402 : f32 to vector<2x142xf32>
    %404 = arith.mulf %403, %377 : vector<2x142xf32>
    %405 = arith.addf %372, %404 : vector<2x142xf32>
    %c7_194 = arith.constant 7 : index
    %c10_195 = arith.constant 10 : index
    %406 = memref.load %arg3[%c7_194, %c10_195] : memref<16x36xf32, #tpu.memory_space<smem>>
    %407 = vector.broadcast %406 : f32 to vector<2x142xf32>
    %408 = arith.mulf %407, %377 : vector<2x142xf32>
    %409 = arith.addf %376, %408 : vector<2x142xf32>
    %410 = vector.extract_strided_slice %343 {offsets = [0, 2], sizes = [2, 142], strides = [1, 1]} : vector<2x144xf32> to vector<2x142xf32>
    %c0_196 = arith.constant 0 : index
    %c11 = arith.constant 11 : index
    %411 = memref.load %arg3[%c0_196, %c11] : memref<16x36xf32, #tpu.memory_space<smem>>
    %412 = vector.broadcast %411 : f32 to vector<2x142xf32>
    %413 = arith.mulf %412, %410 : vector<2x142xf32>
    %414 = arith.addf %381, %413 : vector<2x142xf32>
    %c1_197 = arith.constant 1 : index
    %c11_198 = arith.constant 11 : index
    %415 = memref.load %arg3[%c1_197, %c11_198] : memref<16x36xf32, #tpu.memory_space<smem>>
    %416 = vector.broadcast %415 : f32 to vector<2x142xf32>
    %417 = arith.mulf %416, %410 : vector<2x142xf32>
    %418 = arith.addf %385, %417 : vector<2x142xf32>
    %c2_199 = arith.constant 2 : index
    %c11_200 = arith.constant 11 : index
    %419 = memref.load %arg3[%c2_199, %c11_200] : memref<16x36xf32, #tpu.memory_space<smem>>
    %420 = vector.broadcast %419 : f32 to vector<2x142xf32>
    %421 = arith.mulf %420, %410 : vector<2x142xf32>
    %422 = arith.addf %389, %421 : vector<2x142xf32>
    %c3_201 = arith.constant 3 : index
    %c11_202 = arith.constant 11 : index
    %423 = memref.load %arg3[%c3_201, %c11_202] : memref<16x36xf32, #tpu.memory_space<smem>>
    %424 = vector.broadcast %423 : f32 to vector<2x142xf32>
    %425 = arith.mulf %424, %410 : vector<2x142xf32>
    %426 = arith.addf %393, %425 : vector<2x142xf32>
    %c4_203 = arith.constant 4 : index
    %c11_204 = arith.constant 11 : index
    %427 = memref.load %arg3[%c4_203, %c11_204] : memref<16x36xf32, #tpu.memory_space<smem>>
    %428 = vector.broadcast %427 : f32 to vector<2x142xf32>
    %429 = arith.mulf %428, %410 : vector<2x142xf32>
    %430 = arith.addf %397, %429 : vector<2x142xf32>
    %c5_205 = arith.constant 5 : index
    %c11_206 = arith.constant 11 : index
    %431 = memref.load %arg3[%c5_205, %c11_206] : memref<16x36xf32, #tpu.memory_space<smem>>
    %432 = vector.broadcast %431 : f32 to vector<2x142xf32>
    %433 = arith.mulf %432, %410 : vector<2x142xf32>
    %434 = arith.addf %401, %433 : vector<2x142xf32>
    %c6_207 = arith.constant 6 : index
    %c11_208 = arith.constant 11 : index
    %435 = memref.load %arg3[%c6_207, %c11_208] : memref<16x36xf32, #tpu.memory_space<smem>>
    %436 = vector.broadcast %435 : f32 to vector<2x142xf32>
    %437 = arith.mulf %436, %410 : vector<2x142xf32>
    %438 = arith.addf %405, %437 : vector<2x142xf32>
    %c7_209 = arith.constant 7 : index
    %c11_210 = arith.constant 11 : index
    %439 = memref.load %arg3[%c7_209, %c11_210] : memref<16x36xf32, #tpu.memory_space<smem>>
    %440 = vector.broadcast %439 : f32 to vector<2x142xf32>
    %441 = arith.mulf %440, %410 : vector<2x142xf32>
    %442 = arith.addf %409, %441 : vector<2x142xf32>
    %c0_211 = arith.constant 0 : index
    %c0_212 = arith.constant 0 : index
    %c1_213 = arith.constant 1 : index
    %c1_214 = arith.constant 1 : index
    %c0_215 = arith.constant 0 : index
    %443 = vector.load %arg2[%c0_211, %c0_212, %c1_213, %c1_214, %c0_215] : memref<1x1x4x4x144xbf16, #tpu.memory_space<vmem>>, vector<1x1x1x2x144xbf16>
    %444 = vector.shape_cast %443 : vector<1x1x1x2x144xbf16> to vector<2x144xbf16>
    %445 = arith.extf %444 : vector<2x144xbf16> to vector<2x144xf32>
    %446 = vector.extract_strided_slice %445 {offsets = [0, 0], sizes = [2, 142], strides = [1, 1]} : vector<2x144xf32> to vector<2x142xf32>
    %c0_216 = arith.constant 0 : index
    %c12 = arith.constant 12 : index
    %447 = memref.load %arg3[%c0_216, %c12] : memref<16x36xf32, #tpu.memory_space<smem>>
    %448 = vector.broadcast %447 : f32 to vector<2x142xf32>
    %449 = arith.mulf %448, %446 : vector<2x142xf32>
    %450 = arith.addf %414, %449 : vector<2x142xf32>
    %c1_217 = arith.constant 1 : index
    %c12_218 = arith.constant 12 : index
    %451 = memref.load %arg3[%c1_217, %c12_218] : memref<16x36xf32, #tpu.memory_space<smem>>
    %452 = vector.broadcast %451 : f32 to vector<2x142xf32>
    %453 = arith.mulf %452, %446 : vector<2x142xf32>
    %454 = arith.addf %418, %453 : vector<2x142xf32>
    %c2_219 = arith.constant 2 : index
    %c12_220 = arith.constant 12 : index
    %455 = memref.load %arg3[%c2_219, %c12_220] : memref<16x36xf32, #tpu.memory_space<smem>>
    %456 = vector.broadcast %455 : f32 to vector<2x142xf32>
    %457 = arith.mulf %456, %446 : vector<2x142xf32>
    %458 = arith.addf %422, %457 : vector<2x142xf32>
    %c3_221 = arith.constant 3 : index
    %c12_222 = arith.constant 12 : index
    %459 = memref.load %arg3[%c3_221, %c12_222] : memref<16x36xf32, #tpu.memory_space<smem>>
    %460 = vector.broadcast %459 : f32 to vector<2x142xf32>
    %461 = arith.mulf %460, %446 : vector<2x142xf32>
    %462 = arith.addf %426, %461 : vector<2x142xf32>
    %c4_223 = arith.constant 4 : index
    %c12_224 = arith.constant 12 : index
    %463 = memref.load %arg3[%c4_223, %c12_224] : memref<16x36xf32, #tpu.memory_space<smem>>
    %464 = vector.broadcast %463 : f32 to vector<2x142xf32>
    %465 = arith.mulf %464, %446 : vector<2x142xf32>
    %466 = arith.addf %430, %465 : vector<2x142xf32>
    %c5_225 = arith.constant 5 : index
    %c12_226 = arith.constant 12 : index
    %467 = memref.load %arg3[%c5_225, %c12_226] : memref<16x36xf32, #tpu.memory_space<smem>>
    %468 = vector.broadcast %467 : f32 to vector<2x142xf32>
    %469 = arith.mulf %468, %446 : vector<2x142xf32>
    %470 = arith.addf %434, %469 : vector<2x142xf32>
    %c6_227 = arith.constant 6 : index
    %c12_228 = arith.constant 12 : index
    %471 = memref.load %arg3[%c6_227, %c12_228] : memref<16x36xf32, #tpu.memory_space<smem>>
    %472 = vector.broadcast %471 : f32 to vector<2x142xf32>
    %473 = arith.mulf %472, %446 : vector<2x142xf32>
    %474 = arith.addf %438, %473 : vector<2x142xf32>
    %c7_229 = arith.constant 7 : index
    %c12_230 = arith.constant 12 : index
    %475 = memref.load %arg3[%c7_229, %c12_230] : memref<16x36xf32, #tpu.memory_space<smem>>
    %476 = vector.broadcast %475 : f32 to vector<2x142xf32>
    %477 = arith.mulf %476, %446 : vector<2x142xf32>
    %478 = arith.addf %442, %477 : vector<2x142xf32>
    %479 = vector.extract_strided_slice %445 {offsets = [0, 1], sizes = [2, 142], strides = [1, 1]} : vector<2x144xf32> to vector<2x142xf32>
    %c0_231 = arith.constant 0 : index
    %c13 = arith.constant 13 : index
    %480 = memref.load %arg3[%c0_231, %c13] : memref<16x36xf32, #tpu.memory_space<smem>>
    %481 = vector.broadcast %480 : f32 to vector<2x142xf32>
    %482 = arith.mulf %481, %479 : vector<2x142xf32>
    %483 = arith.addf %450, %482 : vector<2x142xf32>
    %c1_232 = arith.constant 1 : index
    %c13_233 = arith.constant 13 : index
    %484 = memref.load %arg3[%c1_232, %c13_233] : memref<16x36xf32, #tpu.memory_space<smem>>
    %485 = vector.broadcast %484 : f32 to vector<2x142xf32>
    %486 = arith.mulf %485, %479 : vector<2x142xf32>
    %487 = arith.addf %454, %486 : vector<2x142xf32>
    %c2_234 = arith.constant 2 : index
    %c13_235 = arith.constant 13 : index
    %488 = memref.load %arg3[%c2_234, %c13_235] : memref<16x36xf32, #tpu.memory_space<smem>>
    %489 = vector.broadcast %488 : f32 to vector<2x142xf32>
    %490 = arith.mulf %489, %479 : vector<2x142xf32>
    %491 = arith.addf %458, %490 : vector<2x142xf32>
    %c3_236 = arith.constant 3 : index
    %c13_237 = arith.constant 13 : index
    %492 = memref.load %arg3[%c3_236, %c13_237] : memref<16x36xf32, #tpu.memory_space<smem>>
    %493 = vector.broadcast %492 : f32 to vector<2x142xf32>
    %494 = arith.mulf %493, %479 : vector<2x142xf32>
    %495 = arith.addf %462, %494 : vector<2x142xf32>
    %c4_238 = arith.constant 4 : index
    %c13_239 = arith.constant 13 : index
    %496 = memref.load %arg3[%c4_238, %c13_239] : memref<16x36xf32, #tpu.memory_space<smem>>
    %497 = vector.broadcast %496 : f32 to vector<2x142xf32>
    %498 = arith.mulf %497, %479 : vector<2x142xf32>
    %499 = arith.addf %466, %498 : vector<2x142xf32>
    %c5_240 = arith.constant 5 : index
    %c13_241 = arith.constant 13 : index
    %500 = memref.load %arg3[%c5_240, %c13_241] : memref<16x36xf32, #tpu.memory_space<smem>>
    %501 = vector.broadcast %500 : f32 to vector<2x142xf32>
    %502 = arith.mulf %501, %479 : vector<2x142xf32>
    %503 = arith.addf %470, %502 : vector<2x142xf32>
    %c6_242 = arith.constant 6 : index
    %c13_243 = arith.constant 13 : index
    %504 = memref.load %arg3[%c6_242, %c13_243] : memref<16x36xf32, #tpu.memory_space<smem>>
    %505 = vector.broadcast %504 : f32 to vector<2x142xf32>
    %506 = arith.mulf %505, %479 : vector<2x142xf32>
    %507 = arith.addf %474, %506 : vector<2x142xf32>
    %c7_244 = arith.constant 7 : index
    %c13_245 = arith.constant 13 : index
    %508 = memref.load %arg3[%c7_244, %c13_245] : memref<16x36xf32, #tpu.memory_space<smem>>
    %509 = vector.broadcast %508 : f32 to vector<2x142xf32>
    %510 = arith.mulf %509, %479 : vector<2x142xf32>
    %511 = arith.addf %478, %510 : vector<2x142xf32>
    %512 = vector.extract_strided_slice %445 {offsets = [0, 2], sizes = [2, 142], strides = [1, 1]} : vector<2x144xf32> to vector<2x142xf32>
    %c0_246 = arith.constant 0 : index
    %c14 = arith.constant 14 : index
    %513 = memref.load %arg3[%c0_246, %c14] : memref<16x36xf32, #tpu.memory_space<smem>>
    %514 = vector.broadcast %513 : f32 to vector<2x142xf32>
    %515 = arith.mulf %514, %512 : vector<2x142xf32>
    %516 = arith.addf %483, %515 : vector<2x142xf32>
    %c1_247 = arith.constant 1 : index
    %c14_248 = arith.constant 14 : index
    %517 = memref.load %arg3[%c1_247, %c14_248] : memref<16x36xf32, #tpu.memory_space<smem>>
    %518 = vector.broadcast %517 : f32 to vector<2x142xf32>
    %519 = arith.mulf %518, %512 : vector<2x142xf32>
    %520 = arith.addf %487, %519 : vector<2x142xf32>
    %c2_249 = arith.constant 2 : index
    %c14_250 = arith.constant 14 : index
    %521 = memref.load %arg3[%c2_249, %c14_250] : memref<16x36xf32, #tpu.memory_space<smem>>
    %522 = vector.broadcast %521 : f32 to vector<2x142xf32>
    %523 = arith.mulf %522, %512 : vector<2x142xf32>
    %524 = arith.addf %491, %523 : vector<2x142xf32>
    %c3_251 = arith.constant 3 : index
    %c14_252 = arith.constant 14 : index
    %525 = memref.load %arg3[%c3_251, %c14_252] : memref<16x36xf32, #tpu.memory_space<smem>>
    %526 = vector.broadcast %525 : f32 to vector<2x142xf32>
    %527 = arith.mulf %526, %512 : vector<2x142xf32>
    %528 = arith.addf %495, %527 : vector<2x142xf32>
    %c4_253 = arith.constant 4 : index
    %c14_254 = arith.constant 14 : index
    %529 = memref.load %arg3[%c4_253, %c14_254] : memref<16x36xf32, #tpu.memory_space<smem>>
    %530 = vector.broadcast %529 : f32 to vector<2x142xf32>
    %531 = arith.mulf %530, %512 : vector<2x142xf32>
    %532 = arith.addf %499, %531 : vector<2x142xf32>
    %c5_255 = arith.constant 5 : index
    %c14_256 = arith.constant 14 : index
    %533 = memref.load %arg3[%c5_255, %c14_256] : memref<16x36xf32, #tpu.memory_space<smem>>
    %534 = vector.broadcast %533 : f32 to vector<2x142xf32>
    %535 = arith.mulf %534, %512 : vector<2x142xf32>
    %536 = arith.addf %503, %535 : vector<2x142xf32>
    %c6_257 = arith.constant 6 : index
    %c14_258 = arith.constant 14 : index
    %537 = memref.load %arg3[%c6_257, %c14_258] : memref<16x36xf32, #tpu.memory_space<smem>>
    %538 = vector.broadcast %537 : f32 to vector<2x142xf32>
    %539 = arith.mulf %538, %512 : vector<2x142xf32>
    %540 = arith.addf %507, %539 : vector<2x142xf32>
    %c7_259 = arith.constant 7 : index
    %c14_260 = arith.constant 14 : index
    %541 = memref.load %arg3[%c7_259, %c14_260] : memref<16x36xf32, #tpu.memory_space<smem>>
    %542 = vector.broadcast %541 : f32 to vector<2x142xf32>
    %543 = arith.mulf %542, %512 : vector<2x142xf32>
    %544 = arith.addf %511, %543 : vector<2x142xf32>
    %c0_261 = arith.constant 0 : index
    %c0_262 = arith.constant 0 : index
    %c1_263 = arith.constant 1 : index
    %c2_264 = arith.constant 2 : index
    %c0_265 = arith.constant 0 : index
    %545 = vector.load %arg2[%c0_261, %c0_262, %c1_263, %c2_264, %c0_265] : memref<1x1x4x4x144xbf16, #tpu.memory_space<vmem>>, vector<1x1x1x2x144xbf16>
    %546 = vector.shape_cast %545 : vector<1x1x1x2x144xbf16> to vector<2x144xbf16>
    %547 = arith.extf %546 : vector<2x144xbf16> to vector<2x144xf32>
    %548 = vector.extract_strided_slice %547 {offsets = [0, 0], sizes = [2, 142], strides = [1, 1]} : vector<2x144xf32> to vector<2x142xf32>
    %c0_266 = arith.constant 0 : index
    %c15 = arith.constant 15 : index
    %549 = memref.load %arg3[%c0_266, %c15] : memref<16x36xf32, #tpu.memory_space<smem>>
    %550 = vector.broadcast %549 : f32 to vector<2x142xf32>
    %551 = arith.mulf %550, %548 : vector<2x142xf32>
    %552 = arith.addf %516, %551 : vector<2x142xf32>
    %c1_267 = arith.constant 1 : index
    %c15_268 = arith.constant 15 : index
    %553 = memref.load %arg3[%c1_267, %c15_268] : memref<16x36xf32, #tpu.memory_space<smem>>
    %554 = vector.broadcast %553 : f32 to vector<2x142xf32>
    %555 = arith.mulf %554, %548 : vector<2x142xf32>
    %556 = arith.addf %520, %555 : vector<2x142xf32>
    %c2_269 = arith.constant 2 : index
    %c15_270 = arith.constant 15 : index
    %557 = memref.load %arg3[%c2_269, %c15_270] : memref<16x36xf32, #tpu.memory_space<smem>>
    %558 = vector.broadcast %557 : f32 to vector<2x142xf32>
    %559 = arith.mulf %558, %548 : vector<2x142xf32>
    %560 = arith.addf %524, %559 : vector<2x142xf32>
    %c3_271 = arith.constant 3 : index
    %c15_272 = arith.constant 15 : index
    %561 = memref.load %arg3[%c3_271, %c15_272] : memref<16x36xf32, #tpu.memory_space<smem>>
    %562 = vector.broadcast %561 : f32 to vector<2x142xf32>
    %563 = arith.mulf %562, %548 : vector<2x142xf32>
    %564 = arith.addf %528, %563 : vector<2x142xf32>
    %c4_273 = arith.constant 4 : index
    %c15_274 = arith.constant 15 : index
    %565 = memref.load %arg3[%c4_273, %c15_274] : memref<16x36xf32, #tpu.memory_space<smem>>
    %566 = vector.broadcast %565 : f32 to vector<2x142xf32>
    %567 = arith.mulf %566, %548 : vector<2x142xf32>
    %568 = arith.addf %532, %567 : vector<2x142xf32>
    %c5_275 = arith.constant 5 : index
    %c15_276 = arith.constant 15 : index
    %569 = memref.load %arg3[%c5_275, %c15_276] : memref<16x36xf32, #tpu.memory_space<smem>>
    %570 = vector.broadcast %569 : f32 to vector<2x142xf32>
    %571 = arith.mulf %570, %548 : vector<2x142xf32>
    %572 = arith.addf %536, %571 : vector<2x142xf32>
    %c6_277 = arith.constant 6 : index
    %c15_278 = arith.constant 15 : index
    %573 = memref.load %arg3[%c6_277, %c15_278] : memref<16x36xf32, #tpu.memory_space<smem>>
    %574 = vector.broadcast %573 : f32 to vector<2x142xf32>
    %575 = arith.mulf %574, %548 : vector<2x142xf32>
    %576 = arith.addf %540, %575 : vector<2x142xf32>
    %c7_279 = arith.constant 7 : index
    %c15_280 = arith.constant 15 : index
    %577 = memref.load %arg3[%c7_279, %c15_280] : memref<16x36xf32, #tpu.memory_space<smem>>
    %578 = vector.broadcast %577 : f32 to vector<2x142xf32>
    %579 = arith.mulf %578, %548 : vector<2x142xf32>
    %580 = arith.addf %544, %579 : vector<2x142xf32>
    %581 = vector.extract_strided_slice %547 {offsets = [0, 1], sizes = [2, 142], strides = [1, 1]} : vector<2x144xf32> to vector<2x142xf32>
    %c0_281 = arith.constant 0 : index
    %c16 = arith.constant 16 : index
    %582 = memref.load %arg3[%c0_281, %c16] : memref<16x36xf32, #tpu.memory_space<smem>>
    %583 = vector.broadcast %582 : f32 to vector<2x142xf32>
    %584 = arith.mulf %583, %581 : vector<2x142xf32>
    %585 = arith.addf %552, %584 : vector<2x142xf32>
    %c1_282 = arith.constant 1 : index
    %c16_283 = arith.constant 16 : index
    %586 = memref.load %arg3[%c1_282, %c16_283] : memref<16x36xf32, #tpu.memory_space<smem>>
    %587 = vector.broadcast %586 : f32 to vector<2x142xf32>
    %588 = arith.mulf %587, %581 : vector<2x142xf32>
    %589 = arith.addf %556, %588 : vector<2x142xf32>
    %c2_284 = arith.constant 2 : index
    %c16_285 = arith.constant 16 : index
    %590 = memref.load %arg3[%c2_284, %c16_285] : memref<16x36xf32, #tpu.memory_space<smem>>
    %591 = vector.broadcast %590 : f32 to vector<2x142xf32>
    %592 = arith.mulf %591, %581 : vector<2x142xf32>
    %593 = arith.addf %560, %592 : vector<2x142xf32>
    %c3_286 = arith.constant 3 : index
    %c16_287 = arith.constant 16 : index
    %594 = memref.load %arg3[%c3_286, %c16_287] : memref<16x36xf32, #tpu.memory_space<smem>>
    %595 = vector.broadcast %594 : f32 to vector<2x142xf32>
    %596 = arith.mulf %595, %581 : vector<2x142xf32>
    %597 = arith.addf %564, %596 : vector<2x142xf32>
    %c4_288 = arith.constant 4 : index
    %c16_289 = arith.constant 16 : index
    %598 = memref.load %arg3[%c4_288, %c16_289] : memref<16x36xf32, #tpu.memory_space<smem>>
    %599 = vector.broadcast %598 : f32 to vector<2x142xf32>
    %600 = arith.mulf %599, %581 : vector<2x142xf32>
    %601 = arith.addf %568, %600 : vector<2x142xf32>
    %c5_290 = arith.constant 5 : index
    %c16_291 = arith.constant 16 : index
    %602 = memref.load %arg3[%c5_290, %c16_291] : memref<16x36xf32, #tpu.memory_space<smem>>
    %603 = vector.broadcast %602 : f32 to vector<2x142xf32>
    %604 = arith.mulf %603, %581 : vector<2x142xf32>
    %605 = arith.addf %572, %604 : vector<2x142xf32>
    %c6_292 = arith.constant 6 : index
    %c16_293 = arith.constant 16 : index
    %606 = memref.load %arg3[%c6_292, %c16_293] : memref<16x36xf32, #tpu.memory_space<smem>>
    %607 = vector.broadcast %606 : f32 to vector<2x142xf32>
    %608 = arith.mulf %607, %581 : vector<2x142xf32>
    %609 = arith.addf %576, %608 : vector<2x142xf32>
    %c7_294 = arith.constant 7 : index
    %c16_295 = arith.constant 16 : index
    %610 = memref.load %arg3[%c7_294, %c16_295] : memref<16x36xf32, #tpu.memory_space<smem>>
    %611 = vector.broadcast %610 : f32 to vector<2x142xf32>
    %612 = arith.mulf %611, %581 : vector<2x142xf32>
    %613 = arith.addf %580, %612 : vector<2x142xf32>
    %614 = vector.extract_strided_slice %547 {offsets = [0, 2], sizes = [2, 142], strides = [1, 1]} : vector<2x144xf32> to vector<2x142xf32>
    %c0_296 = arith.constant 0 : index
    %c17 = arith.constant 17 : index
    %615 = memref.load %arg3[%c0_296, %c17] : memref<16x36xf32, #tpu.memory_space<smem>>
    %616 = vector.broadcast %615 : f32 to vector<2x142xf32>
    %617 = arith.mulf %616, %614 : vector<2x142xf32>
    %618 = arith.addf %585, %617 : vector<2x142xf32>
    %c1_297 = arith.constant 1 : index
    %c17_298 = arith.constant 17 : index
    %619 = memref.load %arg3[%c1_297, %c17_298] : memref<16x36xf32, #tpu.memory_space<smem>>
    %620 = vector.broadcast %619 : f32 to vector<2x142xf32>
    %621 = arith.mulf %620, %614 : vector<2x142xf32>
    %622 = arith.addf %589, %621 : vector<2x142xf32>
    %c2_299 = arith.constant 2 : index
    %c17_300 = arith.constant 17 : index
    %623 = memref.load %arg3[%c2_299, %c17_300] : memref<16x36xf32, #tpu.memory_space<smem>>
    %624 = vector.broadcast %623 : f32 to vector<2x142xf32>
    %625 = arith.mulf %624, %614 : vector<2x142xf32>
    %626 = arith.addf %593, %625 : vector<2x142xf32>
    %c3_301 = arith.constant 3 : index
    %c17_302 = arith.constant 17 : index
    %627 = memref.load %arg3[%c3_301, %c17_302] : memref<16x36xf32, #tpu.memory_space<smem>>
    %628 = vector.broadcast %627 : f32 to vector<2x142xf32>
    %629 = arith.mulf %628, %614 : vector<2x142xf32>
    %630 = arith.addf %597, %629 : vector<2x142xf32>
    %c4_303 = arith.constant 4 : index
    %c17_304 = arith.constant 17 : index
    %631 = memref.load %arg3[%c4_303, %c17_304] : memref<16x36xf32, #tpu.memory_space<smem>>
    %632 = vector.broadcast %631 : f32 to vector<2x142xf32>
    %633 = arith.mulf %632, %614 : vector<2x142xf32>
    %634 = arith.addf %601, %633 : vector<2x142xf32>
    %c5_305 = arith.constant 5 : index
    %c17_306 = arith.constant 17 : index
    %635 = memref.load %arg3[%c5_305, %c17_306] : memref<16x36xf32, #tpu.memory_space<smem>>
    %636 = vector.broadcast %635 : f32 to vector<2x142xf32>
    %637 = arith.mulf %636, %614 : vector<2x142xf32>
    %638 = arith.addf %605, %637 : vector<2x142xf32>
    %c6_307 = arith.constant 6 : index
    %c17_308 = arith.constant 17 : index
    %639 = memref.load %arg3[%c6_307, %c17_308] : memref<16x36xf32, #tpu.memory_space<smem>>
    %640 = vector.broadcast %639 : f32 to vector<2x142xf32>
    %641 = arith.mulf %640, %614 : vector<2x142xf32>
    %642 = arith.addf %609, %641 : vector<2x142xf32>
    %c7_309 = arith.constant 7 : index
    %c17_310 = arith.constant 17 : index
    %643 = memref.load %arg3[%c7_309, %c17_310] : memref<16x36xf32, #tpu.memory_space<smem>>
    %644 = vector.broadcast %643 : f32 to vector<2x142xf32>
    %645 = arith.mulf %644, %614 : vector<2x142xf32>
    %646 = arith.addf %613, %645 : vector<2x142xf32>
    %c0_311 = arith.constant 0 : index
    %c0_312 = arith.constant 0 : index
    %c2_313 = arith.constant 2 : index
    %c0_314 = arith.constant 0 : index
    %c0_315 = arith.constant 0 : index
    %647 = vector.load %arg2[%c0_311, %c0_312, %c2_313, %c0_314, %c0_315] : memref<1x1x4x4x144xbf16, #tpu.memory_space<vmem>>, vector<1x1x1x2x144xbf16>
    %648 = vector.shape_cast %647 : vector<1x1x1x2x144xbf16> to vector<2x144xbf16>
    %649 = arith.extf %648 : vector<2x144xbf16> to vector<2x144xf32>
    %650 = vector.extract_strided_slice %649 {offsets = [0, 0], sizes = [2, 142], strides = [1, 1]} : vector<2x144xf32> to vector<2x142xf32>
    %c0_316 = arith.constant 0 : index
    %c18 = arith.constant 18 : index
    %651 = memref.load %arg3[%c0_316, %c18] : memref<16x36xf32, #tpu.memory_space<smem>>
    %652 = vector.broadcast %651 : f32 to vector<2x142xf32>
    %653 = arith.mulf %652, %650 : vector<2x142xf32>
    %654 = arith.addf %618, %653 : vector<2x142xf32>
    %c1_317 = arith.constant 1 : index
    %c18_318 = arith.constant 18 : index
    %655 = memref.load %arg3[%c1_317, %c18_318] : memref<16x36xf32, #tpu.memory_space<smem>>
    %656 = vector.broadcast %655 : f32 to vector<2x142xf32>
    %657 = arith.mulf %656, %650 : vector<2x142xf32>
    %658 = arith.addf %622, %657 : vector<2x142xf32>
    %c2_319 = arith.constant 2 : index
    %c18_320 = arith.constant 18 : index
    %659 = memref.load %arg3[%c2_319, %c18_320] : memref<16x36xf32, #tpu.memory_space<smem>>
    %660 = vector.broadcast %659 : f32 to vector<2x142xf32>
    %661 = arith.mulf %660, %650 : vector<2x142xf32>
    %662 = arith.addf %626, %661 : vector<2x142xf32>
    %c3_321 = arith.constant 3 : index
    %c18_322 = arith.constant 18 : index
    %663 = memref.load %arg3[%c3_321, %c18_322] : memref<16x36xf32, #tpu.memory_space<smem>>
    %664 = vector.broadcast %663 : f32 to vector<2x142xf32>
    %665 = arith.mulf %664, %650 : vector<2x142xf32>
    %666 = arith.addf %630, %665 : vector<2x142xf32>
    %c4_323 = arith.constant 4 : index
    %c18_324 = arith.constant 18 : index
    %667 = memref.load %arg3[%c4_323, %c18_324] : memref<16x36xf32, #tpu.memory_space<smem>>
    %668 = vector.broadcast %667 : f32 to vector<2x142xf32>
    %669 = arith.mulf %668, %650 : vector<2x142xf32>
    %670 = arith.addf %634, %669 : vector<2x142xf32>
    %c5_325 = arith.constant 5 : index
    %c18_326 = arith.constant 18 : index
    %671 = memref.load %arg3[%c5_325, %c18_326] : memref<16x36xf32, #tpu.memory_space<smem>>
    %672 = vector.broadcast %671 : f32 to vector<2x142xf32>
    %673 = arith.mulf %672, %650 : vector<2x142xf32>
    %674 = arith.addf %638, %673 : vector<2x142xf32>
    %c6_327 = arith.constant 6 : index
    %c18_328 = arith.constant 18 : index
    %675 = memref.load %arg3[%c6_327, %c18_328] : memref<16x36xf32, #tpu.memory_space<smem>>
    %676 = vector.broadcast %675 : f32 to vector<2x142xf32>
    %677 = arith.mulf %676, %650 : vector<2x142xf32>
    %678 = arith.addf %642, %677 : vector<2x142xf32>
    %c7_329 = arith.constant 7 : index
    %c18_330 = arith.constant 18 : index
    %679 = memref.load %arg3[%c7_329, %c18_330] : memref<16x36xf32, #tpu.memory_space<smem>>
    %680 = vector.broadcast %679 : f32 to vector<2x142xf32>
    %681 = arith.mulf %680, %650 : vector<2x142xf32>
    %682 = arith.addf %646, %681 : vector<2x142xf32>
    %683 = vector.extract_strided_slice %649 {offsets = [0, 1], sizes = [2, 142], strides = [1, 1]} : vector<2x144xf32> to vector<2x142xf32>
    %c0_331 = arith.constant 0 : index
    %c19 = arith.constant 19 : index
    %684 = memref.load %arg3[%c0_331, %c19] : memref<16x36xf32, #tpu.memory_space<smem>>
    %685 = vector.broadcast %684 : f32 to vector<2x142xf32>
    %686 = arith.mulf %685, %683 : vector<2x142xf32>
    %687 = arith.addf %654, %686 : vector<2x142xf32>
    %c1_332 = arith.constant 1 : index
    %c19_333 = arith.constant 19 : index
    %688 = memref.load %arg3[%c1_332, %c19_333] : memref<16x36xf32, #tpu.memory_space<smem>>
    %689 = vector.broadcast %688 : f32 to vector<2x142xf32>
    %690 = arith.mulf %689, %683 : vector<2x142xf32>
    %691 = arith.addf %658, %690 : vector<2x142xf32>
    %c2_334 = arith.constant 2 : index
    %c19_335 = arith.constant 19 : index
    %692 = memref.load %arg3[%c2_334, %c19_335] : memref<16x36xf32, #tpu.memory_space<smem>>
    %693 = vector.broadcast %692 : f32 to vector<2x142xf32>
    %694 = arith.mulf %693, %683 : vector<2x142xf32>
    %695 = arith.addf %662, %694 : vector<2x142xf32>
    %c3_336 = arith.constant 3 : index
    %c19_337 = arith.constant 19 : index
    %696 = memref.load %arg3[%c3_336, %c19_337] : memref<16x36xf32, #tpu.memory_space<smem>>
    %697 = vector.broadcast %696 : f32 to vector<2x142xf32>
    %698 = arith.mulf %697, %683 : vector<2x142xf32>
    %699 = arith.addf %666, %698 : vector<2x142xf32>
    %c4_338 = arith.constant 4 : index
    %c19_339 = arith.constant 19 : index
    %700 = memref.load %arg3[%c4_338, %c19_339] : memref<16x36xf32, #tpu.memory_space<smem>>
    %701 = vector.broadcast %700 : f32 to vector<2x142xf32>
    %702 = arith.mulf %701, %683 : vector<2x142xf32>
    %703 = arith.addf %670, %702 : vector<2x142xf32>
    %c5_340 = arith.constant 5 : index
    %c19_341 = arith.constant 19 : index
    %704 = memref.load %arg3[%c5_340, %c19_341] : memref<16x36xf32, #tpu.memory_space<smem>>
    %705 = vector.broadcast %704 : f32 to vector<2x142xf32>
    %706 = arith.mulf %705, %683 : vector<2x142xf32>
    %707 = arith.addf %674, %706 : vector<2x142xf32>
    %c6_342 = arith.constant 6 : index
    %c19_343 = arith.constant 19 : index
    %708 = memref.load %arg3[%c6_342, %c19_343] : memref<16x36xf32, #tpu.memory_space<smem>>
    %709 = vector.broadcast %708 : f32 to vector<2x142xf32>
    %710 = arith.mulf %709, %683 : vector<2x142xf32>
    %711 = arith.addf %678, %710 : vector<2x142xf32>
    %c7_344 = arith.constant 7 : index
    %c19_345 = arith.constant 19 : index
    %712 = memref.load %arg3[%c7_344, %c19_345] : memref<16x36xf32, #tpu.memory_space<smem>>
    %713 = vector.broadcast %712 : f32 to vector<2x142xf32>
    %714 = arith.mulf %713, %683 : vector<2x142xf32>
    %715 = arith.addf %682, %714 : vector<2x142xf32>
    %716 = vector.extract_strided_slice %649 {offsets = [0, 2], sizes = [2, 142], strides = [1, 1]} : vector<2x144xf32> to vector<2x142xf32>
    %c0_346 = arith.constant 0 : index
    %c20 = arith.constant 20 : index
    %717 = memref.load %arg3[%c0_346, %c20] : memref<16x36xf32, #tpu.memory_space<smem>>
    %718 = vector.broadcast %717 : f32 to vector<2x142xf32>
    %719 = arith.mulf %718, %716 : vector<2x142xf32>
    %720 = arith.addf %687, %719 : vector<2x142xf32>
    %c1_347 = arith.constant 1 : index
    %c20_348 = arith.constant 20 : index
    %721 = memref.load %arg3[%c1_347, %c20_348] : memref<16x36xf32, #tpu.memory_space<smem>>
    %722 = vector.broadcast %721 : f32 to vector<2x142xf32>
    %723 = arith.mulf %722, %716 : vector<2x142xf32>
    %724 = arith.addf %691, %723 : vector<2x142xf32>
    %c2_349 = arith.constant 2 : index
    %c20_350 = arith.constant 20 : index
    %725 = memref.load %arg3[%c2_349, %c20_350] : memref<16x36xf32, #tpu.memory_space<smem>>
    %726 = vector.broadcast %725 : f32 to vector<2x142xf32>
    %727 = arith.mulf %726, %716 : vector<2x142xf32>
    %728 = arith.addf %695, %727 : vector<2x142xf32>
    %c3_351 = arith.constant 3 : index
    %c20_352 = arith.constant 20 : index
    %729 = memref.load %arg3[%c3_351, %c20_352] : memref<16x36xf32, #tpu.memory_space<smem>>
    %730 = vector.broadcast %729 : f32 to vector<2x142xf32>
    %731 = arith.mulf %730, %716 : vector<2x142xf32>
    %732 = arith.addf %699, %731 : vector<2x142xf32>
    %c4_353 = arith.constant 4 : index
    %c20_354 = arith.constant 20 : index
    %733 = memref.load %arg3[%c4_353, %c20_354] : memref<16x36xf32, #tpu.memory_space<smem>>
    %734 = vector.broadcast %733 : f32 to vector<2x142xf32>
    %735 = arith.mulf %734, %716 : vector<2x142xf32>
    %736 = arith.addf %703, %735 : vector<2x142xf32>
    %c5_355 = arith.constant 5 : index
    %c20_356 = arith.constant 20 : index
    %737 = memref.load %arg3[%c5_355, %c20_356] : memref<16x36xf32, #tpu.memory_space<smem>>
    %738 = vector.broadcast %737 : f32 to vector<2x142xf32>
    %739 = arith.mulf %738, %716 : vector<2x142xf32>
    %740 = arith.addf %707, %739 : vector<2x142xf32>
    %c6_357 = arith.constant 6 : index
    %c20_358 = arith.constant 20 : index
    %741 = memref.load %arg3[%c6_357, %c20_358] : memref<16x36xf32, #tpu.memory_space<smem>>
    %742 = vector.broadcast %741 : f32 to vector<2x142xf32>
    %743 = arith.mulf %742, %716 : vector<2x142xf32>
    %744 = arith.addf %711, %743 : vector<2x142xf32>
    %c7_359 = arith.constant 7 : index
    %c20_360 = arith.constant 20 : index
    %745 = memref.load %arg3[%c7_359, %c20_360] : memref<16x36xf32, #tpu.memory_space<smem>>
    %746 = vector.broadcast %745 : f32 to vector<2x142xf32>
    %747 = arith.mulf %746, %716 : vector<2x142xf32>
    %748 = arith.addf %715, %747 : vector<2x142xf32>
    %c0_361 = arith.constant 0 : index
    %c0_362 = arith.constant 0 : index
    %c2_363 = arith.constant 2 : index
    %c1_364 = arith.constant 1 : index
    %c0_365 = arith.constant 0 : index
    %749 = vector.load %arg2[%c0_361, %c0_362, %c2_363, %c1_364, %c0_365] : memref<1x1x4x4x144xbf16, #tpu.memory_space<vmem>>, vector<1x1x1x2x144xbf16>
    %750 = vector.shape_cast %749 : vector<1x1x1x2x144xbf16> to vector<2x144xbf16>
    %751 = arith.extf %750 : vector<2x144xbf16> to vector<2x144xf32>
    %752 = vector.extract_strided_slice %751 {offsets = [0, 0], sizes = [2, 142], strides = [1, 1]} : vector<2x144xf32> to vector<2x142xf32>
    %c0_366 = arith.constant 0 : index
    %c21 = arith.constant 21 : index
    %753 = memref.load %arg3[%c0_366, %c21] : memref<16x36xf32, #tpu.memory_space<smem>>
    %754 = vector.broadcast %753 : f32 to vector<2x142xf32>
    %755 = arith.mulf %754, %752 : vector<2x142xf32>
    %756 = arith.addf %720, %755 : vector<2x142xf32>
    %c1_367 = arith.constant 1 : index
    %c21_368 = arith.constant 21 : index
    %757 = memref.load %arg3[%c1_367, %c21_368] : memref<16x36xf32, #tpu.memory_space<smem>>
    %758 = vector.broadcast %757 : f32 to vector<2x142xf32>
    %759 = arith.mulf %758, %752 : vector<2x142xf32>
    %760 = arith.addf %724, %759 : vector<2x142xf32>
    %c2_369 = arith.constant 2 : index
    %c21_370 = arith.constant 21 : index
    %761 = memref.load %arg3[%c2_369, %c21_370] : memref<16x36xf32, #tpu.memory_space<smem>>
    %762 = vector.broadcast %761 : f32 to vector<2x142xf32>
    %763 = arith.mulf %762, %752 : vector<2x142xf32>
    %764 = arith.addf %728, %763 : vector<2x142xf32>
    %c3_371 = arith.constant 3 : index
    %c21_372 = arith.constant 21 : index
    %765 = memref.load %arg3[%c3_371, %c21_372] : memref<16x36xf32, #tpu.memory_space<smem>>
    %766 = vector.broadcast %765 : f32 to vector<2x142xf32>
    %767 = arith.mulf %766, %752 : vector<2x142xf32>
    %768 = arith.addf %732, %767 : vector<2x142xf32>
    %c4_373 = arith.constant 4 : index
    %c21_374 = arith.constant 21 : index
    %769 = memref.load %arg3[%c4_373, %c21_374] : memref<16x36xf32, #tpu.memory_space<smem>>
    %770 = vector.broadcast %769 : f32 to vector<2x142xf32>
    %771 = arith.mulf %770, %752 : vector<2x142xf32>
    %772 = arith.addf %736, %771 : vector<2x142xf32>
    %c5_375 = arith.constant 5 : index
    %c21_376 = arith.constant 21 : index
    %773 = memref.load %arg3[%c5_375, %c21_376] : memref<16x36xf32, #tpu.memory_space<smem>>
    %774 = vector.broadcast %773 : f32 to vector<2x142xf32>
    %775 = arith.mulf %774, %752 : vector<2x142xf32>
    %776 = arith.addf %740, %775 : vector<2x142xf32>
    %c6_377 = arith.constant 6 : index
    %c21_378 = arith.constant 21 : index
    %777 = memref.load %arg3[%c6_377, %c21_378] : memref<16x36xf32, #tpu.memory_space<smem>>
    %778 = vector.broadcast %777 : f32 to vector<2x142xf32>
    %779 = arith.mulf %778, %752 : vector<2x142xf32>
    %780 = arith.addf %744, %779 : vector<2x142xf32>
    %c7_379 = arith.constant 7 : index
    %c21_380 = arith.constant 21 : index
    %781 = memref.load %arg3[%c7_379, %c21_380] : memref<16x36xf32, #tpu.memory_space<smem>>
    %782 = vector.broadcast %781 : f32 to vector<2x142xf32>
    %783 = arith.mulf %782, %752 : vector<2x142xf32>
    %784 = arith.addf %748, %783 : vector<2x142xf32>
    %785 = vector.extract_strided_slice %751 {offsets = [0, 1], sizes = [2, 142], strides = [1, 1]} : vector<2x144xf32> to vector<2x142xf32>
    %c0_381 = arith.constant 0 : index
    %c22 = arith.constant 22 : index
    %786 = memref.load %arg3[%c0_381, %c22] : memref<16x36xf32, #tpu.memory_space<smem>>
    %787 = vector.broadcast %786 : f32 to vector<2x142xf32>
    %788 = arith.mulf %787, %785 : vector<2x142xf32>
    %789 = arith.addf %756, %788 : vector<2x142xf32>
    %c1_382 = arith.constant 1 : index
    %c22_383 = arith.constant 22 : index
    %790 = memref.load %arg3[%c1_382, %c22_383] : memref<16x36xf32, #tpu.memory_space<smem>>
    %791 = vector.broadcast %790 : f32 to vector<2x142xf32>
    %792 = arith.mulf %791, %785 : vector<2x142xf32>
    %793 = arith.addf %760, %792 : vector<2x142xf32>
    %c2_384 = arith.constant 2 : index
    %c22_385 = arith.constant 22 : index
    %794 = memref.load %arg3[%c2_384, %c22_385] : memref<16x36xf32, #tpu.memory_space<smem>>
    %795 = vector.broadcast %794 : f32 to vector<2x142xf32>
    %796 = arith.mulf %795, %785 : vector<2x142xf32>
    %797 = arith.addf %764, %796 : vector<2x142xf32>
    %c3_386 = arith.constant 3 : index
    %c22_387 = arith.constant 22 : index
    %798 = memref.load %arg3[%c3_386, %c22_387] : memref<16x36xf32, #tpu.memory_space<smem>>
    %799 = vector.broadcast %798 : f32 to vector<2x142xf32>
    %800 = arith.mulf %799, %785 : vector<2x142xf32>
    %801 = arith.addf %768, %800 : vector<2x142xf32>
    %c4_388 = arith.constant 4 : index
    %c22_389 = arith.constant 22 : index
    %802 = memref.load %arg3[%c4_388, %c22_389] : memref<16x36xf32, #tpu.memory_space<smem>>
    %803 = vector.broadcast %802 : f32 to vector<2x142xf32>
    %804 = arith.mulf %803, %785 : vector<2x142xf32>
    %805 = arith.addf %772, %804 : vector<2x142xf32>
    %c5_390 = arith.constant 5 : index
    %c22_391 = arith.constant 22 : index
    %806 = memref.load %arg3[%c5_390, %c22_391] : memref<16x36xf32, #tpu.memory_space<smem>>
    %807 = vector.broadcast %806 : f32 to vector<2x142xf32>
    %808 = arith.mulf %807, %785 : vector<2x142xf32>
    %809 = arith.addf %776, %808 : vector<2x142xf32>
    %c6_392 = arith.constant 6 : index
    %c22_393 = arith.constant 22 : index
    %810 = memref.load %arg3[%c6_392, %c22_393] : memref<16x36xf32, #tpu.memory_space<smem>>
    %811 = vector.broadcast %810 : f32 to vector<2x142xf32>
    %812 = arith.mulf %811, %785 : vector<2x142xf32>
    %813 = arith.addf %780, %812 : vector<2x142xf32>
    %c7_394 = arith.constant 7 : index
    %c22_395 = arith.constant 22 : index
    %814 = memref.load %arg3[%c7_394, %c22_395] : memref<16x36xf32, #tpu.memory_space<smem>>
    %815 = vector.broadcast %814 : f32 to vector<2x142xf32>
    %816 = arith.mulf %815, %785 : vector<2x142xf32>
    %817 = arith.addf %784, %816 : vector<2x142xf32>
    %818 = vector.extract_strided_slice %751 {offsets = [0, 2], sizes = [2, 142], strides = [1, 1]} : vector<2x144xf32> to vector<2x142xf32>
    %c0_396 = arith.constant 0 : index
    %c23 = arith.constant 23 : index
    %819 = memref.load %arg3[%c0_396, %c23] : memref<16x36xf32, #tpu.memory_space<smem>>
    %820 = vector.broadcast %819 : f32 to vector<2x142xf32>
    %821 = arith.mulf %820, %818 : vector<2x142xf32>
    %822 = arith.addf %789, %821 : vector<2x142xf32>
    %c1_397 = arith.constant 1 : index
    %c23_398 = arith.constant 23 : index
    %823 = memref.load %arg3[%c1_397, %c23_398] : memref<16x36xf32, #tpu.memory_space<smem>>
    %824 = vector.broadcast %823 : f32 to vector<2x142xf32>
    %825 = arith.mulf %824, %818 : vector<2x142xf32>
    %826 = arith.addf %793, %825 : vector<2x142xf32>
    %c2_399 = arith.constant 2 : index
    %c23_400 = arith.constant 23 : index
    %827 = memref.load %arg3[%c2_399, %c23_400] : memref<16x36xf32, #tpu.memory_space<smem>>
    %828 = vector.broadcast %827 : f32 to vector<2x142xf32>
    %829 = arith.mulf %828, %818 : vector<2x142xf32>
    %830 = arith.addf %797, %829 : vector<2x142xf32>
    %c3_401 = arith.constant 3 : index
    %c23_402 = arith.constant 23 : index
    %831 = memref.load %arg3[%c3_401, %c23_402] : memref<16x36xf32, #tpu.memory_space<smem>>
    %832 = vector.broadcast %831 : f32 to vector<2x142xf32>
    %833 = arith.mulf %832, %818 : vector<2x142xf32>
    %834 = arith.addf %801, %833 : vector<2x142xf32>
    %c4_403 = arith.constant 4 : index
    %c23_404 = arith.constant 23 : index
    %835 = memref.load %arg3[%c4_403, %c23_404] : memref<16x36xf32, #tpu.memory_space<smem>>
    %836 = vector.broadcast %835 : f32 to vector<2x142xf32>
    %837 = arith.mulf %836, %818 : vector<2x142xf32>
    %838 = arith.addf %805, %837 : vector<2x142xf32>
    %c5_405 = arith.constant 5 : index
    %c23_406 = arith.constant 23 : index
    %839 = memref.load %arg3[%c5_405, %c23_406] : memref<16x36xf32, #tpu.memory_space<smem>>
    %840 = vector.broadcast %839 : f32 to vector<2x142xf32>
    %841 = arith.mulf %840, %818 : vector<2x142xf32>
    %842 = arith.addf %809, %841 : vector<2x142xf32>
    %c6_407 = arith.constant 6 : index
    %c23_408 = arith.constant 23 : index
    %843 = memref.load %arg3[%c6_407, %c23_408] : memref<16x36xf32, #tpu.memory_space<smem>>
    %844 = vector.broadcast %843 : f32 to vector<2x142xf32>
    %845 = arith.mulf %844, %818 : vector<2x142xf32>
    %846 = arith.addf %813, %845 : vector<2x142xf32>
    %c7_409 = arith.constant 7 : index
    %c23_410 = arith.constant 23 : index
    %847 = memref.load %arg3[%c7_409, %c23_410] : memref<16x36xf32, #tpu.memory_space<smem>>
    %848 = vector.broadcast %847 : f32 to vector<2x142xf32>
    %849 = arith.mulf %848, %818 : vector<2x142xf32>
    %850 = arith.addf %817, %849 : vector<2x142xf32>
    %c0_411 = arith.constant 0 : index
    %c0_412 = arith.constant 0 : index
    %c2_413 = arith.constant 2 : index
    %c2_414 = arith.constant 2 : index
    %c0_415 = arith.constant 0 : index
    %851 = vector.load %arg2[%c0_411, %c0_412, %c2_413, %c2_414, %c0_415] : memref<1x1x4x4x144xbf16, #tpu.memory_space<vmem>>, vector<1x1x1x2x144xbf16>
    %852 = vector.shape_cast %851 : vector<1x1x1x2x144xbf16> to vector<2x144xbf16>
    %853 = arith.extf %852 : vector<2x144xbf16> to vector<2x144xf32>
    %854 = vector.extract_strided_slice %853 {offsets = [0, 0], sizes = [2, 142], strides = [1, 1]} : vector<2x144xf32> to vector<2x142xf32>
    %c0_416 = arith.constant 0 : index
    %c24 = arith.constant 24 : index
    %855 = memref.load %arg3[%c0_416, %c24] : memref<16x36xf32, #tpu.memory_space<smem>>
    %856 = vector.broadcast %855 : f32 to vector<2x142xf32>
    %857 = arith.mulf %856, %854 : vector<2x142xf32>
    %858 = arith.addf %822, %857 : vector<2x142xf32>
    %c1_417 = arith.constant 1 : index
    %c24_418 = arith.constant 24 : index
    %859 = memref.load %arg3[%c1_417, %c24_418] : memref<16x36xf32, #tpu.memory_space<smem>>
    %860 = vector.broadcast %859 : f32 to vector<2x142xf32>
    %861 = arith.mulf %860, %854 : vector<2x142xf32>
    %862 = arith.addf %826, %861 : vector<2x142xf32>
    %c2_419 = arith.constant 2 : index
    %c24_420 = arith.constant 24 : index
    %863 = memref.load %arg3[%c2_419, %c24_420] : memref<16x36xf32, #tpu.memory_space<smem>>
    %864 = vector.broadcast %863 : f32 to vector<2x142xf32>
    %865 = arith.mulf %864, %854 : vector<2x142xf32>
    %866 = arith.addf %830, %865 : vector<2x142xf32>
    %c3_421 = arith.constant 3 : index
    %c24_422 = arith.constant 24 : index
    %867 = memref.load %arg3[%c3_421, %c24_422] : memref<16x36xf32, #tpu.memory_space<smem>>
    %868 = vector.broadcast %867 : f32 to vector<2x142xf32>
    %869 = arith.mulf %868, %854 : vector<2x142xf32>
    %870 = arith.addf %834, %869 : vector<2x142xf32>
    %c4_423 = arith.constant 4 : index
    %c24_424 = arith.constant 24 : index
    %871 = memref.load %arg3[%c4_423, %c24_424] : memref<16x36xf32, #tpu.memory_space<smem>>
    %872 = vector.broadcast %871 : f32 to vector<2x142xf32>
    %873 = arith.mulf %872, %854 : vector<2x142xf32>
    %874 = arith.addf %838, %873 : vector<2x142xf32>
    %c5_425 = arith.constant 5 : index
    %c24_426 = arith.constant 24 : index
    %875 = memref.load %arg3[%c5_425, %c24_426] : memref<16x36xf32, #tpu.memory_space<smem>>
    %876 = vector.broadcast %875 : f32 to vector<2x142xf32>
    %877 = arith.mulf %876, %854 : vector<2x142xf32>
    %878 = arith.addf %842, %877 : vector<2x142xf32>
    %c6_427 = arith.constant 6 : index
    %c24_428 = arith.constant 24 : index
    %879 = memref.load %arg3[%c6_427, %c24_428] : memref<16x36xf32, #tpu.memory_space<smem>>
    %880 = vector.broadcast %879 : f32 to vector<2x142xf32>
    %881 = arith.mulf %880, %854 : vector<2x142xf32>
    %882 = arith.addf %846, %881 : vector<2x142xf32>
    %c7_429 = arith.constant 7 : index
    %c24_430 = arith.constant 24 : index
    %883 = memref.load %arg3[%c7_429, %c24_430] : memref<16x36xf32, #tpu.memory_space<smem>>
    %884 = vector.broadcast %883 : f32 to vector<2x142xf32>
    %885 = arith.mulf %884, %854 : vector<2x142xf32>
    %886 = arith.addf %850, %885 : vector<2x142xf32>
    %887 = vector.extract_strided_slice %853 {offsets = [0, 1], sizes = [2, 142], strides = [1, 1]} : vector<2x144xf32> to vector<2x142xf32>
    %c0_431 = arith.constant 0 : index
    %c25 = arith.constant 25 : index
    %888 = memref.load %arg3[%c0_431, %c25] : memref<16x36xf32, #tpu.memory_space<smem>>
    %889 = vector.broadcast %888 : f32 to vector<2x142xf32>
    %890 = arith.mulf %889, %887 : vector<2x142xf32>
    %891 = arith.addf %858, %890 : vector<2x142xf32>
    %c1_432 = arith.constant 1 : index
    %c25_433 = arith.constant 25 : index
    %892 = memref.load %arg3[%c1_432, %c25_433] : memref<16x36xf32, #tpu.memory_space<smem>>
    %893 = vector.broadcast %892 : f32 to vector<2x142xf32>
    %894 = arith.mulf %893, %887 : vector<2x142xf32>
    %895 = arith.addf %862, %894 : vector<2x142xf32>
    %c2_434 = arith.constant 2 : index
    %c25_435 = arith.constant 25 : index
    %896 = memref.load %arg3[%c2_434, %c25_435] : memref<16x36xf32, #tpu.memory_space<smem>>
    %897 = vector.broadcast %896 : f32 to vector<2x142xf32>
    %898 = arith.mulf %897, %887 : vector<2x142xf32>
    %899 = arith.addf %866, %898 : vector<2x142xf32>
    %c3_436 = arith.constant 3 : index
    %c25_437 = arith.constant 25 : index
    %900 = memref.load %arg3[%c3_436, %c25_437] : memref<16x36xf32, #tpu.memory_space<smem>>
    %901 = vector.broadcast %900 : f32 to vector<2x142xf32>
    %902 = arith.mulf %901, %887 : vector<2x142xf32>
    %903 = arith.addf %870, %902 : vector<2x142xf32>
    %c4_438 = arith.constant 4 : index
    %c25_439 = arith.constant 25 : index
    %904 = memref.load %arg3[%c4_438, %c25_439] : memref<16x36xf32, #tpu.memory_space<smem>>
    %905 = vector.broadcast %904 : f32 to vector<2x142xf32>
    %906 = arith.mulf %905, %887 : vector<2x142xf32>
    %907 = arith.addf %874, %906 : vector<2x142xf32>
    %c5_440 = arith.constant 5 : index
    %c25_441 = arith.constant 25 : index
    %908 = memref.load %arg3[%c5_440, %c25_441] : memref<16x36xf32, #tpu.memory_space<smem>>
    %909 = vector.broadcast %908 : f32 to vector<2x142xf32>
    %910 = arith.mulf %909, %887 : vector<2x142xf32>
    %911 = arith.addf %878, %910 : vector<2x142xf32>
    %c6_442 = arith.constant 6 : index
    %c25_443 = arith.constant 25 : index
    %912 = memref.load %arg3[%c6_442, %c25_443] : memref<16x36xf32, #tpu.memory_space<smem>>
    %913 = vector.broadcast %912 : f32 to vector<2x142xf32>
    %914 = arith.mulf %913, %887 : vector<2x142xf32>
    %915 = arith.addf %882, %914 : vector<2x142xf32>
    %c7_444 = arith.constant 7 : index
    %c25_445 = arith.constant 25 : index
    %916 = memref.load %arg3[%c7_444, %c25_445] : memref<16x36xf32, #tpu.memory_space<smem>>
    %917 = vector.broadcast %916 : f32 to vector<2x142xf32>
    %918 = arith.mulf %917, %887 : vector<2x142xf32>
    %919 = arith.addf %886, %918 : vector<2x142xf32>
    %920 = vector.extract_strided_slice %853 {offsets = [0, 2], sizes = [2, 142], strides = [1, 1]} : vector<2x144xf32> to vector<2x142xf32>
    %c0_446 = arith.constant 0 : index
    %c26 = arith.constant 26 : index
    %921 = memref.load %arg3[%c0_446, %c26] : memref<16x36xf32, #tpu.memory_space<smem>>
    %922 = vector.broadcast %921 : f32 to vector<2x142xf32>
    %923 = arith.mulf %922, %920 : vector<2x142xf32>
    %924 = arith.addf %891, %923 : vector<2x142xf32>
    %c1_447 = arith.constant 1 : index
    %c26_448 = arith.constant 26 : index
    %925 = memref.load %arg3[%c1_447, %c26_448] : memref<16x36xf32, #tpu.memory_space<smem>>
    %926 = vector.broadcast %925 : f32 to vector<2x142xf32>
    %927 = arith.mulf %926, %920 : vector<2x142xf32>
    %928 = arith.addf %895, %927 : vector<2x142xf32>
    %c2_449 = arith.constant 2 : index
    %c26_450 = arith.constant 26 : index
    %929 = memref.load %arg3[%c2_449, %c26_450] : memref<16x36xf32, #tpu.memory_space<smem>>
    %930 = vector.broadcast %929 : f32 to vector<2x142xf32>
    %931 = arith.mulf %930, %920 : vector<2x142xf32>
    %932 = arith.addf %899, %931 : vector<2x142xf32>
    %c3_451 = arith.constant 3 : index
    %c26_452 = arith.constant 26 : index
    %933 = memref.load %arg3[%c3_451, %c26_452] : memref<16x36xf32, #tpu.memory_space<smem>>
    %934 = vector.broadcast %933 : f32 to vector<2x142xf32>
    %935 = arith.mulf %934, %920 : vector<2x142xf32>
    %936 = arith.addf %903, %935 : vector<2x142xf32>
    %c4_453 = arith.constant 4 : index
    %c26_454 = arith.constant 26 : index
    %937 = memref.load %arg3[%c4_453, %c26_454] : memref<16x36xf32, #tpu.memory_space<smem>>
    %938 = vector.broadcast %937 : f32 to vector<2x142xf32>
    %939 = arith.mulf %938, %920 : vector<2x142xf32>
    %940 = arith.addf %907, %939 : vector<2x142xf32>
    %c5_455 = arith.constant 5 : index
    %c26_456 = arith.constant 26 : index
    %941 = memref.load %arg3[%c5_455, %c26_456] : memref<16x36xf32, #tpu.memory_space<smem>>
    %942 = vector.broadcast %941 : f32 to vector<2x142xf32>
    %943 = arith.mulf %942, %920 : vector<2x142xf32>
    %944 = arith.addf %911, %943 : vector<2x142xf32>
    %c6_457 = arith.constant 6 : index
    %c26_458 = arith.constant 26 : index
    %945 = memref.load %arg3[%c6_457, %c26_458] : memref<16x36xf32, #tpu.memory_space<smem>>
    %946 = vector.broadcast %945 : f32 to vector<2x142xf32>
    %947 = arith.mulf %946, %920 : vector<2x142xf32>
    %948 = arith.addf %915, %947 : vector<2x142xf32>
    %c7_459 = arith.constant 7 : index
    %c26_460 = arith.constant 26 : index
    %949 = memref.load %arg3[%c7_459, %c26_460] : memref<16x36xf32, #tpu.memory_space<smem>>
    %950 = vector.broadcast %949 : f32 to vector<2x142xf32>
    %951 = arith.mulf %950, %920 : vector<2x142xf32>
    %952 = arith.addf %919, %951 : vector<2x142xf32>
    %c0_461 = arith.constant 0 : index
    %c0_462 = arith.constant 0 : index
    %c3_463 = arith.constant 3 : index
    %c0_464 = arith.constant 0 : index
    %c0_465 = arith.constant 0 : index
    %953 = vector.load %arg2[%c0_461, %c0_462, %c3_463, %c0_464, %c0_465] : memref<1x1x4x4x144xbf16, #tpu.memory_space<vmem>>, vector<1x1x1x2x144xbf16>
    %954 = vector.shape_cast %953 : vector<1x1x1x2x144xbf16> to vector<2x144xbf16>
    %955 = arith.extf %954 : vector<2x144xbf16> to vector<2x144xf32>
    %956 = vector.extract_strided_slice %955 {offsets = [0, 0], sizes = [2, 142], strides = [1, 1]} : vector<2x144xf32> to vector<2x142xf32>
    %c0_466 = arith.constant 0 : index
    %c27 = arith.constant 27 : index
    %957 = memref.load %arg3[%c0_466, %c27] : memref<16x36xf32, #tpu.memory_space<smem>>
    %958 = vector.broadcast %957 : f32 to vector<2x142xf32>
    %959 = arith.mulf %958, %956 : vector<2x142xf32>
    %960 = arith.addf %924, %959 : vector<2x142xf32>
    %c1_467 = arith.constant 1 : index
    %c27_468 = arith.constant 27 : index
    %961 = memref.load %arg3[%c1_467, %c27_468] : memref<16x36xf32, #tpu.memory_space<smem>>
    %962 = vector.broadcast %961 : f32 to vector<2x142xf32>
    %963 = arith.mulf %962, %956 : vector<2x142xf32>
    %964 = arith.addf %928, %963 : vector<2x142xf32>
    %c2_469 = arith.constant 2 : index
    %c27_470 = arith.constant 27 : index
    %965 = memref.load %arg3[%c2_469, %c27_470] : memref<16x36xf32, #tpu.memory_space<smem>>
    %966 = vector.broadcast %965 : f32 to vector<2x142xf32>
    %967 = arith.mulf %966, %956 : vector<2x142xf32>
    %968 = arith.addf %932, %967 : vector<2x142xf32>
    %c3_471 = arith.constant 3 : index
    %c27_472 = arith.constant 27 : index
    %969 = memref.load %arg3[%c3_471, %c27_472] : memref<16x36xf32, #tpu.memory_space<smem>>
    %970 = vector.broadcast %969 : f32 to vector<2x142xf32>
    %971 = arith.mulf %970, %956 : vector<2x142xf32>
    %972 = arith.addf %936, %971 : vector<2x142xf32>
    %c4_473 = arith.constant 4 : index
    %c27_474 = arith.constant 27 : index
    %973 = memref.load %arg3[%c4_473, %c27_474] : memref<16x36xf32, #tpu.memory_space<smem>>
    %974 = vector.broadcast %973 : f32 to vector<2x142xf32>
    %975 = arith.mulf %974, %956 : vector<2x142xf32>
    %976 = arith.addf %940, %975 : vector<2x142xf32>
    %c5_475 = arith.constant 5 : index
    %c27_476 = arith.constant 27 : index
    %977 = memref.load %arg3[%c5_475, %c27_476] : memref<16x36xf32, #tpu.memory_space<smem>>
    %978 = vector.broadcast %977 : f32 to vector<2x142xf32>
    %979 = arith.mulf %978, %956 : vector<2x142xf32>
    %980 = arith.addf %944, %979 : vector<2x142xf32>
    %c6_477 = arith.constant 6 : index
    %c27_478 = arith.constant 27 : index
    %981 = memref.load %arg3[%c6_477, %c27_478] : memref<16x36xf32, #tpu.memory_space<smem>>
    %982 = vector.broadcast %981 : f32 to vector<2x142xf32>
    %983 = arith.mulf %982, %956 : vector<2x142xf32>
    %984 = arith.addf %948, %983 : vector<2x142xf32>
    %c7_479 = arith.constant 7 : index
    %c27_480 = arith.constant 27 : index
    %985 = memref.load %arg3[%c7_479, %c27_480] : memref<16x36xf32, #tpu.memory_space<smem>>
    %986 = vector.broadcast %985 : f32 to vector<2x142xf32>
    %987 = arith.mulf %986, %956 : vector<2x142xf32>
    %988 = arith.addf %952, %987 : vector<2x142xf32>
    %989 = vector.extract_strided_slice %955 {offsets = [0, 1], sizes = [2, 142], strides = [1, 1]} : vector<2x144xf32> to vector<2x142xf32>
    %c0_481 = arith.constant 0 : index
    %c28 = arith.constant 28 : index
    %990 = memref.load %arg3[%c0_481, %c28] : memref<16x36xf32, #tpu.memory_space<smem>>
    %991 = vector.broadcast %990 : f32 to vector<2x142xf32>
    %992 = arith.mulf %991, %989 : vector<2x142xf32>
    %993 = arith.addf %960, %992 : vector<2x142xf32>
    %c1_482 = arith.constant 1 : index
    %c28_483 = arith.constant 28 : index
    %994 = memref.load %arg3[%c1_482, %c28_483] : memref<16x36xf32, #tpu.memory_space<smem>>
    %995 = vector.broadcast %994 : f32 to vector<2x142xf32>
    %996 = arith.mulf %995, %989 : vector<2x142xf32>
    %997 = arith.addf %964, %996 : vector<2x142xf32>
    %c2_484 = arith.constant 2 : index
    %c28_485 = arith.constant 28 : index
    %998 = memref.load %arg3[%c2_484, %c28_485] : memref<16x36xf32, #tpu.memory_space<smem>>
    %999 = vector.broadcast %998 : f32 to vector<2x142xf32>
    %1000 = arith.mulf %999, %989 : vector<2x142xf32>
    %1001 = arith.addf %968, %1000 : vector<2x142xf32>
    %c3_486 = arith.constant 3 : index
    %c28_487 = arith.constant 28 : index
    %1002 = memref.load %arg3[%c3_486, %c28_487] : memref<16x36xf32, #tpu.memory_space<smem>>
    %1003 = vector.broadcast %1002 : f32 to vector<2x142xf32>
    %1004 = arith.mulf %1003, %989 : vector<2x142xf32>
    %1005 = arith.addf %972, %1004 : vector<2x142xf32>
    %c4_488 = arith.constant 4 : index
    %c28_489 = arith.constant 28 : index
    %1006 = memref.load %arg3[%c4_488, %c28_489] : memref<16x36xf32, #tpu.memory_space<smem>>
    %1007 = vector.broadcast %1006 : f32 to vector<2x142xf32>
    %1008 = arith.mulf %1007, %989 : vector<2x142xf32>
    %1009 = arith.addf %976, %1008 : vector<2x142xf32>
    %c5_490 = arith.constant 5 : index
    %c28_491 = arith.constant 28 : index
    %1010 = memref.load %arg3[%c5_490, %c28_491] : memref<16x36xf32, #tpu.memory_space<smem>>
    %1011 = vector.broadcast %1010 : f32 to vector<2x142xf32>
    %1012 = arith.mulf %1011, %989 : vector<2x142xf32>
    %1013 = arith.addf %980, %1012 : vector<2x142xf32>
    %c6_492 = arith.constant 6 : index
    %c28_493 = arith.constant 28 : index
    %1014 = memref.load %arg3[%c6_492, %c28_493] : memref<16x36xf32, #tpu.memory_space<smem>>
    %1015 = vector.broadcast %1014 : f32 to vector<2x142xf32>
    %1016 = arith.mulf %1015, %989 : vector<2x142xf32>
    %1017 = arith.addf %984, %1016 : vector<2x142xf32>
    %c7_494 = arith.constant 7 : index
    %c28_495 = arith.constant 28 : index
    %1018 = memref.load %arg3[%c7_494, %c28_495] : memref<16x36xf32, #tpu.memory_space<smem>>
    %1019 = vector.broadcast %1018 : f32 to vector<2x142xf32>
    %1020 = arith.mulf %1019, %989 : vector<2x142xf32>
    %1021 = arith.addf %988, %1020 : vector<2x142xf32>
    %1022 = vector.extract_strided_slice %955 {offsets = [0, 2], sizes = [2, 142], strides = [1, 1]} : vector<2x144xf32> to vector<2x142xf32>
    %c0_496 = arith.constant 0 : index
    %c29 = arith.constant 29 : index
    %1023 = memref.load %arg3[%c0_496, %c29] : memref<16x36xf32, #tpu.memory_space<smem>>
    %1024 = vector.broadcast %1023 : f32 to vector<2x142xf32>
    %1025 = arith.mulf %1024, %1022 : vector<2x142xf32>
    %1026 = arith.addf %993, %1025 : vector<2x142xf32>
    %c1_497 = arith.constant 1 : index
    %c29_498 = arith.constant 29 : index
    %1027 = memref.load %arg3[%c1_497, %c29_498] : memref<16x36xf32, #tpu.memory_space<smem>>
    %1028 = vector.broadcast %1027 : f32 to vector<2x142xf32>
    %1029 = arith.mulf %1028, %1022 : vector<2x142xf32>
    %1030 = arith.addf %997, %1029 : vector<2x142xf32>
    %c2_499 = arith.constant 2 : index
    %c29_500 = arith.constant 29 : index
    %1031 = memref.load %arg3[%c2_499, %c29_500] : memref<16x36xf32, #tpu.memory_space<smem>>
    %1032 = vector.broadcast %1031 : f32 to vector<2x142xf32>
    %1033 = arith.mulf %1032, %1022 : vector<2x142xf32>
    %1034 = arith.addf %1001, %1033 : vector<2x142xf32>
    %c3_501 = arith.constant 3 : index
    %c29_502 = arith.constant 29 : index
    %1035 = memref.load %arg3[%c3_501, %c29_502] : memref<16x36xf32, #tpu.memory_space<smem>>
    %1036 = vector.broadcast %1035 : f32 to vector<2x142xf32>
    %1037 = arith.mulf %1036, %1022 : vector<2x142xf32>
    %1038 = arith.addf %1005, %1037 : vector<2x142xf32>
    %c4_503 = arith.constant 4 : index
    %c29_504 = arith.constant 29 : index
    %1039 = memref.load %arg3[%c4_503, %c29_504] : memref<16x36xf32, #tpu.memory_space<smem>>
    %1040 = vector.broadcast %1039 : f32 to vector<2x142xf32>
    %1041 = arith.mulf %1040, %1022 : vector<2x142xf32>
    %1042 = arith.addf %1009, %1041 : vector<2x142xf32>
    %c5_505 = arith.constant 5 : index
    %c29_506 = arith.constant 29 : index
    %1043 = memref.load %arg3[%c5_505, %c29_506] : memref<16x36xf32, #tpu.memory_space<smem>>
    %1044 = vector.broadcast %1043 : f32 to vector<2x142xf32>
    %1045 = arith.mulf %1044, %1022 : vector<2x142xf32>
    %1046 = arith.addf %1013, %1045 : vector<2x142xf32>
    %c6_507 = arith.constant 6 : index
    %c29_508 = arith.constant 29 : index
    %1047 = memref.load %arg3[%c6_507, %c29_508] : memref<16x36xf32, #tpu.memory_space<smem>>
    %1048 = vector.broadcast %1047 : f32 to vector<2x142xf32>
    %1049 = arith.mulf %1048, %1022 : vector<2x142xf32>
    %1050 = arith.addf %1017, %1049 : vector<2x142xf32>
    %c7_509 = arith.constant 7 : index
    %c29_510 = arith.constant 29 : index
    %1051 = memref.load %arg3[%c7_509, %c29_510] : memref<16x36xf32, #tpu.memory_space<smem>>
    %1052 = vector.broadcast %1051 : f32 to vector<2x142xf32>
    %1053 = arith.mulf %1052, %1022 : vector<2x142xf32>
    %1054 = arith.addf %1021, %1053 : vector<2x142xf32>
    %c0_511 = arith.constant 0 : index
    %c0_512 = arith.constant 0 : index
    %c3_513 = arith.constant 3 : index
    %c1_514 = arith.constant 1 : index
    %c0_515 = arith.constant 0 : index
    %1055 = vector.load %arg2[%c0_511, %c0_512, %c3_513, %c1_514, %c0_515] : memref<1x1x4x4x144xbf16, #tpu.memory_space<vmem>>, vector<1x1x1x2x144xbf16>
    %1056 = vector.shape_cast %1055 : vector<1x1x1x2x144xbf16> to vector<2x144xbf16>
    %1057 = arith.extf %1056 : vector<2x144xbf16> to vector<2x144xf32>
    %1058 = vector.extract_strided_slice %1057 {offsets = [0, 0], sizes = [2, 142], strides = [1, 1]} : vector<2x144xf32> to vector<2x142xf32>
    %c0_516 = arith.constant 0 : index
    %c30 = arith.constant 30 : index
    %1059 = memref.load %arg3[%c0_516, %c30] : memref<16x36xf32, #tpu.memory_space<smem>>
    %1060 = vector.broadcast %1059 : f32 to vector<2x142xf32>
    %1061 = arith.mulf %1060, %1058 : vector<2x142xf32>
    %1062 = arith.addf %1026, %1061 : vector<2x142xf32>
    %c1_517 = arith.constant 1 : index
    %c30_518 = arith.constant 30 : index
    %1063 = memref.load %arg3[%c1_517, %c30_518] : memref<16x36xf32, #tpu.memory_space<smem>>
    %1064 = vector.broadcast %1063 : f32 to vector<2x142xf32>
    %1065 = arith.mulf %1064, %1058 : vector<2x142xf32>
    %1066 = arith.addf %1030, %1065 : vector<2x142xf32>
    %c2_519 = arith.constant 2 : index
    %c30_520 = arith.constant 30 : index
    %1067 = memref.load %arg3[%c2_519, %c30_520] : memref<16x36xf32, #tpu.memory_space<smem>>
    %1068 = vector.broadcast %1067 : f32 to vector<2x142xf32>
    %1069 = arith.mulf %1068, %1058 : vector<2x142xf32>
    %1070 = arith.addf %1034, %1069 : vector<2x142xf32>
    %c3_521 = arith.constant 3 : index
    %c30_522 = arith.constant 30 : index
    %1071 = memref.load %arg3[%c3_521, %c30_522] : memref<16x36xf32, #tpu.memory_space<smem>>
    %1072 = vector.broadcast %1071 : f32 to vector<2x142xf32>
    %1073 = arith.mulf %1072, %1058 : vector<2x142xf32>
    %1074 = arith.addf %1038, %1073 : vector<2x142xf32>
    %c4_523 = arith.constant 4 : index
    %c30_524 = arith.constant 30 : index
    %1075 = memref.load %arg3[%c4_523, %c30_524] : memref<16x36xf32, #tpu.memory_space<smem>>
    %1076 = vector.broadcast %1075 : f32 to vector<2x142xf32>
    %1077 = arith.mulf %1076, %1058 : vector<2x142xf32>
    %1078 = arith.addf %1042, %1077 : vector<2x142xf32>
    %c5_525 = arith.constant 5 : index
    %c30_526 = arith.constant 30 : index
    %1079 = memref.load %arg3[%c5_525, %c30_526] : memref<16x36xf32, #tpu.memory_space<smem>>
    %1080 = vector.broadcast %1079 : f32 to vector<2x142xf32>
    %1081 = arith.mulf %1080, %1058 : vector<2x142xf32>
    %1082 = arith.addf %1046, %1081 : vector<2x142xf32>
    %c6_527 = arith.constant 6 : index
    %c30_528 = arith.constant 30 : index
    %1083 = memref.load %arg3[%c6_527, %c30_528] : memref<16x36xf32, #tpu.memory_space<smem>>
    %1084 = vector.broadcast %1083 : f32 to vector<2x142xf32>
    %1085 = arith.mulf %1084, %1058 : vector<2x142xf32>
    %1086 = arith.addf %1050, %1085 : vector<2x142xf32>
    %c7_529 = arith.constant 7 : index
    %c30_530 = arith.constant 30 : index
    %1087 = memref.load %arg3[%c7_529, %c30_530] : memref<16x36xf32, #tpu.memory_space<smem>>
    %1088 = vector.broadcast %1087 : f32 to vector<2x142xf32>
    %1089 = arith.mulf %1088, %1058 : vector<2x142xf32>
    %1090 = arith.addf %1054, %1089 : vector<2x142xf32>
    %1091 = vector.extract_strided_slice %1057 {offsets = [0, 1], sizes = [2, 142], strides = [1, 1]} : vector<2x144xf32> to vector<2x142xf32>
    %c0_531 = arith.constant 0 : index
    %c31 = arith.constant 31 : index
    %1092 = memref.load %arg3[%c0_531, %c31] : memref<16x36xf32, #tpu.memory_space<smem>>
    %1093 = vector.broadcast %1092 : f32 to vector<2x142xf32>
    %1094 = arith.mulf %1093, %1091 : vector<2x142xf32>
    %1095 = arith.addf %1062, %1094 : vector<2x142xf32>
    %c1_532 = arith.constant 1 : index
    %c31_533 = arith.constant 31 : index
    %1096 = memref.load %arg3[%c1_532, %c31_533] : memref<16x36xf32, #tpu.memory_space<smem>>
    %1097 = vector.broadcast %1096 : f32 to vector<2x142xf32>
    %1098 = arith.mulf %1097, %1091 : vector<2x142xf32>
    %1099 = arith.addf %1066, %1098 : vector<2x142xf32>
    %c2_534 = arith.constant 2 : index
    %c31_535 = arith.constant 31 : index
    %1100 = memref.load %arg3[%c2_534, %c31_535] : memref<16x36xf32, #tpu.memory_space<smem>>
    %1101 = vector.broadcast %1100 : f32 to vector<2x142xf32>
    %1102 = arith.mulf %1101, %1091 : vector<2x142xf32>
    %1103 = arith.addf %1070, %1102 : vector<2x142xf32>
    %c3_536 = arith.constant 3 : index
    %c31_537 = arith.constant 31 : index
    %1104 = memref.load %arg3[%c3_536, %c31_537] : memref<16x36xf32, #tpu.memory_space<smem>>
    %1105 = vector.broadcast %1104 : f32 to vector<2x142xf32>
    %1106 = arith.mulf %1105, %1091 : vector<2x142xf32>
    %1107 = arith.addf %1074, %1106 : vector<2x142xf32>
    %c4_538 = arith.constant 4 : index
    %c31_539 = arith.constant 31 : index
    %1108 = memref.load %arg3[%c4_538, %c31_539] : memref<16x36xf32, #tpu.memory_space<smem>>
    %1109 = vector.broadcast %1108 : f32 to vector<2x142xf32>
    %1110 = arith.mulf %1109, %1091 : vector<2x142xf32>
    %1111 = arith.addf %1078, %1110 : vector<2x142xf32>
    %c5_540 = arith.constant 5 : index
    %c31_541 = arith.constant 31 : index
    %1112 = memref.load %arg3[%c5_540, %c31_541] : memref<16x36xf32, #tpu.memory_space<smem>>
    %1113 = vector.broadcast %1112 : f32 to vector<2x142xf32>
    %1114 = arith.mulf %1113, %1091 : vector<2x142xf32>
    %1115 = arith.addf %1082, %1114 : vector<2x142xf32>
    %c6_542 = arith.constant 6 : index
    %c31_543 = arith.constant 31 : index
    %1116 = memref.load %arg3[%c6_542, %c31_543] : memref<16x36xf32, #tpu.memory_space<smem>>
    %1117 = vector.broadcast %1116 : f32 to vector<2x142xf32>
    %1118 = arith.mulf %1117, %1091 : vector<2x142xf32>
    %1119 = arith.addf %1086, %1118 : vector<2x142xf32>
    %c7_544 = arith.constant 7 : index
    %c31_545 = arith.constant 31 : index
    %1120 = memref.load %arg3[%c7_544, %c31_545] : memref<16x36xf32, #tpu.memory_space<smem>>
    %1121 = vector.broadcast %1120 : f32 to vector<2x142xf32>
    %1122 = arith.mulf %1121, %1091 : vector<2x142xf32>
    %1123 = arith.addf %1090, %1122 : vector<2x142xf32>
    %1124 = vector.extract_strided_slice %1057 {offsets = [0, 2], sizes = [2, 142], strides = [1, 1]} : vector<2x144xf32> to vector<2x142xf32>
    %c0_546 = arith.constant 0 : index
    %c32 = arith.constant 32 : index
    %1125 = memref.load %arg3[%c0_546, %c32] : memref<16x36xf32, #tpu.memory_space<smem>>
    %1126 = vector.broadcast %1125 : f32 to vector<2x142xf32>
    %1127 = arith.mulf %1126, %1124 : vector<2x142xf32>
    %1128 = arith.addf %1095, %1127 : vector<2x142xf32>
    %c1_547 = arith.constant 1 : index
    %c32_548 = arith.constant 32 : index
    %1129 = memref.load %arg3[%c1_547, %c32_548] : memref<16x36xf32, #tpu.memory_space<smem>>
    %1130 = vector.broadcast %1129 : f32 to vector<2x142xf32>
    %1131 = arith.mulf %1130, %1124 : vector<2x142xf32>
    %1132 = arith.addf %1099, %1131 : vector<2x142xf32>
    %c2_549 = arith.constant 2 : index
    %c32_550 = arith.constant 32 : index
    %1133 = memref.load %arg3[%c2_549, %c32_550] : memref<16x36xf32, #tpu.memory_space<smem>>
    %1134 = vector.broadcast %1133 : f32 to vector<2x142xf32>
    %1135 = arith.mulf %1134, %1124 : vector<2x142xf32>
    %1136 = arith.addf %1103, %1135 : vector<2x142xf32>
    %c3_551 = arith.constant 3 : index
    %c32_552 = arith.constant 32 : index
    %1137 = memref.load %arg3[%c3_551, %c32_552] : memref<16x36xf32, #tpu.memory_space<smem>>
    %1138 = vector.broadcast %1137 : f32 to vector<2x142xf32>
    %1139 = arith.mulf %1138, %1124 : vector<2x142xf32>
    %1140 = arith.addf %1107, %1139 : vector<2x142xf32>
    %c4_553 = arith.constant 4 : index
    %c32_554 = arith.constant 32 : index
    %1141 = memref.load %arg3[%c4_553, %c32_554] : memref<16x36xf32, #tpu.memory_space<smem>>
    %1142 = vector.broadcast %1141 : f32 to vector<2x142xf32>
    %1143 = arith.mulf %1142, %1124 : vector<2x142xf32>
    %1144 = arith.addf %1111, %1143 : vector<2x142xf32>
    %c5_555 = arith.constant 5 : index
    %c32_556 = arith.constant 32 : index
    %1145 = memref.load %arg3[%c5_555, %c32_556] : memref<16x36xf32, #tpu.memory_space<smem>>
    %1146 = vector.broadcast %1145 : f32 to vector<2x142xf32>
    %1147 = arith.mulf %1146, %1124 : vector<2x142xf32>
    %1148 = arith.addf %1115, %1147 : vector<2x142xf32>
    %c6_557 = arith.constant 6 : index
    %c32_558 = arith.constant 32 : index
    %1149 = memref.load %arg3[%c6_557, %c32_558] : memref<16x36xf32, #tpu.memory_space<smem>>
    %1150 = vector.broadcast %1149 : f32 to vector<2x142xf32>
    %1151 = arith.mulf %1150, %1124 : vector<2x142xf32>
    %1152 = arith.addf %1119, %1151 : vector<2x142xf32>
    %c7_559 = arith.constant 7 : index
    %c32_560 = arith.constant 32 : index
    %1153 = memref.load %arg3[%c7_559, %c32_560] : memref<16x36xf32, #tpu.memory_space<smem>>
    %1154 = vector.broadcast %1153 : f32 to vector<2x142xf32>
    %1155 = arith.mulf %1154, %1124 : vector<2x142xf32>
    %1156 = arith.addf %1123, %1155 : vector<2x142xf32>
    %c0_561 = arith.constant 0 : index
    %c0_562 = arith.constant 0 : index
    %c3_563 = arith.constant 3 : index
    %c2_564 = arith.constant 2 : index
    %c0_565 = arith.constant 0 : index
    %1157 = vector.load %arg2[%c0_561, %c0_562, %c3_563, %c2_564, %c0_565] : memref<1x1x4x4x144xbf16, #tpu.memory_space<vmem>>, vector<1x1x1x2x144xbf16>
    %1158 = vector.shape_cast %1157 : vector<1x1x1x2x144xbf16> to vector<2x144xbf16>
    %1159 = arith.extf %1158 : vector<2x144xbf16> to vector<2x144xf32>
    %1160 = vector.extract_strided_slice %1159 {offsets = [0, 0], sizes = [2, 142], strides = [1, 1]} : vector<2x144xf32> to vector<2x142xf32>
    %c0_566 = arith.constant 0 : index
    %c33 = arith.constant 33 : index
    %1161 = memref.load %arg3[%c0_566, %c33] : memref<16x36xf32, #tpu.memory_space<smem>>
    %1162 = vector.broadcast %1161 : f32 to vector<2x142xf32>
    %1163 = arith.mulf %1162, %1160 : vector<2x142xf32>
    %1164 = arith.addf %1128, %1163 : vector<2x142xf32>
    %c1_567 = arith.constant 1 : index
    %c33_568 = arith.constant 33 : index
    %1165 = memref.load %arg3[%c1_567, %c33_568] : memref<16x36xf32, #tpu.memory_space<smem>>
    %1166 = vector.broadcast %1165 : f32 to vector<2x142xf32>
    %1167 = arith.mulf %1166, %1160 : vector<2x142xf32>
    %1168 = arith.addf %1132, %1167 : vector<2x142xf32>
    %c2_569 = arith.constant 2 : index
    %c33_570 = arith.constant 33 : index
    %1169 = memref.load %arg3[%c2_569, %c33_570] : memref<16x36xf32, #tpu.memory_space<smem>>
    %1170 = vector.broadcast %1169 : f32 to vector<2x142xf32>
    %1171 = arith.mulf %1170, %1160 : vector<2x142xf32>
    %1172 = arith.addf %1136, %1171 : vector<2x142xf32>
    %c3_571 = arith.constant 3 : index
    %c33_572 = arith.constant 33 : index
    %1173 = memref.load %arg3[%c3_571, %c33_572] : memref<16x36xf32, #tpu.memory_space<smem>>
    %1174 = vector.broadcast %1173 : f32 to vector<2x142xf32>
    %1175 = arith.mulf %1174, %1160 : vector<2x142xf32>
    %1176 = arith.addf %1140, %1175 : vector<2x142xf32>
    %c4_573 = arith.constant 4 : index
    %c33_574 = arith.constant 33 : index
    %1177 = memref.load %arg3[%c4_573, %c33_574] : memref<16x36xf32, #tpu.memory_space<smem>>
    %1178 = vector.broadcast %1177 : f32 to vector<2x142xf32>
    %1179 = arith.mulf %1178, %1160 : vector<2x142xf32>
    %1180 = arith.addf %1144, %1179 : vector<2x142xf32>
    %c5_575 = arith.constant 5 : index
    %c33_576 = arith.constant 33 : index
    %1181 = memref.load %arg3[%c5_575, %c33_576] : memref<16x36xf32, #tpu.memory_space<smem>>
    %1182 = vector.broadcast %1181 : f32 to vector<2x142xf32>
    %1183 = arith.mulf %1182, %1160 : vector<2x142xf32>
    %1184 = arith.addf %1148, %1183 : vector<2x142xf32>
    %c6_577 = arith.constant 6 : index
    %c33_578 = arith.constant 33 : index
    %1185 = memref.load %arg3[%c6_577, %c33_578] : memref<16x36xf32, #tpu.memory_space<smem>>
    %1186 = vector.broadcast %1185 : f32 to vector<2x142xf32>
    %1187 = arith.mulf %1186, %1160 : vector<2x142xf32>
    %1188 = arith.addf %1152, %1187 : vector<2x142xf32>
    %c7_579 = arith.constant 7 : index
    %c33_580 = arith.constant 33 : index
    %1189 = memref.load %arg3[%c7_579, %c33_580] : memref<16x36xf32, #tpu.memory_space<smem>>
    %1190 = vector.broadcast %1189 : f32 to vector<2x142xf32>
    %1191 = arith.mulf %1190, %1160 : vector<2x142xf32>
    %1192 = arith.addf %1156, %1191 : vector<2x142xf32>
    %1193 = vector.extract_strided_slice %1159 {offsets = [0, 1], sizes = [2, 142], strides = [1, 1]} : vector<2x144xf32> to vector<2x142xf32>
    %c0_581 = arith.constant 0 : index
    %c34 = arith.constant 34 : index
    %1194 = memref.load %arg3[%c0_581, %c34] : memref<16x36xf32, #tpu.memory_space<smem>>
    %1195 = vector.broadcast %1194 : f32 to vector<2x142xf32>
    %1196 = arith.mulf %1195, %1193 : vector<2x142xf32>
    %1197 = arith.addf %1164, %1196 : vector<2x142xf32>
    %c1_582 = arith.constant 1 : index
    %c34_583 = arith.constant 34 : index
    %1198 = memref.load %arg3[%c1_582, %c34_583] : memref<16x36xf32, #tpu.memory_space<smem>>
    %1199 = vector.broadcast %1198 : f32 to vector<2x142xf32>
    %1200 = arith.mulf %1199, %1193 : vector<2x142xf32>
    %1201 = arith.addf %1168, %1200 : vector<2x142xf32>
    %c2_584 = arith.constant 2 : index
    %c34_585 = arith.constant 34 : index
    %1202 = memref.load %arg3[%c2_584, %c34_585] : memref<16x36xf32, #tpu.memory_space<smem>>
    %1203 = vector.broadcast %1202 : f32 to vector<2x142xf32>
    %1204 = arith.mulf %1203, %1193 : vector<2x142xf32>
    %1205 = arith.addf %1172, %1204 : vector<2x142xf32>
    %c3_586 = arith.constant 3 : index
    %c34_587 = arith.constant 34 : index
    %1206 = memref.load %arg3[%c3_586, %c34_587] : memref<16x36xf32, #tpu.memory_space<smem>>
    %1207 = vector.broadcast %1206 : f32 to vector<2x142xf32>
    %1208 = arith.mulf %1207, %1193 : vector<2x142xf32>
    %1209 = arith.addf %1176, %1208 : vector<2x142xf32>
    %c4_588 = arith.constant 4 : index
    %c34_589 = arith.constant 34 : index
    %1210 = memref.load %arg3[%c4_588, %c34_589] : memref<16x36xf32, #tpu.memory_space<smem>>
    %1211 = vector.broadcast %1210 : f32 to vector<2x142xf32>
    %1212 = arith.mulf %1211, %1193 : vector<2x142xf32>
    %1213 = arith.addf %1180, %1212 : vector<2x142xf32>
    %c5_590 = arith.constant 5 : index
    %c34_591 = arith.constant 34 : index
    %1214 = memref.load %arg3[%c5_590, %c34_591] : memref<16x36xf32, #tpu.memory_space<smem>>
    %1215 = vector.broadcast %1214 : f32 to vector<2x142xf32>
    %1216 = arith.mulf %1215, %1193 : vector<2x142xf32>
    %1217 = arith.addf %1184, %1216 : vector<2x142xf32>
    %c6_592 = arith.constant 6 : index
    %c34_593 = arith.constant 34 : index
    %1218 = memref.load %arg3[%c6_592, %c34_593] : memref<16x36xf32, #tpu.memory_space<smem>>
    %1219 = vector.broadcast %1218 : f32 to vector<2x142xf32>
    %1220 = arith.mulf %1219, %1193 : vector<2x142xf32>
    %1221 = arith.addf %1188, %1220 : vector<2x142xf32>
    %c7_594 = arith.constant 7 : index
    %c34_595 = arith.constant 34 : index
    %1222 = memref.load %arg3[%c7_594, %c34_595] : memref<16x36xf32, #tpu.memory_space<smem>>
    %1223 = vector.broadcast %1222 : f32 to vector<2x142xf32>
    %1224 = arith.mulf %1223, %1193 : vector<2x142xf32>
    %1225 = arith.addf %1192, %1224 : vector<2x142xf32>
    %1226 = vector.extract_strided_slice %1159 {offsets = [0, 2], sizes = [2, 142], strides = [1, 1]} : vector<2x144xf32> to vector<2x142xf32>
    %c0_596 = arith.constant 0 : index
    %c35 = arith.constant 35 : index
    %1227 = memref.load %arg3[%c0_596, %c35] : memref<16x36xf32, #tpu.memory_space<smem>>
    %1228 = vector.broadcast %1227 : f32 to vector<2x142xf32>
    %1229 = arith.mulf %1228, %1226 : vector<2x142xf32>
    %1230 = arith.addf %1197, %1229 : vector<2x142xf32>
    %c1_597 = arith.constant 1 : index
    %c35_598 = arith.constant 35 : index
    %1231 = memref.load %arg3[%c1_597, %c35_598] : memref<16x36xf32, #tpu.memory_space<smem>>
    %1232 = vector.broadcast %1231 : f32 to vector<2x142xf32>
    %1233 = arith.mulf %1232, %1226 : vector<2x142xf32>
    %1234 = arith.addf %1201, %1233 : vector<2x142xf32>
    %c2_599 = arith.constant 2 : index
    %c35_600 = arith.constant 35 : index
    %1235 = memref.load %arg3[%c2_599, %c35_600] : memref<16x36xf32, #tpu.memory_space<smem>>
    %1236 = vector.broadcast %1235 : f32 to vector<2x142xf32>
    %1237 = arith.mulf %1236, %1226 : vector<2x142xf32>
    %1238 = arith.addf %1205, %1237 : vector<2x142xf32>
    %c3_601 = arith.constant 3 : index
    %c35_602 = arith.constant 35 : index
    %1239 = memref.load %arg3[%c3_601, %c35_602] : memref<16x36xf32, #tpu.memory_space<smem>>
    %1240 = vector.broadcast %1239 : f32 to vector<2x142xf32>
    %1241 = arith.mulf %1240, %1226 : vector<2x142xf32>
    %1242 = arith.addf %1209, %1241 : vector<2x142xf32>
    %c4_603 = arith.constant 4 : index
    %c35_604 = arith.constant 35 : index
    %1243 = memref.load %arg3[%c4_603, %c35_604] : memref<16x36xf32, #tpu.memory_space<smem>>
    %1244 = vector.broadcast %1243 : f32 to vector<2x142xf32>
    %1245 = arith.mulf %1244, %1226 : vector<2x142xf32>
    %1246 = arith.addf %1213, %1245 : vector<2x142xf32>
    %c5_605 = arith.constant 5 : index
    %c35_606 = arith.constant 35 : index
    %1247 = memref.load %arg3[%c5_605, %c35_606] : memref<16x36xf32, #tpu.memory_space<smem>>
    %1248 = vector.broadcast %1247 : f32 to vector<2x142xf32>
    %1249 = arith.mulf %1248, %1226 : vector<2x142xf32>
    %1250 = arith.addf %1217, %1249 : vector<2x142xf32>
    %c6_607 = arith.constant 6 : index
    %c35_608 = arith.constant 35 : index
    %1251 = memref.load %arg3[%c6_607, %c35_608] : memref<16x36xf32, #tpu.memory_space<smem>>
    %1252 = vector.broadcast %1251 : f32 to vector<2x142xf32>
    %1253 = arith.mulf %1252, %1226 : vector<2x142xf32>
    %1254 = arith.addf %1221, %1253 : vector<2x142xf32>
    %c7_609 = arith.constant 7 : index
    %c35_610 = arith.constant 35 : index
    %1255 = memref.load %arg3[%c7_609, %c35_610] : memref<16x36xf32, #tpu.memory_space<smem>>
    %1256 = vector.broadcast %1255 : f32 to vector<2x142xf32>
    %1257 = arith.mulf %1256, %1226 : vector<2x142xf32>
    %1258 = arith.addf %1225, %1257 : vector<2x142xf32>
    %cst = arith.constant 0.000000e+00 : f32
    %1259 = vector.broadcast %cst : f32 to vector<2x142xf32>
    %1260 = arith.maximumf %1230, %1259 : vector<2x142xf32>
    %cst_611 = arith.constant 0.000000e+00 : f32
    %1261 = vector.broadcast %cst_611 : f32 to vector<2x142xf32>
    %1262 = arith.maximumf %1234, %1261 : vector<2x142xf32>
    %cst_612 = arith.constant 0.000000e+00 : f32
    %1263 = vector.broadcast %cst_612 : f32 to vector<2x142xf32>
    %1264 = arith.maximumf %1238, %1263 : vector<2x142xf32>
    %cst_613 = arith.constant 0.000000e+00 : f32
    %1265 = vector.broadcast %cst_613 : f32 to vector<2x142xf32>
    %1266 = arith.maximumf %1242, %1265 : vector<2x142xf32>
    %cst_614 = arith.constant 0.000000e+00 : f32
    %1267 = vector.broadcast %cst_614 : f32 to vector<2x142xf32>
    %1268 = arith.maximumf %1246, %1267 : vector<2x142xf32>
    %cst_615 = arith.constant 0.000000e+00 : f32
    %1269 = vector.broadcast %cst_615 : f32 to vector<2x142xf32>
    %1270 = arith.maximumf %1250, %1269 : vector<2x142xf32>
    %cst_616 = arith.constant 0.000000e+00 : f32
    %1271 = vector.broadcast %cst_616 : f32 to vector<2x142xf32>
    %1272 = arith.maximumf %1254, %1271 : vector<2x142xf32>
    %cst_617 = arith.constant 0.000000e+00 : f32
    %1273 = vector.broadcast %cst_617 : f32 to vector<2x142xf32>
    %1274 = arith.maximumf %1258, %1273 : vector<2x142xf32>
    %c0_618 = arith.constant 0 : index
    %1275 = memref.load %arg7[%c0_618] : memref<8xf32, #tpu.memory_space<smem>>
    %cst_619 = arith.constant 0.000000e+00 : f32
    %1276 = vector.broadcast %cst_619 : f32 to vector<2x142xf32>
    %1277 = arith.select %18, %1260, %1276 : vector<2x142xi1>, vector<2x142xf32>
    %1278 = vector.shape_cast %1277 : vector<2x142xf32> to vector<1x2x142xf32>
    %cst_620 = arith.constant dense<0.000000e+00> : vector<1xf32>
    %1279 = vector.multi_reduction <add>, %1278, %cst_620 [1, 2] : vector<1x2x142xf32> to vector<1xf32>
    %1280 = vector.shape_cast %1279 : vector<1xf32> to vector<1x1x1xf32>
    %1281 = vector.extract %1280[0, 0, 0] : f32 from vector<1x1x1xf32>
    %1282 = arith.mulf %1275, %1281 : f32
    %cst_621 = arith.constant 0.000000e+00 : f32
    %1283 = arith.addf %cst_621, %1282 : f32
    %c1_622 = arith.constant 1 : index
    %1284 = memref.load %arg7[%c1_622] : memref<8xf32, #tpu.memory_space<smem>>
    %cst_623 = arith.constant 0.000000e+00 : f32
    %1285 = vector.broadcast %cst_623 : f32 to vector<2x142xf32>
    %1286 = arith.select %18, %1262, %1285 : vector<2x142xi1>, vector<2x142xf32>
    %1287 = vector.shape_cast %1286 : vector<2x142xf32> to vector<1x2x142xf32>
    %cst_624 = arith.constant dense<0.000000e+00> : vector<1xf32>
    %1288 = vector.multi_reduction <add>, %1287, %cst_624 [1, 2] : vector<1x2x142xf32> to vector<1xf32>
    %1289 = vector.shape_cast %1288 : vector<1xf32> to vector<1x1x1xf32>
    %1290 = vector.extract %1289[0, 0, 0] : f32 from vector<1x1x1xf32>
    %1291 = arith.mulf %1284, %1290 : f32
    %1292 = arith.addf %1283, %1291 : f32
    %c2_625 = arith.constant 2 : index
    %1293 = memref.load %arg7[%c2_625] : memref<8xf32, #tpu.memory_space<smem>>
    %cst_626 = arith.constant 0.000000e+00 : f32
    %1294 = vector.broadcast %cst_626 : f32 to vector<2x142xf32>
    %1295 = arith.select %18, %1264, %1294 : vector<2x142xi1>, vector<2x142xf32>
    %1296 = vector.shape_cast %1295 : vector<2x142xf32> to vector<1x2x142xf32>
    %cst_627 = arith.constant dense<0.000000e+00> : vector<1xf32>
    %1297 = vector.multi_reduction <add>, %1296, %cst_627 [1, 2] : vector<1x2x142xf32> to vector<1xf32>
    %1298 = vector.shape_cast %1297 : vector<1xf32> to vector<1x1x1xf32>
    %1299 = vector.extract %1298[0, 0, 0] : f32 from vector<1x1x1xf32>
    %1300 = arith.mulf %1293, %1299 : f32
    %1301 = arith.addf %1292, %1300 : f32
    %c3_628 = arith.constant 3 : index
    %1302 = memref.load %arg7[%c3_628] : memref<8xf32, #tpu.memory_space<smem>>
    %cst_629 = arith.constant 0.000000e+00 : f32
    %1303 = vector.broadcast %cst_629 : f32 to vector<2x142xf32>
    %1304 = arith.select %18, %1266, %1303 : vector<2x142xi1>, vector<2x142xf32>
    %1305 = vector.shape_cast %1304 : vector<2x142xf32> to vector<1x2x142xf32>
    %cst_630 = arith.constant dense<0.000000e+00> : vector<1xf32>
    %1306 = vector.multi_reduction <add>, %1305, %cst_630 [1, 2] : vector<1x2x142xf32> to vector<1xf32>
    %1307 = vector.shape_cast %1306 : vector<1xf32> to vector<1x1x1xf32>
    %1308 = vector.extract %1307[0, 0, 0] : f32 from vector<1x1x1xf32>
    %1309 = arith.mulf %1302, %1308 : f32
    %1310 = arith.addf %1301, %1309 : f32
    %c4_631 = arith.constant 4 : index
    %1311 = memref.load %arg7[%c4_631] : memref<8xf32, #tpu.memory_space<smem>>
    %cst_632 = arith.constant 0.000000e+00 : f32
    %1312 = vector.broadcast %cst_632 : f32 to vector<2x142xf32>
    %1313 = arith.select %18, %1268, %1312 : vector<2x142xi1>, vector<2x142xf32>
    %1314 = vector.shape_cast %1313 : vector<2x142xf32> to vector<1x2x142xf32>
    %cst_633 = arith.constant dense<0.000000e+00> : vector<1xf32>
    %1315 = vector.multi_reduction <add>, %1314, %cst_633 [1, 2] : vector<1x2x142xf32> to vector<1xf32>
    %1316 = vector.shape_cast %1315 : vector<1xf32> to vector<1x1x1xf32>
    %1317 = vector.extract %1316[0, 0, 0] : f32 from vector<1x1x1xf32>
    %1318 = arith.mulf %1311, %1317 : f32
    %1319 = arith.addf %1310, %1318 : f32
    %c5_634 = arith.constant 5 : index
    %1320 = memref.load %arg7[%c5_634] : memref<8xf32, #tpu.memory_space<smem>>
    %cst_635 = arith.constant 0.000000e+00 : f32
    %1321 = vector.broadcast %cst_635 : f32 to vector<2x142xf32>
    %1322 = arith.select %18, %1270, %1321 : vector<2x142xi1>, vector<2x142xf32>
    %1323 = vector.shape_cast %1322 : vector<2x142xf32> to vector<1x2x142xf32>
    %cst_636 = arith.constant dense<0.000000e+00> : vector<1xf32>
    %1324 = vector.multi_reduction <add>, %1323, %cst_636 [1, 2] : vector<1x2x142xf32> to vector<1xf32>
    %1325 = vector.shape_cast %1324 : vector<1xf32> to vector<1x1x1xf32>
    %1326 = vector.extract %1325[0, 0, 0] : f32 from vector<1x1x1xf32>
    %1327 = arith.mulf %1320, %1326 : f32
    %1328 = arith.addf %1319, %1327 : f32
    %c6_637 = arith.constant 6 : index
    %1329 = memref.load %arg7[%c6_637] : memref<8xf32, #tpu.memory_space<smem>>
    %cst_638 = arith.constant 0.000000e+00 : f32
    %1330 = vector.broadcast %cst_638 : f32 to vector<2x142xf32>
    %1331 = arith.select %18, %1272, %1330 : vector<2x142xi1>, vector<2x142xf32>
    %1332 = vector.shape_cast %1331 : vector<2x142xf32> to vector<1x2x142xf32>
    %cst_639 = arith.constant dense<0.000000e+00> : vector<1xf32>
    %1333 = vector.multi_reduction <add>, %1332, %cst_639 [1, 2] : vector<1x2x142xf32> to vector<1xf32>
    %1334 = vector.shape_cast %1333 : vector<1xf32> to vector<1x1x1xf32>
    %1335 = vector.extract %1334[0, 0, 0] : f32 from vector<1x1x1xf32>
    %1336 = arith.mulf %1329, %1335 : f32
    %1337 = arith.addf %1328, %1336 : f32
    %c7_640 = arith.constant 7 : index
    %1338 = memref.load %arg7[%c7_640] : memref<8xf32, #tpu.memory_space<smem>>
    %cst_641 = arith.constant 0.000000e+00 : f32
    %1339 = vector.broadcast %cst_641 : f32 to vector<2x142xf32>
    %1340 = arith.select %18, %1274, %1339 : vector<2x142xi1>, vector<2x142xf32>
    %1341 = vector.shape_cast %1340 : vector<2x142xf32> to vector<1x2x142xf32>
    %cst_642 = arith.constant dense<0.000000e+00> : vector<1xf32>
    %1342 = vector.multi_reduction <add>, %1341, %cst_642 [1, 2] : vector<1x2x142xf32> to vector<1xf32>
    %1343 = vector.shape_cast %1342 : vector<1xf32> to vector<1x1x1xf32>
    %1344 = vector.extract %1343[0, 0, 0] : f32 from vector<1x1x1xf32>
    %1345 = arith.mulf %1338, %1344 : f32
    %1346 = arith.addf %1337, %1345 : f32
    %1347 = vector.broadcast %1346 : f32 to vector<1x1x1x1xf32>
    %c0_643 = arith.constant 0 : index
    %c0_644 = arith.constant 0 : index
    %c0_645 = arith.constant 0 : index
    %c0_646 = arith.constant 0 : index
    %1348 = vector.load %arg8[%c0_643, %c0_644, %c0_645, %c0_646] : memref<1x1x1x1xf32, #tpu.memory_space<vmem>>, vector<1x1x1x1xf32>
    tpu.vector_store %arg8[%c0_643, %c0_644, %c0_645, %c0_646], %1347 {strides = array<i32>} : memref<1x1x1x1xf32, #tpu.memory_space<vmem>>, vector<1x1x1x1xf32>,
    %c8_647 = arith.constant 8 : index
    %1349 = memref.load %arg4[%c8_647] : memref<16xf32, #tpu.memory_space<smem>>
    %1350 = vector.broadcast %1349 : f32 to vector<2x142xf32>
    %c9_648 = arith.constant 9 : index
    %1351 = memref.load %arg4[%c9_648] : memref<16xf32, #tpu.memory_space<smem>>
    %1352 = vector.broadcast %1351 : f32 to vector<2x142xf32>
    %c10_649 = arith.constant 10 : index
    %1353 = memref.load %arg4[%c10_649] : memref<16xf32, #tpu.memory_space<smem>>
    %1354 = vector.broadcast %1353 : f32 to vector<2x142xf32>
    %c11_650 = arith.constant 11 : index
    %1355 = memref.load %arg4[%c11_650] : memref<16xf32, #tpu.memory_space<smem>>
    %1356 = vector.broadcast %1355 : f32 to vector<2x142xf32>
    %c12_651 = arith.constant 12 : index
    %1357 = memref.load %arg4[%c12_651] : memref<16xf32, #tpu.memory_space<smem>>
    %1358 = vector.broadcast %1357 : f32 to vector<2x142xf32>
    %c13_652 = arith.constant 13 : index
    %1359 = memref.load %arg4[%c13_652] : memref<16xf32, #tpu.memory_space<smem>>
    %1360 = vector.broadcast %1359 : f32 to vector<2x142xf32>
    %c14_653 = arith.constant 14 : index
    %1361 = memref.load %arg4[%c14_653] : memref<16xf32, #tpu.memory_space<smem>>
    %1362 = vector.broadcast %1361 : f32 to vector<2x142xf32>
    %c15_654 = arith.constant 15 : index
    %1363 = memref.load %arg4[%c15_654] : memref<16xf32, #tpu.memory_space<smem>>
    %1364 = vector.broadcast %1363 : f32 to vector<2x142xf32>
    %c0_655 = arith.constant 0 : index
    %c0_656 = arith.constant 0 : index
    %c0_657 = arith.constant 0 : index
    %c0_658 = arith.constant 0 : index
    %c0_659 = arith.constant 0 : index
    %1365 = vector.load %arg2[%c0_655, %c0_656, %c0_657, %c0_658, %c0_659] : memref<1x1x4x4x144xbf16, #tpu.memory_space<vmem>>, vector<1x1x1x2x144xbf16>
    %1366 = vector.shape_cast %1365 : vector<1x1x1x2x144xbf16> to vector<2x144xbf16>
    %1367 = arith.extf %1366 : vector<2x144xbf16> to vector<2x144xf32>
    %1368 = vector.extract_strided_slice %1367 {offsets = [0, 0], sizes = [2, 142], strides = [1, 1]} : vector<2x144xf32> to vector<2x142xf32>
    %c8_660 = arith.constant 8 : index
    %c0_661 = arith.constant 0 : index
    %1369 = memref.load %arg3[%c8_660, %c0_661] : memref<16x36xf32, #tpu.memory_space<smem>>
    %1370 = vector.broadcast %1369 : f32 to vector<2x142xf32>
    %1371 = arith.mulf %1370, %1368 : vector<2x142xf32>
    %1372 = arith.addf %1350, %1371 : vector<2x142xf32>
    %c9_662 = arith.constant 9 : index
    %c0_663 = arith.constant 0 : index
    %1373 = memref.load %arg3[%c9_662, %c0_663] : memref<16x36xf32, #tpu.memory_space<smem>>
    %1374 = vector.broadcast %1373 : f32 to vector<2x142xf32>
    %1375 = arith.mulf %1374, %1368 : vector<2x142xf32>
    %1376 = arith.addf %1352, %1375 : vector<2x142xf32>
    %c10_664 = arith.constant 10 : index
    %c0_665 = arith.constant 0 : index
    %1377 = memref.load %arg3[%c10_664, %c0_665] : memref<16x36xf32, #tpu.memory_space<smem>>
    %1378 = vector.broadcast %1377 : f32 to vector<2x142xf32>
    %1379 = arith.mulf %1378, %1368 : vector<2x142xf32>
    %1380 = arith.addf %1354, %1379 : vector<2x142xf32>
    %c11_666 = arith.constant 11 : index
    %c0_667 = arith.constant 0 : index
    %1381 = memref.load %arg3[%c11_666, %c0_667] : memref<16x36xf32, #tpu.memory_space<smem>>
    %1382 = vector.broadcast %1381 : f32 to vector<2x142xf32>
    %1383 = arith.mulf %1382, %1368 : vector<2x142xf32>
    %1384 = arith.addf %1356, %1383 : vector<2x142xf32>
    %c12_668 = arith.constant 12 : index
    %c0_669 = arith.constant 0 : index
    %1385 = memref.load %arg3[%c12_668, %c0_669] : memref<16x36xf32, #tpu.memory_space<smem>>
    %1386 = vector.broadcast %1385 : f32 to vector<2x142xf32>
    %1387 = arith.mulf %1386, %1368 : vector<2x142xf32>
    %1388 = arith.addf %1358, %1387 : vector<2x142xf32>
    %c13_670 = arith.constant 13 : index
    %c0_671 = arith.constant 0 : index
    %1389 = memref.load %arg3[%c13_670, %c0_671] : memref<16x36xf32, #tpu.memory_space<smem>>
    %1390 = vector.broadcast %1389 : f32 to vector<2x142xf32>
    %1391 = arith.mulf %1390, %1368 : vector<2x142xf32>
    %1392 = arith.addf %1360, %1391 : vector<2x142xf32>
    %c14_672 = arith.constant 14 : index
    %c0_673 = arith.constant 0 : index
    %1393 = memref.load %arg3[%c14_672, %c0_673] : memref<16x36xf32, #tpu.memory_space<smem>>
    %1394 = vector.broadcast %1393 : f32 to vector<2x142xf32>
    %1395 = arith.mulf %1394, %1368 : vector<2x142xf32>
    %1396 = arith.addf %1362, %1395 : vector<2x142xf32>
    %c15_674 = arith.constant 15 : index
    %c0_675 = arith.constant 0 : index
    %1397 = memref.load %arg3[%c15_674, %c0_675] : memref<16x36xf32, #tpu.memory_space<smem>>
    %1398 = vector.broadcast %1397 : f32 to vector<2x142xf32>
    %1399 = arith.mulf %1398, %1368 : vector<2x142xf32>
    %1400 = arith.addf %1364, %1399 : vector<2x142xf32>
    %1401 = vector.extract_strided_slice %1367 {offsets = [0, 1], sizes = [2, 142], strides = [1, 1]} : vector<2x144xf32> to vector<2x142xf32>
    %c8_676 = arith.constant 8 : index
    %c1_677 = arith.constant 1 : index
    %1402 = memref.load %arg3[%c8_676, %c1_677] : memref<16x36xf32, #tpu.memory_space<smem>>
    %1403 = vector.broadcast %1402 : f32 to vector<2x142xf32>
    %1404 = arith.mulf %1403, %1401 : vector<2x142xf32>
    %1405 = arith.addf %1372, %1404 : vector<2x142xf32>
    %c9_678 = arith.constant 9 : index
    %c1_679 = arith.constant 1 : index
    %1406 = memref.load %arg3[%c9_678, %c1_679] : memref<16x36xf32, #tpu.memory_space<smem>>
    %1407 = vector.broadcast %1406 : f32 to vector<2x142xf32>
    %1408 = arith.mulf %1407, %1401 : vector<2x142xf32>
    %1409 = arith.addf %1376, %1408 : vector<2x142xf32>
    %c10_680 = arith.constant 10 : index
    %c1_681 = arith.constant 1 : index
    %1410 = memref.load %arg3[%c10_680, %c1_681] : memref<16x36xf32, #tpu.memory_space<smem>>
    %1411 = vector.broadcast %1410 : f32 to vector<2x142xf32>
    %1412 = arith.mulf %1411, %1401 : vector<2x142xf32>
    %1413 = arith.addf %1380, %1412 : vector<2x142xf32>
    %c11_682 = arith.constant 11 : index
    %c1_683 = arith.constant 1 : index
    %1414 = memref.load %arg3[%c11_682, %c1_683] : memref<16x36xf32, #tpu.memory_space<smem>>
    %1415 = vector.broadcast %1414 : f32 to vector<2x142xf32>
    %1416 = arith.mulf %1415, %1401 : vector<2x142xf32>
    %1417 = arith.addf %1384, %1416 : vector<2x142xf32>
    %c12_684 = arith.constant 12 : index
    %c1_685 = arith.constant 1 : index
    %1418 = memref.load %arg3[%c12_684, %c1_685] : memref<16x36xf32, #tpu.memory_space<smem>>
    %1419 = vector.broadcast %1418 : f32 to vector<2x142xf32>
    %1420 = arith.mulf %1419, %1401 : vector<2x142xf32>
    %1421 = arith.addf %1388, %1420 : vector<2x142xf32>
    %c13_686 = arith.constant 13 : index
    %c1_687 = arith.constant 1 : index
    %1422 = memref.load %arg3[%c13_686, %c1_687] : memref<16x36xf32, #tpu.memory_space<smem>>
    %1423 = vector.broadcast %1422 : f32 to vector<2x142xf32>
    %1424 = arith.mulf %1423, %1401 : vector<2x142xf32>
    %1425 = arith.addf %1392, %1424 : vector<2x142xf32>
    %c14_688 = arith.constant 14 : index
    %c1_689 = arith.constant 1 : index
    %1426 = memref.load %arg3[%c14_688, %c1_689] : memref<16x36xf32, #tpu.memory_space<smem>>
    %1427 = vector.broadcast %1426 : f32 to vector<2x142xf32>
    %1428 = arith.mulf %1427, %1401 : vector<2x142xf32>
    %1429 = arith.addf %1396, %1428 : vector<2x142xf32>
    %c15_690 = arith.constant 15 : index
    %c1_691 = arith.constant 1 : index
    %1430 = memref.load %arg3[%c15_690, %c1_691] : memref<16x36xf32, #tpu.memory_space<smem>>
    %1431 = vector.broadcast %1430 : f32 to vector<2x142xf32>
    %1432 = arith.mulf %1431, %1401 : vector<2x142xf32>
    %1433 = arith.addf %1400, %1432 : vector<2x142xf32>
    %1434 = vector.extract_strided_slice %1367 {offsets = [0, 2], sizes = [2, 142], strides = [1, 1]} : vector<2x144xf32> to vector<2x142xf32>
    %c8_692 = arith.constant 8 : index
    %c2_693 = arith.constant 2 : index
    %1435 = memref.load %arg3[%c8_692, %c2_693] : memref<16x36xf32, #tpu.memory_space<smem>>
    %1436 = vector.broadcast %1435 : f32 to vector<2x142xf32>
    %1437 = arith.mulf %1436, %1434 : vector<2x142xf32>
    %1438 = arith.addf %1405, %1437 : vector<2x142xf32>
    %c9_694 = arith.constant 9 : index
    %c2_695 = arith.constant 2 : index
    %1439 = memref.load %arg3[%c9_694, %c2_695] : memref<16x36xf32, #tpu.memory_space<smem>>
    %1440 = vector.broadcast %1439 : f32 to vector<2x142xf32>
    %1441 = arith.mulf %1440, %1434 : vector<2x142xf32>
    %1442 = arith.addf %1409, %1441 : vector<2x142xf32>
    %c10_696 = arith.constant 10 : index
    %c2_697 = arith.constant 2 : index
    %1443 = memref.load %arg3[%c10_696, %c2_697] : memref<16x36xf32, #tpu.memory_space<smem>>
    %1444 = vector.broadcast %1443 : f32 to vector<2x142xf32>
    %1445 = arith.mulf %1444, %1434 : vector<2x142xf32>
    %1446 = arith.addf %1413, %1445 : vector<2x142xf32>
    %c11_698 = arith.constant 11 : index
    %c2_699 = arith.constant 2 : index
    %1447 = memref.load %arg3[%c11_698, %c2_699] : memref<16x36xf32, #tpu.memory_space<smem>>
    %1448 = vector.broadcast %1447 : f32 to vector<2x142xf32>
    %1449 = arith.mulf %1448, %1434 : vector<2x142xf32>
    %1450 = arith.addf %1417, %1449 : vector<2x142xf32>
    %c12_700 = arith.constant 12 : index
    %c2_701 = arith.constant 2 : index
    %1451 = memref.load %arg3[%c12_700, %c2_701] : memref<16x36xf32, #tpu.memory_space<smem>>
    %1452 = vector.broadcast %1451 : f32 to vector<2x142xf32>
    %1453 = arith.mulf %1452, %1434 : vector<2x142xf32>
    %1454 = arith.addf %1421, %1453 : vector<2x142xf32>
    %c13_702 = arith.constant 13 : index
    %c2_703 = arith.constant 2 : index
    %1455 = memref.load %arg3[%c13_702, %c2_703] : memref<16x36xf32, #tpu.memory_space<smem>>
    %1456 = vector.broadcast %1455 : f32 to vector<2x142xf32>
    %1457 = arith.mulf %1456, %1434 : vector<2x142xf32>
    %1458 = arith.addf %1425, %1457 : vector<2x142xf32>
    %c14_704 = arith.constant 14 : index
    %c2_705 = arith.constant 2 : index
    %1459 = memref.load %arg3[%c14_704, %c2_705] : memref<16x36xf32, #tpu.memory_space<smem>>
    %1460 = vector.broadcast %1459 : f32 to vector<2x142xf32>
    %1461 = arith.mulf %1460, %1434 : vector<2x142xf32>
    %1462 = arith.addf %1429, %1461 : vector<2x142xf32>
    %c15_706 = arith.constant 15 : index
    %c2_707 = arith.constant 2 : index
    %1463 = memref.load %arg3[%c15_706, %c2_707] : memref<16x36xf32, #tpu.memory_space<smem>>
    %1464 = vector.broadcast %1463 : f32 to vector<2x142xf32>
    %1465 = arith.mulf %1464, %1434 : vector<2x142xf32>
    %1466 = arith.addf %1433, %1465 : vector<2x142xf32>
    %c0_708 = arith.constant 0 : index
    %c0_709 = arith.constant 0 : index
    %c0_710 = arith.constant 0 : index
    %c1_711 = arith.constant 1 : index
    %c0_712 = arith.constant 0 : index
    %1467 = vector.load %arg2[%c0_708, %c0_709, %c0_710, %c1_711, %c0_712] : memref<1x1x4x4x144xbf16, #tpu.memory_space<vmem>>, vector<1x1x1x2x144xbf16>
    %1468 = vector.shape_cast %1467 : vector<1x1x1x2x144xbf16> to vector<2x144xbf16>
    %1469 = arith.extf %1468 : vector<2x144xbf16> to vector<2x144xf32>
    %1470 = vector.extract_strided_slice %1469 {offsets = [0, 0], sizes = [2, 142], strides = [1, 1]} : vector<2x144xf32> to vector<2x142xf32>
    %c8_713 = arith.constant 8 : index
    %c3_714 = arith.constant 3 : index
    %1471 = memref.load %arg3[%c8_713, %c3_714] : memref<16x36xf32, #tpu.memory_space<smem>>
    %1472 = vector.broadcast %1471 : f32 to vector<2x142xf32>
    %1473 = arith.mulf %1472, %1470 : vector<2x142xf32>
    %1474 = arith.addf %1438, %1473 : vector<2x142xf32>
    %c9_715 = arith.constant 9 : index
    %c3_716 = arith.constant 3 : index
    %1475 = memref.load %arg3[%c9_715, %c3_716] : memref<16x36xf32, #tpu.memory_space<smem>>
    %1476 = vector.broadcast %1475 : f32 to vector<2x142xf32>
    %1477 = arith.mulf %1476, %1470 : vector<2x142xf32>
    %1478 = arith.addf %1442, %1477 : vector<2x142xf32>
    %c10_717 = arith.constant 10 : index
    %c3_718 = arith.constant 3 : index
    %1479 = memref.load %arg3[%c10_717, %c3_718] : memref<16x36xf32, #tpu.memory_space<smem>>
    %1480 = vector.broadcast %1479 : f32 to vector<2x142xf32>
    %1481 = arith.mulf %1480, %1470 : vector<2x142xf32>
    %1482 = arith.addf %1446, %1481 : vector<2x142xf32>
    %c11_719 = arith.constant 11 : index
    %c3_720 = arith.constant 3 : index
    %1483 = memref.load %arg3[%c11_719, %c3_720] : memref<16x36xf32, #tpu.memory_space<smem>>
    %1484 = vector.broadcast %1483 : f32 to vector<2x142xf32>
    %1485 = arith.mulf %1484, %1470 : vector<2x142xf32>
    %1486 = arith.addf %1450, %1485 : vector<2x142xf32>
    %c12_721 = arith.constant 12 : index
    %c3_722 = arith.constant 3 : index
    %1487 = memref.load %arg3[%c12_721, %c3_722] : memref<16x36xf32, #tpu.memory_space<smem>>
    %1488 = vector.broadcast %1487 : f32 to vector<2x142xf32>
    %1489 = arith.mulf %1488, %1470 : vector<2x142xf32>
    %1490 = arith.addf %1454, %1489 : vector<2x142xf32>
    %c13_723 = arith.constant 13 : index
    %c3_724 = arith.constant 3 : index
    %1491 = memref.load %arg3[%c13_723, %c3_724] : memref<16x36xf32, #tpu.memory_space<smem>>
    %1492 = vector.broadcast %1491 : f32 to vector<2x142xf32>
    %1493 = arith.mulf %1492, %1470 : vector<2x142xf32>
    %1494 = arith.addf %1458, %1493 : vector<2x142xf32>
    %c14_725 = arith.constant 14 : index
    %c3_726 = arith.constant 3 : index
    %1495 = memref.load %arg3[%c14_725, %c3_726] : memref<16x36xf32, #tpu.memory_space<smem>>
    %1496 = vector.broadcast %1495 : f32 to vector<2x142xf32>
    %1497 = arith.mulf %1496, %1470 : vector<2x142xf32>
    %1498 = arith.addf %1462, %1497 : vector<2x142xf32>
    %c15_727 = arith.constant 15 : index
    %c3_728 = arith.constant 3 : index
    %1499 = memref.load %arg3[%c15_727, %c3_728] : memref<16x36xf32, #tpu.memory_space<smem>>
    %1500 = vector.broadcast %1499 : f32 to vector<2x142xf32>
    %1501 = arith.mulf %1500, %1470 : vector<2x142xf32>
    %1502 = arith.addf %1466, %1501 : vector<2x142xf32>
    %1503 = vector.extract_strided_slice %1469 {offsets = [0, 1], sizes = [2, 142], strides = [1, 1]} : vector<2x144xf32> to vector<2x142xf32>
    %c8_729 = arith.constant 8 : index
    %c4_730 = arith.constant 4 : index
    %1504 = memref.load %arg3[%c8_729, %c4_730] : memref<16x36xf32, #tpu.memory_space<smem>>
    %1505 = vector.broadcast %1504 : f32 to vector<2x142xf32>
    %1506 = arith.mulf %1505, %1503 : vector<2x142xf32>
    %1507 = arith.addf %1474, %1506 : vector<2x142xf32>
    %c9_731 = arith.constant 9 : index
    %c4_732 = arith.constant 4 : index
    %1508 = memref.load %arg3[%c9_731, %c4_732] : memref<16x36xf32, #tpu.memory_space<smem>>
    %1509 = vector.broadcast %1508 : f32 to vector<2x142xf32>
    %1510 = arith.mulf %1509, %1503 : vector<2x142xf32>
    %1511 = arith.addf %1478, %1510 : vector<2x142xf32>
    %c10_733 = arith.constant 10 : index
    %c4_734 = arith.constant 4 : index
    %1512 = memref.load %arg3[%c10_733, %c4_734] : memref<16x36xf32, #tpu.memory_space<smem>>
    %1513 = vector.broadcast %1512 : f32 to vector<2x142xf32>
    %1514 = arith.mulf %1513, %1503 : vector<2x142xf32>
    %1515 = arith.addf %1482, %1514 : vector<2x142xf32>
    %c11_735 = arith.constant 11 : index
    %c4_736 = arith.constant 4 : index
    %1516 = memref.load %arg3[%c11_735, %c4_736] : memref<16x36xf32, #tpu.memory_space<smem>>
    %1517 = vector.broadcast %1516 : f32 to vector<2x142xf32>
    %1518 = arith.mulf %1517, %1503 : vector<2x142xf32>
    %1519 = arith.addf %1486, %1518 : vector<2x142xf32>
    %c12_737 = arith.constant 12 : index
    %c4_738 = arith.constant 4 : index
    %1520 = memref.load %arg3[%c12_737, %c4_738] : memref<16x36xf32, #tpu.memory_space<smem>>
    %1521 = vector.broadcast %1520 : f32 to vector<2x142xf32>
    %1522 = arith.mulf %1521, %1503 : vector<2x142xf32>
    %1523 = arith.addf %1490, %1522 : vector<2x142xf32>
    %c13_739 = arith.constant 13 : index
    %c4_740 = arith.constant 4 : index
    %1524 = memref.load %arg3[%c13_739, %c4_740] : memref<16x36xf32, #tpu.memory_space<smem>>
    %1525 = vector.broadcast %1524 : f32 to vector<2x142xf32>
    %1526 = arith.mulf %1525, %1503 : vector<2x142xf32>
    %1527 = arith.addf %1494, %1526 : vector<2x142xf32>
    %c14_741 = arith.constant 14 : index
    %c4_742 = arith.constant 4 : index
    %1528 = memref.load %arg3[%c14_741, %c4_742] : memref<16x36xf32, #tpu.memory_space<smem>>
    %1529 = vector.broadcast %1528 : f32 to vector<2x142xf32>
    %1530 = arith.mulf %1529, %1503 : vector<2x142xf32>
    %1531 = arith.addf %1498, %1530 : vector<2x142xf32>
    %c15_743 = arith.constant 15 : index
    %c4_744 = arith.constant 4 : index
    %1532 = memref.load %arg3[%c15_743, %c4_744] : memref<16x36xf32, #tpu.memory_space<smem>>
    %1533 = vector.broadcast %1532 : f32 to vector<2x142xf32>
    %1534 = arith.mulf %1533, %1503 : vector<2x142xf32>
    %1535 = arith.addf %1502, %1534 : vector<2x142xf32>
    %1536 = vector.extract_strided_slice %1469 {offsets = [0, 2], sizes = [2, 142], strides = [1, 1]} : vector<2x144xf32> to vector<2x142xf32>
    %c8_745 = arith.constant 8 : index
    %c5_746 = arith.constant 5 : index
    %1537 = memref.load %arg3[%c8_745, %c5_746] : memref<16x36xf32, #tpu.memory_space<smem>>
    %1538 = vector.broadcast %1537 : f32 to vector<2x142xf32>
    %1539 = arith.mulf %1538, %1536 : vector<2x142xf32>
    %1540 = arith.addf %1507, %1539 : vector<2x142xf32>
    %c9_747 = arith.constant 9 : index
    %c5_748 = arith.constant 5 : index
    %1541 = memref.load %arg3[%c9_747, %c5_748] : memref<16x36xf32, #tpu.memory_space<smem>>
    %1542 = vector.broadcast %1541 : f32 to vector<2x142xf32>
    %1543 = arith.mulf %1542, %1536 : vector<2x142xf32>
    %1544 = arith.addf %1511, %1543 : vector<2x142xf32>
    %c10_749 = arith.constant 10 : index
    %c5_750 = arith.constant 5 : index
    %1545 = memref.load %arg3[%c10_749, %c5_750] : memref<16x36xf32, #tpu.memory_space<smem>>
    %1546 = vector.broadcast %1545 : f32 to vector<2x142xf32>
    %1547 = arith.mulf %1546, %1536 : vector<2x142xf32>
    %1548 = arith.addf %1515, %1547 : vector<2x142xf32>
    %c11_751 = arith.constant 11 : index
    %c5_752 = arith.constant 5 : index
    %1549 = memref.load %arg3[%c11_751, %c5_752] : memref<16x36xf32, #tpu.memory_space<smem>>
    %1550 = vector.broadcast %1549 : f32 to vector<2x142xf32>
    %1551 = arith.mulf %1550, %1536 : vector<2x142xf32>
    %1552 = arith.addf %1519, %1551 : vector<2x142xf32>
    %c12_753 = arith.constant 12 : index
    %c5_754 = arith.constant 5 : index
    %1553 = memref.load %arg3[%c12_753, %c5_754] : memref<16x36xf32, #tpu.memory_space<smem>>
    %1554 = vector.broadcast %1553 : f32 to vector<2x142xf32>
    %1555 = arith.mulf %1554, %1536 : vector<2x142xf32>
    %1556 = arith.addf %1523, %1555 : vector<2x142xf32>
    %c13_755 = arith.constant 13 : index
    %c5_756 = arith.constant 5 : index
    %1557 = memref.load %arg3[%c13_755, %c5_756] : memref<16x36xf32, #tpu.memory_space<smem>>
    %1558 = vector.broadcast %1557 : f32 to vector<2x142xf32>
    %1559 = arith.mulf %1558, %1536 : vector<2x142xf32>
    %1560 = arith.addf %1527, %1559 : vector<2x142xf32>
    %c14_757 = arith.constant 14 : index
    %c5_758 = arith.constant 5 : index
    %1561 = memref.load %arg3[%c14_757, %c5_758] : memref<16x36xf32, #tpu.memory_space<smem>>
    %1562 = vector.broadcast %1561 : f32 to vector<2x142xf32>
    %1563 = arith.mulf %1562, %1536 : vector<2x142xf32>
    %1564 = arith.addf %1531, %1563 : vector<2x142xf32>
    %c15_759 = arith.constant 15 : index
    %c5_760 = arith.constant 5 : index
    %1565 = memref.load %arg3[%c15_759, %c5_760] : memref<16x36xf32, #tpu.memory_space<smem>>
    %1566 = vector.broadcast %1565 : f32 to vector<2x142xf32>
    %1567 = arith.mulf %1566, %1536 : vector<2x142xf32>
    %1568 = arith.addf %1535, %1567 : vector<2x142xf32>
    %c0_761 = arith.constant 0 : index
    %c0_762 = arith.constant 0 : index
    %c0_763 = arith.constant 0 : index
    %c2_764 = arith.constant 2 : index
    %c0_765 = arith.constant 0 : index
    %1569 = vector.load %arg2[%c0_761, %c0_762, %c0_763, %c2_764, %c0_765] : memref<1x1x4x4x144xbf16, #tpu.memory_space<vmem>>, vector<1x1x1x2x144xbf16>
    %1570 = vector.shape_cast %1569 : vector<1x1x1x2x144xbf16> to vector<2x144xbf16>
    %1571 = arith.extf %1570 : vector<2x144xbf16> to vector<2x144xf32>
    %1572 = vector.extract_strided_slice %1571 {offsets = [0, 0], sizes = [2, 142], strides = [1, 1]} : vector<2x144xf32> to vector<2x142xf32>
    %c8_766 = arith.constant 8 : index
    %c6_767 = arith.constant 6 : index
    %1573 = memref.load %arg3[%c8_766, %c6_767] : memref<16x36xf32, #tpu.memory_space<smem>>
    %1574 = vector.broadcast %1573 : f32 to vector<2x142xf32>
    %1575 = arith.mulf %1574, %1572 : vector<2x142xf32>
    %1576 = arith.addf %1540, %1575 : vector<2x142xf32>
    %c9_768 = arith.constant 9 : index
    %c6_769 = arith.constant 6 : index
    %1577 = memref.load %arg3[%c9_768, %c6_769] : memref<16x36xf32, #tpu.memory_space<smem>>
    %1578 = vector.broadcast %1577 : f32 to vector<2x142xf32>
    %1579 = arith.mulf %1578, %1572 : vector<2x142xf32>
    %1580 = arith.addf %1544, %1579 : vector<2x142xf32>
    %c10_770 = arith.constant 10 : index
    %c6_771 = arith.constant 6 : index
    %1581 = memref.load %arg3[%c10_770, %c6_771] : memref<16x36xf32, #tpu.memory_space<smem>>
    %1582 = vector.broadcast %1581 : f32 to vector<2x142xf32>
    %1583 = arith.mulf %1582, %1572 : vector<2x142xf32>
    %1584 = arith.addf %1548, %1583 : vector<2x142xf32>
    %c11_772 = arith.constant 11 : index
    %c6_773 = arith.constant 6 : index
    %1585 = memref.load %arg3[%c11_772, %c6_773] : memref<16x36xf32, #tpu.memory_space<smem>>
    %1586 = vector.broadcast %1585 : f32 to vector<2x142xf32>
    %1587 = arith.mulf %1586, %1572 : vector<2x142xf32>
    %1588 = arith.addf %1552, %1587 : vector<2x142xf32>
    %c12_774 = arith.constant 12 : index
    %c6_775 = arith.constant 6 : index
    %1589 = memref.load %arg3[%c12_774, %c6_775] : memref<16x36xf32, #tpu.memory_space<smem>>
    %1590 = vector.broadcast %1589 : f32 to vector<2x142xf32>
    %1591 = arith.mulf %1590, %1572 : vector<2x142xf32>
    %1592 = arith.addf %1556, %1591 : vector<2x142xf32>
    %c13_776 = arith.constant 13 : index
    %c6_777 = arith.constant 6 : index
    %1593 = memref.load %arg3[%c13_776, %c6_777] : memref<16x36xf32, #tpu.memory_space<smem>>
    %1594 = vector.broadcast %1593 : f32 to vector<2x142xf32>
    %1595 = arith.mulf %1594, %1572 : vector<2x142xf32>
    %1596 = arith.addf %1560, %1595 : vector<2x142xf32>
    %c14_778 = arith.constant 14 : index
    %c6_779 = arith.constant 6 : index
    %1597 = memref.load %arg3[%c14_778, %c6_779] : memref<16x36xf32, #tpu.memory_space<smem>>
    %1598 = vector.broadcast %1597 : f32 to vector<2x142xf32>
    %1599 = arith.mulf %1598, %1572 : vector<2x142xf32>
    %1600 = arith.addf %1564, %1599 : vector<2x142xf32>
    %c15_780 = arith.constant 15 : index
    %c6_781 = arith.constant 6 : index
    %1601 = memref.load %arg3[%c15_780, %c6_781] : memref<16x36xf32, #tpu.memory_space<smem>>
    %1602 = vector.broadcast %1601 : f32 to vector<2x142xf32>
    %1603 = arith.mulf %1602, %1572 : vector<2x142xf32>
    %1604 = arith.addf %1568, %1603 : vector<2x142xf32>
    %1605 = vector.extract_strided_slice %1571 {offsets = [0, 1], sizes = [2, 142], strides = [1, 1]} : vector<2x144xf32> to vector<2x142xf32>
    %c8_782 = arith.constant 8 : index
    %c7_783 = arith.constant 7 : index
    %1606 = memref.load %arg3[%c8_782, %c7_783] : memref<16x36xf32, #tpu.memory_space<smem>>
    %1607 = vector.broadcast %1606 : f32 to vector<2x142xf32>
    %1608 = arith.mulf %1607, %1605 : vector<2x142xf32>
    %1609 = arith.addf %1576, %1608 : vector<2x142xf32>
    %c9_784 = arith.constant 9 : index
    %c7_785 = arith.constant 7 : index
    %1610 = memref.load %arg3[%c9_784, %c7_785] : memref<16x36xf32, #tpu.memory_space<smem>>
    %1611 = vector.broadcast %1610 : f32 to vector<2x142xf32>
    %1612 = arith.mulf %1611, %1605 : vector<2x142xf32>
    %1613 = arith.addf %1580, %1612 : vector<2x142xf32>
    %c10_786 = arith.constant 10 : index
    %c7_787 = arith.constant 7 : index
    %1614 = memref.load %arg3[%c10_786, %c7_787] : memref<16x36xf32, #tpu.memory_space<smem>>
    %1615 = vector.broadcast %1614 : f32 to vector<2x142xf32>
    %1616 = arith.mulf %1615, %1605 : vector<2x142xf32>
    %1617 = arith.addf %1584, %1616 : vector<2x142xf32>
    %c11_788 = arith.constant 11 : index
    %c7_789 = arith.constant 7 : index
    %1618 = memref.load %arg3[%c11_788, %c7_789] : memref<16x36xf32, #tpu.memory_space<smem>>
    %1619 = vector.broadcast %1618 : f32 to vector<2x142xf32>
    %1620 = arith.mulf %1619, %1605 : vector<2x142xf32>
    %1621 = arith.addf %1588, %1620 : vector<2x142xf32>
    %c12_790 = arith.constant 12 : index
    %c7_791 = arith.constant 7 : index
    %1622 = memref.load %arg3[%c12_790, %c7_791] : memref<16x36xf32, #tpu.memory_space<smem>>
    %1623 = vector.broadcast %1622 : f32 to vector<2x142xf32>
    %1624 = arith.mulf %1623, %1605 : vector<2x142xf32>
    %1625 = arith.addf %1592, %1624 : vector<2x142xf32>
    %c13_792 = arith.constant 13 : index
    %c7_793 = arith.constant 7 : index
    %1626 = memref.load %arg3[%c13_792, %c7_793] : memref<16x36xf32, #tpu.memory_space<smem>>
    %1627 = vector.broadcast %1626 : f32 to vector<2x142xf32>
    %1628 = arith.mulf %1627, %1605 : vector<2x142xf32>
    %1629 = arith.addf %1596, %1628 : vector<2x142xf32>
    %c14_794 = arith.constant 14 : index
    %c7_795 = arith.constant 7 : index
    %1630 = memref.load %arg3[%c14_794, %c7_795] : memref<16x36xf32, #tpu.memory_space<smem>>
    %1631 = vector.broadcast %1630 : f32 to vector<2x142xf32>
    %1632 = arith.mulf %1631, %1605 : vector<2x142xf32>
    %1633 = arith.addf %1600, %1632 : vector<2x142xf32>
    %c15_796 = arith.constant 15 : index
    %c7_797 = arith.constant 7 : index
    %1634 = memref.load %arg3[%c15_796, %c7_797] : memref<16x36xf32, #tpu.memory_space<smem>>
    %1635 = vector.broadcast %1634 : f32 to vector<2x142xf32>
    %1636 = arith.mulf %1635, %1605 : vector<2x142xf32>
    %1637 = arith.addf %1604, %1636 : vector<2x142xf32>
    %1638 = vector.extract_strided_slice %1571 {offsets = [0, 2], sizes = [2, 142], strides = [1, 1]} : vector<2x144xf32> to vector<2x142xf32>
    %c8_798 = arith.constant 8 : index
    %c8_799 = arith.constant 8 : index
    %1639 = memref.load %arg3[%c8_798, %c8_799] : memref<16x36xf32, #tpu.memory_space<smem>>
    %1640 = vector.broadcast %1639 : f32 to vector<2x142xf32>
    %1641 = arith.mulf %1640, %1638 : vector<2x142xf32>
    %1642 = arith.addf %1609, %1641 : vector<2x142xf32>
    %c9_800 = arith.constant 9 : index
    %c8_801 = arith.constant 8 : index
    %1643 = memref.load %arg3[%c9_800, %c8_801] : memref<16x36xf32, #tpu.memory_space<smem>>
    %1644 = vector.broadcast %1643 : f32 to vector<2x142xf32>
    %1645 = arith.mulf %1644, %1638 : vector<2x142xf32>
    %1646 = arith.addf %1613, %1645 : vector<2x142xf32>
    %c10_802 = arith.constant 10 : index
    %c8_803 = arith.constant 8 : index
    %1647 = memref.load %arg3[%c10_802, %c8_803] : memref<16x36xf32, #tpu.memory_space<smem>>
    %1648 = vector.broadcast %1647 : f32 to vector<2x142xf32>
    %1649 = arith.mulf %1648, %1638 : vector<2x142xf32>
    %1650 = arith.addf %1617, %1649 : vector<2x142xf32>
    %c11_804 = arith.constant 11 : index
    %c8_805 = arith.constant 8 : index
    %1651 = memref.load %arg3[%c11_804, %c8_805] : memref<16x36xf32, #tpu.memory_space<smem>>
    %1652 = vector.broadcast %1651 : f32 to vector<2x142xf32>
    %1653 = arith.mulf %1652, %1638 : vector<2x142xf32>
    %1654 = arith.addf %1621, %1653 : vector<2x142xf32>
    %c12_806 = arith.constant 12 : index
    %c8_807 = arith.constant 8 : index
    %1655 = memref.load %arg3[%c12_806, %c8_807] : memref<16x36xf32, #tpu.memory_space<smem>>
    %1656 = vector.broadcast %1655 : f32 to vector<2x142xf32>
    %1657 = arith.mulf %1656, %1638 : vector<2x142xf32>
    %1658 = arith.addf %1625, %1657 : vector<2x142xf32>
    %c13_808 = arith.constant 13 : index
    %c8_809 = arith.constant 8 : index
    %1659 = memref.load %arg3[%c13_808, %c8_809] : memref<16x36xf32, #tpu.memory_space<smem>>
    %1660 = vector.broadcast %1659 : f32 to vector<2x142xf32>
    %1661 = arith.mulf %1660, %1638 : vector<2x142xf32>
    %1662 = arith.addf %1629, %1661 : vector<2x142xf32>
    %c14_810 = arith.constant 14 : index
    %c8_811 = arith.constant 8 : index
    %1663 = memref.load %arg3[%c14_810, %c8_811] : memref<16x36xf32, #tpu.memory_space<smem>>
    %1664 = vector.broadcast %1663 : f32 to vector<2x142xf32>
    %1665 = arith.mulf %1664, %1638 : vector<2x142xf32>
    %1666 = arith.addf %1633, %1665 : vector<2x142xf32>
    %c15_812 = arith.constant 15 : index
    %c8_813 = arith.constant 8 : index
    %1667 = memref.load %arg3[%c15_812, %c8_813] : memref<16x36xf32, #tpu.memory_space<smem>>
    %1668 = vector.broadcast %1667 : f32 to vector<2x142xf32>
    %1669 = arith.mulf %1668, %1638 : vector<2x142xf32>
    %1670 = arith.addf %1637, %1669 : vector<2x142xf32>
    %c0_814 = arith.constant 0 : index
    %c0_815 = arith.constant 0 : index
    %c1_816 = arith.constant 1 : index
    %c0_817 = arith.constant 0 : index
    %c0_818 = arith.constant 0 : index
    %1671 = vector.load %arg2[%c0_814, %c0_815, %c1_816, %c0_817, %c0_818] : memref<1x1x4x4x144xbf16, #tpu.memory_space<vmem>>, vector<1x1x1x2x144xbf16>
    %1672 = vector.shape_cast %1671 : vector<1x1x1x2x144xbf16> to vector<2x144xbf16>
    %1673 = arith.extf %1672 : vector<2x144xbf16> to vector<2x144xf32>
    %1674 = vector.extract_strided_slice %1673 {offsets = [0, 0], sizes = [2, 142], strides = [1, 1]} : vector<2x144xf32> to vector<2x142xf32>
    %c8_819 = arith.constant 8 : index
    %c9_820 = arith.constant 9 : index
    %1675 = memref.load %arg3[%c8_819, %c9_820] : memref<16x36xf32, #tpu.memory_space<smem>>
    %1676 = vector.broadcast %1675 : f32 to vector<2x142xf32>
    %1677 = arith.mulf %1676, %1674 : vector<2x142xf32>
    %1678 = arith.addf %1642, %1677 : vector<2x142xf32>
    %c9_821 = arith.constant 9 : index
    %c9_822 = arith.constant 9 : index
    %1679 = memref.load %arg3[%c9_821, %c9_822] : memref<16x36xf32, #tpu.memory_space<smem>>
    %1680 = vector.broadcast %1679 : f32 to vector<2x142xf32>
    %1681 = arith.mulf %1680, %1674 : vector<2x142xf32>
    %1682 = arith.addf %1646, %1681 : vector<2x142xf32>
    %c10_823 = arith.constant 10 : index
    %c9_824 = arith.constant 9 : index
    %1683 = memref.load %arg3[%c10_823, %c9_824] : memref<16x36xf32, #tpu.memory_space<smem>>
    %1684 = vector.broadcast %1683 : f32 to vector<2x142xf32>
    %1685 = arith.mulf %1684, %1674 : vector<2x142xf32>
    %1686 = arith.addf %1650, %1685 : vector<2x142xf32>
    %c11_825 = arith.constant 11 : index
    %c9_826 = arith.constant 9 : index
    %1687 = memref.load %arg3[%c11_825, %c9_826] : memref<16x36xf32, #tpu.memory_space<smem>>
    %1688 = vector.broadcast %1687 : f32 to vector<2x142xf32>
    %1689 = arith.mulf %1688, %1674 : vector<2x142xf32>
    %1690 = arith.addf %1654, %1689 : vector<2x142xf32>
    %c12_827 = arith.constant 12 : index
    %c9_828 = arith.constant 9 : index
    %1691 = memref.load %arg3[%c12_827, %c9_828] : memref<16x36xf32, #tpu.memory_space<smem>>
    %1692 = vector.broadcast %1691 : f32 to vector<2x142xf32>
    %1693 = arith.mulf %1692, %1674 : vector<2x142xf32>
    %1694 = arith.addf %1658, %1693 : vector<2x142xf32>
    %c13_829 = arith.constant 13 : index
    %c9_830 = arith.constant 9 : index
    %1695 = memref.load %arg3[%c13_829, %c9_830] : memref<16x36xf32, #tpu.memory_space<smem>>
    %1696 = vector.broadcast %1695 : f32 to vector<2x142xf32>
    %1697 = arith.mulf %1696, %1674 : vector<2x142xf32>
    %1698 = arith.addf %1662, %1697 : vector<2x142xf32>
    %c14_831 = arith.constant 14 : index
    %c9_832 = arith.constant 9 : index
    %1699 = memref.load %arg3[%c14_831, %c9_832] : memref<16x36xf32, #tpu.memory_space<smem>>
    %1700 = vector.broadcast %1699 : f32 to vector<2x142xf32>
    %1701 = arith.mulf %1700, %1674 : vector<2x142xf32>
    %1702 = arith.addf %1666, %1701 : vector<2x142xf32>
    %c15_833 = arith.constant 15 : index
    %c9_834 = arith.constant 9 : index
    %1703 = memref.load %arg3[%c15_833, %c9_834] : memref<16x36xf32, #tpu.memory_space<smem>>
    %1704 = vector.broadcast %1703 : f32 to vector<2x142xf32>
    %1705 = arith.mulf %1704, %1674 : vector<2x142xf32>
    %1706 = arith.addf %1670, %1705 : vector<2x142xf32>
    %1707 = vector.extract_strided_slice %1673 {offsets = [0, 1], sizes = [2, 142], strides = [1, 1]} : vector<2x144xf32> to vector<2x142xf32>
    %c8_835 = arith.constant 8 : index
    %c10_836 = arith.constant 10 : index
    %1708 = memref.load %arg3[%c8_835, %c10_836] : memref<16x36xf32, #tpu.memory_space<smem>>
    %1709 = vector.broadcast %1708 : f32 to vector<2x142xf32>
    %1710 = arith.mulf %1709, %1707 : vector<2x142xf32>
    %1711 = arith.addf %1678, %1710 : vector<2x142xf32>
    %c9_837 = arith.constant 9 : index
    %c10_838 = arith.constant 10 : index
    %1712 = memref.load %arg3[%c9_837, %c10_838] : memref<16x36xf32, #tpu.memory_space<smem>>
    %1713 = vector.broadcast %1712 : f32 to vector<2x142xf32>
    %1714 = arith.mulf %1713, %1707 : vector<2x142xf32>
    %1715 = arith.addf %1682, %1714 : vector<2x142xf32>
    %c10_839 = arith.constant 10 : index
    %c10_840 = arith.constant 10 : index
    %1716 = memref.load %arg3[%c10_839, %c10_840] : memref<16x36xf32, #tpu.memory_space<smem>>
    %1717 = vector.broadcast %1716 : f32 to vector<2x142xf32>
    %1718 = arith.mulf %1717, %1707 : vector<2x142xf32>
    %1719 = arith.addf %1686, %1718 : vector<2x142xf32>
    %c11_841 = arith.constant 11 : index
    %c10_842 = arith.constant 10 : index
    %1720 = memref.load %arg3[%c11_841, %c10_842] : memref<16x36xf32, #tpu.memory_space<smem>>
    %1721 = vector.broadcast %1720 : f32 to vector<2x142xf32>
    %1722 = arith.mulf %1721, %1707 : vector<2x142xf32>
    %1723 = arith.addf %1690, %1722 : vector<2x142xf32>
    %c12_843 = arith.constant 12 : index
    %c10_844 = arith.constant 10 : index
    %1724 = memref.load %arg3[%c12_843, %c10_844] : memref<16x36xf32, #tpu.memory_space<smem>>
    %1725 = vector.broadcast %1724 : f32 to vector<2x142xf32>
    %1726 = arith.mulf %1725, %1707 : vector<2x142xf32>
    %1727 = arith.addf %1694, %1726 : vector<2x142xf32>
    %c13_845 = arith.constant 13 : index
    %c10_846 = arith.constant 10 : index
    %1728 = memref.load %arg3[%c13_845, %c10_846] : memref<16x36xf32, #tpu.memory_space<smem>>
    %1729 = vector.broadcast %1728 : f32 to vector<2x142xf32>
    %1730 = arith.mulf %1729, %1707 : vector<2x142xf32>
    %1731 = arith.addf %1698, %1730 : vector<2x142xf32>
    %c14_847 = arith.constant 14 : index
    %c10_848 = arith.constant 10 : index
    %1732 = memref.load %arg3[%c14_847, %c10_848] : memref<16x36xf32, #tpu.memory_space<smem>>
    %1733 = vector.broadcast %1732 : f32 to vector<2x142xf32>
    %1734 = arith.mulf %1733, %1707 : vector<2x142xf32>
    %1735 = arith.addf %1702, %1734 : vector<2x142xf32>
    %c15_849 = arith.constant 15 : index
    %c10_850 = arith.constant 10 : index
    %1736 = memref.load %arg3[%c15_849, %c10_850] : memref<16x36xf32, #tpu.memory_space<smem>>
    %1737 = vector.broadcast %1736 : f32 to vector<2x142xf32>
    %1738 = arith.mulf %1737, %1707 : vector<2x142xf32>
    %1739 = arith.addf %1706, %1738 : vector<2x142xf32>
    %1740 = vector.extract_strided_slice %1673 {offsets = [0, 2], sizes = [2, 142], strides = [1, 1]} : vector<2x144xf32> to vector<2x142xf32>
    %c8_851 = arith.constant 8 : index
    %c11_852 = arith.constant 11 : index
    %1741 = memref.load %arg3[%c8_851, %c11_852] : memref<16x36xf32, #tpu.memory_space<smem>>
    %1742 = vector.broadcast %1741 : f32 to vector<2x142xf32>
    %1743 = arith.mulf %1742, %1740 : vector<2x142xf32>
    %1744 = arith.addf %1711, %1743 : vector<2x142xf32>
    %c9_853 = arith.constant 9 : index
    %c11_854 = arith.constant 11 : index
    %1745 = memref.load %arg3[%c9_853, %c11_854] : memref<16x36xf32, #tpu.memory_space<smem>>
    %1746 = vector.broadcast %1745 : f32 to vector<2x142xf32>
    %1747 = arith.mulf %1746, %1740 : vector<2x142xf32>
    %1748 = arith.addf %1715, %1747 : vector<2x142xf32>
    %c10_855 = arith.constant 10 : index
    %c11_856 = arith.constant 11 : index
    %1749 = memref.load %arg3[%c10_855, %c11_856] : memref<16x36xf32, #tpu.memory_space<smem>>
    %1750 = vector.broadcast %1749 : f32 to vector<2x142xf32>
    %1751 = arith.mulf %1750, %1740 : vector<2x142xf32>
    %1752 = arith.addf %1719, %1751 : vector<2x142xf32>
    %c11_857 = arith.constant 11 : index
    %c11_858 = arith.constant 11 : index
    %1753 = memref.load %arg3[%c11_857, %c11_858] : memref<16x36xf32, #tpu.memory_space<smem>>
    %1754 = vector.broadcast %1753 : f32 to vector<2x142xf32>
    %1755 = arith.mulf %1754, %1740 : vector<2x142xf32>
    %1756 = arith.addf %1723, %1755 : vector<2x142xf32>
    %c12_859 = arith.constant 12 : index
    %c11_860 = arith.constant 11 : index
    %1757 = memref.load %arg3[%c12_859, %c11_860] : memref<16x36xf32, #tpu.memory_space<smem>>
    %1758 = vector.broadcast %1757 : f32 to vector<2x142xf32>
    %1759 = arith.mulf %1758, %1740 : vector<2x142xf32>
    %1760 = arith.addf %1727, %1759 : vector<2x142xf32>
    %c13_861 = arith.constant 13 : index
    %c11_862 = arith.constant 11 : index
    %1761 = memref.load %arg3[%c13_861, %c11_862] : memref<16x36xf32, #tpu.memory_space<smem>>
    %1762 = vector.broadcast %1761 : f32 to vector<2x142xf32>
    %1763 = arith.mulf %1762, %1740 : vector<2x142xf32>
    %1764 = arith.addf %1731, %1763 : vector<2x142xf32>
    %c14_863 = arith.constant 14 : index
    %c11_864 = arith.constant 11 : index
    %1765 = memref.load %arg3[%c14_863, %c11_864] : memref<16x36xf32, #tpu.memory_space<smem>>
    %1766 = vector.broadcast %1765 : f32 to vector<2x142xf32>
    %1767 = arith.mulf %1766, %1740 : vector<2x142xf32>
    %1768 = arith.addf %1735, %1767 : vector<2x142xf32>
    %c15_865 = arith.constant 15 : index
    %c11_866 = arith.constant 11 : index
    %1769 = memref.load %arg3[%c15_865, %c11_866] : memref<16x36xf32, #tpu.memory_space<smem>>
    %1770 = vector.broadcast %1769 : f32 to vector<2x142xf32>
    %1771 = arith.mulf %1770, %1740 : vector<2x142xf32>
    %1772 = arith.addf %1739, %1771 : vector<2x142xf32>
    %c0_867 = arith.constant 0 : index
    %c0_868 = arith.constant 0 : index
    %c1_869 = arith.constant 1 : index
    %c1_870 = arith.constant 1 : index
    %c0_871 = arith.constant 0 : index
    %1773 = vector.load %arg2[%c0_867, %c0_868, %c1_869, %c1_870, %c0_871] : memref<1x1x4x4x144xbf16, #tpu.memory_space<vmem>>, vector<1x1x1x2x144xbf16>
    %1774 = vector.shape_cast %1773 : vector<1x1x1x2x144xbf16> to vector<2x144xbf16>
    %1775 = arith.extf %1774 : vector<2x144xbf16> to vector<2x144xf32>
    %1776 = vector.extract_strided_slice %1775 {offsets = [0, 0], sizes = [2, 142], strides = [1, 1]} : vector<2x144xf32> to vector<2x142xf32>
    %c8_872 = arith.constant 8 : index
    %c12_873 = arith.constant 12 : index
    %1777 = memref.load %arg3[%c8_872, %c12_873] : memref<16x36xf32, #tpu.memory_space<smem>>
    %1778 = vector.broadcast %1777 : f32 to vector<2x142xf32>
    %1779 = arith.mulf %1778, %1776 : vector<2x142xf32>
    %1780 = arith.addf %1744, %1779 : vector<2x142xf32>
    %c9_874 = arith.constant 9 : index
    %c12_875 = arith.constant 12 : index
    %1781 = memref.load %arg3[%c9_874, %c12_875] : memref<16x36xf32, #tpu.memory_space<smem>>
    %1782 = vector.broadcast %1781 : f32 to vector<2x142xf32>
    %1783 = arith.mulf %1782, %1776 : vector<2x142xf32>
    %1784 = arith.addf %1748, %1783 : vector<2x142xf32>
    %c10_876 = arith.constant 10 : index
    %c12_877 = arith.constant 12 : index
    %1785 = memref.load %arg3[%c10_876, %c12_877] : memref<16x36xf32, #tpu.memory_space<smem>>
    %1786 = vector.broadcast %1785 : f32 to vector<2x142xf32>
    %1787 = arith.mulf %1786, %1776 : vector<2x142xf32>
    %1788 = arith.addf %1752, %1787 : vector<2x142xf32>
    %c11_878 = arith.constant 11 : index
    %c12_879 = arith.constant 12 : index
    %1789 = memref.load %arg3[%c11_878, %c12_879] : memref<16x36xf32, #tpu.memory_space<smem>>
    %1790 = vector.broadcast %1789 : f32 to vector<2x142xf32>
    %1791 = arith.mulf %1790, %1776 : vector<2x142xf32>
    %1792 = arith.addf %1756, %1791 : vector<2x142xf32>
    %c12_880 = arith.constant 12 : index
    %c12_881 = arith.constant 12 : index
    %1793 = memref.load %arg3[%c12_880, %c12_881] : memref<16x36xf32, #tpu.memory_space<smem>>
    %1794 = vector.broadcast %1793 : f32 to vector<2x142xf32>
    %1795 = arith.mulf %1794, %1776 : vector<2x142xf32>
    %1796 = arith.addf %1760, %1795 : vector<2x142xf32>
    %c13_882 = arith.constant 13 : index
    %c12_883 = arith.constant 12 : index
    %1797 = memref.load %arg3[%c13_882, %c12_883] : memref<16x36xf32, #tpu.memory_space<smem>>
    %1798 = vector.broadcast %1797 : f32 to vector<2x142xf32>
    %1799 = arith.mulf %1798, %1776 : vector<2x142xf32>
    %1800 = arith.addf %1764, %1799 : vector<2x142xf32>
    %c14_884 = arith.constant 14 : index
    %c12_885 = arith.constant 12 : index
    %1801 = memref.load %arg3[%c14_884, %c12_885] : memref<16x36xf32, #tpu.memory_space<smem>>
    %1802 = vector.broadcast %1801 : f32 to vector<2x142xf32>
    %1803 = arith.mulf %1802, %1776 : vector<2x142xf32>
    %1804 = arith.addf %1768, %1803 : vector<2x142xf32>
    %c15_886 = arith.constant 15 : index
    %c12_887 = arith.constant 12 : index
    %1805 = memref.load %arg3[%c15_886, %c12_887] : memref<16x36xf32, #tpu.memory_space<smem>>
    %1806 = vector.broadcast %1805 : f32 to vector<2x142xf32>
    %1807 = arith.mulf %1806, %1776 : vector<2x142xf32>
    %1808 = arith.addf %1772, %1807 : vector<2x142xf32>
    %1809 = vector.extract_strided_slice %1775 {offsets = [0, 1], sizes = [2, 142], strides = [1, 1]} : vector<2x144xf32> to vector<2x142xf32>
    %c8_888 = arith.constant 8 : index
    %c13_889 = arith.constant 13 : index
    %1810 = memref.load %arg3[%c8_888, %c13_889] : memref<16x36xf32, #tpu.memory_space<smem>>
    %1811 = vector.broadcast %1810 : f32 to vector<2x142xf32>
    %1812 = arith.mulf %1811, %1809 : vector<2x142xf32>
    %1813 = arith.addf %1780, %1812 : vector<2x142xf32>
    %c9_890 = arith.constant 9 : index
    %c13_891 = arith.constant 13 : index
    %1814 = memref.load %arg3[%c9_890, %c13_891] : memref<16x36xf32, #tpu.memory_space<smem>>
    %1815 = vector.broadcast %1814 : f32 to vector<2x142xf32>
    %1816 = arith.mulf %1815, %1809 : vector<2x142xf32>
    %1817 = arith.addf %1784, %1816 : vector<2x142xf32>
    %c10_892 = arith.constant 10 : index
    %c13_893 = arith.constant 13 : index
    %1818 = memref.load %arg3[%c10_892, %c13_893] : memref<16x36xf32, #tpu.memory_space<smem>>
    %1819 = vector.broadcast %1818 : f32 to vector<2x142xf32>
    %1820 = arith.mulf %1819, %1809 : vector<2x142xf32>
    %1821 = arith.addf %1788, %1820 : vector<2x142xf32>
    %c11_894 = arith.constant 11 : index
    %c13_895 = arith.constant 13 : index
    %1822 = memref.load %arg3[%c11_894, %c13_895] : memref<16x36xf32, #tpu.memory_space<smem>>
    %1823 = vector.broadcast %1822 : f32 to vector<2x142xf32>
    %1824 = arith.mulf %1823, %1809 : vector<2x142xf32>
    %1825 = arith.addf %1792, %1824 : vector<2x142xf32>
    %c12_896 = arith.constant 12 : index
    %c13_897 = arith.constant 13 : index
    %1826 = memref.load %arg3[%c12_896, %c13_897] : memref<16x36xf32, #tpu.memory_space<smem>>
    %1827 = vector.broadcast %1826 : f32 to vector<2x142xf32>
    %1828 = arith.mulf %1827, %1809 : vector<2x142xf32>
    %1829 = arith.addf %1796, %1828 : vector<2x142xf32>
    %c13_898 = arith.constant 13 : index
    %c13_899 = arith.constant 13 : index
    %1830 = memref.load %arg3[%c13_898, %c13_899] : memref<16x36xf32, #tpu.memory_space<smem>>
    %1831 = vector.broadcast %1830 : f32 to vector<2x142xf32>
    %1832 = arith.mulf %1831, %1809 : vector<2x142xf32>
    %1833 = arith.addf %1800, %1832 : vector<2x142xf32>
    %c14_900 = arith.constant 14 : index
    %c13_901 = arith.constant 13 : index
    %1834 = memref.load %arg3[%c14_900, %c13_901] : memref<16x36xf32, #tpu.memory_space<smem>>
    %1835 = vector.broadcast %1834 : f32 to vector<2x142xf32>
    %1836 = arith.mulf %1835, %1809 : vector<2x142xf32>
    %1837 = arith.addf %1804, %1836 : vector<2x142xf32>
    %c15_902 = arith.constant 15 : index
    %c13_903 = arith.constant 13 : index
    %1838 = memref.load %arg3[%c15_902, %c13_903] : memref<16x36xf32, #tpu.memory_space<smem>>
    %1839 = vector.broadcast %1838 : f32 to vector<2x142xf32>
    %1840 = arith.mulf %1839, %1809 : vector<2x142xf32>
    %1841 = arith.addf %1808, %1840 : vector<2x142xf32>
    %1842 = vector.extract_strided_slice %1775 {offsets = [0, 2], sizes = [2, 142], strides = [1, 1]} : vector<2x144xf32> to vector<2x142xf32>
    %c8_904 = arith.constant 8 : index
    %c14_905 = arith.constant 14 : index
    %1843 = memref.load %arg3[%c8_904, %c14_905] : memref<16x36xf32, #tpu.memory_space<smem>>
    %1844 = vector.broadcast %1843 : f32 to vector<2x142xf32>
    %1845 = arith.mulf %1844, %1842 : vector<2x142xf32>
    %1846 = arith.addf %1813, %1845 : vector<2x142xf32>
    %c9_906 = arith.constant 9 : index
    %c14_907 = arith.constant 14 : index
    %1847 = memref.load %arg3[%c9_906, %c14_907] : memref<16x36xf32, #tpu.memory_space<smem>>
    %1848 = vector.broadcast %1847 : f32 to vector<2x142xf32>
    %1849 = arith.mulf %1848, %1842 : vector<2x142xf32>
    %1850 = arith.addf %1817, %1849 : vector<2x142xf32>
    %c10_908 = arith.constant 10 : index
    %c14_909 = arith.constant 14 : index
    %1851 = memref.load %arg3[%c10_908, %c14_909] : memref<16x36xf32, #tpu.memory_space<smem>>
    %1852 = vector.broadcast %1851 : f32 to vector<2x142xf32>
    %1853 = arith.mulf %1852, %1842 : vector<2x142xf32>
    %1854 = arith.addf %1821, %1853 : vector<2x142xf32>
    %c11_910 = arith.constant 11 : index
    %c14_911 = arith.constant 14 : index
    %1855 = memref.load %arg3[%c11_910, %c14_911] : memref<16x36xf32, #tpu.memory_space<smem>>
    %1856 = vector.broadcast %1855 : f32 to vector<2x142xf32>
    %1857 = arith.mulf %1856, %1842 : vector<2x142xf32>
    %1858 = arith.addf %1825, %1857 : vector<2x142xf32>
    %c12_912 = arith.constant 12 : index
    %c14_913 = arith.constant 14 : index
    %1859 = memref.load %arg3[%c12_912, %c14_913] : memref<16x36xf32, #tpu.memory_space<smem>>
    %1860 = vector.broadcast %1859 : f32 to vector<2x142xf32>
    %1861 = arith.mulf %1860, %1842 : vector<2x142xf32>
    %1862 = arith.addf %1829, %1861 : vector<2x142xf32>
    %c13_914 = arith.constant 13 : index
    %c14_915 = arith.constant 14 : index
    %1863 = memref.load %arg3[%c13_914, %c14_915] : memref<16x36xf32, #tpu.memory_space<smem>>
    %1864 = vector.broadcast %1863 : f32 to vector<2x142xf32>
    %1865 = arith.mulf %1864, %1842 : vector<2x142xf32>
    %1866 = arith.addf %1833, %1865 : vector<2x142xf32>
    %c14_916 = arith.constant 14 : index
    %c14_917 = arith.constant 14 : index
    %1867 = memref.load %arg3[%c14_916, %c14_917] : memref<16x36xf32, #tpu.memory_space<smem>>
    %1868 = vector.broadcast %1867 : f32 to vector<2x142xf32>
    %1869 = arith.mulf %1868, %1842 : vector<2x142xf32>
    %1870 = arith.addf %1837, %1869 : vector<2x142xf32>
    %c15_918 = arith.constant 15 : index
    %c14_919 = arith.constant 14 : index
    %1871 = memref.load %arg3[%c15_918, %c14_919] : memref<16x36xf32, #tpu.memory_space<smem>>
    %1872 = vector.broadcast %1871 : f32 to vector<2x142xf32>
    %1873 = arith.mulf %1872, %1842 : vector<2x142xf32>
    %1874 = arith.addf %1841, %1873 : vector<2x142xf32>
    %c0_920 = arith.constant 0 : index
    %c0_921 = arith.constant 0 : index
    %c1_922 = arith.constant 1 : index
    %c2_923 = arith.constant 2 : index
    %c0_924 = arith.constant 0 : index
    %1875 = vector.load %arg2[%c0_920, %c0_921, %c1_922, %c2_923, %c0_924] : memref<1x1x4x4x144xbf16, #tpu.memory_space<vmem>>, vector<1x1x1x2x144xbf16>
    %1876 = vector.shape_cast %1875 : vector<1x1x1x2x144xbf16> to vector<2x144xbf16>
    %1877 = arith.extf %1876 : vector<2x144xbf16> to vector<2x144xf32>
    %1878 = vector.extract_strided_slice %1877 {offsets = [0, 0], sizes = [2, 142], strides = [1, 1]} : vector<2x144xf32> to vector<2x142xf32>
    %c8_925 = arith.constant 8 : index
    %c15_926 = arith.constant 15 : index
    %1879 = memref.load %arg3[%c8_925, %c15_926] : memref<16x36xf32, #tpu.memory_space<smem>>
    %1880 = vector.broadcast %1879 : f32 to vector<2x142xf32>
    %1881 = arith.mulf %1880, %1878 : vector<2x142xf32>
    %1882 = arith.addf %1846, %1881 : vector<2x142xf32>
    %c9_927 = arith.constant 9 : index
    %c15_928 = arith.constant 15 : index
    %1883 = memref.load %arg3[%c9_927, %c15_928] : memref<16x36xf32, #tpu.memory_space<smem>>
    %1884 = vector.broadcast %1883 : f32 to vector<2x142xf32>
    %1885 = arith.mulf %1884, %1878 : vector<2x142xf32>
    %1886 = arith.addf %1850, %1885 : vector<2x142xf32>
    %c10_929 = arith.constant 10 : index
    %c15_930 = arith.constant 15 : index
    %1887 = memref.load %arg3[%c10_929, %c15_930] : memref<16x36xf32, #tpu.memory_space<smem>>
    %1888 = vector.broadcast %1887 : f32 to vector<2x142xf32>
    %1889 = arith.mulf %1888, %1878 : vector<2x142xf32>
    %1890 = arith.addf %1854, %1889 : vector<2x142xf32>
    %c11_931 = arith.constant 11 : index
    %c15_932 = arith.constant 15 : index
    %1891 = memref.load %arg3[%c11_931, %c15_932] : memref<16x36xf32, #tpu.memory_space<smem>>
    %1892 = vector.broadcast %1891 : f32 to vector<2x142xf32>
    %1893 = arith.mulf %1892, %1878 : vector<2x142xf32>
    %1894 = arith.addf %1858, %1893 : vector<2x142xf32>
    %c12_933 = arith.constant 12 : index
    %c15_934 = arith.constant 15 : index
    %1895 = memref.load %arg3[%c12_933, %c15_934] : memref<16x36xf32, #tpu.memory_space<smem>>
    %1896 = vector.broadcast %1895 : f32 to vector<2x142xf32>
    %1897 = arith.mulf %1896, %1878 : vector<2x142xf32>
    %1898 = arith.addf %1862, %1897 : vector<2x142xf32>
    %c13_935 = arith.constant 13 : index
    %c15_936 = arith.constant 15 : index
    %1899 = memref.load %arg3[%c13_935, %c15_936] : memref<16x36xf32, #tpu.memory_space<smem>>
    %1900 = vector.broadcast %1899 : f32 to vector<2x142xf32>
    %1901 = arith.mulf %1900, %1878 : vector<2x142xf32>
    %1902 = arith.addf %1866, %1901 : vector<2x142xf32>
    %c14_937 = arith.constant 14 : index
    %c15_938 = arith.constant 15 : index
    %1903 = memref.load %arg3[%c14_937, %c15_938] : memref<16x36xf32, #tpu.memory_space<smem>>
    %1904 = vector.broadcast %1903 : f32 to vector<2x142xf32>
    %1905 = arith.mulf %1904, %1878 : vector<2x142xf32>
    %1906 = arith.addf %1870, %1905 : vector<2x142xf32>
    %c15_939 = arith.constant 15 : index
    %c15_940 = arith.constant 15 : index
    %1907 = memref.load %arg3[%c15_939, %c15_940] : memref<16x36xf32, #tpu.memory_space<smem>>
    %1908 = vector.broadcast %1907 : f32 to vector<2x142xf32>
    %1909 = arith.mulf %1908, %1878 : vector<2x142xf32>
    %1910 = arith.addf %1874, %1909 : vector<2x142xf32>
    %1911 = vector.extract_strided_slice %1877 {offsets = [0, 1], sizes = [2, 142], strides = [1, 1]} : vector<2x144xf32> to vector<2x142xf32>
    %c8_941 = arith.constant 8 : index
    %c16_942 = arith.constant 16 : index
    %1912 = memref.load %arg3[%c8_941, %c16_942] : memref<16x36xf32, #tpu.memory_space<smem>>
    %1913 = vector.broadcast %1912 : f32 to vector<2x142xf32>
    %1914 = arith.mulf %1913, %1911 : vector<2x142xf32>
    %1915 = arith.addf %1882, %1914 : vector<2x142xf32>
    %c9_943 = arith.constant 9 : index
    %c16_944 = arith.constant 16 : index
    %1916 = memref.load %arg3[%c9_943, %c16_944] : memref<16x36xf32, #tpu.memory_space<smem>>
    %1917 = vector.broadcast %1916 : f32 to vector<2x142xf32>
    %1918 = arith.mulf %1917, %1911 : vector<2x142xf32>
    %1919 = arith.addf %1886, %1918 : vector<2x142xf32>
    %c10_945 = arith.constant 10 : index
    %c16_946 = arith.constant 16 : index
    %1920 = memref.load %arg3[%c10_945, %c16_946] : memref<16x36xf32, #tpu.memory_space<smem>>
    %1921 = vector.broadcast %1920 : f32 to vector<2x142xf32>
    %1922 = arith.mulf %1921, %1911 : vector<2x142xf32>
    %1923 = arith.addf %1890, %1922 : vector<2x142xf32>
    %c11_947 = arith.constant 11 : index
    %c16_948 = arith.constant 16 : index
    %1924 = memref.load %arg3[%c11_947, %c16_948] : memref<16x36xf32, #tpu.memory_space<smem>>
    %1925 = vector.broadcast %1924 : f32 to vector<2x142xf32>
    %1926 = arith.mulf %1925, %1911 : vector<2x142xf32>
    %1927 = arith.addf %1894, %1926 : vector<2x142xf32>
    %c12_949 = arith.constant 12 : index
    %c16_950 = arith.constant 16 : index
    %1928 = memref.load %arg3[%c12_949, %c16_950] : memref<16x36xf32, #tpu.memory_space<smem>>
    %1929 = vector.broadcast %1928 : f32 to vector<2x142xf32>
    %1930 = arith.mulf %1929, %1911 : vector<2x142xf32>
    %1931 = arith.addf %1898, %1930 : vector<2x142xf32>
    %c13_951 = arith.constant 13 : index
    %c16_952 = arith.constant 16 : index
    %1932 = memref.load %arg3[%c13_951, %c16_952] : memref<16x36xf32, #tpu.memory_space<smem>>
    %1933 = vector.broadcast %1932 : f32 to vector<2x142xf32>
    %1934 = arith.mulf %1933, %1911 : vector<2x142xf32>
    %1935 = arith.addf %1902, %1934 : vector<2x142xf32>
    %c14_953 = arith.constant 14 : index
    %c16_954 = arith.constant 16 : index
    %1936 = memref.load %arg3[%c14_953, %c16_954] : memref<16x36xf32, #tpu.memory_space<smem>>
    %1937 = vector.broadcast %1936 : f32 to vector<2x142xf32>
    %1938 = arith.mulf %1937, %1911 : vector<2x142xf32>
    %1939 = arith.addf %1906, %1938 : vector<2x142xf32>
    %c15_955 = arith.constant 15 : index
    %c16_956 = arith.constant 16 : index
    %1940 = memref.load %arg3[%c15_955, %c16_956] : memref<16x36xf32, #tpu.memory_space<smem>>
    %1941 = vector.broadcast %1940 : f32 to vector<2x142xf32>
    %1942 = arith.mulf %1941, %1911 : vector<2x142xf32>
    %1943 = arith.addf %1910, %1942 : vector<2x142xf32>
    %1944 = vector.extract_strided_slice %1877 {offsets = [0, 2], sizes = [2, 142], strides = [1, 1]} : vector<2x144xf32> to vector<2x142xf32>
    %c8_957 = arith.constant 8 : index
    %c17_958 = arith.constant 17 : index
    %1945 = memref.load %arg3[%c8_957, %c17_958] : memref<16x36xf32, #tpu.memory_space<smem>>
    %1946 = vector.broadcast %1945 : f32 to vector<2x142xf32>
    %1947 = arith.mulf %1946, %1944 : vector<2x142xf32>
    %1948 = arith.addf %1915, %1947 : vector<2x142xf32>
    %c9_959 = arith.constant 9 : index
    %c17_960 = arith.constant 17 : index
    %1949 = memref.load %arg3[%c9_959, %c17_960] : memref<16x36xf32, #tpu.memory_space<smem>>
    %1950 = vector.broadcast %1949 : f32 to vector<2x142xf32>
    %1951 = arith.mulf %1950, %1944 : vector<2x142xf32>
    %1952 = arith.addf %1919, %1951 : vector<2x142xf32>
    %c10_961 = arith.constant 10 : index
    %c17_962 = arith.constant 17 : index
    %1953 = memref.load %arg3[%c10_961, %c17_962] : memref<16x36xf32, #tpu.memory_space<smem>>
    %1954 = vector.broadcast %1953 : f32 to vector<2x142xf32>
    %1955 = arith.mulf %1954, %1944 : vector<2x142xf32>
    %1956 = arith.addf %1923, %1955 : vector<2x142xf32>
    %c11_963 = arith.constant 11 : index
    %c17_964 = arith.constant 17 : index
    %1957 = memref.load %arg3[%c11_963, %c17_964] : memref<16x36xf32, #tpu.memory_space<smem>>
    %1958 = vector.broadcast %1957 : f32 to vector<2x142xf32>
    %1959 = arith.mulf %1958, %1944 : vector<2x142xf32>
    %1960 = arith.addf %1927, %1959 : vector<2x142xf32>
    %c12_965 = arith.constant 12 : index
    %c17_966 = arith.constant 17 : index
    %1961 = memref.load %arg3[%c12_965, %c17_966] : memref<16x36xf32, #tpu.memory_space<smem>>
    %1962 = vector.broadcast %1961 : f32 to vector<2x142xf32>
    %1963 = arith.mulf %1962, %1944 : vector<2x142xf32>
    %1964 = arith.addf %1931, %1963 : vector<2x142xf32>
    %c13_967 = arith.constant 13 : index
    %c17_968 = arith.constant 17 : index
    %1965 = memref.load %arg3[%c13_967, %c17_968] : memref<16x36xf32, #tpu.memory_space<smem>>
    %1966 = vector.broadcast %1965 : f32 to vector<2x142xf32>
    %1967 = arith.mulf %1966, %1944 : vector<2x142xf32>
    %1968 = arith.addf %1935, %1967 : vector<2x142xf32>
    %c14_969 = arith.constant 14 : index
    %c17_970 = arith.constant 17 : index
    %1969 = memref.load %arg3[%c14_969, %c17_970] : memref<16x36xf32, #tpu.memory_space<smem>>
    %1970 = vector.broadcast %1969 : f32 to vector<2x142xf32>
    %1971 = arith.mulf %1970, %1944 : vector<2x142xf32>
    %1972 = arith.addf %1939, %1971 : vector<2x142xf32>
    %c15_971 = arith.constant 15 : index
    %c17_972 = arith.constant 17 : index
    %1973 = memref.load %arg3[%c15_971, %c17_972] : memref<16x36xf32, #tpu.memory_space<smem>>
    %1974 = vector.broadcast %1973 : f32 to vector<2x142xf32>
    %1975 = arith.mulf %1974, %1944 : vector<2x142xf32>
    %1976 = arith.addf %1943, %1975 : vector<2x142xf32>
    %c0_973 = arith.constant 0 : index
    %c0_974 = arith.constant 0 : index
    %c2_975 = arith.constant 2 : index
    %c0_976 = arith.constant 0 : index
    %c0_977 = arith.constant 0 : index
    %1977 = vector.load %arg2[%c0_973, %c0_974, %c2_975, %c0_976, %c0_977] : memref<1x1x4x4x144xbf16, #tpu.memory_space<vmem>>, vector<1x1x1x2x144xbf16>
    %1978 = vector.shape_cast %1977 : vector<1x1x1x2x144xbf16> to vector<2x144xbf16>
    %1979 = arith.extf %1978 : vector<2x144xbf16> to vector<2x144xf32>
    %1980 = vector.extract_strided_slice %1979 {offsets = [0, 0], sizes = [2, 142], strides = [1, 1]} : vector<2x144xf32> to vector<2x142xf32>
    %c8_978 = arith.constant 8 : index
    %c18_979 = arith.constant 18 : index
    %1981 = memref.load %arg3[%c8_978, %c18_979] : memref<16x36xf32, #tpu.memory_space<smem>>
    %1982 = vector.broadcast %1981 : f32 to vector<2x142xf32>
    %1983 = arith.mulf %1982, %1980 : vector<2x142xf32>
    %1984 = arith.addf %1948, %1983 : vector<2x142xf32>
    %c9_980 = arith.constant 9 : index
    %c18_981 = arith.constant 18 : index
    %1985 = memref.load %arg3[%c9_980, %c18_981] : memref<16x36xf32, #tpu.memory_space<smem>>
    %1986 = vector.broadcast %1985 : f32 to vector<2x142xf32>
    %1987 = arith.mulf %1986, %1980 : vector<2x142xf32>
    %1988 = arith.addf %1952, %1987 : vector<2x142xf32>
    %c10_982 = arith.constant 10 : index
    %c18_983 = arith.constant 18 : index
    %1989 = memref.load %arg3[%c10_982, %c18_983] : memref<16x36xf32, #tpu.memory_space<smem>>
    %1990 = vector.broadcast %1989 : f32 to vector<2x142xf32>
    %1991 = arith.mulf %1990, %1980 : vector<2x142xf32>
    %1992 = arith.addf %1956, %1991 : vector<2x142xf32>
    %c11_984 = arith.constant 11 : index
    %c18_985 = arith.constant 18 : index
    %1993 = memref.load %arg3[%c11_984, %c18_985] : memref<16x36xf32, #tpu.memory_space<smem>>
    %1994 = vector.broadcast %1993 : f32 to vector<2x142xf32>
    %1995 = arith.mulf %1994, %1980 : vector<2x142xf32>
    %1996 = arith.addf %1960, %1995 : vector<2x142xf32>
    %c12_986 = arith.constant 12 : index
    %c18_987 = arith.constant 18 : index
    %1997 = memref.load %arg3[%c12_986, %c18_987] : memref<16x36xf32, #tpu.memory_space<smem>>
    %1998 = vector.broadcast %1997 : f32 to vector<2x142xf32>
    %1999 = arith.mulf %1998, %1980 : vector<2x142xf32>
    %2000 = arith.addf %1964, %1999 : vector<2x142xf32>
    %c13_988 = arith.constant 13 : index
    %c18_989 = arith.constant 18 : index
    %2001 = memref.load %arg3[%c13_988, %c18_989] : memref<16x36xf32, #tpu.memory_space<smem>>
    %2002 = vector.broadcast %2001 : f32 to vector<2x142xf32>
    %2003 = arith.mulf %2002, %1980 : vector<2x142xf32>
    %2004 = arith.addf %1968, %2003 : vector<2x142xf32>
    %c14_990 = arith.constant 14 : index
    %c18_991 = arith.constant 18 : index
    %2005 = memref.load %arg3[%c14_990, %c18_991] : memref<16x36xf32, #tpu.memory_space<smem>>
    %2006 = vector.broadcast %2005 : f32 to vector<2x142xf32>
    %2007 = arith.mulf %2006, %1980 : vector<2x142xf32>
    %2008 = arith.addf %1972, %2007 : vector<2x142xf32>
    %c15_992 = arith.constant 15 : index
    %c18_993 = arith.constant 18 : index
    %2009 = memref.load %arg3[%c15_992, %c18_993] : memref<16x36xf32, #tpu.memory_space<smem>>
    %2010 = vector.broadcast %2009 : f32 to vector<2x142xf32>
    %2011 = arith.mulf %2010, %1980 : vector<2x142xf32>
    %2012 = arith.addf %1976, %2011 : vector<2x142xf32>
    %2013 = vector.extract_strided_slice %1979 {offsets = [0, 1], sizes = [2, 142], strides = [1, 1]} : vector<2x144xf32> to vector<2x142xf32>
    %c8_994 = arith.constant 8 : index
    %c19_995 = arith.constant 19 : index
    %2014 = memref.load %arg3[%c8_994, %c19_995] : memref<16x36xf32, #tpu.memory_space<smem>>
    %2015 = vector.broadcast %2014 : f32 to vector<2x142xf32>
    %2016 = arith.mulf %2015, %2013 : vector<2x142xf32>
    %2017 = arith.addf %1984, %2016 : vector<2x142xf32>
    %c9_996 = arith.constant 9 : index
    %c19_997 = arith.constant 19 : index
    %2018 = memref.load %arg3[%c9_996, %c19_997] : memref<16x36xf32, #tpu.memory_space<smem>>
    %2019 = vector.broadcast %2018 : f32 to vector<2x142xf32>
    %2020 = arith.mulf %2019, %2013 : vector<2x142xf32>
    %2021 = arith.addf %1988, %2020 : vector<2x142xf32>
    %c10_998 = arith.constant 10 : index
    %c19_999 = arith.constant 19 : index
    %2022 = memref.load %arg3[%c10_998, %c19_999] : memref<16x36xf32, #tpu.memory_space<smem>>
    %2023 = vector.broadcast %2022 : f32 to vector<2x142xf32>
    %2024 = arith.mulf %2023, %2013 : vector<2x142xf32>
    %2025 = arith.addf %1992, %2024 : vector<2x142xf32>
    %c11_1000 = arith.constant 11 : index
    %c19_1001 = arith.constant 19 : index
    %2026 = memref.load %arg3[%c11_1000, %c19_1001] : memref<16x36xf32, #tpu.memory_space<smem>>
    %2027 = vector.broadcast %2026 : f32 to vector<2x142xf32>
    %2028 = arith.mulf %2027, %2013 : vector<2x142xf32>
    %2029 = arith.addf %1996, %2028 : vector<2x142xf32>
    %c12_1002 = arith.constant 12 : index
    %c19_1003 = arith.constant 19 : index
    %2030 = memref.load %arg3[%c12_1002, %c19_1003] : memref<16x36xf32, #tpu.memory_space<smem>>
    %2031 = vector.broadcast %2030 : f32 to vector<2x142xf32>
    %2032 = arith.mulf %2031, %2013 : vector<2x142xf32>
    %2033 = arith.addf %2000, %2032 : vector<2x142xf32>
    %c13_1004 = arith.constant 13 : index
    %c19_1005 = arith.constant 19 : index
    %2034 = memref.load %arg3[%c13_1004, %c19_1005] : memref<16x36xf32, #tpu.memory_space<smem>>
    %2035 = vector.broadcast %2034 : f32 to vector<2x142xf32>
    %2036 = arith.mulf %2035, %2013 : vector<2x142xf32>
    %2037 = arith.addf %2004, %2036 : vector<2x142xf32>
    %c14_1006 = arith.constant 14 : index
    %c19_1007 = arith.constant 19 : index
    %2038 = memref.load %arg3[%c14_1006, %c19_1007] : memref<16x36xf32, #tpu.memory_space<smem>>
    %2039 = vector.broadcast %2038 : f32 to vector<2x142xf32>
    %2040 = arith.mulf %2039, %2013 : vector<2x142xf32>
    %2041 = arith.addf %2008, %2040 : vector<2x142xf32>
    %c15_1008 = arith.constant 15 : index
    %c19_1009 = arith.constant 19 : index
    %2042 = memref.load %arg3[%c15_1008, %c19_1009] : memref<16x36xf32, #tpu.memory_space<smem>>
    %2043 = vector.broadcast %2042 : f32 to vector<2x142xf32>
    %2044 = arith.mulf %2043, %2013 : vector<2x142xf32>
    %2045 = arith.addf %2012, %2044 : vector<2x142xf32>
    %2046 = vector.extract_strided_slice %1979 {offsets = [0, 2], sizes = [2, 142], strides = [1, 1]} : vector<2x144xf32> to vector<2x142xf32>
    %c8_1010 = arith.constant 8 : index
    %c20_1011 = arith.constant 20 : index
    %2047 = memref.load %arg3[%c8_1010, %c20_1011] : memref<16x36xf32, #tpu.memory_space<smem>>
    %2048 = vector.broadcast %2047 : f32 to vector<2x142xf32>
    %2049 = arith.mulf %2048, %2046 : vector<2x142xf32>
    %2050 = arith.addf %2017, %2049 : vector<2x142xf32>
    %c9_1012 = arith.constant 9 : index
    %c20_1013 = arith.constant 20 : index
    %2051 = memref.load %arg3[%c9_1012, %c20_1013] : memref<16x36xf32, #tpu.memory_space<smem>>
    %2052 = vector.broadcast %2051 : f32 to vector<2x142xf32>
    %2053 = arith.mulf %2052, %2046 : vector<2x142xf32>
    %2054 = arith.addf %2021, %2053 : vector<2x142xf32>
    %c10_1014 = arith.constant 10 : index
    %c20_1015 = arith.constant 20 : index
    %2055 = memref.load %arg3[%c10_1014, %c20_1015] : memref<16x36xf32, #tpu.memory_space<smem>>
    %2056 = vector.broadcast %2055 : f32 to vector<2x142xf32>
    %2057 = arith.mulf %2056, %2046 : vector<2x142xf32>
    %2058 = arith.addf %2025, %2057 : vector<2x142xf32>
    %c11_1016 = arith.constant 11 : index
    %c20_1017 = arith.constant 20 : index
    %2059 = memref.load %arg3[%c11_1016, %c20_1017] : memref<16x36xf32, #tpu.memory_space<smem>>
    %2060 = vector.broadcast %2059 : f32 to vector<2x142xf32>
    %2061 = arith.mulf %2060, %2046 : vector<2x142xf32>
    %2062 = arith.addf %2029, %2061 : vector<2x142xf32>
    %c12_1018 = arith.constant 12 : index
    %c20_1019 = arith.constant 20 : index
    %2063 = memref.load %arg3[%c12_1018, %c20_1019] : memref<16x36xf32, #tpu.memory_space<smem>>
    %2064 = vector.broadcast %2063 : f32 to vector<2x142xf32>
    %2065 = arith.mulf %2064, %2046 : vector<2x142xf32>
    %2066 = arith.addf %2033, %2065 : vector<2x142xf32>
    %c13_1020 = arith.constant 13 : index
    %c20_1021 = arith.constant 20 : index
    %2067 = memref.load %arg3[%c13_1020, %c20_1021] : memref<16x36xf32, #tpu.memory_space<smem>>
    %2068 = vector.broadcast %2067 : f32 to vector<2x142xf32>
    %2069 = arith.mulf %2068, %2046 : vector<2x142xf32>
    %2070 = arith.addf %2037, %2069 : vector<2x142xf32>
    %c14_1022 = arith.constant 14 : index
    %c20_1023 = arith.constant 20 : index
    %2071 = memref.load %arg3[%c14_1022, %c20_1023] : memref<16x36xf32, #tpu.memory_space<smem>>
    %2072 = vector.broadcast %2071 : f32 to vector<2x142xf32>
    %2073 = arith.mulf %2072, %2046 : vector<2x142xf32>
    %2074 = arith.addf %2041, %2073 : vector<2x142xf32>
    %c15_1024 = arith.constant 15 : index
    %c20_1025 = arith.constant 20 : index
    %2075 = memref.load %arg3[%c15_1024, %c20_1025] : memref<16x36xf32, #tpu.memory_space<smem>>
    %2076 = vector.broadcast %2075 : f32 to vector<2x142xf32>
    %2077 = arith.mulf %2076, %2046 : vector<2x142xf32>
    %2078 = arith.addf %2045, %2077 : vector<2x142xf32>
    %c0_1026 = arith.constant 0 : index
    %c0_1027 = arith.constant 0 : index
    %c2_1028 = arith.constant 2 : index
    %c1_1029 = arith.constant 1 : index
    %c0_1030 = arith.constant 0 : index
    %2079 = vector.load %arg2[%c0_1026, %c0_1027, %c2_1028, %c1_1029, %c0_1030] : memref<1x1x4x4x144xbf16, #tpu.memory_space<vmem>>, vector<1x1x1x2x144xbf16>
    %2080 = vector.shape_cast %2079 : vector<1x1x1x2x144xbf16> to vector<2x144xbf16>
    %2081 = arith.extf %2080 : vector<2x144xbf16> to vector<2x144xf32>
    %2082 = vector.extract_strided_slice %2081 {offsets = [0, 0], sizes = [2, 142], strides = [1, 1]} : vector<2x144xf32> to vector<2x142xf32>
    %c8_1031 = arith.constant 8 : index
    %c21_1032 = arith.constant 21 : index
    %2083 = memref.load %arg3[%c8_1031, %c21_1032] : memref<16x36xf32, #tpu.memory_space<smem>>
    %2084 = vector.broadcast %2083 : f32 to vector<2x142xf32>
    %2085 = arith.mulf %2084, %2082 : vector<2x142xf32>
    %2086 = arith.addf %2050, %2085 : vector<2x142xf32>
    %c9_1033 = arith.constant 9 : index
    %c21_1034 = arith.constant 21 : index
    %2087 = memref.load %arg3[%c9_1033, %c21_1034] : memref<16x36xf32, #tpu.memory_space<smem>>
    %2088 = vector.broadcast %2087 : f32 to vector<2x142xf32>
    %2089 = arith.mulf %2088, %2082 : vector<2x142xf32>
    %2090 = arith.addf %2054, %2089 : vector<2x142xf32>
    %c10_1035 = arith.constant 10 : index
    %c21_1036 = arith.constant 21 : index
    %2091 = memref.load %arg3[%c10_1035, %c21_1036] : memref<16x36xf32, #tpu.memory_space<smem>>
    %2092 = vector.broadcast %2091 : f32 to vector<2x142xf32>
    %2093 = arith.mulf %2092, %2082 : vector<2x142xf32>
    %2094 = arith.addf %2058, %2093 : vector<2x142xf32>
    %c11_1037 = arith.constant 11 : index
    %c21_1038 = arith.constant 21 : index
    %2095 = memref.load %arg3[%c11_1037, %c21_1038] : memref<16x36xf32, #tpu.memory_space<smem>>
    %2096 = vector.broadcast %2095 : f32 to vector<2x142xf32>
    %2097 = arith.mulf %2096, %2082 : vector<2x142xf32>
    %2098 = arith.addf %2062, %2097 : vector<2x142xf32>
    %c12_1039 = arith.constant 12 : index
    %c21_1040 = arith.constant 21 : index
    %2099 = memref.load %arg3[%c12_1039, %c21_1040] : memref<16x36xf32, #tpu.memory_space<smem>>
    %2100 = vector.broadcast %2099 : f32 to vector<2x142xf32>
    %2101 = arith.mulf %2100, %2082 : vector<2x142xf32>
    %2102 = arith.addf %2066, %2101 : vector<2x142xf32>
    %c13_1041 = arith.constant 13 : index
    %c21_1042 = arith.constant 21 : index
    %2103 = memref.load %arg3[%c13_1041, %c21_1042] : memref<16x36xf32, #tpu.memory_space<smem>>
    %2104 = vector.broadcast %2103 : f32 to vector<2x142xf32>
    %2105 = arith.mulf %2104, %2082 : vector<2x142xf32>
    %2106 = arith.addf %2070, %2105 : vector<2x142xf32>
    %c14_1043 = arith.constant 14 : index
    %c21_1044 = arith.constant 21 : index
    %2107 = memref.load %arg3[%c14_1043, %c21_1044] : memref<16x36xf32, #tpu.memory_space<smem>>
    %2108 = vector.broadcast %2107 : f32 to vector<2x142xf32>
    %2109 = arith.mulf %2108, %2082 : vector<2x142xf32>
    %2110 = arith.addf %2074, %2109 : vector<2x142xf32>
    %c15_1045 = arith.constant 15 : index
    %c21_1046 = arith.constant 21 : index
    %2111 = memref.load %arg3[%c15_1045, %c21_1046] : memref<16x36xf32, #tpu.memory_space<smem>>
    %2112 = vector.broadcast %2111 : f32 to vector<2x142xf32>
    %2113 = arith.mulf %2112, %2082 : vector<2x142xf32>
    %2114 = arith.addf %2078, %2113 : vector<2x142xf32>
    %2115 = vector.extract_strided_slice %2081 {offsets = [0, 1], sizes = [2, 142], strides = [1, 1]} : vector<2x144xf32> to vector<2x142xf32>
    %c8_1047 = arith.constant 8 : index
    %c22_1048 = arith.constant 22 : index
    %2116 = memref.load %arg3[%c8_1047, %c22_1048] : memref<16x36xf32, #tpu.memory_space<smem>>
    %2117 = vector.broadcast %2116 : f32 to vector<2x142xf32>
    %2118 = arith.mulf %2117, %2115 : vector<2x142xf32>
    %2119 = arith.addf %2086, %2118 : vector<2x142xf32>
    %c9_1049 = arith.constant 9 : index
    %c22_1050 = arith.constant 22 : index
    %2120 = memref.load %arg3[%c9_1049, %c22_1050] : memref<16x36xf32, #tpu.memory_space<smem>>
    %2121 = vector.broadcast %2120 : f32 to vector<2x142xf32>
    %2122 = arith.mulf %2121, %2115 : vector<2x142xf32>
    %2123 = arith.addf %2090, %2122 : vector<2x142xf32>
    %c10_1051 = arith.constant 10 : index
    %c22_1052 = arith.constant 22 : index
    %2124 = memref.load %arg3[%c10_1051, %c22_1052] : memref<16x36xf32, #tpu.memory_space<smem>>
    %2125 = vector.broadcast %2124 : f32 to vector<2x142xf32>
    %2126 = arith.mulf %2125, %2115 : vector<2x142xf32>
    %2127 = arith.addf %2094, %2126 : vector<2x142xf32>
    %c11_1053 = arith.constant 11 : index
    %c22_1054 = arith.constant 22 : index
    %2128 = memref.load %arg3[%c11_1053, %c22_1054] : memref<16x36xf32, #tpu.memory_space<smem>>
    %2129 = vector.broadcast %2128 : f32 to vector<2x142xf32>
    %2130 = arith.mulf %2129, %2115 : vector<2x142xf32>
    %2131 = arith.addf %2098, %2130 : vector<2x142xf32>
    %c12_1055 = arith.constant 12 : index
    %c22_1056 = arith.constant 22 : index
    %2132 = memref.load %arg3[%c12_1055, %c22_1056] : memref<16x36xf32, #tpu.memory_space<smem>>
    %2133 = vector.broadcast %2132 : f32 to vector<2x142xf32>
    %2134 = arith.mulf %2133, %2115 : vector<2x142xf32>
    %2135 = arith.addf %2102, %2134 : vector<2x142xf32>
    %c13_1057 = arith.constant 13 : index
    %c22_1058 = arith.constant 22 : index
    %2136 = memref.load %arg3[%c13_1057, %c22_1058] : memref<16x36xf32, #tpu.memory_space<smem>>
    %2137 = vector.broadcast %2136 : f32 to vector<2x142xf32>
    %2138 = arith.mulf %2137, %2115 : vector<2x142xf32>
    %2139 = arith.addf %2106, %2138 : vector<2x142xf32>
    %c14_1059 = arith.constant 14 : index
    %c22_1060 = arith.constant 22 : index
    %2140 = memref.load %arg3[%c14_1059, %c22_1060] : memref<16x36xf32, #tpu.memory_space<smem>>
    %2141 = vector.broadcast %2140 : f32 to vector<2x142xf32>
    %2142 = arith.mulf %2141, %2115 : vector<2x142xf32>
    %2143 = arith.addf %2110, %2142 : vector<2x142xf32>
    %c15_1061 = arith.constant 15 : index
    %c22_1062 = arith.constant 22 : index
    %2144 = memref.load %arg3[%c15_1061, %c22_1062] : memref<16x36xf32, #tpu.memory_space<smem>>
    %2145 = vector.broadcast %2144 : f32 to vector<2x142xf32>
    %2146 = arith.mulf %2145, %2115 : vector<2x142xf32>
    %2147 = arith.addf %2114, %2146 : vector<2x142xf32>
    %2148 = vector.extract_strided_slice %2081 {offsets = [0, 2], sizes = [2, 142], strides = [1, 1]} : vector<2x144xf32> to vector<2x142xf32>
    %c8_1063 = arith.constant 8 : index
    %c23_1064 = arith.constant 23 : index
    %2149 = memref.load %arg3[%c8_1063, %c23_1064] : memref<16x36xf32, #tpu.memory_space<smem>>
    %2150 = vector.broadcast %2149 : f32 to vector<2x142xf32>
    %2151 = arith.mulf %2150, %2148 : vector<2x142xf32>
    %2152 = arith.addf %2119, %2151 : vector<2x142xf32>
    %c9_1065 = arith.constant 9 : index
    %c23_1066 = arith.constant 23 : index
    %2153 = memref.load %arg3[%c9_1065, %c23_1066] : memref<16x36xf32, #tpu.memory_space<smem>>
    %2154 = vector.broadcast %2153 : f32 to vector<2x142xf32>
    %2155 = arith.mulf %2154, %2148 : vector<2x142xf32>
    %2156 = arith.addf %2123, %2155 : vector<2x142xf32>
    %c10_1067 = arith.constant 10 : index
    %c23_1068 = arith.constant 23 : index
    %2157 = memref.load %arg3[%c10_1067, %c23_1068] : memref<16x36xf32, #tpu.memory_space<smem>>
    %2158 = vector.broadcast %2157 : f32 to vector<2x142xf32>
    %2159 = arith.mulf %2158, %2148 : vector<2x142xf32>
    %2160 = arith.addf %2127, %2159 : vector<2x142xf32>
    %c11_1069 = arith.constant 11 : index
    %c23_1070 = arith.constant 23 : index
    %2161 = memref.load %arg3[%c11_1069, %c23_1070] : memref<16x36xf32, #tpu.memory_space<smem>>
    %2162 = vector.broadcast %2161 : f32 to vector<2x142xf32>
    %2163 = arith.mulf %2162, %2148 : vector<2x142xf32>
    %2164 = arith.addf %2131, %2163 : vector<2x142xf32>
    %c12_1071 = arith.constant 12 : index
    %c23_1072 = arith.constant 23 : index
    %2165 = memref.load %arg3[%c12_1071, %c23_1072] : memref<16x36xf32, #tpu.memory_space<smem>>
    %2166 = vector.broadcast %2165 : f32 to vector<2x142xf32>
    %2167 = arith.mulf %2166, %2148 : vector<2x142xf32>
    %2168 = arith.addf %2135, %2167 : vector<2x142xf32>
    %c13_1073 = arith.constant 13 : index
    %c23_1074 = arith.constant 23 : index
    %2169 = memref.load %arg3[%c13_1073, %c23_1074] : memref<16x36xf32, #tpu.memory_space<smem>>
    %2170 = vector.broadcast %2169 : f32 to vector<2x142xf32>
    %2171 = arith.mulf %2170, %2148 : vector<2x142xf32>
    %2172 = arith.addf %2139, %2171 : vector<2x142xf32>
    %c14_1075 = arith.constant 14 : index
    %c23_1076 = arith.constant 23 : index
    %2173 = memref.load %arg3[%c14_1075, %c23_1076] : memref<16x36xf32, #tpu.memory_space<smem>>
    %2174 = vector.broadcast %2173 : f32 to vector<2x142xf32>
    %2175 = arith.mulf %2174, %2148 : vector<2x142xf32>
    %2176 = arith.addf %2143, %2175 : vector<2x142xf32>
    %c15_1077 = arith.constant 15 : index
    %c23_1078 = arith.constant 23 : index
    %2177 = memref.load %arg3[%c15_1077, %c23_1078] : memref<16x36xf32, #tpu.memory_space<smem>>
    %2178 = vector.broadcast %2177 : f32 to vector<2x142xf32>
    %2179 = arith.mulf %2178, %2148 : vector<2x142xf32>
    %2180 = arith.addf %2147, %2179 : vector<2x142xf32>
    %c0_1079 = arith.constant 0 : index
    %c0_1080 = arith.constant 0 : index
    %c2_1081 = arith.constant 2 : index
    %c2_1082 = arith.constant 2 : index
    %c0_1083 = arith.constant 0 : index
    %2181 = vector.load %arg2[%c0_1079, %c0_1080, %c2_1081, %c2_1082, %c0_1083] : memref<1x1x4x4x144xbf16, #tpu.memory_space<vmem>>, vector<1x1x1x2x144xbf16>
    %2182 = vector.shape_cast %2181 : vector<1x1x1x2x144xbf16> to vector<2x144xbf16>
    %2183 = arith.extf %2182 : vector<2x144xbf16> to vector<2x144xf32>
    %2184 = vector.extract_strided_slice %2183 {offsets = [0, 0], sizes = [2, 142], strides = [1, 1]} : vector<2x144xf32> to vector<2x142xf32>
    %c8_1084 = arith.constant 8 : index
    %c24_1085 = arith.constant 24 : index
    %2185 = memref.load %arg3[%c8_1084, %c24_1085] : memref<16x36xf32, #tpu.memory_space<smem>>
    %2186 = vector.broadcast %2185 : f32 to vector<2x142xf32>
    %2187 = arith.mulf %2186, %2184 : vector<2x142xf32>
    %2188 = arith.addf %2152, %2187 : vector<2x142xf32>
    %c9_1086 = arith.constant 9 : index
    %c24_1087 = arith.constant 24 : index
    %2189 = memref.load %arg3[%c9_1086, %c24_1087] : memref<16x36xf32, #tpu.memory_space<smem>>
    %2190 = vector.broadcast %2189 : f32 to vector<2x142xf32>
    %2191 = arith.mulf %2190, %2184 : vector<2x142xf32>
    %2192 = arith.addf %2156, %2191 : vector<2x142xf32>
    %c10_1088 = arith.constant 10 : index
    %c24_1089 = arith.constant 24 : index
    %2193 = memref.load %arg3[%c10_1088, %c24_1089] : memref<16x36xf32, #tpu.memory_space<smem>>
    %2194 = vector.broadcast %2193 : f32 to vector<2x142xf32>
    %2195 = arith.mulf %2194, %2184 : vector<2x142xf32>
    %2196 = arith.addf %2160, %2195 : vector<2x142xf32>
    %c11_1090 = arith.constant 11 : index
    %c24_1091 = arith.constant 24 : index
    %2197 = memref.load %arg3[%c11_1090, %c24_1091] : memref<16x36xf32, #tpu.memory_space<smem>>
    %2198 = vector.broadcast %2197 : f32 to vector<2x142xf32>
    %2199 = arith.mulf %2198, %2184 : vector<2x142xf32>
    %2200 = arith.addf %2164, %2199 : vector<2x142xf32>
    %c12_1092 = arith.constant 12 : index
    %c24_1093 = arith.constant 24 : index
    %2201 = memref.load %arg3[%c12_1092, %c24_1093] : memref<16x36xf32, #tpu.memory_space<smem>>
    %2202 = vector.broadcast %2201 : f32 to vector<2x142xf32>
    %2203 = arith.mulf %2202, %2184 : vector<2x142xf32>
    %2204 = arith.addf %2168, %2203 : vector<2x142xf32>
    %c13_1094 = arith.constant 13 : index
    %c24_1095 = arith.constant 24 : index
    %2205 = memref.load %arg3[%c13_1094, %c24_1095] : memref<16x36xf32, #tpu.memory_space<smem>>
    %2206 = vector.broadcast %2205 : f32 to vector<2x142xf32>
    %2207 = arith.mulf %2206, %2184 : vector<2x142xf32>
    %2208 = arith.addf %2172, %2207 : vector<2x142xf32>
    %c14_1096 = arith.constant 14 : index
    %c24_1097 = arith.constant 24 : index
    %2209 = memref.load %arg3[%c14_1096, %c24_1097] : memref<16x36xf32, #tpu.memory_space<smem>>
    %2210 = vector.broadcast %2209 : f32 to vector<2x142xf32>
    %2211 = arith.mulf %2210, %2184 : vector<2x142xf32>
    %2212 = arith.addf %2176, %2211 : vector<2x142xf32>
    %c15_1098 = arith.constant 15 : index
    %c24_1099 = arith.constant 24 : index
    %2213 = memref.load %arg3[%c15_1098, %c24_1099] : memref<16x36xf32, #tpu.memory_space<smem>>
    %2214 = vector.broadcast %2213 : f32 to vector<2x142xf32>
    %2215 = arith.mulf %2214, %2184 : vector<2x142xf32>
    %2216 = arith.addf %2180, %2215 : vector<2x142xf32>
    %2217 = vector.extract_strided_slice %2183 {offsets = [0, 1], sizes = [2, 142], strides = [1, 1]} : vector<2x144xf32> to vector<2x142xf32>
    %c8_1100 = arith.constant 8 : index
    %c25_1101 = arith.constant 25 : index
    %2218 = memref.load %arg3[%c8_1100, %c25_1101] : memref<16x36xf32, #tpu.memory_space<smem>>
    %2219 = vector.broadcast %2218 : f32 to vector<2x142xf32>
    %2220 = arith.mulf %2219, %2217 : vector<2x142xf32>
    %2221 = arith.addf %2188, %2220 : vector<2x142xf32>
    %c9_1102 = arith.constant 9 : index
    %c25_1103 = arith.constant 25 : index
    %2222 = memref.load %arg3[%c9_1102, %c25_1103] : memref<16x36xf32, #tpu.memory_space<smem>>
    %2223 = vector.broadcast %2222 : f32 to vector<2x142xf32>
    %2224 = arith.mulf %2223, %2217 : vector<2x142xf32>
    %2225 = arith.addf %2192, %2224 : vector<2x142xf32>
    %c10_1104 = arith.constant 10 : index
    %c25_1105 = arith.constant 25 : index
    %2226 = memref.load %arg3[%c10_1104, %c25_1105] : memref<16x36xf32, #tpu.memory_space<smem>>
    %2227 = vector.broadcast %2226 : f32 to vector<2x142xf32>
    %2228 = arith.mulf %2227, %2217 : vector<2x142xf32>
    %2229 = arith.addf %2196, %2228 : vector<2x142xf32>
    %c11_1106 = arith.constant 11 : index
    %c25_1107 = arith.constant 25 : index
    %2230 = memref.load %arg3[%c11_1106, %c25_1107] : memref<16x36xf32, #tpu.memory_space<smem>>
    %2231 = vector.broadcast %2230 : f32 to vector<2x142xf32>
    %2232 = arith.mulf %2231, %2217 : vector<2x142xf32>
    %2233 = arith.addf %2200, %2232 : vector<2x142xf32>
    %c12_1108 = arith.constant 12 : index
    %c25_1109 = arith.constant 25 : index
    %2234 = memref.load %arg3[%c12_1108, %c25_1109] : memref<16x36xf32, #tpu.memory_space<smem>>
    %2235 = vector.broadcast %2234 : f32 to vector<2x142xf32>
    %2236 = arith.mulf %2235, %2217 : vector<2x142xf32>
    %2237 = arith.addf %2204, %2236 : vector<2x142xf32>
    %c13_1110 = arith.constant 13 : index
    %c25_1111 = arith.constant 25 : index
    %2238 = memref.load %arg3[%c13_1110, %c25_1111] : memref<16x36xf32, #tpu.memory_space<smem>>
    %2239 = vector.broadcast %2238 : f32 to vector<2x142xf32>
    %2240 = arith.mulf %2239, %2217 : vector<2x142xf32>
    %2241 = arith.addf %2208, %2240 : vector<2x142xf32>
    %c14_1112 = arith.constant 14 : index
    %c25_1113 = arith.constant 25 : index
    %2242 = memref.load %arg3[%c14_1112, %c25_1113] : memref<16x36xf32, #tpu.memory_space<smem>>
    %2243 = vector.broadcast %2242 : f32 to vector<2x142xf32>
    %2244 = arith.mulf %2243, %2217 : vector<2x142xf32>
    %2245 = arith.addf %2212, %2244 : vector<2x142xf32>
    %c15_1114 = arith.constant 15 : index
    %c25_1115 = arith.constant 25 : index
    %2246 = memref.load %arg3[%c15_1114, %c25_1115] : memref<16x36xf32, #tpu.memory_space<smem>>
    %2247 = vector.broadcast %2246 : f32 to vector<2x142xf32>
    %2248 = arith.mulf %2247, %2217 : vector<2x142xf32>
    %2249 = arith.addf %2216, %2248 : vector<2x142xf32>
    %2250 = vector.extract_strided_slice %2183 {offsets = [0, 2], sizes = [2, 142], strides = [1, 1]} : vector<2x144xf32> to vector<2x142xf32>
    %c8_1116 = arith.constant 8 : index
    %c26_1117 = arith.constant 26 : index
    %2251 = memref.load %arg3[%c8_1116, %c26_1117] : memref<16x36xf32, #tpu.memory_space<smem>>
    %2252 = vector.broadcast %2251 : f32 to vector<2x142xf32>
    %2253 = arith.mulf %2252, %2250 : vector<2x142xf32>
    %2254 = arith.addf %2221, %2253 : vector<2x142xf32>
    %c9_1118 = arith.constant 9 : index
    %c26_1119 = arith.constant 26 : index
    %2255 = memref.load %arg3[%c9_1118, %c26_1119] : memref<16x36xf32, #tpu.memory_space<smem>>
    %2256 = vector.broadcast %2255 : f32 to vector<2x142xf32>
    %2257 = arith.mulf %2256, %2250 : vector<2x142xf32>
    %2258 = arith.addf %2225, %2257 : vector<2x142xf32>
    %c10_1120 = arith.constant 10 : index
    %c26_1121 = arith.constant 26 : index
    %2259 = memref.load %arg3[%c10_1120, %c26_1121] : memref<16x36xf32, #tpu.memory_space<smem>>
    %2260 = vector.broadcast %2259 : f32 to vector<2x142xf32>
    %2261 = arith.mulf %2260, %2250 : vector<2x142xf32>
    %2262 = arith.addf %2229, %2261 : vector<2x142xf32>
    %c11_1122 = arith.constant 11 : index
    %c26_1123 = arith.constant 26 : index
    %2263 = memref.load %arg3[%c11_1122, %c26_1123] : memref<16x36xf32, #tpu.memory_space<smem>>
    %2264 = vector.broadcast %2263 : f32 to vector<2x142xf32>
    %2265 = arith.mulf %2264, %2250 : vector<2x142xf32>
    %2266 = arith.addf %2233, %2265 : vector<2x142xf32>
    %c12_1124 = arith.constant 12 : index
    %c26_1125 = arith.constant 26 : index
    %2267 = memref.load %arg3[%c12_1124, %c26_1125] : memref<16x36xf32, #tpu.memory_space<smem>>
    %2268 = vector.broadcast %2267 : f32 to vector<2x142xf32>
    %2269 = arith.mulf %2268, %2250 : vector<2x142xf32>
    %2270 = arith.addf %2237, %2269 : vector<2x142xf32>
    %c13_1126 = arith.constant 13 : index
    %c26_1127 = arith.constant 26 : index
    %2271 = memref.load %arg3[%c13_1126, %c26_1127] : memref<16x36xf32, #tpu.memory_space<smem>>
    %2272 = vector.broadcast %2271 : f32 to vector<2x142xf32>
    %2273 = arith.mulf %2272, %2250 : vector<2x142xf32>
    %2274 = arith.addf %2241, %2273 : vector<2x142xf32>
    %c14_1128 = arith.constant 14 : index
    %c26_1129 = arith.constant 26 : index
    %2275 = memref.load %arg3[%c14_1128, %c26_1129] : memref<16x36xf32, #tpu.memory_space<smem>>
    %2276 = vector.broadcast %2275 : f32 to vector<2x142xf32>
    %2277 = arith.mulf %2276, %2250 : vector<2x142xf32>
    %2278 = arith.addf %2245, %2277 : vector<2x142xf32>
    %c15_1130 = arith.constant 15 : index
    %c26_1131 = arith.constant 26 : index
    %2279 = memref.load %arg3[%c15_1130, %c26_1131] : memref<16x36xf32, #tpu.memory_space<smem>>
    %2280 = vector.broadcast %2279 : f32 to vector<2x142xf32>
    %2281 = arith.mulf %2280, %2250 : vector<2x142xf32>
    %2282 = arith.addf %2249, %2281 : vector<2x142xf32>
    %c0_1132 = arith.constant 0 : index
    %c0_1133 = arith.constant 0 : index
    %c3_1134 = arith.constant 3 : index
    %c0_1135 = arith.constant 0 : index
    %c0_1136 = arith.constant 0 : index
    %2283 = vector.load %arg2[%c0_1132, %c0_1133, %c3_1134, %c0_1135, %c0_1136] : memref<1x1x4x4x144xbf16, #tpu.memory_space<vmem>>, vector<1x1x1x2x144xbf16>
    %2284 = vector.shape_cast %2283 : vector<1x1x1x2x144xbf16> to vector<2x144xbf16>
    %2285 = arith.extf %2284 : vector<2x144xbf16> to vector<2x144xf32>
    %2286 = vector.extract_strided_slice %2285 {offsets = [0, 0], sizes = [2, 142], strides = [1, 1]} : vector<2x144xf32> to vector<2x142xf32>
    %c8_1137 = arith.constant 8 : index
    %c27_1138 = arith.constant 27 : index
    %2287 = memref.load %arg3[%c8_1137, %c27_1138] : memref<16x36xf32, #tpu.memory_space<smem>>
    %2288 = vector.broadcast %2287 : f32 to vector<2x142xf32>
    %2289 = arith.mulf %2288, %2286 : vector<2x142xf32>
    %2290 = arith.addf %2254, %2289 : vector<2x142xf32>
    %c9_1139 = arith.constant 9 : index
    %c27_1140 = arith.constant 27 : index
    %2291 = memref.load %arg3[%c9_1139, %c27_1140] : memref<16x36xf32, #tpu.memory_space<smem>>
    %2292 = vector.broadcast %2291 : f32 to vector<2x142xf32>
    %2293 = arith.mulf %2292, %2286 : vector<2x142xf32>
    %2294 = arith.addf %2258, %2293 : vector<2x142xf32>
    %c10_1141 = arith.constant 10 : index
    %c27_1142 = arith.constant 27 : index
    %2295 = memref.load %arg3[%c10_1141, %c27_1142] : memref<16x36xf32, #tpu.memory_space<smem>>
    %2296 = vector.broadcast %2295 : f32 to vector<2x142xf32>
    %2297 = arith.mulf %2296, %2286 : vector<2x142xf32>
    %2298 = arith.addf %2262, %2297 : vector<2x142xf32>
    %c11_1143 = arith.constant 11 : index
    %c27_1144 = arith.constant 27 : index
    %2299 = memref.load %arg3[%c11_1143, %c27_1144] : memref<16x36xf32, #tpu.memory_space<smem>>
    %2300 = vector.broadcast %2299 : f32 to vector<2x142xf32>
    %2301 = arith.mulf %2300, %2286 : vector<2x142xf32>
    %2302 = arith.addf %2266, %2301 : vector<2x142xf32>
    %c12_1145 = arith.constant 12 : index
    %c27_1146 = arith.constant 27 : index
    %2303 = memref.load %arg3[%c12_1145, %c27_1146] : memref<16x36xf32, #tpu.memory_space<smem>>
    %2304 = vector.broadcast %2303 : f32 to vector<2x142xf32>
    %2305 = arith.mulf %2304, %2286 : vector<2x142xf32>
    %2306 = arith.addf %2270, %2305 : vector<2x142xf32>
    %c13_1147 = arith.constant 13 : index
    %c27_1148 = arith.constant 27 : index
    %2307 = memref.load %arg3[%c13_1147, %c27_1148] : memref<16x36xf32, #tpu.memory_space<smem>>
    %2308 = vector.broadcast %2307 : f32 to vector<2x142xf32>
    %2309 = arith.mulf %2308, %2286 : vector<2x142xf32>
    %2310 = arith.addf %2274, %2309 : vector<2x142xf32>
    %c14_1149 = arith.constant 14 : index
    %c27_1150 = arith.constant 27 : index
    %2311 = memref.load %arg3[%c14_1149, %c27_1150] : memref<16x36xf32, #tpu.memory_space<smem>>
    %2312 = vector.broadcast %2311 : f32 to vector<2x142xf32>
    %2313 = arith.mulf %2312, %2286 : vector<2x142xf32>
    %2314 = arith.addf %2278, %2313 : vector<2x142xf32>
    %c15_1151 = arith.constant 15 : index
    %c27_1152 = arith.constant 27 : index
    %2315 = memref.load %arg3[%c15_1151, %c27_1152] : memref<16x36xf32, #tpu.memory_space<smem>>
    %2316 = vector.broadcast %2315 : f32 to vector<2x142xf32>
    %2317 = arith.mulf %2316, %2286 : vector<2x142xf32>
    %2318 = arith.addf %2282, %2317 : vector<2x142xf32>
    %2319 = vector.extract_strided_slice %2285 {offsets = [0, 1], sizes = [2, 142], strides = [1, 1]} : vector<2x144xf32> to vector<2x142xf32>
    %c8_1153 = arith.constant 8 : index
    %c28_1154 = arith.constant 28 : index
    %2320 = memref.load %arg3[%c8_1153, %c28_1154] : memref<16x36xf32, #tpu.memory_space<smem>>
    %2321 = vector.broadcast %2320 : f32 to vector<2x142xf32>
    %2322 = arith.mulf %2321, %2319 : vector<2x142xf32>
    %2323 = arith.addf %2290, %2322 : vector<2x142xf32>
    %c9_1155 = arith.constant 9 : index
    %c28_1156 = arith.constant 28 : index
    %2324 = memref.load %arg3[%c9_1155, %c28_1156] : memref<16x36xf32, #tpu.memory_space<smem>>
    %2325 = vector.broadcast %2324 : f32 to vector<2x142xf32>
    %2326 = arith.mulf %2325, %2319 : vector<2x142xf32>
    %2327 = arith.addf %2294, %2326 : vector<2x142xf32>
    %c10_1157 = arith.constant 10 : index
    %c28_1158 = arith.constant 28 : index
    %2328 = memref.load %arg3[%c10_1157, %c28_1158] : memref<16x36xf32, #tpu.memory_space<smem>>
    %2329 = vector.broadcast %2328 : f32 to vector<2x142xf32>
    %2330 = arith.mulf %2329, %2319 : vector<2x142xf32>
    %2331 = arith.addf %2298, %2330 : vector<2x142xf32>
    %c11_1159 = arith.constant 11 : index
    %c28_1160 = arith.constant 28 : index
    %2332 = memref.load %arg3[%c11_1159, %c28_1160] : memref<16x36xf32, #tpu.memory_space<smem>>
    %2333 = vector.broadcast %2332 : f32 to vector<2x142xf32>
    %2334 = arith.mulf %2333, %2319 : vector<2x142xf32>
    %2335 = arith.addf %2302, %2334 : vector<2x142xf32>
    %c12_1161 = arith.constant 12 : index
    %c28_1162 = arith.constant 28 : index
    %2336 = memref.load %arg3[%c12_1161, %c28_1162] : memref<16x36xf32, #tpu.memory_space<smem>>
    %2337 = vector.broadcast %2336 : f32 to vector<2x142xf32>
    %2338 = arith.mulf %2337, %2319 : vector<2x142xf32>
    %2339 = arith.addf %2306, %2338 : vector<2x142xf32>
    %c13_1163 = arith.constant 13 : index
    %c28_1164 = arith.constant 28 : index
    %2340 = memref.load %arg3[%c13_1163, %c28_1164] : memref<16x36xf32, #tpu.memory_space<smem>>
    %2341 = vector.broadcast %2340 : f32 to vector<2x142xf32>
    %2342 = arith.mulf %2341, %2319 : vector<2x142xf32>
    %2343 = arith.addf %2310, %2342 : vector<2x142xf32>
    %c14_1165 = arith.constant 14 : index
    %c28_1166 = arith.constant 28 : index
    %2344 = memref.load %arg3[%c14_1165, %c28_1166] : memref<16x36xf32, #tpu.memory_space<smem>>
    %2345 = vector.broadcast %2344 : f32 to vector<2x142xf32>
    %2346 = arith.mulf %2345, %2319 : vector<2x142xf32>
    %2347 = arith.addf %2314, %2346 : vector<2x142xf32>
    %c15_1167 = arith.constant 15 : index
    %c28_1168 = arith.constant 28 : index
    %2348 = memref.load %arg3[%c15_1167, %c28_1168] : memref<16x36xf32, #tpu.memory_space<smem>>
    %2349 = vector.broadcast %2348 : f32 to vector<2x142xf32>
    %2350 = arith.mulf %2349, %2319 : vector<2x142xf32>
    %2351 = arith.addf %2318, %2350 : vector<2x142xf32>
    %2352 = vector.extract_strided_slice %2285 {offsets = [0, 2], sizes = [2, 142], strides = [1, 1]} : vector<2x144xf32> to vector<2x142xf32>
    %c8_1169 = arith.constant 8 : index
    %c29_1170 = arith.constant 29 : index
    %2353 = memref.load %arg3[%c8_1169, %c29_1170] : memref<16x36xf32, #tpu.memory_space<smem>>
    %2354 = vector.broadcast %2353 : f32 to vector<2x142xf32>
    %2355 = arith.mulf %2354, %2352 : vector<2x142xf32>
    %2356 = arith.addf %2323, %2355 : vector<2x142xf32>
    %c9_1171 = arith.constant 9 : index
    %c29_1172 = arith.constant 29 : index
    %2357 = memref.load %arg3[%c9_1171, %c29_1172] : memref<16x36xf32, #tpu.memory_space<smem>>
    %2358 = vector.broadcast %2357 : f32 to vector<2x142xf32>
    %2359 = arith.mulf %2358, %2352 : vector<2x142xf32>
    %2360 = arith.addf %2327, %2359 : vector<2x142xf32>
    %c10_1173 = arith.constant 10 : index
    %c29_1174 = arith.constant 29 : index
    %2361 = memref.load %arg3[%c10_1173, %c29_1174] : memref<16x36xf32, #tpu.memory_space<smem>>
    %2362 = vector.broadcast %2361 : f32 to vector<2x142xf32>
    %2363 = arith.mulf %2362, %2352 : vector<2x142xf32>
    %2364 = arith.addf %2331, %2363 : vector<2x142xf32>
    %c11_1175 = arith.constant 11 : index
    %c29_1176 = arith.constant 29 : index
    %2365 = memref.load %arg3[%c11_1175, %c29_1176] : memref<16x36xf32, #tpu.memory_space<smem>>
    %2366 = vector.broadcast %2365 : f32 to vector<2x142xf32>
    %2367 = arith.mulf %2366, %2352 : vector<2x142xf32>
    %2368 = arith.addf %2335, %2367 : vector<2x142xf32>
    %c12_1177 = arith.constant 12 : index
    %c29_1178 = arith.constant 29 : index
    %2369 = memref.load %arg3[%c12_1177, %c29_1178] : memref<16x36xf32, #tpu.memory_space<smem>>
    %2370 = vector.broadcast %2369 : f32 to vector<2x142xf32>
    %2371 = arith.mulf %2370, %2352 : vector<2x142xf32>
    %2372 = arith.addf %2339, %2371 : vector<2x142xf32>
    %c13_1179 = arith.constant 13 : index
    %c29_1180 = arith.constant 29 : index
    %2373 = memref.load %arg3[%c13_1179, %c29_1180] : memref<16x36xf32, #tpu.memory_space<smem>>
    %2374 = vector.broadcast %2373 : f32 to vector<2x142xf32>
    %2375 = arith.mulf %2374, %2352 : vector<2x142xf32>
    %2376 = arith.addf %2343, %2375 : vector<2x142xf32>
    %c14_1181 = arith.constant 14 : index
    %c29_1182 = arith.constant 29 : index
    %2377 = memref.load %arg3[%c14_1181, %c29_1182] : memref<16x36xf32, #tpu.memory_space<smem>>
    %2378 = vector.broadcast %2377 : f32 to vector<2x142xf32>
    %2379 = arith.mulf %2378, %2352 : vector<2x142xf32>
    %2380 = arith.addf %2347, %2379 : vector<2x142xf32>
    %c15_1183 = arith.constant 15 : index
    %c29_1184 = arith.constant 29 : index
    %2381 = memref.load %arg3[%c15_1183, %c29_1184] : memref<16x36xf32, #tpu.memory_space<smem>>
    %2382 = vector.broadcast %2381 : f32 to vector<2x142xf32>
    %2383 = arith.mulf %2382, %2352 : vector<2x142xf32>
    %2384 = arith.addf %2351, %2383 : vector<2x142xf32>
    %c0_1185 = arith.constant 0 : index
    %c0_1186 = arith.constant 0 : index
    %c3_1187 = arith.constant 3 : index
    %c1_1188 = arith.constant 1 : index
    %c0_1189 = arith.constant 0 : index
    %2385 = vector.load %arg2[%c0_1185, %c0_1186, %c3_1187, %c1_1188, %c0_1189] : memref<1x1x4x4x144xbf16, #tpu.memory_space<vmem>>, vector<1x1x1x2x144xbf16>
    %2386 = vector.shape_cast %2385 : vector<1x1x1x2x144xbf16> to vector<2x144xbf16>
    %2387 = arith.extf %2386 : vector<2x144xbf16> to vector<2x144xf32>
    %2388 = vector.extract_strided_slice %2387 {offsets = [0, 0], sizes = [2, 142], strides = [1, 1]} : vector<2x144xf32> to vector<2x142xf32>
    %c8_1190 = arith.constant 8 : index
    %c30_1191 = arith.constant 30 : index
    %2389 = memref.load %arg3[%c8_1190, %c30_1191] : memref<16x36xf32, #tpu.memory_space<smem>>
    %2390 = vector.broadcast %2389 : f32 to vector<2x142xf32>
    %2391 = arith.mulf %2390, %2388 : vector<2x142xf32>
    %2392 = arith.addf %2356, %2391 : vector<2x142xf32>
    %c9_1192 = arith.constant 9 : index
    %c30_1193 = arith.constant 30 : index
    %2393 = memref.load %arg3[%c9_1192, %c30_1193] : memref<16x36xf32, #tpu.memory_space<smem>>
    %2394 = vector.broadcast %2393 : f32 to vector<2x142xf32>
    %2395 = arith.mulf %2394, %2388 : vector<2x142xf32>
    %2396 = arith.addf %2360, %2395 : vector<2x142xf32>
    %c10_1194 = arith.constant 10 : index
    %c30_1195 = arith.constant 30 : index
    %2397 = memref.load %arg3[%c10_1194, %c30_1195] : memref<16x36xf32, #tpu.memory_space<smem>>
    %2398 = vector.broadcast %2397 : f32 to vector<2x142xf32>
    %2399 = arith.mulf %2398, %2388 : vector<2x142xf32>
    %2400 = arith.addf %2364, %2399 : vector<2x142xf32>
    %c11_1196 = arith.constant 11 : index
    %c30_1197 = arith.constant 30 : index
    %2401 = memref.load %arg3[%c11_1196, %c30_1197] : memref<16x36xf32, #tpu.memory_space<smem>>
    %2402 = vector.broadcast %2401 : f32 to vector<2x142xf32>
    %2403 = arith.mulf %2402, %2388 : vector<2x142xf32>
    %2404 = arith.addf %2368, %2403 : vector<2x142xf32>
    %c12_1198 = arith.constant 12 : index
    %c30_1199 = arith.constant 30 : index
    %2405 = memref.load %arg3[%c12_1198, %c30_1199] : memref<16x36xf32, #tpu.memory_space<smem>>
    %2406 = vector.broadcast %2405 : f32 to vector<2x142xf32>
    %2407 = arith.mulf %2406, %2388 : vector<2x142xf32>
    %2408 = arith.addf %2372, %2407 : vector<2x142xf32>
    %c13_1200 = arith.constant 13 : index
    %c30_1201 = arith.constant 30 : index
    %2409 = memref.load %arg3[%c13_1200, %c30_1201] : memref<16x36xf32, #tpu.memory_space<smem>>
    %2410 = vector.broadcast %2409 : f32 to vector<2x142xf32>
    %2411 = arith.mulf %2410, %2388 : vector<2x142xf32>
    %2412 = arith.addf %2376, %2411 : vector<2x142xf32>
    %c14_1202 = arith.constant 14 : index
    %c30_1203 = arith.constant 30 : index
    %2413 = memref.load %arg3[%c14_1202, %c30_1203] : memref<16x36xf32, #tpu.memory_space<smem>>
    %2414 = vector.broadcast %2413 : f32 to vector<2x142xf32>
    %2415 = arith.mulf %2414, %2388 : vector<2x142xf32>
    %2416 = arith.addf %2380, %2415 : vector<2x142xf32>
    %c15_1204 = arith.constant 15 : index
    %c30_1205 = arith.constant 30 : index
    %2417 = memref.load %arg3[%c15_1204, %c30_1205] : memref<16x36xf32, #tpu.memory_space<smem>>
    %2418 = vector.broadcast %2417 : f32 to vector<2x142xf32>
    %2419 = arith.mulf %2418, %2388 : vector<2x142xf32>
    %2420 = arith.addf %2384, %2419 : vector<2x142xf32>
    %2421 = vector.extract_strided_slice %2387 {offsets = [0, 1], sizes = [2, 142], strides = [1, 1]} : vector<2x144xf32> to vector<2x142xf32>
    %c8_1206 = arith.constant 8 : index
    %c31_1207 = arith.constant 31 : index
    %2422 = memref.load %arg3[%c8_1206, %c31_1207] : memref<16x36xf32, #tpu.memory_space<smem>>
    %2423 = vector.broadcast %2422 : f32 to vector<2x142xf32>
    %2424 = arith.mulf %2423, %2421 : vector<2x142xf32>
    %2425 = arith.addf %2392, %2424 : vector<2x142xf32>
    %c9_1208 = arith.constant 9 : index
    %c31_1209 = arith.constant 31 : index
    %2426 = memref.load %arg3[%c9_1208, %c31_1209] : memref<16x36xf32, #tpu.memory_space<smem>>
    %2427 = vector.broadcast %2426 : f32 to vector<2x142xf32>
    %2428 = arith.mulf %2427, %2421 : vector<2x142xf32>
    %2429 = arith.addf %2396, %2428 : vector<2x142xf32>
    %c10_1210 = arith.constant 10 : index
    %c31_1211 = arith.constant 31 : index
    %2430 = memref.load %arg3[%c10_1210, %c31_1211] : memref<16x36xf32, #tpu.memory_space<smem>>
    %2431 = vector.broadcast %2430 : f32 to vector<2x142xf32>
    %2432 = arith.mulf %2431, %2421 : vector<2x142xf32>
    %2433 = arith.addf %2400, %2432 : vector<2x142xf32>
    %c11_1212 = arith.constant 11 : index
    %c31_1213 = arith.constant 31 : index
    %2434 = memref.load %arg3[%c11_1212, %c31_1213] : memref<16x36xf32, #tpu.memory_space<smem>>
    %2435 = vector.broadcast %2434 : f32 to vector<2x142xf32>
    %2436 = arith.mulf %2435, %2421 : vector<2x142xf32>
    %2437 = arith.addf %2404, %2436 : vector<2x142xf32>
    %c12_1214 = arith.constant 12 : index
    %c31_1215 = arith.constant 31 : index
    %2438 = memref.load %arg3[%c12_1214, %c31_1215] : memref<16x36xf32, #tpu.memory_space<smem>>
    %2439 = vector.broadcast %2438 : f32 to vector<2x142xf32>
    %2440 = arith.mulf %2439, %2421 : vector<2x142xf32>
    %2441 = arith.addf %2408, %2440 : vector<2x142xf32>
    %c13_1216 = arith.constant 13 : index
    %c31_1217 = arith.constant 31 : index
    %2442 = memref.load %arg3[%c13_1216, %c31_1217] : memref<16x36xf32, #tpu.memory_space<smem>>
    %2443 = vector.broadcast %2442 : f32 to vector<2x142xf32>
    %2444 = arith.mulf %2443, %2421 : vector<2x142xf32>
    %2445 = arith.addf %2412, %2444 : vector<2x142xf32>
    %c14_1218 = arith.constant 14 : index
    %c31_1219 = arith.constant 31 : index
    %2446 = memref.load %arg3[%c14_1218, %c31_1219] : memref<16x36xf32, #tpu.memory_space<smem>>
    %2447 = vector.broadcast %2446 : f32 to vector<2x142xf32>
    %2448 = arith.mulf %2447, %2421 : vector<2x142xf32>
    %2449 = arith.addf %2416, %2448 : vector<2x142xf32>
    %c15_1220 = arith.constant 15 : index
    %c31_1221 = arith.constant 31 : index
    %2450 = memref.load %arg3[%c15_1220, %c31_1221] : memref<16x36xf32, #tpu.memory_space<smem>>
    %2451 = vector.broadcast %2450 : f32 to vector<2x142xf32>
    %2452 = arith.mulf %2451, %2421 : vector<2x142xf32>
    %2453 = arith.addf %2420, %2452 : vector<2x142xf32>
    %2454 = vector.extract_strided_slice %2387 {offsets = [0, 2], sizes = [2, 142], strides = [1, 1]} : vector<2x144xf32> to vector<2x142xf32>
    %c8_1222 = arith.constant 8 : index
    %c32_1223 = arith.constant 32 : index
    %2455 = memref.load %arg3[%c8_1222, %c32_1223] : memref<16x36xf32, #tpu.memory_space<smem>>
    %2456 = vector.broadcast %2455 : f32 to vector<2x142xf32>
    %2457 = arith.mulf %2456, %2454 : vector<2x142xf32>
    %2458 = arith.addf %2425, %2457 : vector<2x142xf32>
    %c9_1224 = arith.constant 9 : index
    %c32_1225 = arith.constant 32 : index
    %2459 = memref.load %arg3[%c9_1224, %c32_1225] : memref<16x36xf32, #tpu.memory_space<smem>>
    %2460 = vector.broadcast %2459 : f32 to vector<2x142xf32>
    %2461 = arith.mulf %2460, %2454 : vector<2x142xf32>
    %2462 = arith.addf %2429, %2461 : vector<2x142xf32>
    %c10_1226 = arith.constant 10 : index
    %c32_1227 = arith.constant 32 : index
    %2463 = memref.load %arg3[%c10_1226, %c32_1227] : memref<16x36xf32, #tpu.memory_space<smem>>
    %2464 = vector.broadcast %2463 : f32 to vector<2x142xf32>
    %2465 = arith.mulf %2464, %2454 : vector<2x142xf32>
    %2466 = arith.addf %2433, %2465 : vector<2x142xf32>
    %c11_1228 = arith.constant 11 : index
    %c32_1229 = arith.constant 32 : index
    %2467 = memref.load %arg3[%c11_1228, %c32_1229] : memref<16x36xf32, #tpu.memory_space<smem>>
    %2468 = vector.broadcast %2467 : f32 to vector<2x142xf32>
    %2469 = arith.mulf %2468, %2454 : vector<2x142xf32>
    %2470 = arith.addf %2437, %2469 : vector<2x142xf32>
    %c12_1230 = arith.constant 12 : index
    %c32_1231 = arith.constant 32 : index
    %2471 = memref.load %arg3[%c12_1230, %c32_1231] : memref<16x36xf32, #tpu.memory_space<smem>>
    %2472 = vector.broadcast %2471 : f32 to vector<2x142xf32>
    %2473 = arith.mulf %2472, %2454 : vector<2x142xf32>
    %2474 = arith.addf %2441, %2473 : vector<2x142xf32>
    %c13_1232 = arith.constant 13 : index
    %c32_1233 = arith.constant 32 : index
    %2475 = memref.load %arg3[%c13_1232, %c32_1233] : memref<16x36xf32, #tpu.memory_space<smem>>
    %2476 = vector.broadcast %2475 : f32 to vector<2x142xf32>
    %2477 = arith.mulf %2476, %2454 : vector<2x142xf32>
    %2478 = arith.addf %2445, %2477 : vector<2x142xf32>
    %c14_1234 = arith.constant 14 : index
    %c32_1235 = arith.constant 32 : index
    %2479 = memref.load %arg3[%c14_1234, %c32_1235] : memref<16x36xf32, #tpu.memory_space<smem>>
    %2480 = vector.broadcast %2479 : f32 to vector<2x142xf32>
    %2481 = arith.mulf %2480, %2454 : vector<2x142xf32>
    %2482 = arith.addf %2449, %2481 : vector<2x142xf32>
    %c15_1236 = arith.constant 15 : index
    %c32_1237 = arith.constant 32 : index
    %2483 = memref.load %arg3[%c15_1236, %c32_1237] : memref<16x36xf32, #tpu.memory_space<smem>>
    %2484 = vector.broadcast %2483 : f32 to vector<2x142xf32>
    %2485 = arith.mulf %2484, %2454 : vector<2x142xf32>
    %2486 = arith.addf %2453, %2485 : vector<2x142xf32>
    %c0_1238 = arith.constant 0 : index
    %c0_1239 = arith.constant 0 : index
    %c3_1240 = arith.constant 3 : index
    %c2_1241 = arith.constant 2 : index
    %c0_1242 = arith.constant 0 : index
    %2487 = vector.load %arg2[%c0_1238, %c0_1239, %c3_1240, %c2_1241, %c0_1242] : memref<1x1x4x4x144xbf16, #tpu.memory_space<vmem>>, vector<1x1x1x2x144xbf16>
    %2488 = vector.shape_cast %2487 : vector<1x1x1x2x144xbf16> to vector<2x144xbf16>
    %2489 = arith.extf %2488 : vector<2x144xbf16> to vector<2x144xf32>
    %2490 = vector.extract_strided_slice %2489 {offsets = [0, 0], sizes = [2, 142], strides = [1, 1]} : vector<2x144xf32> to vector<2x142xf32>
    %c8_1243 = arith.constant 8 : index
    %c33_1244 = arith.constant 33 : index
    %2491 = memref.load %arg3[%c8_1243, %c33_1244] : memref<16x36xf32, #tpu.memory_space<smem>>
    %2492 = vector.broadcast %2491 : f32 to vector<2x142xf32>
    %2493 = arith.mulf %2492, %2490 : vector<2x142xf32>
    %2494 = arith.addf %2458, %2493 : vector<2x142xf32>
    %c9_1245 = arith.constant 9 : index
    %c33_1246 = arith.constant 33 : index
    %2495 = memref.load %arg3[%c9_1245, %c33_1246] : memref<16x36xf32, #tpu.memory_space<smem>>
    %2496 = vector.broadcast %2495 : f32 to vector<2x142xf32>
    %2497 = arith.mulf %2496, %2490 : vector<2x142xf32>
    %2498 = arith.addf %2462, %2497 : vector<2x142xf32>
    %c10_1247 = arith.constant 10 : index
    %c33_1248 = arith.constant 33 : index
    %2499 = memref.load %arg3[%c10_1247, %c33_1248] : memref<16x36xf32, #tpu.memory_space<smem>>
    %2500 = vector.broadcast %2499 : f32 to vector<2x142xf32>
    %2501 = arith.mulf %2500, %2490 : vector<2x142xf32>
    %2502 = arith.addf %2466, %2501 : vector<2x142xf32>
    %c11_1249 = arith.constant 11 : index
    %c33_1250 = arith.constant 33 : index
    %2503 = memref.load %arg3[%c11_1249, %c33_1250] : memref<16x36xf32, #tpu.memory_space<smem>>
    %2504 = vector.broadcast %2503 : f32 to vector<2x142xf32>
    %2505 = arith.mulf %2504, %2490 : vector<2x142xf32>
    %2506 = arith.addf %2470, %2505 : vector<2x142xf32>
    %c12_1251 = arith.constant 12 : index
    %c33_1252 = arith.constant 33 : index
    %2507 = memref.load %arg3[%c12_1251, %c33_1252] : memref<16x36xf32, #tpu.memory_space<smem>>
    %2508 = vector.broadcast %2507 : f32 to vector<2x142xf32>
    %2509 = arith.mulf %2508, %2490 : vector<2x142xf32>
    %2510 = arith.addf %2474, %2509 : vector<2x142xf32>
    %c13_1253 = arith.constant 13 : index
    %c33_1254 = arith.constant 33 : index
    %2511 = memref.load %arg3[%c13_1253, %c33_1254] : memref<16x36xf32, #tpu.memory_space<smem>>
    %2512 = vector.broadcast %2511 : f32 to vector<2x142xf32>
    %2513 = arith.mulf %2512, %2490 : vector<2x142xf32>
    %2514 = arith.addf %2478, %2513 : vector<2x142xf32>
    %c14_1255 = arith.constant 14 : index
    %c33_1256 = arith.constant 33 : index
    %2515 = memref.load %arg3[%c14_1255, %c33_1256] : memref<16x36xf32, #tpu.memory_space<smem>>
    %2516 = vector.broadcast %2515 : f32 to vector<2x142xf32>
    %2517 = arith.mulf %2516, %2490 : vector<2x142xf32>
    %2518 = arith.addf %2482, %2517 : vector<2x142xf32>
    %c15_1257 = arith.constant 15 : index
    %c33_1258 = arith.constant 33 : index
    %2519 = memref.load %arg3[%c15_1257, %c33_1258] : memref<16x36xf32, #tpu.memory_space<smem>>
    %2520 = vector.broadcast %2519 : f32 to vector<2x142xf32>
    %2521 = arith.mulf %2520, %2490 : vector<2x142xf32>
    %2522 = arith.addf %2486, %2521 : vector<2x142xf32>
    %2523 = vector.extract_strided_slice %2489 {offsets = [0, 1], sizes = [2, 142], strides = [1, 1]} : vector<2x144xf32> to vector<2x142xf32>
    %c8_1259 = arith.constant 8 : index
    %c34_1260 = arith.constant 34 : index
    %2524 = memref.load %arg3[%c8_1259, %c34_1260] : memref<16x36xf32, #tpu.memory_space<smem>>
    %2525 = vector.broadcast %2524 : f32 to vector<2x142xf32>
    %2526 = arith.mulf %2525, %2523 : vector<2x142xf32>
    %2527 = arith.addf %2494, %2526 : vector<2x142xf32>
    %c9_1261 = arith.constant 9 : index
    %c34_1262 = arith.constant 34 : index
    %2528 = memref.load %arg3[%c9_1261, %c34_1262] : memref<16x36xf32, #tpu.memory_space<smem>>
    %2529 = vector.broadcast %2528 : f32 to vector<2x142xf32>
    %2530 = arith.mulf %2529, %2523 : vector<2x142xf32>
    %2531 = arith.addf %2498, %2530 : vector<2x142xf32>
    %c10_1263 = arith.constant 10 : index
    %c34_1264 = arith.constant 34 : index
    %2532 = memref.load %arg3[%c10_1263, %c34_1264] : memref<16x36xf32, #tpu.memory_space<smem>>
    %2533 = vector.broadcast %2532 : f32 to vector<2x142xf32>
    %2534 = arith.mulf %2533, %2523 : vector<2x142xf32>
    %2535 = arith.addf %2502, %2534 : vector<2x142xf32>
    %c11_1265 = arith.constant 11 : index
    %c34_1266 = arith.constant 34 : index
    %2536 = memref.load %arg3[%c11_1265, %c34_1266] : memref<16x36xf32, #tpu.memory_space<smem>>
    %2537 = vector.broadcast %2536 : f32 to vector<2x142xf32>
    %2538 = arith.mulf %2537, %2523 : vector<2x142xf32>
    %2539 = arith.addf %2506, %2538 : vector<2x142xf32>
    %c12_1267 = arith.constant 12 : index
    %c34_1268 = arith.constant 34 : index
    %2540 = memref.load %arg3[%c12_1267, %c34_1268] : memref<16x36xf32, #tpu.memory_space<smem>>
    %2541 = vector.broadcast %2540 : f32 to vector<2x142xf32>
    %2542 = arith.mulf %2541, %2523 : vector<2x142xf32>
    %2543 = arith.addf %2510, %2542 : vector<2x142xf32>
    %c13_1269 = arith.constant 13 : index
    %c34_1270 = arith.constant 34 : index
    %2544 = memref.load %arg3[%c13_1269, %c34_1270] : memref<16x36xf32, #tpu.memory_space<smem>>
    %2545 = vector.broadcast %2544 : f32 to vector<2x142xf32>
    %2546 = arith.mulf %2545, %2523 : vector<2x142xf32>
    %2547 = arith.addf %2514, %2546 : vector<2x142xf32>
    %c14_1271 = arith.constant 14 : index
    %c34_1272 = arith.constant 34 : index
    %2548 = memref.load %arg3[%c14_1271, %c34_1272] : memref<16x36xf32, #tpu.memory_space<smem>>
    %2549 = vector.broadcast %2548 : f32 to vector<2x142xf32>
    %2550 = arith.mulf %2549, %2523 : vector<2x142xf32>
    %2551 = arith.addf %2518, %2550 : vector<2x142xf32>
    %c15_1273 = arith.constant 15 : index
    %c34_1274 = arith.constant 34 : index
    %2552 = memref.load %arg3[%c15_1273, %c34_1274] : memref<16x36xf32, #tpu.memory_space<smem>>
    %2553 = vector.broadcast %2552 : f32 to vector<2x142xf32>
    %2554 = arith.mulf %2553, %2523 : vector<2x142xf32>
    %2555 = arith.addf %2522, %2554 : vector<2x142xf32>
    %2556 = vector.extract_strided_slice %2489 {offsets = [0, 2], sizes = [2, 142], strides = [1, 1]} : vector<2x144xf32> to vector<2x142xf32>
    %c8_1275 = arith.constant 8 : index
    %c35_1276 = arith.constant 35 : index
    %2557 = memref.load %arg3[%c8_1275, %c35_1276] : memref<16x36xf32, #tpu.memory_space<smem>>
    %2558 = vector.broadcast %2557 : f32 to vector<2x142xf32>
    %2559 = arith.mulf %2558, %2556 : vector<2x142xf32>
    %2560 = arith.addf %2527, %2559 : vector<2x142xf32>
    %c9_1277 = arith.constant 9 : index
    %c35_1278 = arith.constant 35 : index
    %2561 = memref.load %arg3[%c9_1277, %c35_1278] : memref<16x36xf32, #tpu.memory_space<smem>>
    %2562 = vector.broadcast %2561 : f32 to vector<2x142xf32>
    %2563 = arith.mulf %2562, %2556 : vector<2x142xf32>
    %2564 = arith.addf %2531, %2563 : vector<2x142xf32>
    %c10_1279 = arith.constant 10 : index
    %c35_1280 = arith.constant 35 : index
    %2565 = memref.load %arg3[%c10_1279, %c35_1280] : memref<16x36xf32, #tpu.memory_space<smem>>
    %2566 = vector.broadcast %2565 : f32 to vector<2x142xf32>
    %2567 = arith.mulf %2566, %2556 : vector<2x142xf32>
    %2568 = arith.addf %2535, %2567 : vector<2x142xf32>
    %c11_1281 = arith.constant 11 : index
    %c35_1282 = arith.constant 35 : index
    %2569 = memref.load %arg3[%c11_1281, %c35_1282] : memref<16x36xf32, #tpu.memory_space<smem>>
    %2570 = vector.broadcast %2569 : f32 to vector<2x142xf32>
    %2571 = arith.mulf %2570, %2556 : vector<2x142xf32>
    %2572 = arith.addf %2539, %2571 : vector<2x142xf32>
    %c12_1283 = arith.constant 12 : index
    %c35_1284 = arith.constant 35 : index
    %2573 = memref.load %arg3[%c12_1283, %c35_1284] : memref<16x36xf32, #tpu.memory_space<smem>>
    %2574 = vector.broadcast %2573 : f32 to vector<2x142xf32>
    %2575 = arith.mulf %2574, %2556 : vector<2x142xf32>
    %2576 = arith.addf %2543, %2575 : vector<2x142xf32>
    %c13_1285 = arith.constant 13 : index
    %c35_1286 = arith.constant 35 : index
    %2577 = memref.load %arg3[%c13_1285, %c35_1286] : memref<16x36xf32, #tpu.memory_space<smem>>
    %2578 = vector.broadcast %2577 : f32 to vector<2x142xf32>
    %2579 = arith.mulf %2578, %2556 : vector<2x142xf32>
    %2580 = arith.addf %2547, %2579 : vector<2x142xf32>
    %c14_1287 = arith.constant 14 : index
    %c35_1288 = arith.constant 35 : index
    %2581 = memref.load %arg3[%c14_1287, %c35_1288] : memref<16x36xf32, #tpu.memory_space<smem>>
    %2582 = vector.broadcast %2581 : f32 to vector<2x142xf32>
    %2583 = arith.mulf %2582, %2556 : vector<2x142xf32>
    %2584 = arith.addf %2551, %2583 : vector<2x142xf32>
    %c15_1289 = arith.constant 15 : index
    %c35_1290 = arith.constant 35 : index
    %2585 = memref.load %arg3[%c15_1289, %c35_1290] : memref<16x36xf32, #tpu.memory_space<smem>>
    %2586 = vector.broadcast %2585 : f32 to vector<2x142xf32>
    %2587 = arith.mulf %2586, %2556 : vector<2x142xf32>
    %2588 = arith.addf %2555, %2587 : vector<2x142xf32>
    %cst_1291 = arith.constant 0.000000e+00 : f32
    %2589 = vector.broadcast %cst_1291 : f32 to vector<2x142xf32>
    %2590 = arith.maximumf %2560, %2589 : vector<2x142xf32>
    %cst_1292 = arith.constant 0.000000e+00 : f32
    %2591 = vector.broadcast %cst_1292 : f32 to vector<2x142xf32>
    %2592 = arith.maximumf %2564, %2591 : vector<2x142xf32>
    %cst_1293 = arith.constant 0.000000e+00 : f32
    %2593 = vector.broadcast %cst_1293 : f32 to vector<2x142xf32>
    %2594 = arith.maximumf %2568, %2593 : vector<2x142xf32>
    %cst_1294 = arith.constant 0.000000e+00 : f32
    %2595 = vector.broadcast %cst_1294 : f32 to vector<2x142xf32>
    %2596 = arith.maximumf %2572, %2595 : vector<2x142xf32>
    %cst_1295 = arith.constant 0.000000e+00 : f32
    %2597 = vector.broadcast %cst_1295 : f32 to vector<2x142xf32>
    %2598 = arith.maximumf %2576, %2597 : vector<2x142xf32>
    %cst_1296 = arith.constant 0.000000e+00 : f32
    %2599 = vector.broadcast %cst_1296 : f32 to vector<2x142xf32>
    %2600 = arith.maximumf %2580, %2599 : vector<2x142xf32>
    %cst_1297 = arith.constant 0.000000e+00 : f32
    %2601 = vector.broadcast %cst_1297 : f32 to vector<2x142xf32>
    %2602 = arith.maximumf %2584, %2601 : vector<2x142xf32>
    %cst_1298 = arith.constant 0.000000e+00 : f32
    %2603 = vector.broadcast %cst_1298 : f32 to vector<2x142xf32>
    %2604 = arith.maximumf %2588, %2603 : vector<2x142xf32>
    %c0_1299 = arith.constant 0 : index
    %2605 = memref.load %arg6[%c0_1299] : memref<1xf32, #tpu.memory_space<smem>>
    %2606 = vector.broadcast %2605 : f32 to vector<2x142xf32>
    %c0_1300 = arith.constant 0 : index
    %2607 = memref.load %arg5[%c0_1300] : memref<8xf32, #tpu.memory_space<smem>>
    %2608 = vector.broadcast %2607 : f32 to vector<2x142xf32>
    %2609 = arith.mulf %2608, %2590 : vector<2x142xf32>
    %2610 = arith.addf %2606, %2609 : vector<2x142xf32>
    %c1_1301 = arith.constant 1 : index
    %2611 = memref.load %arg5[%c1_1301] : memref<8xf32, #tpu.memory_space<smem>>
    %2612 = vector.broadcast %2611 : f32 to vector<2x142xf32>
    %2613 = arith.mulf %2612, %2592 : vector<2x142xf32>
    %2614 = arith.addf %2610, %2613 : vector<2x142xf32>
    %c2_1302 = arith.constant 2 : index
    %2615 = memref.load %arg5[%c2_1302] : memref<8xf32, #tpu.memory_space<smem>>
    %2616 = vector.broadcast %2615 : f32 to vector<2x142xf32>
    %2617 = arith.mulf %2616, %2594 : vector<2x142xf32>
    %2618 = arith.addf %2614, %2617 : vector<2x142xf32>
    %c3_1303 = arith.constant 3 : index
    %2619 = memref.load %arg5[%c3_1303] : memref<8xf32, #tpu.memory_space<smem>>
    %2620 = vector.broadcast %2619 : f32 to vector<2x142xf32>
    %2621 = arith.mulf %2620, %2596 : vector<2x142xf32>
    %2622 = arith.addf %2618, %2621 : vector<2x142xf32>
    %c4_1304 = arith.constant 4 : index
    %2623 = memref.load %arg5[%c4_1304] : memref<8xf32, #tpu.memory_space<smem>>
    %2624 = vector.broadcast %2623 : f32 to vector<2x142xf32>
    %2625 = arith.mulf %2624, %2598 : vector<2x142xf32>
    %2626 = arith.addf %2622, %2625 : vector<2x142xf32>
    %c5_1305 = arith.constant 5 : index
    %2627 = memref.load %arg5[%c5_1305] : memref<8xf32, #tpu.memory_space<smem>>
    %2628 = vector.broadcast %2627 : f32 to vector<2x142xf32>
    %2629 = arith.mulf %2628, %2600 : vector<2x142xf32>
    %2630 = arith.addf %2626, %2629 : vector<2x142xf32>
    %c6_1306 = arith.constant 6 : index
    %2631 = memref.load %arg5[%c6_1306] : memref<8xf32, #tpu.memory_space<smem>>
    %2632 = vector.broadcast %2631 : f32 to vector<2x142xf32>
    %2633 = arith.mulf %2632, %2602 : vector<2x142xf32>
    %2634 = arith.addf %2630, %2633 : vector<2x142xf32>
    %c7_1307 = arith.constant 7 : index
    %2635 = memref.load %arg5[%c7_1307] : memref<8xf32, #tpu.memory_space<smem>>
    %2636 = vector.broadcast %2635 : f32 to vector<2x142xf32>
    %2637 = arith.mulf %2636, %2604 : vector<2x142xf32>
    %2638 = arith.addf %2634, %2637 : vector<2x142xf32>
    %c0_1308 = arith.constant 0 : index
    %c0_1309 = arith.constant 0 : index
    %c0_1310 = arith.constant 0 : index
    %2639 = vector.load %arg9[%c0_1308, %c0_1309, %c0_1310] : memref<1x2x142xf32, #tpu.memory_space<vmem>>, vector<1x2x142xf32>
    %2640 = vector.shape_cast %2639 : vector<1x2x142xf32> to vector<2x142xf32>
    %2641 = vector.shape_cast %2638 : vector<2x142xf32> to vector<1x2x142xf32>
    tpu.vector_store %arg9[%c0_1308, %c0_1309, %c0_1310], %2641 {strides = array<i32>} : memref<1x2x142xf32, #tpu.memory_space<vmem>>, vector<1x2x142xf32>,
    return
  }
  func.func @transform_0(%arg0: i32, %arg1: i32) -> (i32, i32, i32, i32, i32) {
    %c0_i32 = arith.constant 0 : i32
    %c0_i32_0 = arith.constant 0 : i32
    %c0_i32_1 = arith.constant 0 : i32
    %c0_i32_2 = arith.constant 0 : i32
    return %arg0, %arg1, %c0_i32, %c0_i32_0, %c0_i32_1 : i32, i32, i32, i32, i32
  }
  func.func @transform_1(%arg0: i32, %arg1: i32) -> (i32, i32) {
    %c0_i32 = arith.constant 0 : i32
    %c0_i32_0 = arith.constant 0 : i32
    %c0_i32_1 = arith.constant 0 : i32
    return %c0_i32, %c0_i32_0 : i32, i32
  }
  func.func @transform_2(%arg0: i32, %arg1: i32) -> i32 {
    %c0_i32 = arith.constant 0 : i32
    %c0_i32_0 = arith.constant 0 : i32
    return %c0_i32 : i32
  }
  func.func @transform_3(%arg0: i32, %arg1: i32) -> i32 {
    %c0_i32 = arith.constant 0 : i32
    %c0_i32_0 = arith.constant 0 : i32
    return %c0_i32 : i32
  }
  func.func @transform_4(%arg0: i32, %arg1: i32) -> i32 {
    %c0_i32 = arith.constant 0 : i32
    %c0_i32_0 = arith.constant 0 : i32
    return %c0_i32 : i32
  }
  func.func @transform_5(%arg0: i32, %arg1: i32) -> i32 {
    %c0_i32 = arith.constant 0 : i32
    %c0_i32_0 = arith.constant 0 : i32
    return %c0_i32 : i32
  }
  func.func @transform_6(%arg0: i32, %arg1: i32) -> (i32, i32, i32, i32) {
    %c0_i32 = arith.constant 0 : i32
    %c0_i32_0 = arith.constant 0 : i32
    %c0_i32_1 = arith.constant 0 : i32
    return %arg0, %arg1, %c0_i32, %c0_i32_0 : i32, i32, i32, i32
  }
  func.func @transform_7(%arg0: i32, %arg1: i32) -> (i32, i32, i32) {
    %c0_i32 = arith.constant 0 : i32
    %c0_i32_0 = arith.constant 0 : i32
    return %arg0, %arg1, %c0_i32 : i32, i32, i32
  }
}

</mosaic_0001>

<llo_original>
// kernel: combined_model_forward.1
$region0: #{combined_model_forward.1}
  #allocation0 [shape = 'u32[]', space=smem, size = 0x4, offset = 0x4, fixed_abs, tag = 'smem constant byte address 0x4 - core index']
  #allocation1 [shape = 'u32[144,128]{1,0:T(1,128)}', space=vmem, size = 0x12000, scoped, tag = 'internal scratch']
  #allocation2 [shape = 'f32[1]{0:T(128)S(6)}', space=smem, size = 0x200, scoped, tag = 'scoped memory for combined_model_forward.1']
  %s0 = inlined_call_operand.vmem [shape: bf16[2,1,4,4,144], index: 0, kind: input, shape index: {}]
  %s1 = inlined_call_operand.vmem [shape: f32[16,36], index: 1, kind: input, shape index: {}]
  %s2 = inlined_call_operand.vmem [shape: f32[16], index: 2, kind: input, shape index: {}]
  %s3 = inlined_call_operand.vmem [shape: f32[8], index: 3, kind: input, shape index: {}]
  %s4 = inlined_call_operand.<no memory space> [shape: f32[1], index: 4, kind: input, shape index: {}]
  %s5 = inlined_call_operand.vmem [shape: f32[8], index: 5, kind: input, shape index: {}]
  %s6 = inlined_call_operand.vmem [shape: f32[2,1,1,1], index: 6, kind: output, shape index: {0}]
  %s7 = inlined_call_operand.vmem [shape: f32[2,2,142], index: 7, kind: output, shape index: {1}]
  %8 = xla_tuple %s6, %s7
  %s9 = sld [smem:[#allocation0]]
  $region81: #{combined_model_forward.1} parent=0
    _
  %s11 = ssub.s32 1, %s9
  %s12 = scalar_select 0, %s11, %s9
  %13 = sst [smem:[#allocation2]] %s4
  $region1: #{combined_model_forward.1} parent=0
    #allocation3 [shape = 'u8[8192]{0}', space=smem, size = 0x2000, scoped, tag = 'input window, operand 1, single buffered']
    #allocation4 [shape = 's32[2]{0}', space=sflag, size = 0x8, scoped, tag = 'scoped memory for combined_model_forward.1']
    #allocation5 [shape = 'u8[512]{0}', space=smem, size = 0x200, scoped, tag = 'input window, operand 2, single buffered']
    #allocation6 [shape = 's32[1]{0}', space=sflag, size = 0x4, scoped, tag = 'scoped memory for combined_model_forward.1']
    #allocation7 [shape = 'u8[512]{0}', space=smem, size = 0x200, scoped, tag = 'input window, operand 3, single buffered']
    #allocation8 [shape = 'u8[512]{0}', space=smem, size = 0x200, scoped, tag = 'input window, operand 5, single buffered']
    #allocation9 [shape = 's32[1]{0}', space=sflag, size = 0x4, scoped, tag = 'scoped memory for combined_model_forward.1']
    %14 = vsyncpa [#allocation4], 0
    %15 = vsyncpa [#allocation6], 0
    %16 = vsyncpa [#allocation9], 0
    loop: start=0, step=1, limit=4
    $region2: #{combined_model_forward.1} parent=1 // loop_pre_header
      _
    $region3: #{combined_model_forward.1} parent=1 // loop_header
      %s18 = sphi 0, %s22
      %p19 = scmp.ge.s32.totalorder %s18, 4
      %s25 = sphi 0, %s37
      %s26 = sphi 0, %s33
      %s27 = sphi 0, %s25
      %s28 = sphi 0, %s26
      %s29 = sphi 0, %s27
      %s30 = sphi 0, %s28
      %s42 = sphi 0, %s44
      %s45 = sphi 0, %s42
      %s46 = sphi 0, %s45
      %s62 = sphi 0, %s46
      %s66 = sphi 0, %s66
      %s68 = sphi 0, %s66
      %s69 = sphi 0, %s68
      %s83 = sphi 0, %s69
      %s87 = sphi 0, %s87
      %s89 = sphi 0, %s87
      %s90 = sphi 0, %s89
      %s104 = sphi 0, %s90
      %s108 = sphi 0, %s108
      %s110 = sphi 0, %s108
      %s111 = sphi 0, %s110
      %s125 = sphi 0, %s111
      %s129 = sphi 0, %s129
      %s131 = sphi 0, %s129
      %s132 = sphi 0, %s131
      %s146 = sphi 0, %s132
      %s150 = sphi 0, %s150
      %s152 = sphi 0, %s150
      %s153 = sphi 0, %s152
      %s167 = sphi 0, %s153
      %s175 = sphi 0, %s177
      %s178 = sphi 0, %s175
      %s179 = sphi 0, %s178
      %s195 = sphi 0, %s179
      %s203 = sphi 0, %s205
      %s206 = sphi 0, %s203
      %s207 = sphi 0, %s206
      %s223 = sphi 0, %s207
    $region4: #{combined_model_forward.1} parent=1 // loop_header_branch
      %21 = sbr.rel (%p19) target = $region8
    $region5: #{combined_model_forward.1} parent=1 // loop_body
      %s23 = ssub.s32 %s18, 1
      %s24 = ssub.s32 %s18, 2
      %s31 = sadd.s32 1, %s26
      %p32 = scmp.ge.s32.totalorder %s31, 1
      %s33 = scalar_select %p32, 0, %s31
      %s34 = sadd.s32 1, %s25
      %s35 = scalar_select %p32, %s34, %s25
      %p36 = scmp.ge.s32.totalorder %s35, 2
      %s37 = scalar_select %p36, 0, %s35
      %s38 = ssub.s32 %s25, %s37
      %s39 = ssub.s32 %s26, %s33
      %s40 = sor.u32 %s38, %s39
      %p41 = scmp.eq.s32.totalorder %s40, 0
      %s43 = sadd.s32 %s42, 1
      %s44 = scalar_select %p41, %s42, %s43
      %p47 = pneg %p41
      %p48 = scmp.eq.s32.totalorder %s18, 1
      %p49 = por %p47, %p48
      %p50 = scmp.ne.s32.totalorder %s42, %s45
      %p51 = scmp.eq.s32.totalorder %s18, 0
      %p52 = por %p50, %p51
      %p53 = scmp.ne.s32.totalorder %s42, %s45
      %p54 = scmp.eq.s32.totalorder %s23, 1
      %p55 = por %p53, %p54
      %p56 = scmp.ne.s32.totalorder %s45, %s46
      %p57 = scmp.eq.s32.totalorder %s23, 0
      %p58 = por %p56, %p57
      %p59 = scmp.ne.s32.totalorder %s45, %s46
      %p60 = scmp.eq.s32.totalorder %s24, 1
      %p61 = por %p59, %p60
      %p63 = scmp.ne.s32.totalorder %s46, %s62
      %p64 = scmp.eq.s32.totalorder %s24, 0
      %p65 = por %p63, %p64
      %s67 = sadd.s32 %s66, 1
      %p70 = scmp.eq.s32.totalorder %s18, 1
      %p71 = scmp.ne.s32.totalorder %s66, %s68
      %p72 = scmp.eq.s32.totalorder %s18, 0
      %p73 = por %p71, %p72
      %p74 = scmp.ne.s32.totalorder %s66, %s68
      %p75 = scmp.eq.s32.totalorder %s23, 1
      %p76 = por %p74, %p75
      %p77 = scmp.ne.s32.totalorder %s68, %s69
      %p78 = scmp.eq.s32.totalorder %s23, 0
      %p79 = por %p77, %p78
      %p80 = scmp.ne.s32.totalorder %s68, %s69
      %p81 = scmp.eq.s32.totalorder %s24, 1
      %p82 = por %p80, %p81
      %p84 = scmp.ne.s32.totalorder %s69, %s83
      %p85 = scmp.eq.s32.totalorder %s24, 0
      %p86 = por %p84, %p85
      %s88 = sadd.s32 %s87, 1
      %p91 = scmp.eq.s32.totalorder %s18, 1
      %p92 = scmp.ne.s32.totalorder %s87, %s89
      %p93 = scmp.eq.s32.totalorder %s18, 0
      %p94 = por %p92, %p93
      %p95 = scmp.ne.s32.totalorder %s87, %s89
      %p96 = scmp.eq.s32.totalorder %s23, 1
      %p97 = por %p95, %p96
      %p98 = scmp.ne.s32.totalorder %s89, %s90
      %p99 = scmp.eq.s32.totalorder %s23, 0
      %p100 = por %p98, %p99
      %p101 = scmp.ne.s32.totalorder %s89, %s90
      %p102 = scmp.eq.s32.totalorder %s24, 1
      %p103 = por %p101, %p102
      %p105 = scmp.ne.s32.totalorder %s90, %s104
      %p106 = scmp.eq.s32.totalorder %s24, 0
      %p107 = por %p105, %p106
      %s109 = sadd.s32 %s108, 1
      %p112 = scmp.eq.s32.totalorder %s18, 1
      %p113 = scmp.ne.s32.totalorder %s108, %s110
      %p114 = scmp.eq.s32.totalorder %s18, 0
      %p115 = por %p113, %p114
      %p116 = scmp.ne.s32.totalorder %s108, %s110
      %p117 = scmp.eq.s32.totalorder %s23, 1
      %p118 = por %p116, %p117
      %p119 = scmp.ne.s32.totalorder %s110, %s111
      %p120 = scmp.eq.s32.totalorder %s23, 0
      %p121 = por %p119, %p120
      %p122 = scmp.ne.s32.totalorder %s110, %s111
      %p123 = scmp.eq.s32.totalorder %s24, 1
      %p124 = por %p122, %p123
      %p126 = scmp.ne.s32.totalorder %s111, %s125
      %p127 = scmp.eq.s32.totalorder %s24, 0
      %p128 = por %p126, %p127
      %s130 = sadd.s32 %s129, 1
      %p133 = scmp.eq.s32.totalorder %s18, 1
      %p134 = scmp.ne.s32.totalorder %s129, %s131
      %p135 = scmp.eq.s32.totalorder %s18, 0
      %p136 = por %p134, %p135
      %p137 = scmp.ne.s32.totalorder %s129, %s131
      %p138 = scmp.eq.s32.totalorder %s23, 1
      %p139 = por %p137, %p138
      %p140 = scmp.ne.s32.totalorder %s131, %s132
      %p141 = scmp.eq.s32.totalorder %s23, 0
      %p142 = por %p140, %p141
      %p143 = scmp.ne.s32.totalorder %s131, %s132
      %p144 = scmp.eq.s32.totalorder %s24, 1
      %p145 = por %p143, %p144
      %p147 = scmp.ne.s32.totalorder %s132, %s146
      %p148 = scmp.eq.s32.totalorder %s24, 0
      %p149 = por %p147, %p148
      %s151 = sadd.s32 %s150, 1
      %p154 = scmp.eq.s32.totalorder %s18, 1
      %p155 = scmp.ne.s32.totalorder %s150, %s152
      %p156 = scmp.eq.s32.totalorder %s18, 0
      %p157 = por %p155, %p156
      %p158 = scmp.ne.s32.totalorder %s150, %s152
      %p159 = scmp.eq.s32.totalorder %s23, 1
      %p160 = por %p158, %p159
      %p161 = scmp.ne.s32.totalorder %s152, %s153
      %p162 = scmp.eq.s32.totalorder %s23, 0
      %p163 = por %p161, %p162
      %p164 = scmp.ne.s32.totalorder %s152, %s153
      %p165 = scmp.eq.s32.totalorder %s24, 1
      %p166 = por %p164, %p165
      %p168 = scmp.ne.s32.totalorder %s153, %s167
      %p169 = scmp.eq.s32.totalorder %s24, 0
      %p170 = por %p168, %p169
      %s171 = ssub.s32 %s25, %s37
      %s172 = ssub.s32 %s26, %s33
      %s173 = sor.u32 %s171, %s172
      %p174 = scmp.eq.s32.totalorder %s173, 0
      %s176 = sadd.s32 %s175, 1
      %s177 = scalar_select %p174, %s175, %s176
      %p180 = pneg %p174
      %p181 = scmp.eq.s32.totalorder %s18, 1
      %p182 = por %p180, %p181
      %p183 = scmp.ne.s32.totalorder %s175, %s178
      %p184 = scmp.eq.s32.totalorder %s18, 0
      %p185 = por %p183, %p184
      %p186 = scmp.ne.s32.totalorder %s175, %s178
      %p187 = scmp.eq.s32.totalorder %s23, 1
      %p188 = por %p186, %p187
      %p189 = scmp.ne.s32.totalorder %s178, %s179
      %p190 = scmp.eq.s32.totalorder %s23, 0
      %p191 = por %p189, %p190
      %p192 = scmp.ne.s32.totalorder %s178, %s179
      %p193 = scmp.eq.s32.totalorder %s24, 1
      %p194 = por %p192, %p193
      %p196 = scmp.ne.s32.totalorder %s179, %s195
      %p197 = scmp.eq.s32.totalorder %s24, 0
      %p198 = por %p196, %p197
      %s199 = ssub.s32 %s25, %s37
      %s200 = ssub.s32 %s26, %s33
      %s201 = sor.u32 %s199, %s200
      %p202 = scmp.eq.s32.totalorder %s201, 0
      %s204 = sadd.s32 %s203, 1
      %s205 = scalar_select %p202, %s203, %s204
      %p208 = pneg %p202
      %p209 = scmp.eq.s32.totalorder %s18, 1
      %p210 = por %p208, %p209
      %p211 = scmp.ne.s32.totalorder %s203, %s206
      %p212 = scmp.eq.s32.totalorder %s18, 0
      %p213 = por %p211, %p212
      %p214 = scmp.ne.s32.totalorder %s203, %s206
      %p215 = scmp.eq.s32.totalorder %s23, 1
      %p216 = por %p214, %p215
      %p217 = scmp.ne.s32.totalorder %s206, %s207
      %p218 = scmp.eq.s32.totalorder %s23, 0
      %p219 = por %p217, %p218
      %p220 = scmp.ne.s32.totalorder %s206, %s207
      %p221 = scmp.eq.s32.totalorder %s24, 1
      %p222 = por %p220, %p221
      %p224 = scmp.ne.s32.totalorder %s207, %s223
      %p225 = scmp.eq.s32.totalorder %s24, 0
      %p226 = por %p224, %p225
      %p227 = scmp.le.s32.totalorder 1, %s18
      %p228 = scmp.lt.s32.totalorder %s18, 3
      %p229 = pnand %p227, %p228
      %p230 = pneg %p229
      // Predicated region
      $region9: #{combined_model_forward.1} parent=5 // pred_check
        _
      $region10: #{combined_model_forward.1} parent=5 // pred_check_branch
        %232 = sbr.rel (%p229) target = $region12
      $region11: #{combined_model_forward.1} parent=5 // pred_region
        %s233 = ssub.s32 %s18, 1
        // Predicated region
        $region13: #{combined_model_forward.1} parent=11 // pred_check
          %p234 = pneg %p79
        $region14: #{combined_model_forward.1} parent=11 // pred_check_branch
          %236 = sbr.rel (%p234) target = $region16
        $region15: #{combined_model_forward.1} parent=11 // pred_region
          %s238 = ssub.s32 256, 256
          %239 = vsyncadd [#allocation4], %s238
          %s240 = sshll.u32 %s1, 4
          %s241 = int_to_ptr.vmem [resolvable:$true] %s240
          %246 = dma.vmem_to_smem %s241, 256, [#allocation3], [#allocation4], 128, 128, 8
        $region16: #{combined_model_forward.1} parent=11 // pred_fallthru
          _
        // Predicated region
        $region17: #{combined_model_forward.1} parent=11 // pred_check
          %p247 = pneg %p100
        $region18: #{combined_model_forward.1} parent=11 // pred_check_branch
          %249 = sbr.rel (%p247) target = $region20
        $region19: #{combined_model_forward.1} parent=11 // pred_region
          %s251 = ssub.s32 16, 16
          %252 = vsyncadd [#allocation6], %s251
          %s254 = sshll.u32 %s2, 4
          %s255 = int_to_ptr.vmem [resolvable:$true] %s254
          %257 = dma.vmem_to_smem %s255, 16, [#allocation5], [#allocation6]
        $region20: #{combined_model_forward.1} parent=11 // pred_fallthru
          _
        // Predicated region
        $region21: #{combined_model_forward.1} parent=11 // pred_check
          %p258 = pneg %p121
        $region22: #{combined_model_forward.1} parent=11 // pred_check_branch
          %260 = sbr.rel (%p258) target = $region24
        $region23: #{combined_model_forward.1} parent=11 // pred_region
          %s262 = ssub.s32 16, 16
          %263 = vsyncadd [#allocation6], %s262
          %s265 = sshll.u32 %s3, 4
          %s266 = int_to_ptr.vmem [resolvable:$true] %s265
          %268 = dma.vmem_to_smem %s266, 16, [#allocation7], [#allocation6]
        $region24: #{combined_model_forward.1} parent=11 // pred_fallthru
          _
        // Predicated region
        $region25: #{combined_model_forward.1} parent=11 // pred_check
          %p269 = pneg %p142
        $region26: #{combined_model_forward.1} parent=11 // pred_check_branch
          %271 = sbr.rel (%p269) target = $region28
        $region27: #{combined_model_forward.1} parent=11 // pred_region
          _
        $region28: #{combined_model_forward.1} parent=11 // pred_fallthru
          _
        // Predicated region
        $region29: #{combined_model_forward.1} parent=11 // pred_check
          %p272 = pneg %p163
        $region30: #{combined_model_forward.1} parent=11 // pred_check_branch
          %274 = sbr.rel (%p272) target = $region32
        $region31: #{combined_model_forward.1} parent=11 // pred_region
          %s276 = ssub.s32 16, 16
          %277 = vsyncadd [#allocation9], %s276
          %s279 = sshll.u32 %s5, 4
          %s280 = int_to_ptr.vmem [resolvable:$true] %s279
          %282 = dma.vmem_to_smem %s280, 16, [#allocation8], [#allocation9]
        $region32: #{combined_model_forward.1} parent=11 // pred_fallthru
          _
      $region12: #{combined_model_forward.1} parent=5 // pred_fallthru
        _
      %p283 = scmp.lt.s32.totalorder %s18, 2
      // Predicated region
      $region33: #{combined_model_forward.1} parent=5 // pred_check
        %p284 = pneg %p283
      $region34: #{combined_model_forward.1} parent=5 // pred_check_branch
        %286 = sbr.rel (%p284) target = $region36
      $region35: #{combined_model_forward.1} parent=5 // pred_region
        // Predicated region
        $region37: #{combined_model_forward.1} parent=35 // pred_check
          %p287 = pneg %p52
        $region38: #{combined_model_forward.1} parent=35 // pred_check_branch
          %289 = sbr.rel (%p287) target = $region40
        $region39: #{combined_model_forward.1} parent=35 // pred_region
          %p290 = scmp.lt.s32.totalorder %s25, 1
          %s291 = scalar_select %p290, %s25, 1
          %p292 = scmp.lt.s32.totalorder %s26, 0
          %s293 = scalar_select %p292, %s26, 0
          %s294 = smul.addr %s293, 8
          %s295 = smul.addr %s291, 8
          %s296 = sadd.s32 %s294, %s295
          %s297 = smul.addr %s296, 2
          %s298 = scalar_lea.vmem %s0, %s297
        $region40: #{combined_model_forward.1} parent=35 // pred_fallthru
          _
      $region36: #{combined_model_forward.1} parent=5 // pred_fallthru
        _
      %p299 = scmp.le.s32.totalorder 1, %s18
      %p300 = scmp.lt.s32.totalorder %s18, 3
      %p301 = pnand %p299, %p300
      %p302 = pneg %p301
      // Predicated region
      $region41: #{combined_model_forward.1} parent=5 // pred_check
        _
      $region42: #{combined_model_forward.1} parent=5 // pred_check_branch
        %304 = sbr.rel (%p301) target = $region44
      $region43: #{combined_model_forward.1} parent=5 // pred_region
        %s305 = ssub.s32 %s18, 1
        // Predicated region
        $region45: #{combined_model_forward.1} parent=43 // pred_check
          %p306 = pneg %p79
        $region46: #{combined_model_forward.1} parent=43 // pred_check_branch
          %308 = sbr.rel (%p306) target = $region48
        $region47: #{combined_model_forward.1} parent=43 // pred_region
          %309 = dma.done [#allocation4], 256
        $region48: #{combined_model_forward.1} parent=43 // pred_fallthru
          _
        // Predicated region
        $region49: #{combined_model_forward.1} parent=43 // pred_check
          %p310 = pneg %p100
        $region50: #{combined_model_forward.1} parent=43 // pred_check_branch
          %312 = sbr.rel (%p310) target = $region52
        $region51: #{combined_model_forward.1} parent=43 // pred_region
          %313 = dma.done [#allocation6], 16
        $region52: #{combined_model_forward.1} parent=43 // pred_fallthru
          _
        // Predicated region
        $region53: #{combined_model_forward.1} parent=43 // pred_check
          %p314 = pneg %p121
        $region54: #{combined_model_forward.1} parent=43 // pred_check_branch
          %316 = sbr.rel (%p314) target = $region56
        $region55: #{combined_model_forward.1} parent=43 // pred_region
          %317 = dma.done [#allocation6], 16
        $region56: #{combined_model_forward.1} parent=43 // pred_fallthru
          _
        // Predicated region
        $region57: #{combined_model_forward.1} parent=43 // pred_check
          %p318 = pneg %p163
        $region58: #{combined_model_forward.1} parent=43 // pred_check_branch
          %320 = sbr.rel (%p318) target = $region60
        $region59: #{combined_model_forward.1} parent=43 // pred_region
          %321 = dma.done [#allocation9], 16
        $region60: #{combined_model_forward.1} parent=43 // pred_fallthru
          _
        %322 = sfence
        %p323 = scmp.lt.s32.totalorder %s27, 1
        %s324 = scalar_select %p323, %s27, 1
        %p325 = scmp.lt.s32.totalorder %s28, 0
        %s326 = scalar_select %p325, %s28, 0
        %s327 = smul.addr %s326, 8
        %s328 = smul.addr %s324, 8
        %s329 = sadd.s32 %s327, %s328
        %s330 = smul.addr %s329, 2
        %s331 = scalar_lea.vmem %s0, %s330
        %p332 = pneg %p58
        %p333 = pneg %p55
        %p334 = pneg %p79
        %p335 = pneg %p76
        %p336 = pneg %p100
        %p337 = pneg %p97
        %p338 = pneg %p121
        %p339 = pneg %p118
        %p340 = pneg %p142
        %p341 = pneg %p139
        %p342 = pneg %p163
        %p343 = pneg %p160
        %p344 = pneg %p191
        %p345 = pneg %p188
        %p346 = scmp.lt.s32.totalorder %s27, 1
        %s347 = scalar_select %p346, %s27, 1
        %p348 = scmp.lt.s32.totalorder %s28, 0
        %s349 = scalar_select %p348, %s28, 0
        %s350 = sadd.s32 %s349, %s347
        %s351 = scalar_lea.vmem %s6, %s350
        %p352 = pneg %p219
        %p353 = pneg %p216
        %p354 = scmp.lt.s32.totalorder %s27, 1
        %s355 = scalar_select %p354, %s27, 1
        %p356 = scmp.lt.s32.totalorder %s28, 0
        %s357 = scalar_select %p356, %s28, 0
        %s358 = smul.addr %s357, 2
        %s359 = smul.addr %s355, 2
        %s360 = sadd.s32 %s358, %s359
        %s361 = smul.addr %s360, 2
        %s362 = scalar_lea.vmem %s7, %s361
        %p363 = scmp.lt.s32.totalorder %s27, 1
        %s364 = scalar_select %p363, %s27, 1
        %p365 = scmp.lt.s32.totalorder %s28, 0
        %s366 = scalar_select %p365, %s28, 0
        %s367 = smul.addr %s366, 8
        %s368 = smul.addr %s364, 8
        %s369 = sadd.s32 %s367, %s368
        %s370 = smul.addr %s369, 2
        %s371 = scalar_lea.vmem %s0, %s370
        %p372 = scmp.lt.s32.totalorder %s27, 1
        %s373 = scalar_select %p372, %s27, 1
        %p374 = scmp.lt.s32.totalorder %s28, 0
        %s375 = scalar_select %p374, %s28, 0
        %s376 = sadd.s32 %s375, %s373
        %s377 = scalar_lea.vmem %s6, %s376
        %p378 = scmp.lt.s32.totalorder %s27, 1
        %s379 = scalar_select %p378, %s27, 1
        %p380 = scmp.lt.s32.totalorder %s28, 0
        %s381 = scalar_select %p380, %s28, 0
        %s382 = smul.addr %s381, 2
        %s383 = smul.addr %s379, 2
        %s384 = sadd.s32 %s382, %s383
        %s385 = smul.addr %s384, 2
        %s386 = scalar_lea.vmem %s7, %s385
        %v387 = vlaneseq
        %v388 = vand.u32 %v387, 127
        %v389 = vadd.s32 %v388, 128
        %vm390 = vcmp.lt.s32.totalorder %v388, 0
        %v391 = vsub.s32 0, %v388
        %v392 = vsel %vm390, %v391, %v388
        %v393 = vmul.u32.u64.compose %v392, 3817748708
        %v394 = vextract.low.u32 %v393
        %v395 = vextract.high.u32 %v393
        %v396 = vshrl.u32 %v395, 4
        %v397 = vmul.u32 %v396, 18
        %v398 = vsub.s32 %v392, %v397
        %v399 = vsub.s32 0, %v398
        %v400 = vsel %vm390, %v399, %v398
        %vm401 = vcmp.lt.s32.totalorder %v389, 0
        %v402 = vsub.s32 0, %v389
        %v403 = vsel %vm401, %v402, %v389
        %v404 = vmul.u32.u64.compose %v403, 3817748708
        %v405 = vextract.low.u32 %v404
        %v406 = vextract.high.u32 %v404
        %v407 = vshrl.u32 %v406, 4
        %v408 = vmul.u32 %v407, 18
        %v409 = vsub.s32 %v403, %v408
        %v410 = vsub.s32 0, %v409
        %v411 = vsel %vm401, %v410, %v409
        %vm412 = vcmp.ne.s32.totalorder %v400, 0
        %vm413 = vcmp.ne.s32.totalorder %v411, 0
        %vm414 = vcmp.lt.s32.totalorder %v400, 0
        %vm415 = vcmp.lt.s32.totalorder %v411, 0
        %vm416 = vmand %vm414, %vm412
        %vm417 = vmand %vm415, %vm413
        %v418 = vadd.s32 %v400, 18
        %v419 = vadd.s32 %v411, 18
        %v420 = vsel %vm416, %v418, %v400
        %v421 = vsel %vm417, %v419, %v411
        %vm422 = vcmp.lt.s32.totalorder %v420, 16
        %vm423 = vcmp.lt.s32.totalorder %v421, 16
        %s424 = sld [smem:[#allocation5]]
        %v425 = vstv %s424
        %s426 = sld [smem:[#allocation5 + $0x1]]
        %v427 = vstv %s426
        %s428 = sld [smem:[#allocation5 + $0x2]]
        %v429 = vstv %s428
        %s430 = sld [smem:[#allocation5 + $0x3]]
        %v431 = vstv %s430
        %s432 = sld [smem:[#allocation5 + $0x4]]
        %v433 = vstv %s432
        %s434 = sld [smem:[#allocation5 + $0x5]]
        %v435 = vstv %s434
        %s436 = sld [smem:[#allocation5 + $0x6]]
        %v437 = vstv %s436
        %s438 = sld [smem:[#allocation5 + $0x7]]
        %v439 = vstv %s438
        %v440 = vld [vmem:[%s371] sm:$0x5]
        %v441 = vunpack.c.l.bf16 %v440
        %s442 = sld [smem:[#allocation3]]
        %v443 = vstv %s442
        %v444 = vmul.f32 %v443, %v441
        %v445 = vadd.f32 %v425, %v444
        %s446 = sld [smem:[#allocation3 + $0x80]]
        %v447 = vstv %s446
        %v448 = vmul.f32 %v447, %v441
        %v449 = vadd.f32 %v427, %v448
        %s450 = sld [smem:[#allocation3 + $0x100]]
        %v451 = vstv %s450
        %v452 = vmul.f32 %v451, %v441
        %v453 = vadd.f32 %v429, %v452
        %s454 = sld [smem:[#allocation3 + $0x180]]
        %v455 = vstv %s454
        %v456 = vmul.f32 %v455, %v441
        %v457 = vadd.f32 %v431, %v456
        %s458 = sld [smem:[#allocation3 + $0x200]]
        %v459 = vstv %s458
        %v460 = vmul.f32 %v459, %v441
        %v461 = vadd.f32 %v433, %v460
        %s462 = sld [smem:[#allocation3 + $0x280]]
        %v463 = vstv %s462
        %v464 = vmul.f32 %v463, %v441
        %v465 = vadd.f32 %v435, %v464
        %s466 = sld [smem:[#allocation3 + $0x300]]
        %v467 = vstv %s466
        %v468 = vmul.f32 %v467, %v441
        %v469 = vadd.f32 %v437, %v468
        %s470 = sld [smem:[#allocation3 + $0x380]]
        %v471 = vstv %s470
        %v472 = vmul.f32 %v471, %v441
        %v473 = vadd.f32 %v439, %v472
        %s474 = sld [smem:[#allocation3 + $0x1]]
        %v475 = vstv %s474
        %v476 = vmul.f32 %v475, %v441
        %478 = vrot.lane.b32.xlu0 %v476, 127
        %v479 = vpop.permute.xlu0 %478
        %v480 = vrot.slane %v479, 4
        %vm481 = vcmask 1039360
        %v482 = vsel %vm481, %v479, %v480
        %v484 = vadd.f32 %v445, %v482
        %s485 = sld [smem:[#allocation3 + $0x81]]
        %v486 = vstv %s485
        %v487 = vmul.f32 %v486, %v441
        %489 = vrot.lane.b32.xlu0 %v487, 127
        %v490 = vpop.permute.xlu0 %489
        %v491 = vrot.slane %v490, 4
        %v492 = vsel %vm481, %v490, %v491
        %v494 = vadd.f32 %v449, %v492
        %s495 = sld [smem:[#allocation3 + $0x101]]
        %v496 = vstv %s495
        %v497 = vmul.f32 %v496, %v441
        %499 = vrot.lane.b32.xlu0 %v497, 127
        %v500 = vpop.permute.xlu0 %499
        %v501 = vrot.slane %v500, 4
        %v502 = vsel %vm481, %v500, %v501
        %v504 = vadd.f32 %v453, %v502
        %s505 = sld [smem:[#allocation3 + $0x181]]
        %v506 = vstv %s505
        %v507 = vmul.f32 %v506, %v441
        %509 = vrot.lane.b32.xlu0 %v507, 127
        %v510 = vpop.permute.xlu0 %509
        %v511 = vrot.slane %v510, 4
        %v512 = vsel %vm481, %v510, %v511
        %v514 = vadd.f32 %v457, %v512
        %s515 = sld [smem:[#allocation3 + $0x201]]
        %v516 = vstv %s515
        %v517 = vmul.f32 %v516, %v441
        %519 = vrot.lane.b32.xlu0 %v517, 127
        %v520 = vpop.permute.xlu0 %519
        %v521 = vrot.slane %v520, 4
        %v522 = vsel %vm481, %v520, %v521
        %v524 = vadd.f32 %v461, %v522
        %s525 = sld [smem:[#allocation3 + $0x281]]
        %v526 = vstv %s525
        %v527 = vmul.f32 %v526, %v441
        %529 = vrot.lane.b32.xlu0 %v527, 127
        %v530 = vpop.permute.xlu0 %529
        %v531 = vrot.slane %v530, 4
        %v532 = vsel %vm481, %v530, %v531
        %v534 = vadd.f32 %v465, %v532
        %s535 = sld [smem:[#allocation3 + $0x301]]
        %v536 = vstv %s535
        %v537 = vmul.f32 %v536, %v441
        %539 = vrot.lane.b32.xlu0 %v537, 127
        %v540 = vpop.permute.xlu0 %539
        %v541 = vrot.slane %v540, 4
        %v542 = vsel %vm481, %v540, %v541
        %v544 = vadd.f32 %v469, %v542
        %s545 = sld [smem:[#allocation3 + $0x381]]
        %v546 = vstv %s545
        %v547 = vmul.f32 %v546, %v441
        %549 = vrot.lane.b32.xlu0 %v547, 127
        %v550 = vpop.permute.xlu0 %549
        %v551 = vrot.slane %v550, 4
        %v552 = vsel %vm481, %v550, %v551
        %v554 = vadd.f32 %v473, %v552
        %s555 = sld [smem:[#allocation3 + $0x2]]
        %v556 = vstv %s555
        %v557 = vmul.f32 %v556, %v441
        %559 = vrot.lane.b32.xlu0 %v557, 126
        %v560 = vpop.permute.xlu0 %559
        %v561 = vrot.slane %v560, 4
        %vm562 = vcmask 1031168
        %v563 = vsel %vm562, %v560, %v561
        %v565 = vadd.f32 %v484, %v563
        %s566 = sld [smem:[#allocation3 + $0x82]]
        %v567 = vstv %s566
        %v568 = vmul.f32 %v567, %v441
        %570 = vrot.lane.b32.xlu0 %v568, 126
        %v571 = vpop.permute.xlu0 %570
        %v572 = vrot.slane %v571, 4
        %v573 = vsel %vm562, %v571, %v572
        %v575 = vadd.f32 %v494, %v573
        %s576 = sld [smem:[#allocation3 + $0x102]]
        %v577 = vstv %s576
        %v578 = vmul.f32 %v577, %v441
        %580 = vrot.lane.b32.xlu0 %v578, 126
        %v581 = vpop.permute.xlu0 %580
        %v582 = vrot.slane %v581, 4
        %v583 = vsel %vm562, %v581, %v582
        %v585 = vadd.f32 %v504, %v583
        %s586 = sld [smem:[#allocation3 + $0x182]]
        %v587 = vstv %s586
        %v588 = vmul.f32 %v587, %v441
        %590 = vrot.lane.b32.xlu0 %v588, 126
        %v591 = vpop.permute.xlu0 %590
        %v592 = vrot.slane %v591, 4
        %v593 = vsel %vm562, %v591, %v592
        %v595 = vadd.f32 %v514, %v593
        %s596 = sld [smem:[#allocation3 + $0x202]]
        %v597 = vstv %s596
        %v598 = vmul.f32 %v597, %v441
        %600 = vrot.lane.b32.xlu0 %v598, 126
        %v601 = vpop.permute.xlu0 %600
        %v602 = vrot.slane %v601, 4
        %v603 = vsel %vm562, %v601, %v602
        %v605 = vadd.f32 %v524, %v603
        %s606 = sld [smem:[#allocation3 + $0x282]]
        %v607 = vstv %s606
        %v608 = vmul.f32 %v607, %v441
        %610 = vrot.lane.b32.xlu0 %v608, 126
        %v611 = vpop.permute.xlu0 %610
        %v612 = vrot.slane %v611, 4
        %v613 = vsel %vm562, %v611, %v612
        %v615 = vadd.f32 %v534, %v613
        %s616 = sld [smem:[#allocation3 + $0x302]]
        %v617 = vstv %s616
        %v618 = vmul.f32 %v617, %v441
        %620 = vrot.lane.b32.xlu0 %v618, 126
        %v621 = vpop.permute.xlu0 %620
        %v622 = vrot.slane %v621, 4
        %v623 = vsel %vm562, %v621, %v622
        %v625 = vadd.f32 %v544, %v623
        %s626 = sld [smem:[#allocation3 + $0x382]]
        %v627 = vstv %s626
        %v628 = vmul.f32 %v627, %v441
        %630 = vrot.lane.b32.xlu0 %v628, 126
        %v631 = vpop.permute.xlu0 %630
        %v632 = vrot.slane %v631, 4
        %v633 = vsel %vm562, %v631, %v632
        %v635 = vadd.f32 %v554, %v633
        %v636 = vld [vmem:[%s371] sm:$0xf]
        %v637 = vunpack.c.l.bf16 %v636
        %s638 = sld [smem:[#allocation3 + $0x3]]
        %v639 = vstv %s638
        %v640 = vmul.f32 %v639, %v637
        %v642 = vrot.slane %v640, 5
        %v643 = vrot.slane %v642, 4
        %v645 = vadd.f32 %v565, %v643
        %s646 = sld [smem:[#allocation3 + $0x83]]
        %v647 = vstv %s646
        %v648 = vmul.f32 %v647, %v637
        %v650 = vrot.slane %v648, 5
        %v651 = vrot.slane %v650, 4
        %v653 = vadd.f32 %v575, %v651
        %s654 = sld [smem:[#allocation3 + $0x103]]
        %v655 = vstv %s654
        %v656 = vmul.f32 %v655, %v637
        %v658 = vrot.slane %v656, 5
        %v659 = vrot.slane %v658, 4
        %v661 = vadd.f32 %v585, %v659
        %s662 = sld [smem:[#allocation3 + $0x183]]
        %v663 = vstv %s662
        %v664 = vmul.f32 %v663, %v637
        %v666 = vrot.slane %v664, 5
        %v667 = vrot.slane %v666, 4
        %v669 = vadd.f32 %v595, %v667
        %s670 = sld [smem:[#allocation3 + $0x203]]
        %v671 = vstv %s670
        %v672 = vmul.f32 %v671, %v637
        %v674 = vrot.slane %v672, 5
        %v675 = vrot.slane %v674, 4
        %v677 = vadd.f32 %v605, %v675
        %s678 = sld [smem:[#allocation3 + $0x283]]
        %v679 = vstv %s678
        %v680 = vmul.f32 %v679, %v637
        %v682 = vrot.slane %v680, 5
        %v683 = vrot.slane %v682, 4
        %v685 = vadd.f32 %v615, %v683
        %s686 = sld [smem:[#allocation3 + $0x303]]
        %v687 = vstv %s686
        %v688 = vmul.f32 %v687, %v637
        %v690 = vrot.slane %v688, 5
        %v691 = vrot.slane %v690, 4
        %v693 = vadd.f32 %v625, %v691
        %s694 = sld [smem:[#allocation3 + $0x383]]
        %v695 = vstv %s694
        %v696 = vmul.f32 %v695, %v637
        %v698 = vrot.slane %v696, 5
        %v699 = vrot.slane %v698, 4
        %v701 = vadd.f32 %v635, %v699
        %s702 = sld [smem:[#allocation3 + $0x4]]
        %v703 = vstv %s702
        %v704 = vmul.f32 %v703, %v637
        %v706 = vrot.slane %v704, 5
        %v707 = vrot.slane %v706, 4
        %708 = vrot.lane.b32.xlu0 %v707, 127
        %v709 = vpop.permute.xlu0 %708
        %v710 = vrot.slane %v709, 4
        %v711 = vsel %vm481, %v709, %v710
        %v713 = vadd.f32 %v645, %v711
        %s714 = sld [smem:[#allocation3 + $0x84]]
        %v715 = vstv %s714
        %v716 = vmul.f32 %v715, %v637
        %v718 = vrot.slane %v716, 5
        %v719 = vrot.slane %v718, 4
        %720 = vrot.lane.b32.xlu0 %v719, 127
        %v721 = vpop.permute.xlu0 %720
        %v722 = vrot.slane %v721, 4
        %v723 = vsel %vm481, %v721, %v722
        %v725 = vadd.f32 %v653, %v723
        %s726 = sld [smem:[#allocation3 + $0x104]]
        %v727 = vstv %s726
        %v728 = vmul.f32 %v727, %v637
        %v730 = vrot.slane %v728, 5
        %v731 = vrot.slane %v730, 4
        %732 = vrot.lane.b32.xlu0 %v731, 127
        %v733 = vpop.permute.xlu0 %732
        %v734 = vrot.slane %v733, 4
        %v735 = vsel %vm481, %v733, %v734
        %v737 = vadd.f32 %v661, %v735
        %s738 = sld [smem:[#allocation3 + $0x184]]
        %v739 = vstv %s738
        %v740 = vmul.f32 %v739, %v637
        %v742 = vrot.slane %v740, 5
        %v743 = vrot.slane %v742, 4
        %744 = vrot.lane.b32.xlu0 %v743, 127
        %v745 = vpop.permute.xlu0 %744
        %v746 = vrot.slane %v745, 4
        %v747 = vsel %vm481, %v745, %v746
        %v749 = vadd.f32 %v669, %v747
        %s750 = sld [smem:[#allocation3 + $0x204]]
        %v751 = vstv %s750
        %v752 = vmul.f32 %v751, %v637
        %v754 = vrot.slane %v752, 5
        %v755 = vrot.slane %v754, 4
        %756 = vrot.lane.b32.xlu0 %v755, 127
        %v757 = vpop.permute.xlu0 %756
        %v758 = vrot.slane %v757, 4
        %v759 = vsel %vm481, %v757, %v758
        %v761 = vadd.f32 %v677, %v759
        %s762 = sld [smem:[#allocation3 + $0x284]]
        %v763 = vstv %s762
        %v764 = vmul.f32 %v763, %v637
        %v766 = vrot.slane %v764, 5
        %v767 = vrot.slane %v766, 4
        %768 = vrot.lane.b32.xlu0 %v767, 127
        %v769 = vpop.permute.xlu0 %768
        %v770 = vrot.slane %v769, 4
        %v771 = vsel %vm481, %v769, %v770
        %v773 = vadd.f32 %v685, %v771
        %s774 = sld [smem:[#allocation3 + $0x304]]
        %v775 = vstv %s774
        %v776 = vmul.f32 %v775, %v637
        %v778 = vrot.slane %v776, 5
        %v779 = vrot.slane %v778, 4
        %780 = vrot.lane.b32.xlu0 %v779, 127
        %v781 = vpop.permute.xlu0 %780
        %v782 = vrot.slane %v781, 4
        %v783 = vsel %vm481, %v781, %v782
        %v785 = vadd.f32 %v693, %v783
        %s786 = sld [smem:[#allocation3 + $0x384]]
        %v787 = vstv %s786
        %v788 = vmul.f32 %v787, %v637
        %v790 = vrot.slane %v788, 5
        %v791 = vrot.slane %v790, 4
        %792 = vrot.lane.b32.xlu0 %v791, 127
        %v793 = vpop.permute.xlu0 %792
        %v794 = vrot.slane %v793, 4
        %v795 = vsel %vm481, %v793, %v794
        %v797 = vadd.f32 %v701, %v795
        %s798 = sld [smem:[#allocation3 + $0x5]]
        %v799 = vstv %s798
        %v800 = vmul.f32 %v799, %v637
        %v802 = vrot.slane %v800, 5
        %v803 = vrot.slane %v802, 4
        %804 = vrot.lane.b32.xlu0 %v803, 126
        %v805 = vpop.permute.xlu0 %804
        %v806 = vrot.slane %v805, 4
        %v807 = vsel %vm562, %v805, %v806
        %v809 = vadd.f32 %v713, %v807
        %s810 = sld [smem:[#allocation3 + $0x85]]
        %v811 = vstv %s810
        %v812 = vmul.f32 %v811, %v637
        %v814 = vrot.slane %v812, 5
        %v815 = vrot.slane %v814, 4
        %816 = vrot.lane.b32.xlu0 %v815, 126
        %v817 = vpop.permute.xlu0 %816
        %v818 = vrot.slane %v817, 4
        %v819 = vsel %vm562, %v817, %v818
        %v821 = vadd.f32 %v725, %v819
        %s822 = sld [smem:[#allocation3 + $0x105]]
        %v823 = vstv %s822
        %v824 = vmul.f32 %v823, %v637
        %v826 = vrot.slane %v824, 5
        %v827 = vrot.slane %v826, 4
        %828 = vrot.lane.b32.xlu0 %v827, 126
        %v829 = vpop.permute.xlu0 %828
        %v830 = vrot.slane %v829, 4
        %v831 = vsel %vm562, %v829, %v830
        %v833 = vadd.f32 %v737, %v831
        %s834 = sld [smem:[#allocation3 + $0x185]]
        %v835 = vstv %s834
        %v836 = vmul.f32 %v835, %v637
        %v838 = vrot.slane %v836, 5
        %v839 = vrot.slane %v838, 4
        %840 = vrot.lane.b32.xlu0 %v839, 126
        %v841 = vpop.permute.xlu0 %840
        %v842 = vrot.slane %v841, 4
        %v843 = vsel %vm562, %v841, %v842
        %v845 = vadd.f32 %v749, %v843
        %s846 = sld [smem:[#allocation3 + $0x205]]
        %v847 = vstv %s846
        %v848 = vmul.f32 %v847, %v637
        %v850 = vrot.slane %v848, 5
        %v851 = vrot.slane %v850, 4
        %852 = vrot.lane.b32.xlu0 %v851, 126
        %v853 = vpop.permute.xlu0 %852
        %v854 = vrot.slane %v853, 4
        %v855 = vsel %vm562, %v853, %v854
        %v857 = vadd.f32 %v761, %v855
        %s858 = sld [smem:[#allocation3 + $0x285]]
        %v859 = vstv %s858
        %v860 = vmul.f32 %v859, %v637
        %v862 = vrot.slane %v860, 5
        %v863 = vrot.slane %v862, 4
        %864 = vrot.lane.b32.xlu0 %v863, 126
        %v865 = vpop.permute.xlu0 %864
        %v866 = vrot.slane %v865, 4
        %v867 = vsel %vm562, %v865, %v866
        %v869 = vadd.f32 %v773, %v867
        %s870 = sld [smem:[#allocation3 + $0x305]]
        %v871 = vstv %s870
        %v872 = vmul.f32 %v871, %v637
        %v874 = vrot.slane %v872, 5
        %v875 = vrot.slane %v874, 4
        %876 = vrot.lane.b32.xlu0 %v875, 126
        %v877 = vpop.permute.xlu0 %876
        %v878 = vrot.slane %v877, 4
        %v879 = vsel %vm562, %v877, %v878
        %v881 = vadd.f32 %v785, %v879
        %s882 = sld [smem:[#allocation3 + $0x385]]
        %v883 = vstv %s882
        %v884 = vmul.f32 %v883, %v637
        %v886 = vrot.slane %v884, 5
        %v887 = vrot.slane %v886, 4
        %888 = vrot.lane.b32.xlu0 %v887, 126
        %v889 = vpop.permute.xlu0 %888
        %v890 = vrot.slane %v889, 4
        %v891 = vsel %vm562, %v889, %v890
        %v893 = vadd.f32 %v797, %v891
        %v894 = vld [vmem:[%s371] sm:$0xa]
        %v895 = vunpack.c.l.bf16 %v894
        %s896 = sld [smem:[#allocation3 + $0x6]]
        %v897 = vstv %s896
        %v898 = vmul.f32 %v897, %v895
        %v900 = vrot.slane %v898, 6
        %v901 = vrot.slane %v900, 4
        %v903 = vadd.f32 %v809, %v901
        %s904 = sld [smem:[#allocation3 + $0x86]]
        %v905 = vstv %s904
        %v906 = vmul.f32 %v905, %v895
        %v908 = vrot.slane %v906, 6
        %v909 = vrot.slane %v908, 4
        %v911 = vadd.f32 %v821, %v909
        %s912 = sld [smem:[#allocation3 + $0x106]]
        %v913 = vstv %s912
        %v914 = vmul.f32 %v913, %v895
        %v916 = vrot.slane %v914, 6
        %v917 = vrot.slane %v916, 4
        %v919 = vadd.f32 %v833, %v917
        %s920 = sld [smem:[#allocation3 + $0x186]]
        %v921 = vstv %s920
        %v922 = vmul.f32 %v921, %v895
        %v924 = vrot.slane %v922, 6
        %v925 = vrot.slane %v924, 4
        %v927 = vadd.f32 %v845, %v925
        %s928 = sld [smem:[#allocation3 + $0x206]]
        %v929 = vstv %s928
        %v930 = vmul.f32 %v929, %v895
        %v932 = vrot.slane %v930, 6
        %v933 = vrot.slane %v932, 4
        %v935 = vadd.f32 %v857, %v933
        %s936 = sld [smem:[#allocation3 + $0x286]]
        %v937 = vstv %s936
        %v938 = vmul.f32 %v937, %v895
        %v940 = vrot.slane %v938, 6
        %v941 = vrot.slane %v940, 4
        %v943 = vadd.f32 %v869, %v941
        %s944 = sld [smem:[#allocation3 + $0x306]]
        %v945 = vstv %s944
        %v946 = vmul.f32 %v945, %v895
        %v948 = vrot.slane %v946, 6
        %v949 = vrot.slane %v948, 4
        %v951 = vadd.f32 %v881, %v949
        %s952 = sld [smem:[#allocation3 + $0x386]]
        %v953 = vstv %s952
        %v954 = vmul.f32 %v953, %v895
        %v956 = vrot.slane %v954, 6
        %v957 = vrot.slane %v956, 4
        %v959 = vadd.f32 %v893, %v957
        %s960 = sld [smem:[#allocation3 + $0x7]]
        %v961 = vstv %s960
        %v962 = vmul.f32 %v961, %v895
        %v964 = vrot.slane %v962, 6
        %v965 = vrot.slane %v964, 4
        %966 = vrot.lane.b32.xlu0 %v965, 127
        %v967 = vpop.permute.xlu0 %966
        %v968 = vrot.slane %v967, 4
        %v969 = vsel %vm481, %v967, %v968
        %v971 = vadd.f32 %v903, %v969
        %s972 = sld [smem:[#allocation3 + $0x87]]
        %v973 = vstv %s972
        %v974 = vmul.f32 %v973, %v895
        %v976 = vrot.slane %v974, 6
        %v977 = vrot.slane %v976, 4
        %978 = vrot.lane.b32.xlu0 %v977, 127
        %v979 = vpop.permute.xlu0 %978
        %v980 = vrot.slane %v979, 4
        %v981 = vsel %vm481, %v979, %v980
        %v983 = vadd.f32 %v911, %v981
        %s984 = sld [smem:[#allocation3 + $0x107]]
        %v985 = vstv %s984
        %v986 = vmul.f32 %v985, %v895
        %v988 = vrot.slane %v986, 6
        %v989 = vrot.slane %v988, 4
        %990 = vrot.lane.b32.xlu0 %v989, 127
        %v991 = vpop.permute.xlu0 %990
        %v992 = vrot.slane %v991, 4
        %v993 = vsel %vm481, %v991, %v992
        %v995 = vadd.f32 %v919, %v993
        %s996 = sld [smem:[#allocation3 + $0x187]]
        %v997 = vstv %s996
        %v998 = vmul.f32 %v997, %v895
        %v1000 = vrot.slane %v998, 6
        %v1001 = vrot.slane %v1000, 4
        %1002 = vrot.lane.b32.xlu0 %v1001, 127
        %v1003 = vpop.permute.xlu0 %1002
        %v1004 = vrot.slane %v1003, 4
        %v1005 = vsel %vm481, %v1003, %v1004
        %v1007 = vadd.f32 %v927, %v1005
        %s1008 = sld [smem:[#allocation3 + $0x207]]
        %v1009 = vstv %s1008
        %v1010 = vmul.f32 %v1009, %v895
        %v1012 = vrot.slane %v1010, 6
        %v1013 = vrot.slane %v1012, 4
        %1014 = vrot.lane.b32.xlu0 %v1013, 127
        %v1015 = vpop.permute.xlu0 %1014
        %v1016 = vrot.slane %v1015, 4
        %v1017 = vsel %vm481, %v1015, %v1016
        %v1019 = vadd.f32 %v935, %v1017
        %s1020 = sld [smem:[#allocation3 + $0x287]]
        %v1021 = vstv %s1020
        %v1022 = vmul.f32 %v1021, %v895
        %v1024 = vrot.slane %v1022, 6
        %v1025 = vrot.slane %v1024, 4
        %1026 = vrot.lane.b32.xlu0 %v1025, 127
        %v1027 = vpop.permute.xlu0 %1026
        %v1028 = vrot.slane %v1027, 4
        %v1029 = vsel %vm481, %v1027, %v1028
        %v1031 = vadd.f32 %v943, %v1029
        %s1032 = sld [smem:[#allocation3 + $0x307]]
        %v1033 = vstv %s1032
        %v1034 = vmul.f32 %v1033, %v895
        %v1036 = vrot.slane %v1034, 6
        %v1037 = vrot.slane %v1036, 4
        %1038 = vrot.lane.b32.xlu0 %v1037, 127
        %v1039 = vpop.permute.xlu0 %1038
        %v1040 = vrot.slane %v1039, 4
        %v1041 = vsel %vm481, %v1039, %v1040
        %v1043 = vadd.f32 %v951, %v1041
        %s1044 = sld [smem:[#allocation3 + $0x387]]
        %v1045 = vstv %s1044
        %v1046 = vmul.f32 %v1045, %v895
        %v1048 = vrot.slane %v1046, 6
        %v1049 = vrot.slane %v1048, 4
        %1050 = vrot.lane.b32.xlu0 %v1049, 127
        %v1051 = vpop.permute.xlu0 %1050
        %v1052 = vrot.slane %v1051, 4
        %v1053 = vsel %vm481, %v1051, %v1052
        %v1055 = vadd.f32 %v959, %v1053
        %s1056 = sld [smem:[#allocation3 + $0x8]]
        %v1057 = vstv %s1056
        %v1058 = vmul.f32 %v1057, %v895
        %v1060 = vrot.slane %v1058, 6
        %v1061 = vrot.slane %v1060, 4
        %1062 = vrot.lane.b32.xlu0 %v1061, 126
        %v1063 = vpop.permute.xlu0 %1062
        %v1064 = vrot.slane %v1063, 4
        %v1065 = vsel %vm562, %v1063, %v1064
        %v1067 = vadd.f32 %v971, %v1065
        %s1068 = sld [smem:[#allocation3 + $0x88]]
        %v1069 = vstv %s1068
        %v1070 = vmul.f32 %v1069, %v895
        %v1072 = vrot.slane %v1070, 6
        %v1073 = vrot.slane %v1072, 4
        %1074 = vrot.lane.b32.xlu0 %v1073, 126
        %v1075 = vpop.permute.xlu0 %1074
        %v1076 = vrot.slane %v1075, 4
        %v1077 = vsel %vm562, %v1075, %v1076
        %v1079 = vadd.f32 %v983, %v1077
        %s1080 = sld [smem:[#allocation3 + $0x108]]
        %v1081 = vstv %s1080
        %v1082 = vmul.f32 %v1081, %v895
        %v1084 = vrot.slane %v1082, 6
        %v1085 = vrot.slane %v1084, 4
        %1086 = vrot.lane.b32.xlu0 %v1085, 126
        %v1087 = vpop.permute.xlu0 %1086
        %v1088 = vrot.slane %v1087, 4
        %v1089 = vsel %vm562, %v1087, %v1088
        %v1091 = vadd.f32 %v995, %v1089
        %s1092 = sld [smem:[#allocation3 + $0x188]]
        %v1093 = vstv %s1092
        %v1094 = vmul.f32 %v1093, %v895
        %v1096 = vrot.slane %v1094, 6
        %v1097 = vrot.slane %v1096, 4
        %1098 = vrot.lane.b32.xlu0 %v1097, 126
        %v1099 = vpop.permute.xlu0 %1098
        %v1100 = vrot.slane %v1099, 4
        %v1101 = vsel %vm562, %v1099, %v1100
        %v1103 = vadd.f32 %v1007, %v1101
        %s1104 = sld [smem:[#allocation3 + $0x208]]
        %v1105 = vstv %s1104
        %v1106 = vmul.f32 %v1105, %v895
        %v1108 = vrot.slane %v1106, 6
        %v1109 = vrot.slane %v1108, 4
        %1110 = vrot.lane.b32.xlu0 %v1109, 126
        %v1111 = vpop.permute.xlu0 %1110
        %v1112 = vrot.slane %v1111, 4
        %v1113 = vsel %vm562, %v1111, %v1112
        %v1115 = vadd.f32 %v1019, %v1113
        %s1116 = sld [smem:[#allocation3 + $0x288]]
        %v1117 = vstv %s1116
        %v1118 = vmul.f32 %v1117, %v895
        %v1120 = vrot.slane %v1118, 6
        %v1121 = vrot.slane %v1120, 4
        %1122 = vrot.lane.b32.xlu0 %v1121, 126
        %v1123 = vpop.permute.xlu0 %1122
        %v1124 = vrot.slane %v1123, 4
        %v1125 = vsel %vm562, %v1123, %v1124
        %v1127 = vadd.f32 %v1031, %v1125
        %s1128 = sld [smem:[#allocation3 + $0x308]]
        %v1129 = vstv %s1128
        %v1130 = vmul.f32 %v1129, %v895
        %v1132 = vrot.slane %v1130, 6
        %v1133 = vrot.slane %v1132, 4
        %1134 = vrot.lane.b32.xlu0 %v1133, 126
        %v1135 = vpop.permute.xlu0 %1134
        %v1136 = vrot.slane %v1135, 4
        %v1137 = vsel %vm562, %v1135, %v1136
        %v1139 = vadd.f32 %v1043, %v1137
        %s1140 = sld [smem:[#allocation3 + $0x388]]
        %v1141 = vstv %s1140
        %v1142 = vmul.f32 %v1141, %v895
        %v1144 = vrot.slane %v1142, 6
        %v1145 = vrot.slane %v1144, 4
        %1146 = vrot.lane.b32.xlu0 %v1145, 126
        %v1147 = vpop.permute.xlu0 %1146
        %v1148 = vrot.slane %v1147, 4
        %v1149 = vsel %vm562, %v1147, %v1148
        %v1151 = vadd.f32 %v1055, %v1149
        %s1152 = scalar_lea.vmem %s371, 4
        %v1153 = vld [vmem:[%s1152] sm:$0x5]
        %v1154 = vunpack.c.l.bf16 %v1153
        %s1155 = sld [smem:[#allocation3 + $0x9]]
        %v1156 = vstv %s1155
        %v1157 = vmul.f32 %v1156, %v1154
        %v1158 = vadd.f32 %v1067, %v1157
        %s1159 = sld [smem:[#allocation3 + $0x89]]
        %v1160 = vstv %s1159
        %v1161 = vmul.f32 %v1160, %v1154
        %v1162 = vadd.f32 %v1079, %v1161
        %s1163 = sld [smem:[#allocation3 + $0x109]]
        %v1164 = vstv %s1163
        %v1165 = vmul.f32 %v1164, %v1154
        %v1166 = vadd.f32 %v1091, %v1165
        %s1167 = sld [smem:[#allocation3 + $0x189]]
        %v1168 = vstv %s1167
        %v1169 = vmul.f32 %v1168, %v1154
        %v1170 = vadd.f32 %v1103, %v1169
        %s1171 = sld [smem:[#allocation3 + $0x209]]
        %v1172 = vstv %s1171
        %v1173 = vmul.f32 %v1172, %v1154
        %v1174 = vadd.f32 %v1115, %v1173
        %s1175 = sld [smem:[#allocation3 + $0x289]]
        %v1176 = vstv %s1175
        %v1177 = vmul.f32 %v1176, %v1154
        %v1178 = vadd.f32 %v1127, %v1177
        %s1179 = sld [smem:[#allocation3 + $0x309]]
        %v1180 = vstv %s1179
        %v1181 = vmul.f32 %v1180, %v1154
        %v1182 = vadd.f32 %v1139, %v1181
        %s1183 = sld [smem:[#allocation3 + $0x389]]
        %v1184 = vstv %s1183
        %v1185 = vmul.f32 %v1184, %v1154
        %v1186 = vadd.f32 %v1151, %v1185
        %s1187 = sld [smem:[#allocation3 + $0xa]]
        %v1188 = vstv %s1187
        %v1189 = vmul.f32 %v1188, %v1154
        %1191 = vrot.lane.b32.xlu0 %v1189, 127
        %v1192 = vpop.permute.xlu0 %1191
        %v1193 = vrot.slane %v1192, 4
        %v1194 = vsel %vm481, %v1192, %v1193
        %v1196 = vadd.f32 %v1158, %v1194
        %s1197 = sld [smem:[#allocation3 + $0x8a]]
        %v1198 = vstv %s1197
        %v1199 = vmul.f32 %v1198, %v1154
        %1201 = vrot.lane.b32.xlu0 %v1199, 127
        %v1202 = vpop.permute.xlu0 %1201
        %v1203 = vrot.slane %v1202, 4
        %v1204 = vsel %vm481, %v1202, %v1203
        %v1206 = vadd.f32 %v1162, %v1204
        %s1207 = sld [smem:[#allocation3 + $0x10a]]
        %v1208 = vstv %s1207
        %v1209 = vmul.f32 %v1208, %v1154
        %1211 = vrot.lane.b32.xlu0 %v1209, 127
        %v1212 = vpop.permute.xlu0 %1211
        %v1213 = vrot.slane %v1212, 4
        %v1214 = vsel %vm481, %v1212, %v1213
        %v1216 = vadd.f32 %v1166, %v1214
        %s1217 = sld [smem:[#allocation3 + $0x18a]]
        %v1218 = vstv %s1217
        %v1219 = vmul.f32 %v1218, %v1154
        %1221 = vrot.lane.b32.xlu0 %v1219, 127
        %v1222 = vpop.permute.xlu0 %1221
        %v1223 = vrot.slane %v1222, 4
        %v1224 = vsel %vm481, %v1222, %v1223
        %v1226 = vadd.f32 %v1170, %v1224
        %s1227 = sld [smem:[#allocation3 + $0x20a]]
        %v1228 = vstv %s1227
        %v1229 = vmul.f32 %v1228, %v1154
        %1231 = vrot.lane.b32.xlu0 %v1229, 127
        %v1232 = vpop.permute.xlu0 %1231
        %v1233 = vrot.slane %v1232, 4
        %v1234 = vsel %vm481, %v1232, %v1233
        %v1236 = vadd.f32 %v1174, %v1234
        %s1237 = sld [smem:[#allocation3 + $0x28a]]
        %v1238 = vstv %s1237
        %v1239 = vmul.f32 %v1238, %v1154
        %1241 = vrot.lane.b32.xlu0 %v1239, 127
        %v1242 = vpop.permute.xlu0 %1241
        %v1243 = vrot.slane %v1242, 4
        %v1244 = vsel %vm481, %v1242, %v1243
        %v1246 = vadd.f32 %v1178, %v1244
        %s1247 = sld [smem:[#allocation3 + $0x30a]]
        %v1248 = vstv %s1247
        %v1249 = vmul.f32 %v1248, %v1154
        %1251 = vrot.lane.b32.xlu0 %v1249, 127
        %v1252 = vpop.permute.xlu0 %1251
        %v1253 = vrot.slane %v1252, 4
        %v1254 = vsel %vm481, %v1252, %v1253
        %v1256 = vadd.f32 %v1182, %v1254
        %s1257 = sld [smem:[#allocation3 + $0x38a]]
        %v1258 = vstv %s1257
        %v1259 = vmul.f32 %v1258, %v1154
        %1261 = vrot.lane.b32.xlu0 %v1259, 127
        %v1262 = vpop.permute.xlu0 %1261
        %v1263 = vrot.slane %v1262, 4
        %v1264 = vsel %vm481, %v1262, %v1263
        %v1266 = vadd.f32 %v1186, %v1264
        %s1267 = sld [smem:[#allocation3 + $0xb]]
        %v1268 = vstv %s1267
        %v1269 = vmul.f32 %v1268, %v1154
        %1271 = vrot.lane.b32.xlu0 %v1269, 126
        %v1272 = vpop.permute.xlu0 %1271
        %v1273 = vrot.slane %v1272, 4
        %v1274 = vsel %vm562, %v1272, %v1273
        %v1276 = vadd.f32 %v1196, %v1274
        %s1277 = sld [smem:[#allocation3 + $0x8b]]
        %v1278 = vstv %s1277
        %v1279 = vmul.f32 %v1278, %v1154
        %1281 = vrot.lane.b32.xlu0 %v1279, 126
        %v1282 = vpop.permute.xlu0 %1281
        %v1283 = vrot.slane %v1282, 4
        %v1284 = vsel %vm562, %v1282, %v1283
        %v1286 = vadd.f32 %v1206, %v1284
        %s1287 = sld [smem:[#allocation3 + $0x10b]]
        %v1288 = vstv %s1287
        %v1289 = vmul.f32 %v1288, %v1154
        %1291 = vrot.lane.b32.xlu0 %v1289, 126
        %v1292 = vpop.permute.xlu0 %1291
        %v1293 = vrot.slane %v1292, 4
        %v1294 = vsel %vm562, %v1292, %v1293
        %v1296 = vadd.f32 %v1216, %v1294
        %s1297 = sld [smem:[#allocation3 + $0x18b]]
        %v1298 = vstv %s1297
        %v1299 = vmul.f32 %v1298, %v1154
        %1301 = vrot.lane.b32.xlu0 %v1299, 126
        %v1302 = vpop.permute.xlu0 %1301
        %v1303 = vrot.slane %v1302, 4
        %v1304 = vsel %vm562, %v1302, %v1303
        %v1306 = vadd.f32 %v1226, %v1304
        %s1307 = sld [smem:[#allocation3 + $0x20b]]
        %v1308 = vstv %s1307
        %v1309 = vmul.f32 %v1308, %v1154
        %1311 = vrot.lane.b32.xlu0 %v1309, 126
        %v1312 = vpop.permute.xlu0 %1311
        %v1313 = vrot.slane %v1312, 4
        %v1314 = vsel %vm562, %v1312, %v1313
        %v1316 = vadd.f32 %v1236, %v1314
        %s1317 = sld [smem:[#allocation3 + $0x28b]]
        %v1318 = vstv %s1317
        %v1319 = vmul.f32 %v1318, %v1154
        %1321 = vrot.lane.b32.xlu0 %v1319, 126
        %v1322 = vpop.permute.xlu0 %1321
        %v1323 = vrot.slane %v1322, 4
        %v1324 = vsel %vm562, %v1322, %v1323
        %v1326 = vadd.f32 %v1246, %v1324
        %s1327 = sld [smem:[#allocation3 + $0x30b]]
        %v1328 = vstv %s1327
        %v1329 = vmul.f32 %v1328, %v1154
        %1331 = vrot.lane.b32.xlu0 %v1329, 126
        %v1332 = vpop.permute.xlu0 %1331
        %v1333 = vrot.slane %v1332, 4
        %v1334 = vsel %vm562, %v1332, %v1333
        %v1336 = vadd.f32 %v1256, %v1334
        %s1337 = sld [smem:[#allocation3 + $0x38b]]
        %v1338 = vstv %s1337
        %v1339 = vmul.f32 %v1338, %v1154
        %1341 = vrot.lane.b32.xlu0 %v1339, 126
        %v1342 = vpop.permute.xlu0 %1341
        %v1343 = vrot.slane %v1342, 4
        %v1344 = vsel %vm562, %v1342, %v1343
        %v1346 = vadd.f32 %v1266, %v1344
        %v1347 = vld [vmem:[%s1152] sm:$0xf]
        %v1348 = vunpack.c.l.bf16 %v1347
        %s1349 = sld [smem:[#allocation3 + $0xc]]
        %v1350 = vstv %s1349
        %v1351 = vmul.f32 %v1350, %v1348
        %v1353 = vrot.slane %v1351, 5
        %v1354 = vrot.slane %v1353, 4
        %v1356 = vadd.f32 %v1276, %v1354
        %s1357 = sld [smem:[#allocation3 + $0x8c]]
        %v1358 = vstv %s1357
        %v1359 = vmul.f32 %v1358, %v1348
        %v1361 = vrot.slane %v1359, 5
        %v1362 = vrot.slane %v1361, 4
        %v1364 = vadd.f32 %v1286, %v1362
        %s1365 = sld [smem:[#allocation3 + $0x10c]]
        %v1366 = vstv %s1365
        %v1367 = vmul.f32 %v1366, %v1348
        %v1369 = vrot.slane %v1367, 5
        %v1370 = vrot.slane %v1369, 4
        %v1372 = vadd.f32 %v1296, %v1370
        %s1373 = sld [smem:[#allocation3 + $0x18c]]
        %v1374 = vstv %s1373
        %v1375 = vmul.f32 %v1374, %v1348
        %v1377 = vrot.slane %v1375, 5
        %v1378 = vrot.slane %v1377, 4
        %v1380 = vadd.f32 %v1306, %v1378
        %s1381 = sld [smem:[#allocation3 + $0x20c]]
        %v1382 = vstv %s1381
        %v1383 = vmul.f32 %v1382, %v1348
        %v1385 = vrot.slane %v1383, 5
        %v1386 = vrot.slane %v1385, 4
        %v1388 = vadd.f32 %v1316, %v1386
        %s1389 = sld [smem:[#allocation3 + $0x28c]]
        %v1390 = vstv %s1389
        %v1391 = vmul.f32 %v1390, %v1348
        %v1393 = vrot.slane %v1391, 5
        %v1394 = vrot.slane %v1393, 4
        %v1396 = vadd.f32 %v1326, %v1394
        %s1397 = sld [smem:[#allocation3 + $0x30c]]
        %v1398 = vstv %s1397
        %v1399 = vmul.f32 %v1398, %v1348
        %v1401 = vrot.slane %v1399, 5
        %v1402 = vrot.slane %v1401, 4
        %v1404 = vadd.f32 %v1336, %v1402
        %s1405 = sld [smem:[#allocation3 + $0x38c]]
        %v1406 = vstv %s1405
        %v1407 = vmul.f32 %v1406, %v1348
        %v1409 = vrot.slane %v1407, 5
        %v1410 = vrot.slane %v1409, 4
        %v1412 = vadd.f32 %v1346, %v1410
        %s1413 = sld [smem:[#allocation3 + $0xd]]
        %v1414 = vstv %s1413
        %v1415 = vmul.f32 %v1414, %v1348
        %v1417 = vrot.slane %v1415, 5
        %v1418 = vrot.slane %v1417, 4
        %1419 = vrot.lane.b32.xlu0 %v1418, 127
        %v1420 = vpop.permute.xlu0 %1419
        %v1421 = vrot.slane %v1420, 4
        %v1422 = vsel %vm481, %v1420, %v1421
        %v1424 = vadd.f32 %v1356, %v1422
        %s1425 = sld [smem:[#allocation3 + $0x8d]]
        %v1426 = vstv %s1425
        %v1427 = vmul.f32 %v1426, %v1348
        %v1429 = vrot.slane %v1427, 5
        %v1430 = vrot.slane %v1429, 4
        %1431 = vrot.lane.b32.xlu0 %v1430, 127
        %v1432 = vpop.permute.xlu0 %1431
        %v1433 = vrot.slane %v1432, 4
        %v1434 = vsel %vm481, %v1432, %v1433
        %v1436 = vadd.f32 %v1364, %v1434
        %s1437 = sld [smem:[#allocation3 + $0x10d]]
        %v1438 = vstv %s1437
        %v1439 = vmul.f32 %v1438, %v1348
        %v1441 = vrot.slane %v1439, 5
        %v1442 = vrot.slane %v1441, 4
        %1443 = vrot.lane.b32.xlu0 %v1442, 127
        %v1444 = vpop.permute.xlu0 %1443
        %v1445 = vrot.slane %v1444, 4
        %v1446 = vsel %vm481, %v1444, %v1445
        %v1448 = vadd.f32 %v1372, %v1446
        %s1449 = sld [smem:[#allocation3 + $0x18d]]
        %v1450 = vstv %s1449
        %v1451 = vmul.f32 %v1450, %v1348
        %v1453 = vrot.slane %v1451, 5
        %v1454 = vrot.slane %v1453, 4
        %1455 = vrot.lane.b32.xlu0 %v1454, 127
        %v1456 = vpop.permute.xlu0 %1455
        %v1457 = vrot.slane %v1456, 4
        %v1458 = vsel %vm481, %v1456, %v1457
        %v1460 = vadd.f32 %v1380, %v1458
        %s1461 = sld [smem:[#allocation3 + $0x20d]]
        %v1462 = vstv %s1461
        %v1463 = vmul.f32 %v1462, %v1348
        %v1465 = vrot.slane %v1463, 5
        %v1466 = vrot.slane %v1465, 4
        %1467 = vrot.lane.b32.xlu0 %v1466, 127
        %v1468 = vpop.permute.xlu0 %1467
        %v1469 = vrot.slane %v1468, 4
        %v1470 = vsel %vm481, %v1468, %v1469
        %v1472 = vadd.f32 %v1388, %v1470
        %s1473 = sld [smem:[#allocation3 + $0x28d]]
        %v1474 = vstv %s1473
        %v1475 = vmul.f32 %v1474, %v1348
        %v1477 = vrot.slane %v1475, 5
        %v1478 = vrot.slane %v1477, 4
        %1479 = vrot.lane.b32.xlu0 %v1478, 127
        %v1480 = vpop.permute.xlu0 %1479
        %v1481 = vrot.slane %v1480, 4
        %v1482 = vsel %vm481, %v1480, %v1481
        %v1484 = vadd.f32 %v1396, %v1482
        %s1485 = sld [smem:[#allocation3 + $0x30d]]
        %v1486 = vstv %s1485
        %v1487 = vmul.f32 %v1486, %v1348
        %v1489 = vrot.slane %v1487, 5
        %v1490 = vrot.slane %v1489, 4
        %1491 = vrot.lane.b32.xlu0 %v1490, 127
        %v1492 = vpop.permute.xlu0 %1491
        %v1493 = vrot.slane %v1492, 4
        %v1494 = vsel %vm481, %v1492, %v1493
        %v1496 = vadd.f32 %v1404, %v1494
        %s1497 = sld [smem:[#allocation3 + $0x38d]]
        %v1498 = vstv %s1497
        %v1499 = vmul.f32 %v1498, %v1348
        %v1501 = vrot.slane %v1499, 5
        %v1502 = vrot.slane %v1501, 4
        %1503 = vrot.lane.b32.xlu0 %v1502, 127
        %v1504 = vpop.permute.xlu0 %1503
        %v1505 = vrot.slane %v1504, 4
        %v1506 = vsel %vm481, %v1504, %v1505
        %v1508 = vadd.f32 %v1412, %v1506
        %s1509 = sld [smem:[#allocation3 + $0xe]]
        %v1510 = vstv %s1509
        %v1511 = vmul.f32 %v1510, %v1348
        %v1513 = vrot.slane %v1511, 5
        %v1514 = vrot.slane %v1513, 4
        %1515 = vrot.lane.b32.xlu0 %v1514, 126
        %v1516 = vpop.permute.xlu0 %1515
        %v1517 = vrot.slane %v1516, 4
        %v1518 = vsel %vm562, %v1516, %v1517
        %v1520 = vadd.f32 %v1424, %v1518
        %s1521 = sld [smem:[#allocation3 + $0x8e]]
        %v1522 = vstv %s1521
        %v1523 = vmul.f32 %v1522, %v1348
        %v1525 = vrot.slane %v1523, 5
        %v1526 = vrot.slane %v1525, 4
        %1527 = vrot.lane.b32.xlu0 %v1526, 126
        %v1528 = vpop.permute.xlu0 %1527
        %v1529 = vrot.slane %v1528, 4
        %v1530 = vsel %vm562, %v1528, %v1529
        %v1532 = vadd.f32 %v1436, %v1530
        %s1533 = sld [smem:[#allocation3 + $0x10e]]
        %v1534 = vstv %s1533
        %v1535 = vmul.f32 %v1534, %v1348
        %v1537 = vrot.slane %v1535, 5
        %v1538 = vrot.slane %v1537, 4
        %1539 = vrot.lane.b32.xlu0 %v1538, 126
        %v1540 = vpop.permute.xlu0 %1539
        %v1541 = vrot.slane %v1540, 4
        %v1542 = vsel %vm562, %v1540, %v1541
        %v1544 = vadd.f32 %v1448, %v1542
        %s1545 = sld [smem:[#allocation3 + $0x18e]]
        %v1546 = vstv %s1545
        %v1547 = vmul.f32 %v1546, %v1348
        %v1549 = vrot.slane %v1547, 5
        %v1550 = vrot.slane %v1549, 4
        %1551 = vrot.lane.b32.xlu0 %v1550, 126
        %v1552 = vpop.permute.xlu0 %1551
        %v1553 = vrot.slane %v1552, 4
        %v1554 = vsel %vm562, %v1552, %v1553
        %v1556 = vadd.f32 %v1460, %v1554
        %s1557 = sld [smem:[#allocation3 + $0x20e]]
        %v1558 = vstv %s1557
        %v1559 = vmul.f32 %v1558, %v1348
        %v1561 = vrot.slane %v1559, 5
        %v1562 = vrot.slane %v1561, 4
        %1563 = vrot.lane.b32.xlu0 %v1562, 126
        %v1564 = vpop.permute.xlu0 %1563
        %v1565 = vrot.slane %v1564, 4
        %v1566 = vsel %vm562, %v1564, %v1565
        %v1568 = vadd.f32 %v1472, %v1566
        %s1569 = sld [smem:[#allocation3 + $0x28e]]
        %v1570 = vstv %s1569
        %v1571 = vmul.f32 %v1570, %v1348
        %v1573 = vrot.slane %v1571, 5
        %v1574 = vrot.slane %v1573, 4
        %1575 = vrot.lane.b32.xlu0 %v1574, 126
        %v1576 = vpop.permute.xlu0 %1575
        %v1577 = vrot.slane %v1576, 4
        %v1578 = vsel %vm562, %v1576, %v1577
        %v1580 = vadd.f32 %v1484, %v1578
        %s1581 = sld [smem:[#allocation3 + $0x30e]]
        %v1582 = vstv %s1581
        %v1583 = vmul.f32 %v1582, %v1348
        %v1585 = vrot.slane %v1583, 5
        %v1586 = vrot.slane %v1585, 4
        %1587 = vrot.lane.b32.xlu0 %v1586, 126
        %v1588 = vpop.permute.xlu0 %1587
        %v1589 = vrot.slane %v1588, 4
        %v1590 = vsel %vm562, %v1588, %v1589
        %v1592 = vadd.f32 %v1496, %v1590
        %s1593 = sld [smem:[#allocation3 + $0x38e]]
        %v1594 = vstv %s1593
        %v1595 = vmul.f32 %v1594, %v1348
        %v1597 = vrot.slane %v1595, 5
        %v1598 = vrot.slane %v1597, 4
        %1599 = vrot.lane.b32.xlu0 %v1598, 126
        %v1600 = vpop.permute.xlu0 %1599
        %v1601 = vrot.slane %v1600, 4
        %v1602 = vsel %vm562, %v1600, %v1601
        %v1604 = vadd.f32 %v1508, %v1602
        %v1605 = vld [vmem:[%s1152] sm:$0xa]
        %v1606 = vunpack.c.l.bf16 %v1605
        %s1607 = sld [smem:[#allocation3 + $0xf]]
        %v1608 = vstv %s1607
        %v1609 = vmul.f32 %v1608, %v1606
        %v1611 = vrot.slane %v1609, 6
        %v1612 = vrot.slane %v1611, 4
        %v1614 = vadd.f32 %v1520, %v1612
        %s1615 = sld [smem:[#allocation3 + $0x8f]]
        %v1616 = vstv %s1615
        %v1617 = vmul.f32 %v1616, %v1606
        %v1619 = vrot.slane %v1617, 6
        %v1620 = vrot.slane %v1619, 4
        %v1622 = vadd.f32 %v1532, %v1620
        %s1623 = sld [smem:[#allocation3 + $0x10f]]
        %v1624 = vstv %s1623
        %v1625 = vmul.f32 %v1624, %v1606
        %v1627 = vrot.slane %v1625, 6
        %v1628 = vrot.slane %v1627, 4
        %v1630 = vadd.f32 %v1544, %v1628
        %s1631 = sld [smem:[#allocation3 + $0x18f]]
        %v1632 = vstv %s1631
        %v1633 = vmul.f32 %v1632, %v1606
        %v1635 = vrot.slane %v1633, 6
        %v1636 = vrot.slane %v1635, 4
        %v1638 = vadd.f32 %v1556, %v1636
        %s1639 = sld [smem:[#allocation3 + $0x20f]]
        %v1640 = vstv %s1639
        %v1641 = vmul.f32 %v1640, %v1606
        %v1643 = vrot.slane %v1641, 6
        %v1644 = vrot.slane %v1643, 4
        %v1646 = vadd.f32 %v1568, %v1644
        %s1647 = sld [smem:[#allocation3 + $0x28f]]
        %v1648 = vstv %s1647
        %v1649 = vmul.f32 %v1648, %v1606
        %v1651 = vrot.slane %v1649, 6
        %v1652 = vrot.slane %v1651, 4
        %v1654 = vadd.f32 %v1580, %v1652
        %s1655 = sld [smem:[#allocation3 + $0x30f]]
        %v1656 = vstv %s1655
        %v1657 = vmul.f32 %v1656, %v1606
        %v1659 = vrot.slane %v1657, 6
        %v1660 = vrot.slane %v1659, 4
        %v1662 = vadd.f32 %v1592, %v1660
        %s1663 = sld [smem:[#allocation3 + $0x38f]]
        %v1664 = vstv %s1663
        %v1665 = vmul.f32 %v1664, %v1606
        %v1667 = vrot.slane %v1665, 6
        %v1668 = vrot.slane %v1667, 4
        %v1670 = vadd.f32 %v1604, %v1668
        %s1671 = sld [smem:[#allocation3 + $0x10]]
        %v1672 = vstv %s1671
        %v1673 = vmul.f32 %v1672, %v1606
        %v1675 = vrot.slane %v1673, 6
        %v1676 = vrot.slane %v1675, 4
        %1677 = vrot.lane.b32.xlu0 %v1676, 127
        %v1678 = vpop.permute.xlu0 %1677
        %v1679 = vrot.slane %v1678, 4
        %v1680 = vsel %vm481, %v1678, %v1679
        %v1682 = vadd.f32 %v1614, %v1680
        %s1683 = sld [smem:[#allocation3 + $0x90]]
        %v1684 = vstv %s1683
        %v1685 = vmul.f32 %v1684, %v1606
        %v1687 = vrot.slane %v1685, 6
        %v1688 = vrot.slane %v1687, 4
        %1689 = vrot.lane.b32.xlu0 %v1688, 127
        %v1690 = vpop.permute.xlu0 %1689
        %v1691 = vrot.slane %v1690, 4
        %v1692 = vsel %vm481, %v1690, %v1691
        %v1694 = vadd.f32 %v1622, %v1692
        %s1695 = sld [smem:[#allocation3 + $0x110]]
        %v1696 = vstv %s1695
        %v1697 = vmul.f32 %v1696, %v1606
        %v1699 = vrot.slane %v1697, 6
        %v1700 = vrot.slane %v1699, 4
        %1701 = vrot.lane.b32.xlu0 %v1700, 127
        %v1702 = vpop.permute.xlu0 %1701
        %v1703 = vrot.slane %v1702, 4
        %v1704 = vsel %vm481, %v1702, %v1703
        %v1706 = vadd.f32 %v1630, %v1704
        %s1707 = sld [smem:[#allocation3 + $0x190]]
        %v1708 = vstv %s1707
        %v1709 = vmul.f32 %v1708, %v1606
        %v1711 = vrot.slane %v1709, 6
        %v1712 = vrot.slane %v1711, 4
        %1713 = vrot.lane.b32.xlu0 %v1712, 127
        %v1714 = vpop.permute.xlu0 %1713
        %v1715 = vrot.slane %v1714, 4
        %v1716 = vsel %vm481, %v1714, %v1715
        %v1718 = vadd.f32 %v1638, %v1716
        %s1719 = sld [smem:[#allocation3 + $0x210]]
        %v1720 = vstv %s1719
        %v1721 = vmul.f32 %v1720, %v1606
        %v1723 = vrot.slane %v1721, 6
        %v1724 = vrot.slane %v1723, 4
        %1725 = vrot.lane.b32.xlu0 %v1724, 127
        %v1726 = vpop.permute.xlu0 %1725
        %v1727 = vrot.slane %v1726, 4
        %v1728 = vsel %vm481, %v1726, %v1727
        %v1730 = vadd.f32 %v1646, %v1728
        %s1731 = sld [smem:[#allocation3 + $0x290]]
        %v1732 = vstv %s1731
        %v1733 = vmul.f32 %v1732, %v1606
        %v1735 = vrot.slane %v1733, 6
        %v1736 = vrot.slane %v1735, 4
        %1737 = vrot.lane.b32.xlu0 %v1736, 127
        %v1738 = vpop.permute.xlu0 %1737
        %v1739 = vrot.slane %v1738, 4
        %v1740 = vsel %vm481, %v1738, %v1739
        %v1742 = vadd.f32 %v1654, %v1740
        %s1743 = sld [smem:[#allocation3 + $0x310]]
        %v1744 = vstv %s1743
        %v1745 = vmul.f32 %v1744, %v1606
        %v1747 = vrot.slane %v1745, 6
        %v1748 = vrot.slane %v1747, 4
        %1749 = vrot.lane.b32.xlu0 %v1748, 127
        %v1750 = vpop.permute.xlu0 %1749
        %v1751 = vrot.slane %v1750, 4
        %v1752 = vsel %vm481, %v1750, %v1751
        %v1754 = vadd.f32 %v1662, %v1752
        %s1755 = sld [smem:[#allocation3 + $0x390]]
        %v1756 = vstv %s1755
        %v1757 = vmul.f32 %v1756, %v1606
        %v1759 = vrot.slane %v1757, 6
        %v1760 = vrot.slane %v1759, 4
        %1761 = vrot.lane.b32.xlu0 %v1760, 127
        %v1762 = vpop.permute.xlu0 %1761
        %v1763 = vrot.slane %v1762, 4
        %v1764 = vsel %vm481, %v1762, %v1763
        %v1766 = vadd.f32 %v1670, %v1764
        %s1767 = sld [smem:[#allocation3 + $0x11]]
        %v1768 = vstv %s1767
        %v1769 = vmul.f32 %v1768, %v1606
        %v1771 = vrot.slane %v1769, 6
        %v1772 = vrot.slane %v1771, 4
        %1773 = vrot.lane.b32.xlu0 %v1772, 126
        %v1774 = vpop.permute.xlu0 %1773
        %v1775 = vrot.slane %v1774, 4
        %v1776 = vsel %vm562, %v1774, %v1775
        %v1778 = vadd.f32 %v1682, %v1776
        %s1779 = sld [smem:[#allocation3 + $0x91]]
        %v1780 = vstv %s1779
        %v1781 = vmul.f32 %v1780, %v1606
        %v1783 = vrot.slane %v1781, 6
        %v1784 = vrot.slane %v1783, 4
        %1785 = vrot.lane.b32.xlu0 %v1784, 126
        %v1786 = vpop.permute.xlu0 %1785
        %v1787 = vrot.slane %v1786, 4
        %v1788 = vsel %vm562, %v1786, %v1787
        %v1790 = vadd.f32 %v1694, %v1788
        %s1791 = sld [smem:[#allocation3 + $0x111]]
        %v1792 = vstv %s1791
        %v1793 = vmul.f32 %v1792, %v1606
        %v1795 = vrot.slane %v1793, 6
        %v1796 = vrot.slane %v1795, 4
        %1797 = vrot.lane.b32.xlu0 %v1796, 126
        %v1798 = vpop.permute.xlu0 %1797
        %v1799 = vrot.slane %v1798, 4
        %v1800 = vsel %vm562, %v1798, %v1799
        %v1802 = vadd.f32 %v1706, %v1800
        %s1803 = sld [smem:[#allocation3 + $0x191]]
        %v1804 = vstv %s1803
        %v1805 = vmul.f32 %v1804, %v1606
        %v1807 = vrot.slane %v1805, 6
        %v1808 = vrot.slane %v1807, 4
        %1809 = vrot.lane.b32.xlu0 %v1808, 126
        %v1810 = vpop.permute.xlu0 %1809
        %v1811 = vrot.slane %v1810, 4
        %v1812 = vsel %vm562, %v1810, %v1811
        %v1814 = vadd.f32 %v1718, %v1812
        %s1815 = sld [smem:[#allocation3 + $0x211]]
        %v1816 = vstv %s1815
        %v1817 = vmul.f32 %v1816, %v1606
        %v1819 = vrot.slane %v1817, 6
        %v1820 = vrot.slane %v1819, 4
        %1821 = vrot.lane.b32.xlu0 %v1820, 126
        %v1822 = vpop.permute.xlu0 %1821
        %v1823 = vrot.slane %v1822, 4
        %v1824 = vsel %vm562, %v1822, %v1823
        %v1826 = vadd.f32 %v1730, %v1824
        %s1827 = sld [smem:[#allocation3 + $0x291]]
        %v1828 = vstv %s1827
        %v1829 = vmul.f32 %v1828, %v1606
        %v1831 = vrot.slane %v1829, 6
        %v1832 = vrot.slane %v1831, 4
        %1833 = vrot.lane.b32.xlu0 %v1832, 126
        %v1834 = vpop.permute.xlu0 %1833
        %v1835 = vrot.slane %v1834, 4
        %v1836 = vsel %vm562, %v1834, %v1835
        %v1838 = vadd.f32 %v1742, %v1836
        %s1839 = sld [smem:[#allocation3 + $0x311]]
        %v1840 = vstv %s1839
        %v1841 = vmul.f32 %v1840, %v1606
        %v1843 = vrot.slane %v1841, 6
        %v1844 = vrot.slane %v1843, 4
        %1845 = vrot.lane.b32.xlu0 %v1844, 126
        %v1846 = vpop.permute.xlu0 %1845
        %v1847 = vrot.slane %v1846, 4
        %v1848 = vsel %vm562, %v1846, %v1847
        %v1850 = vadd.f32 %v1754, %v1848
        %s1851 = sld [smem:[#allocation3 + $0x391]]
        %v1852 = vstv %s1851
        %v1853 = vmul.f32 %v1852, %v1606
        %v1855 = vrot.slane %v1853, 6
        %v1856 = vrot.slane %v1855, 4
        %1857 = vrot.lane.b32.xlu0 %v1856, 126
        %v1858 = vpop.permute.xlu0 %1857
        %v1859 = vrot.slane %v1858, 4
        %v1860 = vsel %vm562, %v1858, %v1859
        %v1862 = vadd.f32 %v1766, %v1860
        %s1863 = scalar_lea.vmem %s371, 8
        %v1864 = vld [vmem:[%s1863] sm:$0x5]
        %v1865 = vunpack.c.l.bf16 %v1864
        %s1866 = sld [smem:[#allocation3 + $0x12]]
        %v1867 = vstv %s1866
        %v1868 = vmul.f32 %v1867, %v1865
        %v1869 = vadd.f32 %v1778, %v1868
        %s1870 = sld [smem:[#allocation3 + $0x92]]
        %v1871 = vstv %s1870
        %v1872 = vmul.f32 %v1871, %v1865
        %v1873 = vadd.f32 %v1790, %v1872
        %s1874 = sld [smem:[#allocation3 + $0x112]]
        %v1875 = vstv %s1874
        %v1876 = vmul.f32 %v1875, %v1865
        %v1877 = vadd.f32 %v1802, %v1876
        %s1878 = sld [smem:[#allocation3 + $0x192]]
        %v1879 = vstv %s1878
        %v1880 = vmul.f32 %v1879, %v1865
        %v1881 = vadd.f32 %v1814, %v1880
        %s1882 = sld [smem:[#allocation3 + $0x212]]
        %v1883 = vstv %s1882
        %v1884 = vmul.f32 %v1883, %v1865
        %v1885 = vadd.f32 %v1826, %v1884
        %s1886 = sld [smem:[#allocation3 + $0x292]]
        %v1887 = vstv %s1886
        %v1888 = vmul.f32 %v1887, %v1865
        %v1889 = vadd.f32 %v1838, %v1888
        %s1890 = sld [smem:[#allocation3 + $0x312]]
        %v1891 = vstv %s1890
        %v1892 = vmul.f32 %v1891, %v1865
        %v1893 = vadd.f32 %v1850, %v1892
        %s1894 = sld [smem:[#allocation3 + $0x392]]
        %v1895 = vstv %s1894
        %v1896 = vmul.f32 %v1895, %v1865
        %v1897 = vadd.f32 %v1862, %v1896
        %s1898 = sld [smem:[#allocation3 + $0x13]]
        %v1899 = vstv %s1898
        %v1900 = vmul.f32 %v1899, %v1865
        %1902 = vrot.lane.b32.xlu0 %v1900, 127
        %v1903 = vpop.permute.xlu0 %1902
        %v1904 = vrot.slane %v1903, 4
        %v1905 = vsel %vm481, %v1903, %v1904
        %v1907 = vadd.f32 %v1869, %v1905
        %s1908 = sld [smem:[#allocation3 + $0x93]]
        %v1909 = vstv %s1908
        %v1910 = vmul.f32 %v1909, %v1865
        %1912 = vrot.lane.b32.xlu0 %v1910, 127
        %v1913 = vpop.permute.xlu0 %1912
        %v1914 = vrot.slane %v1913, 4
        %v1915 = vsel %vm481, %v1913, %v1914
        %v1917 = vadd.f32 %v1873, %v1915
        %s1918 = sld [smem:[#allocation3 + $0x113]]
        %v1919 = vstv %s1918
        %v1920 = vmul.f32 %v1919, %v1865
        %1922 = vrot.lane.b32.xlu0 %v1920, 127
        %v1923 = vpop.permute.xlu0 %1922
        %v1924 = vrot.slane %v1923, 4
        %v1925 = vsel %vm481, %v1923, %v1924
        %v1927 = vadd.f32 %v1877, %v1925
        %s1928 = sld [smem:[#allocation3 + $0x193]]
        %v1929 = vstv %s1928
        %v1930 = vmul.f32 %v1929, %v1865
        %1932 = vrot.lane.b32.xlu0 %v1930, 127
        %v1933 = vpop.permute.xlu0 %1932
        %v1934 = vrot.slane %v1933, 4
        %v1935 = vsel %vm481, %v1933, %v1934
        %v1937 = vadd.f32 %v1881, %v1935
        %s1938 = sld [smem:[#allocation3 + $0x213]]
        %v1939 = vstv %s1938
        %v1940 = vmul.f32 %v1939, %v1865
        %1942 = vrot.lane.b32.xlu0 %v1940, 127
        %v1943 = vpop.permute.xlu0 %1942
        %v1944 = vrot.slane %v1943, 4
        %v1945 = vsel %vm481, %v1943, %v1944
        %v1947 = vadd.f32 %v1885, %v1945
        %s1948 = sld [smem:[#allocation3 + $0x293]]
        %v1949 = vstv %s1948
        %v1950 = vmul.f32 %v1949, %v1865
        %1952 = vrot.lane.b32.xlu0 %v1950, 127
        %v1953 = vpop.permute.xlu0 %1952
        %v1954 = vrot.slane %v1953, 4
        %v1955 = vsel %vm481, %v1953, %v1954
        %v1957 = vadd.f32 %v1889, %v1955
        %s1958 = sld [smem:[#allocation3 + $0x313]]
        %v1959 = vstv %s1958
        %v1960 = vmul.f32 %v1959, %v1865
        %1962 = vrot.lane.b32.xlu0 %v1960, 127
        %v1963 = vpop.permute.xlu0 %1962
        %v1964 = vrot.slane %v1963, 4
        %v1965 = vsel %vm481, %v1963, %v1964
        %v1967 = vadd.f32 %v1893, %v1965
        %s1968 = sld [smem:[#allocation3 + $0x393]]
        %v1969 = vstv %s1968
        %v1970 = vmul.f32 %v1969, %v1865
        %1972 = vrot.lane.b32.xlu0 %v1970, 127
        %v1973 = vpop.permute.xlu0 %1972
        %v1974 = vrot.slane %v1973, 4
        %v1975 = vsel %vm481, %v1973, %v1974
        %v1977 = vadd.f32 %v1897, %v1975
        %s1978 = sld [smem:[#allocation3 + $0x14]]
        %v1979 = vstv %s1978
        %v1980 = vmul.f32 %v1979, %v1865
        %1982 = vrot.lane.b32.xlu0 %v1980, 126
        %v1983 = vpop.permute.xlu0 %1982
        %v1984 = vrot.slane %v1983, 4
        %v1985 = vsel %vm562, %v1983, %v1984
        %v1987 = vadd.f32 %v1907, %v1985
        %s1988 = sld [smem:[#allocation3 + $0x94]]
        %v1989 = vstv %s1988
        %v1990 = vmul.f32 %v1989, %v1865
        %1992 = vrot.lane.b32.xlu0 %v1990, 126
        %v1993 = vpop.permute.xlu0 %1992
        %v1994 = vrot.slane %v1993, 4
        %v1995 = vsel %vm562, %v1993, %v1994
        %v1997 = vadd.f32 %v1917, %v1995
        %s1998 = sld [smem:[#allocation3 + $0x114]]
        %v1999 = vstv %s1998
        %v2000 = vmul.f32 %v1999, %v1865
        %2002 = vrot.lane.b32.xlu0 %v2000, 126
        %v2003 = vpop.permute.xlu0 %2002
        %v2004 = vrot.slane %v2003, 4
        %v2005 = vsel %vm562, %v2003, %v2004
        %v2007 = vadd.f32 %v1927, %v2005
        %s2008 = sld [smem:[#allocation3 + $0x194]]
        %v2009 = vstv %s2008
        %v2010 = vmul.f32 %v2009, %v1865
        %2012 = vrot.lane.b32.xlu0 %v2010, 126
        %v2013 = vpop.permute.xlu0 %2012
        %v2014 = vrot.slane %v2013, 4
        %v2015 = vsel %vm562, %v2013, %v2014
        %v2017 = vadd.f32 %v1937, %v2015
        %s2018 = sld [smem:[#allocation3 + $0x214]]
        %v2019 = vstv %s2018
        %v2020 = vmul.f32 %v2019, %v1865
        %2022 = vrot.lane.b32.xlu0 %v2020, 126
        %v2023 = vpop.permute.xlu0 %2022
        %v2024 = vrot.slane %v2023, 4
        %v2025 = vsel %vm562, %v2023, %v2024
        %v2027 = vadd.f32 %v1947, %v2025
        %s2028 = sld [smem:[#allocation3 + $0x294]]
        %v2029 = vstv %s2028
        %v2030 = vmul.f32 %v2029, %v1865
        %2032 = vrot.lane.b32.xlu0 %v2030, 126
        %v2033 = vpop.permute.xlu0 %2032
        %v2034 = vrot.slane %v2033, 4
        %v2035 = vsel %vm562, %v2033, %v2034
        %v2037 = vadd.f32 %v1957, %v2035
        %s2038 = sld [smem:[#allocation3 + $0x314]]
        %v2039 = vstv %s2038
        %v2040 = vmul.f32 %v2039, %v1865
        %2042 = vrot.lane.b32.xlu0 %v2040, 126
        %v2043 = vpop.permute.xlu0 %2042
        %v2044 = vrot.slane %v2043, 4
        %v2045 = vsel %vm562, %v2043, %v2044
        %v2047 = vadd.f32 %v1967, %v2045
        %s2048 = sld [smem:[#allocation3 + $0x394]]
        %v2049 = vstv %s2048
        %v2050 = vmul.f32 %v2049, %v1865
        %2052 = vrot.lane.b32.xlu0 %v2050, 126
        %v2053 = vpop.permute.xlu0 %2052
        %v2054 = vrot.slane %v2053, 4
        %v2055 = vsel %vm562, %v2053, %v2054
        %v2057 = vadd.f32 %v1977, %v2055
        %v2058 = vld [vmem:[%s1863] sm:$0xf]
        %v2059 = vunpack.c.l.bf16 %v2058
        %s2060 = sld [smem:[#allocation3 + $0x15]]
        %v2061 = vstv %s2060
        %v2062 = vmul.f32 %v2061, %v2059
        %v2064 = vrot.slane %v2062, 5
        %v2065 = vrot.slane %v2064, 4
        %v2067 = vadd.f32 %v1987, %v2065
        %s2068 = sld [smem:[#allocation3 + $0x95]]
        %v2069 = vstv %s2068
        %v2070 = vmul.f32 %v2069, %v2059
        %v2072 = vrot.slane %v2070, 5
        %v2073 = vrot.slane %v2072, 4
        %v2075 = vadd.f32 %v1997, %v2073
        %s2076 = sld [smem:[#allocation3 + $0x115]]
        %v2077 = vstv %s2076
        %v2078 = vmul.f32 %v2077, %v2059
        %v2080 = vrot.slane %v2078, 5
        %v2081 = vrot.slane %v2080, 4
        %v2083 = vadd.f32 %v2007, %v2081
        %s2084 = sld [smem:[#allocation3 + $0x195]]
        %v2085 = vstv %s2084
        %v2086 = vmul.f32 %v2085, %v2059
        %v2088 = vrot.slane %v2086, 5
        %v2089 = vrot.slane %v2088, 4
        %v2091 = vadd.f32 %v2017, %v2089
        %s2092 = sld [smem:[#allocation3 + $0x215]]
        %v2093 = vstv %s2092
        %v2094 = vmul.f32 %v2093, %v2059
        %v2096 = vrot.slane %v2094, 5
        %v2097 = vrot.slane %v2096, 4
        %v2099 = vadd.f32 %v2027, %v2097
        %s2100 = sld [smem:[#allocation3 + $0x295]]
        %v2101 = vstv %s2100
        %v2102 = vmul.f32 %v2101, %v2059
        %v2104 = vrot.slane %v2102, 5
        %v2105 = vrot.slane %v2104, 4
        %v2107 = vadd.f32 %v2037, %v2105
        %s2108 = sld [smem:[#allocation3 + $0x315]]
        %v2109 = vstv %s2108
        %v2110 = vmul.f32 %v2109, %v2059
        %v2112 = vrot.slane %v2110, 5
        %v2113 = vrot.slane %v2112, 4
        %v2115 = vadd.f32 %v2047, %v2113
        %s2116 = sld [smem:[#allocation3 + $0x395]]
        %v2117 = vstv %s2116
        %v2118 = vmul.f32 %v2117, %v2059
        %v2120 = vrot.slane %v2118, 5
        %v2121 = vrot.slane %v2120, 4
        %v2123 = vadd.f32 %v2057, %v2121
        %s2124 = sld [smem:[#allocation3 + $0x16]]
        %v2125 = vstv %s2124
        %v2126 = vmul.f32 %v2125, %v2059
        %v2128 = vrot.slane %v2126, 5
        %v2129 = vrot.slane %v2128, 4
        %2130 = vrot.lane.b32.xlu0 %v2129, 127
        %v2131 = vpop.permute.xlu0 %2130
        %v2132 = vrot.slane %v2131, 4
        %v2133 = vsel %vm481, %v2131, %v2132
        %v2135 = vadd.f32 %v2067, %v2133
        %s2136 = sld [smem:[#allocation3 + $0x96]]
        %v2137 = vstv %s2136
        %v2138 = vmul.f32 %v2137, %v2059
        %v2140 = vrot.slane %v2138, 5
        %v2141 = vrot.slane %v2140, 4
        %2142 = vrot.lane.b32.xlu0 %v2141, 127
        %v2143 = vpop.permute.xlu0 %2142
        %v2144 = vrot.slane %v2143, 4
        %v2145 = vsel %vm481, %v2143, %v2144
        %v2147 = vadd.f32 %v2075, %v2145
        %s2148 = sld [smem:[#allocation3 + $0x116]]
        %v2149 = vstv %s2148
        %v2150 = vmul.f32 %v2149, %v2059
        %v2152 = vrot.slane %v2150, 5
        %v2153 = vrot.slane %v2152, 4
        %2154 = vrot.lane.b32.xlu0 %v2153, 127
        %v2155 = vpop.permute.xlu0 %2154
        %v2156 = vrot.slane %v2155, 4
        %v2157 = vsel %vm481, %v2155, %v2156
        %v2159 = vadd.f32 %v2083, %v2157
        %s2160 = sld [smem:[#allocation3 + $0x196]]
        %v2161 = vstv %s2160
        %v2162 = vmul.f32 %v2161, %v2059
        %v2164 = vrot.slane %v2162, 5
        %v2165 = vrot.slane %v2164, 4
        %2166 = vrot.lane.b32.xlu0 %v2165, 127
        %v2167 = vpop.permute.xlu0 %2166
        %v2168 = vrot.slane %v2167, 4
        %v2169 = vsel %vm481, %v2167, %v2168
        %v2171 = vadd.f32 %v2091, %v2169
        %s2172 = sld [smem:[#allocation3 + $0x216]]
        %v2173 = vstv %s2172
        %v2174 = vmul.f32 %v2173, %v2059
        %v2176 = vrot.slane %v2174, 5
        %v2177 = vrot.slane %v2176, 4
        %2178 = vrot.lane.b32.xlu0 %v2177, 127
        %v2179 = vpop.permute.xlu0 %2178
        %v2180 = vrot.slane %v2179, 4
        %v2181 = vsel %vm481, %v2179, %v2180
        %v2183 = vadd.f32 %v2099, %v2181
        %s2184 = sld [smem:[#allocation3 + $0x296]]
        %v2185 = vstv %s2184
        %v2186 = vmul.f32 %v2185, %v2059
        %v2188 = vrot.slane %v2186, 5
        %v2189 = vrot.slane %v2188, 4
        %2190 = vrot.lane.b32.xlu0 %v2189, 127
        %v2191 = vpop.permute.xlu0 %2190
        %v2192 = vrot.slane %v2191, 4
        %v2193 = vsel %vm481, %v2191, %v2192
        %v2195 = vadd.f32 %v2107, %v2193
        %s2196 = sld [smem:[#allocation3 + $0x316]]
        %v2197 = vstv %s2196
        %v2198 = vmul.f32 %v2197, %v2059
        %v2200 = vrot.slane %v2198, 5
        %v2201 = vrot.slane %v2200, 4
        %2202 = vrot.lane.b32.xlu0 %v2201, 127
        %v2203 = vpop.permute.xlu0 %2202
        %v2204 = vrot.slane %v2203, 4
        %v2205 = vsel %vm481, %v2203, %v2204
        %v2207 = vadd.f32 %v2115, %v2205
        %s2208 = sld [smem:[#allocation3 + $0x396]]
        %v2209 = vstv %s2208
        %v2210 = vmul.f32 %v2209, %v2059
        %v2212 = vrot.slane %v2210, 5
        %v2213 = vrot.slane %v2212, 4
        %2214 = vrot.lane.b32.xlu0 %v2213, 127
        %v2215 = vpop.permute.xlu0 %2214
        %v2216 = vrot.slane %v2215, 4
        %v2217 = vsel %vm481, %v2215, %v2216
        %v2219 = vadd.f32 %v2123, %v2217
        %s2220 = sld [smem:[#allocation3 + $0x17]]
        %v2221 = vstv %s2220
        %v2222 = vmul.f32 %v2221, %v2059
        %v2224 = vrot.slane %v2222, 5
        %v2225 = vrot.slane %v2224, 4
        %2226 = vrot.lane.b32.xlu0 %v2225, 126
        %v2227 = vpop.permute.xlu0 %2226
        %v2228 = vrot.slane %v2227, 4
        %v2229 = vsel %vm562, %v2227, %v2228
        %v2231 = vadd.f32 %v2135, %v2229
        %s2232 = sld [smem:[#allocation3 + $0x97]]
        %v2233 = vstv %s2232
        %v2234 = vmul.f32 %v2233, %v2059
        %v2236 = vrot.slane %v2234, 5
        %v2237 = vrot.slane %v2236, 4
        %2238 = vrot.lane.b32.xlu0 %v2237, 126
        %v2239 = vpop.permute.xlu0 %2238
        %v2240 = vrot.slane %v2239, 4
        %v2241 = vsel %vm562, %v2239, %v2240
        %v2243 = vadd.f32 %v2147, %v2241
        %s2244 = sld [smem:[#allocation3 + $0x117]]
        %v2245 = vstv %s2244
        %v2246 = vmul.f32 %v2245, %v2059
        %v2248 = vrot.slane %v2246, 5
        %v2249 = vrot.slane %v2248, 4
        %2250 = vrot.lane.b32.xlu0 %v2249, 126
        %v2251 = vpop.permute.xlu0 %2250
        %v2252 = vrot.slane %v2251, 4
        %v2253 = vsel %vm562, %v2251, %v2252
        %v2255 = vadd.f32 %v2159, %v2253
        %s2256 = sld [smem:[#allocation3 + $0x197]]
        %v2257 = vstv %s2256
        %v2258 = vmul.f32 %v2257, %v2059
        %v2260 = vrot.slane %v2258, 5
        %v2261 = vrot.slane %v2260, 4
        %2262 = vrot.lane.b32.xlu0 %v2261, 126
        %v2263 = vpop.permute.xlu0 %2262
        %v2264 = vrot.slane %v2263, 4
        %v2265 = vsel %vm562, %v2263, %v2264
        %v2267 = vadd.f32 %v2171, %v2265
        %s2268 = sld [smem:[#allocation3 + $0x217]]
        %v2269 = vstv %s2268
        %v2270 = vmul.f32 %v2269, %v2059
        %v2272 = vrot.slane %v2270, 5
        %v2273 = vrot.slane %v2272, 4
        %2274 = vrot.lane.b32.xlu0 %v2273, 126
        %v2275 = vpop.permute.xlu0 %2274
        %v2276 = vrot.slane %v2275, 4
        %v2277 = vsel %vm562, %v2275, %v2276
        %v2279 = vadd.f32 %v2183, %v2277
        %s2280 = sld [smem:[#allocation3 + $0x297]]
        %v2281 = vstv %s2280
        %v2282 = vmul.f32 %v2281, %v2059
        %v2284 = vrot.slane %v2282, 5
        %v2285 = vrot.slane %v2284, 4
        %2286 = vrot.lane.b32.xlu0 %v2285, 126
        %v2287 = vpop.permute.xlu0 %2286
        %v2288 = vrot.slane %v2287, 4
        %v2289 = vsel %vm562, %v2287, %v2288
        %v2291 = vadd.f32 %v2195, %v2289
        %s2292 = sld [smem:[#allocation3 + $0x317]]
        %v2293 = vstv %s2292
        %v2294 = vmul.f32 %v2293, %v2059
        %v2296 = vrot.slane %v2294, 5
        %v2297 = vrot.slane %v2296, 4
        %2298 = vrot.lane.b32.xlu0 %v2297, 126
        %v2299 = vpop.permute.xlu0 %2298
        %v2300 = vrot.slane %v2299, 4
        %v2301 = vsel %vm562, %v2299, %v2300
        %v2303 = vadd.f32 %v2207, %v2301
        %s2304 = sld [smem:[#allocation3 + $0x397]]
        %v2305 = vstv %s2304
        %v2306 = vmul.f32 %v2305, %v2059
        %v2308 = vrot.slane %v2306, 5
        %v2309 = vrot.slane %v2308, 4
        %2310 = vrot.lane.b32.xlu0 %v2309, 126
        %v2311 = vpop.permute.xlu0 %2310
        %v2312 = vrot.slane %v2311, 4
        %v2313 = vsel %vm562, %v2311, %v2312
        %v2315 = vadd.f32 %v2219, %v2313
        %v2316 = vld [vmem:[%s1863] sm:$0xa]
        %v2317 = vunpack.c.l.bf16 %v2316
        %s2318 = sld [smem:[#allocation3 + $0x18]]
        %v2319 = vstv %s2318
        %v2320 = vmul.f32 %v2319, %v2317
        %v2322 = vrot.slane %v2320, 6
        %v2323 = vrot.slane %v2322, 4
        %v2325 = vadd.f32 %v2231, %v2323
        %s2326 = sld [smem:[#allocation3 + $0x98]]
        %v2327 = vstv %s2326
        %v2328 = vmul.f32 %v2327, %v2317
        %v2330 = vrot.slane %v2328, 6
        %v2331 = vrot.slane %v2330, 4
        %v2333 = vadd.f32 %v2243, %v2331
        %s2334 = sld [smem:[#allocation3 + $0x118]]
        %v2335 = vstv %s2334
        %v2336 = vmul.f32 %v2335, %v2317
        %v2338 = vrot.slane %v2336, 6
        %v2339 = vrot.slane %v2338, 4
        %v2341 = vadd.f32 %v2255, %v2339
        %s2342 = sld [smem:[#allocation3 + $0x198]]
        %v2343 = vstv %s2342
        %v2344 = vmul.f32 %v2343, %v2317
        %v2346 = vrot.slane %v2344, 6
        %v2347 = vrot.slane %v2346, 4
        %v2349 = vadd.f32 %v2267, %v2347
        %s2350 = sld [smem:[#allocation3 + $0x218]]
        %v2351 = vstv %s2350
        %v2352 = vmul.f32 %v2351, %v2317
        %v2354 = vrot.slane %v2352, 6
        %v2355 = vrot.slane %v2354, 4
        %v2357 = vadd.f32 %v2279, %v2355
        %s2358 = sld [smem:[#allocation3 + $0x298]]
        %v2359 = vstv %s2358
        %v2360 = vmul.f32 %v2359, %v2317
        %v2362 = vrot.slane %v2360, 6
        %v2363 = vrot.slane %v2362, 4
        %v2365 = vadd.f32 %v2291, %v2363
        %s2366 = sld [smem:[#allocation3 + $0x318]]
        %v2367 = vstv %s2366
        %v2368 = vmul.f32 %v2367, %v2317
        %v2370 = vrot.slane %v2368, 6
        %v2371 = vrot.slane %v2370, 4
        %v2373 = vadd.f32 %v2303, %v2371
        %s2374 = sld [smem:[#allocation3 + $0x398]]
        %v2375 = vstv %s2374
        %v2376 = vmul.f32 %v2375, %v2317
        %v2378 = vrot.slane %v2376, 6
        %v2379 = vrot.slane %v2378, 4
        %v2381 = vadd.f32 %v2315, %v2379
        %s2382 = sld [smem:[#allocation3 + $0x19]]
        %v2383 = vstv %s2382
        %v2384 = vmul.f32 %v2383, %v2317
        %v2386 = vrot.slane %v2384, 6
        %v2387 = vrot.slane %v2386, 4
        %2388 = vrot.lane.b32.xlu0 %v2387, 127
        %v2389 = vpop.permute.xlu0 %2388
        %v2390 = vrot.slane %v2389, 4
        %v2391 = vsel %vm481, %v2389, %v2390
        %v2393 = vadd.f32 %v2325, %v2391
        %s2394 = sld [smem:[#allocation3 + $0x99]]
        %v2395 = vstv %s2394
        %v2396 = vmul.f32 %v2395, %v2317
        %v2398 = vrot.slane %v2396, 6
        %v2399 = vrot.slane %v2398, 4
        %2400 = vrot.lane.b32.xlu0 %v2399, 127
        %v2401 = vpop.permute.xlu0 %2400
        %v2402 = vrot.slane %v2401, 4
        %v2403 = vsel %vm481, %v2401, %v2402
        %v2405 = vadd.f32 %v2333, %v2403
        %s2406 = sld [smem:[#allocation3 + $0x119]]
        %v2407 = vstv %s2406
        %v2408 = vmul.f32 %v2407, %v2317
        %v2410 = vrot.slane %v2408, 6
        %v2411 = vrot.slane %v2410, 4
        %2412 = vrot.lane.b32.xlu0 %v2411, 127
        %v2413 = vpop.permute.xlu0 %2412
        %v2414 = vrot.slane %v2413, 4
        %v2415 = vsel %vm481, %v2413, %v2414
        %v2417 = vadd.f32 %v2341, %v2415
        %s2418 = sld [smem:[#allocation3 + $0x199]]
        %v2419 = vstv %s2418
        %v2420 = vmul.f32 %v2419, %v2317
        %v2422 = vrot.slane %v2420, 6
        %v2423 = vrot.slane %v2422, 4
        %2424 = vrot.lane.b32.xlu0 %v2423, 127
        %v2425 = vpop.permute.xlu0 %2424
        %v2426 = vrot.slane %v2425, 4
        %v2427 = vsel %vm481, %v2425, %v2426
        %v2429 = vadd.f32 %v2349, %v2427
        %s2430 = sld [smem:[#allocation3 + $0x219]]
        %v2431 = vstv %s2430
        %v2432 = vmul.f32 %v2431, %v2317
        %v2434 = vrot.slane %v2432, 6
        %v2435 = vrot.slane %v2434, 4
        %2436 = vrot.lane.b32.xlu0 %v2435, 127
        %v2437 = vpop.permute.xlu0 %2436
        %v2438 = vrot.slane %v2437, 4
        %v2439 = vsel %vm481, %v2437, %v2438
        %v2441 = vadd.f32 %v2357, %v2439
        %s2442 = sld [smem:[#allocation3 + $0x299]]
        %v2443 = vstv %s2442
        %v2444 = vmul.f32 %v2443, %v2317
        %v2446 = vrot.slane %v2444, 6
        %v2447 = vrot.slane %v2446, 4
        %2448 = vrot.lane.b32.xlu0 %v2447, 127
        %v2449 = vpop.permute.xlu0 %2448
        %v2450 = vrot.slane %v2449, 4
        %v2451 = vsel %vm481, %v2449, %v2450
        %v2453 = vadd.f32 %v2365, %v2451
        %s2454 = sld [smem:[#allocation3 + $0x319]]
        %v2455 = vstv %s2454
        %v2456 = vmul.f32 %v2455, %v2317
        %v2458 = vrot.slane %v2456, 6
        %v2459 = vrot.slane %v2458, 4
        %2460 = vrot.lane.b32.xlu0 %v2459, 127
        %v2461 = vpop.permute.xlu0 %2460
        %v2462 = vrot.slane %v2461, 4
        %v2463 = vsel %vm481, %v2461, %v2462
        %v2465 = vadd.f32 %v2373, %v2463
        %s2466 = sld [smem:[#allocation3 + $0x399]]
        %v2467 = vstv %s2466
        %v2468 = vmul.f32 %v2467, %v2317
        %v2470 = vrot.slane %v2468, 6
        %v2471 = vrot.slane %v2470, 4
        %2472 = vrot.lane.b32.xlu0 %v2471, 127
        %v2473 = vpop.permute.xlu0 %2472
        %v2474 = vrot.slane %v2473, 4
        %v2475 = vsel %vm481, %v2473, %v2474
        %v2477 = vadd.f32 %v2381, %v2475
        %s2478 = sld [smem:[#allocation3 + $0x1a]]
        %v2479 = vstv %s2478
        %v2480 = vmul.f32 %v2479, %v2317
        %v2482 = vrot.slane %v2480, 6
        %v2483 = vrot.slane %v2482, 4
        %2484 = vrot.lane.b32.xlu0 %v2483, 126
        %v2485 = vpop.permute.xlu0 %2484
        %v2486 = vrot.slane %v2485, 4
        %v2487 = vsel %vm562, %v2485, %v2486
        %v2489 = vadd.f32 %v2393, %v2487
        %s2490 = sld [smem:[#allocation3 + $0x9a]]
        %v2491 = vstv %s2490
        %v2492 = vmul.f32 %v2491, %v2317
        %v2494 = vrot.slane %v2492, 6
        %v2495 = vrot.slane %v2494, 4
        %2496 = vrot.lane.b32.xlu0 %v2495, 126
        %v2497 = vpop.permute.xlu0 %2496
        %v2498 = vrot.slane %v2497, 4
        %v2499 = vsel %vm562, %v2497, %v2498
        %v2501 = vadd.f32 %v2405, %v2499
        %s2502 = sld [smem:[#allocation3 + $0x11a]]
        %v2503 = vstv %s2502
        %v2504 = vmul.f32 %v2503, %v2317
        %v2506 = vrot.slane %v2504, 6
        %v2507 = vrot.slane %v2506, 4
        %2508 = vrot.lane.b32.xlu0 %v2507, 126
        %v2509 = vpop.permute.xlu0 %2508
        %v2510 = vrot.slane %v2509, 4
        %v2511 = vsel %vm562, %v2509, %v2510
        %v2513 = vadd.f32 %v2417, %v2511
        %s2514 = sld [smem:[#allocation3 + $0x19a]]
        %v2515 = vstv %s2514
        %v2516 = vmul.f32 %v2515, %v2317
        %v2518 = vrot.slane %v2516, 6
        %v2519 = vrot.slane %v2518, 4
        %2520 = vrot.lane.b32.xlu0 %v2519, 126
        %v2521 = vpop.permute.xlu0 %2520
        %v2522 = vrot.slane %v2521, 4
        %v2523 = vsel %vm562, %v2521, %v2522
        %v2525 = vadd.f32 %v2429, %v2523
        %s2526 = sld [smem:[#allocation3 + $0x21a]]
        %v2527 = vstv %s2526
        %v2528 = vmul.f32 %v2527, %v2317
        %v2530 = vrot.slane %v2528, 6
        %v2531 = vrot.slane %v2530, 4
        %2532 = vrot.lane.b32.xlu0 %v2531, 126
        %v2533 = vpop.permute.xlu0 %2532
        %v2534 = vrot.slane %v2533, 4
        %v2535 = vsel %vm562, %v2533, %v2534
        %v2537 = vadd.f32 %v2441, %v2535
        %s2538 = sld [smem:[#allocation3 + $0x29a]]
        %v2539 = vstv %s2538
        %v2540 = vmul.f32 %v2539, %v2317
        %v2542 = vrot.slane %v2540, 6
        %v2543 = vrot.slane %v2542, 4
        %2544 = vrot.lane.b32.xlu0 %v2543, 126
        %v2545 = vpop.permute.xlu0 %2544
        %v2546 = vrot.slane %v2545, 4
        %v2547 = vsel %vm562, %v2545, %v2546
        %v2549 = vadd.f32 %v2453, %v2547
        %s2550 = sld [smem:[#allocation3 + $0x31a]]
        %v2551 = vstv %s2550
        %v2552 = vmul.f32 %v2551, %v2317
        %v2554 = vrot.slane %v2552, 6
        %v2555 = vrot.slane %v2554, 4
        %2556 = vrot.lane.b32.xlu0 %v2555, 126
        %v2557 = vpop.permute.xlu0 %2556
        %v2558 = vrot.slane %v2557, 4
        %v2559 = vsel %vm562, %v2557, %v2558
        %v2561 = vadd.f32 %v2465, %v2559
        %s2562 = sld [smem:[#allocation3 + $0x39a]]
        %v2563 = vstv %s2562
        %v2564 = vmul.f32 %v2563, %v2317
        %v2566 = vrot.slane %v2564, 6
        %v2567 = vrot.slane %v2566, 4
        %2568 = vrot.lane.b32.xlu0 %v2567, 126
        %v2569 = vpop.permute.xlu0 %2568
        %v2570 = vrot.slane %v2569, 4
        %v2571 = vsel %vm562, %v2569, %v2570
        %v2573 = vadd.f32 %v2477, %v2571
        %s2574 = scalar_lea.vmem %s371, 12
        %v2575 = vld [vmem:[%s2574] sm:$0x5]
        %v2576 = vunpack.c.l.bf16 %v2575
        %s2577 = sld [smem:[#allocation3 + $0x1b]]
        %v2578 = vstv %s2577
        %v2579 = vmul.f32 %v2578, %v2576
        %v2580 = vadd.f32 %v2489, %v2579
        %s2581 = sld [smem:[#allocation3 + $0x9b]]
        %v2582 = vstv %s2581
        %v2583 = vmul.f32 %v2582, %v2576
        %v2584 = vadd.f32 %v2501, %v2583
        %s2585 = sld [smem:[#allocation3 + $0x11b]]
        %v2586 = vstv %s2585
        %v2587 = vmul.f32 %v2586, %v2576
        %v2588 = vadd.f32 %v2513, %v2587
        %s2589 = sld [smem:[#allocation3 + $0x19b]]
        %v2590 = vstv %s2589
        %v2591 = vmul.f32 %v2590, %v2576
        %v2592 = vadd.f32 %v2525, %v2591
        %s2593 = sld [smem:[#allocation3 + $0x21b]]
        %v2594 = vstv %s2593
        %v2595 = vmul.f32 %v2594, %v2576
        %v2596 = vadd.f32 %v2537, %v2595
        %s2597 = sld [smem:[#allocation3 + $0x29b]]
        %v2598 = vstv %s2597
        %v2599 = vmul.f32 %v2598, %v2576
        %v2600 = vadd.f32 %v2549, %v2599
        %s2601 = sld [smem:[#allocation3 + $0x31b]]
        %v2602 = vstv %s2601
        %v2603 = vmul.f32 %v2602, %v2576
        %v2604 = vadd.f32 %v2561, %v2603
        %s2605 = sld [smem:[#allocation3 + $0x39b]]
        %v2606 = vstv %s2605
        %v2607 = vmul.f32 %v2606, %v2576
        %v2608 = vadd.f32 %v2573, %v2607
        %s2609 = sld [smem:[#allocation3 + $0x1c]]
        %v2610 = vstv %s2609
        %v2611 = vmul.f32 %v2610, %v2576
        %2613 = vrot.lane.b32.xlu0 %v2611, 127
        %v2614 = vpop.permute.xlu0 %2613
        %v2615 = vrot.slane %v2614, 4
        %v2616 = vsel %vm481, %v2614, %v2615
        %v2618 = vadd.f32 %v2580, %v2616
        %s2619 = sld [smem:[#allocation3 + $0x9c]]
        %v2620 = vstv %s2619
        %v2621 = vmul.f32 %v2620, %v2576
        %2623 = vrot.lane.b32.xlu0 %v2621, 127
        %v2624 = vpop.permute.xlu0 %2623
        %v2625 = vrot.slane %v2624, 4
        %v2626 = vsel %vm481, %v2624, %v2625
        %v2628 = vadd.f32 %v2584, %v2626
        %s2629 = sld [smem:[#allocation3 + $0x11c]]
        %v2630 = vstv %s2629
        %v2631 = vmul.f32 %v2630, %v2576
        %2633 = vrot.lane.b32.xlu0 %v2631, 127
        %v2634 = vpop.permute.xlu0 %2633
        %v2635 = vrot.slane %v2634, 4
        %v2636 = vsel %vm481, %v2634, %v2635
        %v2638 = vadd.f32 %v2588, %v2636
        %s2639 = sld [smem:[#allocation3 + $0x19c]]
        %v2640 = vstv %s2639
        %v2641 = vmul.f32 %v2640, %v2576
        %2643 = vrot.lane.b32.xlu0 %v2641, 127
        %v2644 = vpop.permute.xlu0 %2643
        %v2645 = vrot.slane %v2644, 4
        %v2646 = vsel %vm481, %v2644, %v2645
        %v2648 = vadd.f32 %v2592, %v2646
        %s2649 = sld [smem:[#allocation3 + $0x21c]]
        %v2650 = vstv %s2649
        %v2651 = vmul.f32 %v2650, %v2576
        %2653 = vrot.lane.b32.xlu0 %v2651, 127
        %v2654 = vpop.permute.xlu0 %2653
        %v2655 = vrot.slane %v2654, 4
        %v2656 = vsel %vm481, %v2654, %v2655
        %v2658 = vadd.f32 %v2596, %v2656
        %s2659 = sld [smem:[#allocation3 + $0x29c]]
        %v2660 = vstv %s2659
        %v2661 = vmul.f32 %v2660, %v2576
        %2663 = vrot.lane.b32.xlu0 %v2661, 127
        %v2664 = vpop.permute.xlu0 %2663
        %v2665 = vrot.slane %v2664, 4
        %v2666 = vsel %vm481, %v2664, %v2665
        %v2668 = vadd.f32 %v2600, %v2666
        %s2669 = sld [smem:[#allocation3 + $0x31c]]
        %v2670 = vstv %s2669
        %v2671 = vmul.f32 %v2670, %v2576
        %2673 = vrot.lane.b32.xlu0 %v2671, 127
        %v2674 = vpop.permute.xlu0 %2673
        %v2675 = vrot.slane %v2674, 4
        %v2676 = vsel %vm481, %v2674, %v2675
        %v2678 = vadd.f32 %v2604, %v2676
        %s2679 = sld [smem:[#allocation3 + $0x39c]]
        %v2680 = vstv %s2679
        %v2681 = vmul.f32 %v2680, %v2576
        %2683 = vrot.lane.b32.xlu0 %v2681, 127
        %v2684 = vpop.permute.xlu0 %2683
        %v2685 = vrot.slane %v2684, 4
        %v2686 = vsel %vm481, %v2684, %v2685
        %v2688 = vadd.f32 %v2608, %v2686
        %s2689 = sld [smem:[#allocation3 + $0x1d]]
        %v2690 = vstv %s2689
        %v2691 = vmul.f32 %v2690, %v2576
        %2693 = vrot.lane.b32.xlu0 %v2691, 126
        %v2694 = vpop.permute.xlu0 %2693
        %v2695 = vrot.slane %v2694, 4
        %v2696 = vsel %vm562, %v2694, %v2695
        %v2698 = vadd.f32 %v2618, %v2696
        %s2699 = sld [smem:[#allocation3 + $0x9d]]
        %v2700 = vstv %s2699
        %v2701 = vmul.f32 %v2700, %v2576
        %2703 = vrot.lane.b32.xlu0 %v2701, 126
        %v2704 = vpop.permute.xlu0 %2703
        %v2705 = vrot.slane %v2704, 4
        %v2706 = vsel %vm562, %v2704, %v2705
        %v2708 = vadd.f32 %v2628, %v2706
        %s2709 = sld [smem:[#allocation3 + $0x11d]]
        %v2710 = vstv %s2709
        %v2711 = vmul.f32 %v2710, %v2576
        %2713 = vrot.lane.b32.xlu0 %v2711, 126
        %v2714 = vpop.permute.xlu0 %2713
        %v2715 = vrot.slane %v2714, 4
        %v2716 = vsel %vm562, %v2714, %v2715
        %v2718 = vadd.f32 %v2638, %v2716
        %s2719 = sld [smem:[#allocation3 + $0x19d]]
        %v2720 = vstv %s2719
        %v2721 = vmul.f32 %v2720, %v2576
        %2723 = vrot.lane.b32.xlu0 %v2721, 126
        %v2724 = vpop.permute.xlu0 %2723
        %v2725 = vrot.slane %v2724, 4
        %v2726 = vsel %vm562, %v2724, %v2725
        %v2728 = vadd.f32 %v2648, %v2726
        %s2729 = sld [smem:[#allocation3 + $0x21d]]
        %v2730 = vstv %s2729
        %v2731 = vmul.f32 %v2730, %v2576
        %2733 = vrot.lane.b32.xlu0 %v2731, 126
        %v2734 = vpop.permute.xlu0 %2733
        %v2735 = vrot.slane %v2734, 4
        %v2736 = vsel %vm562, %v2734, %v2735
        %v2738 = vadd.f32 %v2658, %v2736
        %s2739 = sld [smem:[#allocation3 + $0x29d]]
        %v2740 = vstv %s2739
        %v2741 = vmul.f32 %v2740, %v2576
        %2743 = vrot.lane.b32.xlu0 %v2741, 126
        %v2744 = vpop.permute.xlu0 %2743
        %v2745 = vrot.slane %v2744, 4
        %v2746 = vsel %vm562, %v2744, %v2745
        %v2748 = vadd.f32 %v2668, %v2746
        %s2749 = sld [smem:[#allocation3 + $0x31d]]
        %v2750 = vstv %s2749
        %v2751 = vmul.f32 %v2750, %v2576
        %2753 = vrot.lane.b32.xlu0 %v2751, 126
        %v2754 = vpop.permute.xlu0 %2753
        %v2755 = vrot.slane %v2754, 4
        %v2756 = vsel %vm562, %v2754, %v2755
        %v2758 = vadd.f32 %v2678, %v2756
        %s2759 = sld [smem:[#allocation3 + $0x39d]]
        %v2760 = vstv %s2759
        %v2761 = vmul.f32 %v2760, %v2576
        %2763 = vrot.lane.b32.xlu0 %v2761, 126
        %v2764 = vpop.permute.xlu0 %2763
        %v2765 = vrot.slane %v2764, 4
        %v2766 = vsel %vm562, %v2764, %v2765
        %v2768 = vadd.f32 %v2688, %v2766
        %v2769 = vld [vmem:[%s2574] sm:$0xf]
        %v2770 = vunpack.c.l.bf16 %v2769
        %s2771 = sld [smem:[#allocation3 + $0x1e]]
        %v2772 = vstv %s2771
        %v2773 = vmul.f32 %v2772, %v2770
        %v2775 = vrot.slane %v2773, 5
        %v2776 = vrot.slane %v2775, 4
        %v2778 = vadd.f32 %v2698, %v2776
        %s2779 = sld [smem:[#allocation3 + $0x9e]]
        %v2780 = vstv %s2779
        %v2781 = vmul.f32 %v2780, %v2770
        %v2783 = vrot.slane %v2781, 5
        %v2784 = vrot.slane %v2783, 4
        %v2786 = vadd.f32 %v2708, %v2784
        %s2787 = sld [smem:[#allocation3 + $0x11e]]
        %v2788 = vstv %s2787
        %v2789 = vmul.f32 %v2788, %v2770
        %v2791 = vrot.slane %v2789, 5
        %v2792 = vrot.slane %v2791, 4
        %v2794 = vadd.f32 %v2718, %v2792
        %s2795 = sld [smem:[#allocation3 + $0x19e]]
        %v2796 = vstv %s2795
        %v2797 = vmul.f32 %v2796, %v2770
        %v2799 = vrot.slane %v2797, 5
        %v2800 = vrot.slane %v2799, 4
        %v2802 = vadd.f32 %v2728, %v2800
        %s2803 = sld [smem:[#allocation3 + $0x21e]]
        %v2804 = vstv %s2803
        %v2805 = vmul.f32 %v2804, %v2770
        %v2807 = vrot.slane %v2805, 5
        %v2808 = vrot.slane %v2807, 4
        %v2810 = vadd.f32 %v2738, %v2808
        %s2811 = sld [smem:[#allocation3 + $0x29e]]
        %v2812 = vstv %s2811
        %v2813 = vmul.f32 %v2812, %v2770
        %v2815 = vrot.slane %v2813, 5
        %v2816 = vrot.slane %v2815, 4
        %v2818 = vadd.f32 %v2748, %v2816
        %s2819 = sld [smem:[#allocation3 + $0x31e]]
        %v2820 = vstv %s2819
        %v2821 = vmul.f32 %v2820, %v2770
        %v2823 = vrot.slane %v2821, 5
        %v2824 = vrot.slane %v2823, 4
        %v2826 = vadd.f32 %v2758, %v2824
        %s2827 = sld [smem:[#allocation3 + $0x39e]]
        %v2828 = vstv %s2827
        %v2829 = vmul.f32 %v2828, %v2770
        %v2831 = vrot.slane %v2829, 5
        %v2832 = vrot.slane %v2831, 4
        %v2834 = vadd.f32 %v2768, %v2832
        %s2835 = sld [smem:[#allocation3 + $0x1f]]
        %v2836 = vstv %s2835
        %v2837 = vmul.f32 %v2836, %v2770
        %v2839 = vrot.slane %v2837, 5
        %v2840 = vrot.slane %v2839, 4
        %2841 = vrot.lane.b32.xlu0 %v2840, 127
        %v2842 = vpop.permute.xlu0 %2841
        %v2843 = vrot.slane %v2842, 4
        %v2844 = vsel %vm481, %v2842, %v2843
        %v2846 = vadd.f32 %v2778, %v2844
        %s2847 = sld [smem:[#allocation3 + $0x9f]]
        %v2848 = vstv %s2847
        %v2849 = vmul.f32 %v2848, %v2770
        %v2851 = vrot.slane %v2849, 5
        %v2852 = vrot.slane %v2851, 4
        %2853 = vrot.lane.b32.xlu0 %v2852, 127
        %v2854 = vpop.permute.xlu0 %2853
        %v2855 = vrot.slane %v2854, 4
        %v2856 = vsel %vm481, %v2854, %v2855
        %v2858 = vadd.f32 %v2786, %v2856
        %s2859 = sld [smem:[#allocation3 + $0x11f]]
        %v2860 = vstv %s2859
        %v2861 = vmul.f32 %v2860, %v2770
        %v2863 = vrot.slane %v2861, 5
        %v2864 = vrot.slane %v2863, 4
        %2865 = vrot.lane.b32.xlu0 %v2864, 127
        %v2866 = vpop.permute.xlu0 %2865
        %v2867 = vrot.slane %v2866, 4
        %v2868 = vsel %vm481, %v2866, %v2867
        %v2870 = vadd.f32 %v2794, %v2868
        %s2871 = sld [smem:[#allocation3 + $0x19f]]
        %v2872 = vstv %s2871
        %v2873 = vmul.f32 %v2872, %v2770
        %v2875 = vrot.slane %v2873, 5
        %v2876 = vrot.slane %v2875, 4
        %2877 = vrot.lane.b32.xlu0 %v2876, 127
        %v2878 = vpop.permute.xlu0 %2877
        %v2879 = vrot.slane %v2878, 4
        %v2880 = vsel %vm481, %v2878, %v2879
        %v2882 = vadd.f32 %v2802, %v2880
        %s2883 = sld [smem:[#allocation3 + $0x21f]]
        %v2884 = vstv %s2883
        %v2885 = vmul.f32 %v2884, %v2770
        %v2887 = vrot.slane %v2885, 5
        %v2888 = vrot.slane %v2887, 4
        %2889 = vrot.lane.b32.xlu0 %v2888, 127
        %v2890 = vpop.permute.xlu0 %2889
        %v2891 = vrot.slane %v2890, 4
        %v2892 = vsel %vm481, %v2890, %v2891
        %v2894 = vadd.f32 %v2810, %v2892
        %s2895 = sld [smem:[#allocation3 + $0x29f]]
        %v2896 = vstv %s2895
        %v2897 = vmul.f32 %v2896, %v2770
        %v2899 = vrot.slane %v2897, 5
        %v2900 = vrot.slane %v2899, 4
        %2901 = vrot.lane.b32.xlu0 %v2900, 127
        %v2902 = vpop.permute.xlu0 %2901
        %v2903 = vrot.slane %v2902, 4
        %v2904 = vsel %vm481, %v2902, %v2903
        %v2906 = vadd.f32 %v2818, %v2904
        %s2907 = sld [smem:[#allocation3 + $0x31f]]
        %v2908 = vstv %s2907
        %v2909 = vmul.f32 %v2908, %v2770
        %v2911 = vrot.slane %v2909, 5
        %v2912 = vrot.slane %v2911, 4
        %2913 = vrot.lane.b32.xlu0 %v2912, 127
        %v2914 = vpop.permute.xlu0 %2913
        %v2915 = vrot.slane %v2914, 4
        %v2916 = vsel %vm481, %v2914, %v2915
        %v2918 = vadd.f32 %v2826, %v2916
        %s2919 = sld [smem:[#allocation3 + $0x39f]]
        %v2920 = vstv %s2919
        %v2921 = vmul.f32 %v2920, %v2770
        %v2923 = vrot.slane %v2921, 5
        %v2924 = vrot.slane %v2923, 4
        %2925 = vrot.lane.b32.xlu0 %v2924, 127
        %v2926 = vpop.permute.xlu0 %2925
        %v2927 = vrot.slane %v2926, 4
        %v2928 = vsel %vm481, %v2926, %v2927
        %v2930 = vadd.f32 %v2834, %v2928
        %s2931 = sld [smem:[#allocation3 + $0x20]]
        %v2932 = vstv %s2931
        %v2933 = vmul.f32 %v2932, %v2770
        %v2935 = vrot.slane %v2933, 5
        %v2936 = vrot.slane %v2935, 4
        %2937 = vrot.lane.b32.xlu0 %v2936, 126
        %v2938 = vpop.permute.xlu0 %2937
        %v2939 = vrot.slane %v2938, 4
        %v2940 = vsel %vm562, %v2938, %v2939
        %v2942 = vadd.f32 %v2846, %v2940
        %s2943 = sld [smem:[#allocation3 + $0xa0]]
        %v2944 = vstv %s2943
        %v2945 = vmul.f32 %v2944, %v2770
        %v2947 = vrot.slane %v2945, 5
        %v2948 = vrot.slane %v2947, 4
        %2949 = vrot.lane.b32.xlu0 %v2948, 126
        %v2950 = vpop.permute.xlu0 %2949
        %v2951 = vrot.slane %v2950, 4
        %v2952 = vsel %vm562, %v2950, %v2951
        %v2954 = vadd.f32 %v2858, %v2952
        %s2955 = sld [smem:[#allocation3 + $0x120]]
        %v2956 = vstv %s2955
        %v2957 = vmul.f32 %v2956, %v2770
        %v2959 = vrot.slane %v2957, 5
        %v2960 = vrot.slane %v2959, 4
        %2961 = vrot.lane.b32.xlu0 %v2960, 126
        %v2962 = vpop.permute.xlu0 %2961
        %v2963 = vrot.slane %v2962, 4
        %v2964 = vsel %vm562, %v2962, %v2963
        %v2966 = vadd.f32 %v2870, %v2964
        %s2967 = sld [smem:[#allocation3 + $0x1a0]]
        %v2968 = vstv %s2967
        %v2969 = vmul.f32 %v2968, %v2770
        %v2971 = vrot.slane %v2969, 5
        %v2972 = vrot.slane %v2971, 4
        %2973 = vrot.lane.b32.xlu0 %v2972, 126
        %v2974 = vpop.permute.xlu0 %2973
        %v2975 = vrot.slane %v2974, 4
        %v2976 = vsel %vm562, %v2974, %v2975
        %v2978 = vadd.f32 %v2882, %v2976
        %s2979 = sld [smem:[#allocation3 + $0x220]]
        %v2980 = vstv %s2979
        %v2981 = vmul.f32 %v2980, %v2770
        %v2983 = vrot.slane %v2981, 5
        %v2984 = vrot.slane %v2983, 4
        %2985 = vrot.lane.b32.xlu0 %v2984, 126
        %v2986 = vpop.permute.xlu0 %2985
        %v2987 = vrot.slane %v2986, 4
        %v2988 = vsel %vm562, %v2986, %v2987
        %v2990 = vadd.f32 %v2894, %v2988
        %s2991 = sld [smem:[#allocation3 + $0x2a0]]
        %v2992 = vstv %s2991
        %v2993 = vmul.f32 %v2992, %v2770
        %v2995 = vrot.slane %v2993, 5
        %v2996 = vrot.slane %v2995, 4
        %2997 = vrot.lane.b32.xlu0 %v2996, 126
        %v2998 = vpop.permute.xlu0 %2997
        %v2999 = vrot.slane %v2998, 4
        %v3000 = vsel %vm562, %v2998, %v2999
        %v3002 = vadd.f32 %v2906, %v3000
        %s3003 = sld [smem:[#allocation3 + $0x320]]
        %v3004 = vstv %s3003
        %v3005 = vmul.f32 %v3004, %v2770
        %v3007 = vrot.slane %v3005, 5
        %v3008 = vrot.slane %v3007, 4
        %3009 = vrot.lane.b32.xlu0 %v3008, 126
        %v3010 = vpop.permute.xlu0 %3009
        %v3011 = vrot.slane %v3010, 4
        %v3012 = vsel %vm562, %v3010, %v3011
        %v3014 = vadd.f32 %v2918, %v3012
        %s3015 = sld [smem:[#allocation3 + $0x3a0]]
        %v3016 = vstv %s3015
        %v3017 = vmul.f32 %v3016, %v2770
        %v3019 = vrot.slane %v3017, 5
        %v3020 = vrot.slane %v3019, 4
        %3021 = vrot.lane.b32.xlu0 %v3020, 126
        %v3022 = vpop.permute.xlu0 %3021
        %v3023 = vrot.slane %v3022, 4
        %v3024 = vsel %vm562, %v3022, %v3023
        %v3026 = vadd.f32 %v2930, %v3024
        %v3027 = vld [vmem:[%s2574] sm:$0xa]
        %v3028 = vunpack.c.l.bf16 %v3027
        %s3029 = sld [smem:[#allocation3 + $0x21]]
        %v3030 = vstv %s3029
        %v3031 = vmul.f32 %v3030, %v3028
        %v3033 = vrot.slane %v3031, 6
        %v3034 = vrot.slane %v3033, 4
        %v3036 = vadd.f32 %v2942, %v3034
        %s3037 = sld [smem:[#allocation3 + $0xa1]]
        %v3038 = vstv %s3037
        %v3039 = vmul.f32 %v3038, %v3028
        %v3041 = vrot.slane %v3039, 6
        %v3042 = vrot.slane %v3041, 4
        %v3044 = vadd.f32 %v2954, %v3042
        %s3045 = sld [smem:[#allocation3 + $0x121]]
        %v3046 = vstv %s3045
        %v3047 = vmul.f32 %v3046, %v3028
        %v3049 = vrot.slane %v3047, 6
        %v3050 = vrot.slane %v3049, 4
        %v3052 = vadd.f32 %v2966, %v3050
        %s3053 = sld [smem:[#allocation3 + $0x1a1]]
        %v3054 = vstv %s3053
        %v3055 = vmul.f32 %v3054, %v3028
        %v3057 = vrot.slane %v3055, 6
        %v3058 = vrot.slane %v3057, 4
        %v3060 = vadd.f32 %v2978, %v3058
        %s3061 = sld [smem:[#allocation3 + $0x221]]
        %v3062 = vstv %s3061
        %v3063 = vmul.f32 %v3062, %v3028
        %v3065 = vrot.slane %v3063, 6
        %v3066 = vrot.slane %v3065, 4
        %v3068 = vadd.f32 %v2990, %v3066
        %s3069 = sld [smem:[#allocation3 + $0x2a1]]
        %v3070 = vstv %s3069
        %v3071 = vmul.f32 %v3070, %v3028
        %v3073 = vrot.slane %v3071, 6
        %v3074 = vrot.slane %v3073, 4
        %v3076 = vadd.f32 %v3002, %v3074
        %s3077 = sld [smem:[#allocation3 + $0x321]]
        %v3078 = vstv %s3077
        %v3079 = vmul.f32 %v3078, %v3028
        %v3081 = vrot.slane %v3079, 6
        %v3082 = vrot.slane %v3081, 4
        %v3084 = vadd.f32 %v3014, %v3082
        %s3085 = sld [smem:[#allocation3 + $0x3a1]]
        %v3086 = vstv %s3085
        %v3087 = vmul.f32 %v3086, %v3028
        %v3089 = vrot.slane %v3087, 6
        %v3090 = vrot.slane %v3089, 4
        %v3092 = vadd.f32 %v3026, %v3090
        %s3093 = sld [smem:[#allocation3 + $0x22]]
        %v3094 = vstv %s3093
        %v3095 = vmul.f32 %v3094, %v3028
        %v3097 = vrot.slane %v3095, 6
        %v3098 = vrot.slane %v3097, 4
        %3099 = vrot.lane.b32.xlu0 %v3098, 127
        %v3100 = vpop.permute.xlu0 %3099
        %v3101 = vrot.slane %v3100, 4
        %v3102 = vsel %vm481, %v3100, %v3101
        %v3104 = vadd.f32 %v3036, %v3102
        %s3105 = sld [smem:[#allocation3 + $0xa2]]
        %v3106 = vstv %s3105
        %v3107 = vmul.f32 %v3106, %v3028
        %v3109 = vrot.slane %v3107, 6
        %v3110 = vrot.slane %v3109, 4
        %3111 = vrot.lane.b32.xlu0 %v3110, 127
        %v3112 = vpop.permute.xlu0 %3111
        %v3113 = vrot.slane %v3112, 4
        %v3114 = vsel %vm481, %v3112, %v3113
        %v3116 = vadd.f32 %v3044, %v3114
        %s3117 = sld [smem:[#allocation3 + $0x122]]
        %v3118 = vstv %s3117
        %v3119 = vmul.f32 %v3118, %v3028
        %v3121 = vrot.slane %v3119, 6
        %v3122 = vrot.slane %v3121, 4
        %3123 = vrot.lane.b32.xlu0 %v3122, 127
        %v3124 = vpop.permute.xlu0 %3123
        %v3125 = vrot.slane %v3124, 4
        %v3126 = vsel %vm481, %v3124, %v3125
        %v3128 = vadd.f32 %v3052, %v3126
        %s3129 = sld [smem:[#allocation3 + $0x1a2]]
        %v3130 = vstv %s3129
        %v3131 = vmul.f32 %v3130, %v3028
        %v3133 = vrot.slane %v3131, 6
        %v3134 = vrot.slane %v3133, 4
        %3135 = vrot.lane.b32.xlu0 %v3134, 127
        %v3136 = vpop.permute.xlu0 %3135
        %v3137 = vrot.slane %v3136, 4
        %v3138 = vsel %vm481, %v3136, %v3137
        %v3140 = vadd.f32 %v3060, %v3138
        %s3141 = sld [smem:[#allocation3 + $0x222]]
        %v3142 = vstv %s3141
        %v3143 = vmul.f32 %v3142, %v3028
        %v3145 = vrot.slane %v3143, 6
        %v3146 = vrot.slane %v3145, 4
        %3147 = vrot.lane.b32.xlu0 %v3146, 127
        %v3148 = vpop.permute.xlu0 %3147
        %v3149 = vrot.slane %v3148, 4
        %v3150 = vsel %vm481, %v3148, %v3149
        %v3152 = vadd.f32 %v3068, %v3150
        %s3153 = sld [smem:[#allocation3 + $0x2a2]]
        %v3154 = vstv %s3153
        %v3155 = vmul.f32 %v3154, %v3028
        %v3157 = vrot.slane %v3155, 6
        %v3158 = vrot.slane %v3157, 4
        %3159 = vrot.lane.b32.xlu0 %v3158, 127
        %v3160 = vpop.permute.xlu0 %3159
        %v3161 = vrot.slane %v3160, 4
        %v3162 = vsel %vm481, %v3160, %v3161
        %v3164 = vadd.f32 %v3076, %v3162
        %s3165 = sld [smem:[#allocation3 + $0x322]]
        %v3166 = vstv %s3165
        %v3167 = vmul.f32 %v3166, %v3028
        %v3169 = vrot.slane %v3167, 6
        %v3170 = vrot.slane %v3169, 4
        %3171 = vrot.lane.b32.xlu0 %v3170, 127
        %v3172 = vpop.permute.xlu0 %3171
        %v3173 = vrot.slane %v3172, 4
        %v3174 = vsel %vm481, %v3172, %v3173
        %v3176 = vadd.f32 %v3084, %v3174
        %s3177 = sld [smem:[#allocation3 + $0x3a2]]
        %v3178 = vstv %s3177
        %v3179 = vmul.f32 %v3178, %v3028
        %v3181 = vrot.slane %v3179, 6
        %v3182 = vrot.slane %v3181, 4
        %3183 = vrot.lane.b32.xlu0 %v3182, 127
        %v3184 = vpop.permute.xlu0 %3183
        %v3185 = vrot.slane %v3184, 4
        %v3186 = vsel %vm481, %v3184, %v3185
        %v3188 = vadd.f32 %v3092, %v3186
        %s3189 = sld [smem:[#allocation3 + $0x23]]
        %v3190 = vstv %s3189
        %v3191 = vmul.f32 %v3190, %v3028
        %v3193 = vrot.slane %v3191, 6
        %v3194 = vrot.slane %v3193, 4
        %3195 = vrot.lane.b32.xlu0 %v3194, 126
        %v3196 = vpop.permute.xlu0 %3195
        %v3197 = vrot.slane %v3196, 4
        %v3198 = vsel %vm562, %v3196, %v3197
        %v3200 = vadd.f32 %v3104, %v3198
        %s3201 = sld [smem:[#allocation3 + $0xa3]]
        %v3202 = vstv %s3201
        %v3203 = vmul.f32 %v3202, %v3028
        %v3205 = vrot.slane %v3203, 6
        %v3206 = vrot.slane %v3205, 4
        %3207 = vrot.lane.b32.xlu0 %v3206, 126
        %v3208 = vpop.permute.xlu0 %3207
        %v3209 = vrot.slane %v3208, 4
        %v3210 = vsel %vm562, %v3208, %v3209
        %v3212 = vadd.f32 %v3116, %v3210
        %s3213 = sld [smem:[#allocation3 + $0x123]]
        %v3214 = vstv %s3213
        %v3215 = vmul.f32 %v3214, %v3028
        %v3217 = vrot.slane %v3215, 6
        %v3218 = vrot.slane %v3217, 4
        %3219 = vrot.lane.b32.xlu0 %v3218, 126
        %v3220 = vpop.permute.xlu0 %3219
        %v3221 = vrot.slane %v3220, 4
        %v3222 = vsel %vm562, %v3220, %v3221
        %v3224 = vadd.f32 %v3128, %v3222
        %s3225 = sld [smem:[#allocation3 + $0x1a3]]
        %v3226 = vstv %s3225
        %v3227 = vmul.f32 %v3226, %v3028
        %v3229 = vrot.slane %v3227, 6
        %v3230 = vrot.slane %v3229, 4
        %3231 = vrot.lane.b32.xlu0 %v3230, 126
        %v3232 = vpop.permute.xlu0 %3231
        %v3233 = vrot.slane %v3232, 4
        %v3234 = vsel %vm562, %v3232, %v3233
        %v3236 = vadd.f32 %v3140, %v3234
        %s3237 = sld [smem:[#allocation3 + $0x223]]
        %v3238 = vstv %s3237
        %v3239 = vmul.f32 %v3238, %v3028
        %v3241 = vrot.slane %v3239, 6
        %v3242 = vrot.slane %v3241, 4
        %3243 = vrot.lane.b32.xlu0 %v3242, 126
        %v3244 = vpop.permute.xlu0 %3243
        %v3245 = vrot.slane %v3244, 4
        %v3246 = vsel %vm562, %v3244, %v3245
        %v3248 = vadd.f32 %v3152, %v3246
        %s3249 = sld [smem:[#allocation3 + $0x2a3]]
        %v3250 = vstv %s3249
        %v3251 = vmul.f32 %v3250, %v3028
        %v3253 = vrot.slane %v3251, 6
        %v3254 = vrot.slane %v3253, 4
        %3255 = vrot.lane.b32.xlu0 %v3254, 126
        %v3256 = vpop.permute.xlu0 %3255
        %v3257 = vrot.slane %v3256, 4
        %v3258 = vsel %vm562, %v3256, %v3257
        %v3260 = vadd.f32 %v3164, %v3258
        %s3261 = sld [smem:[#allocation3 + $0x323]]
        %v3262 = vstv %s3261
        %v3263 = vmul.f32 %v3262, %v3028
        %v3265 = vrot.slane %v3263, 6
        %v3266 = vrot.slane %v3265, 4
        %3267 = vrot.lane.b32.xlu0 %v3266, 126
        %v3268 = vpop.permute.xlu0 %3267
        %v3269 = vrot.slane %v3268, 4
        %v3270 = vsel %vm562, %v3268, %v3269
        %v3272 = vadd.f32 %v3176, %v3270
        %s3273 = sld [smem:[#allocation3 + $0x3a3]]
        %v3274 = vstv %s3273
        %v3275 = vmul.f32 %v3274, %v3028
        %v3277 = vrot.slane %v3275, 6
        %v3278 = vrot.slane %v3277, 4
        %3279 = vrot.lane.b32.xlu0 %v3278, 126
        %v3280 = vpop.permute.xlu0 %3279
        %v3281 = vrot.slane %v3280, 4
        %v3282 = vsel %vm562, %v3280, %v3281
        %v3284 = vadd.f32 %v3188, %v3282
        %v3285 = vmax.f32 %v3200, 0.0
        %v3286 = vmax.f32 %v3212, 0.0
        %v3287 = vmax.f32 %v3224, 0.0
        %v3288 = vmax.f32 %v3236, 0.0
        %v3289 = vmax.f32 %v3248, 0.0
        %v3290 = vmax.f32 %v3260, 0.0
        %v3291 = vmax.f32 %v3272, 0.0
        %v3292 = vmax.f32 %v3284, 0.0
        %s3293 = sld [smem:[#allocation8]]
        %v3295 = vcombine.high %v3285, %v3285
        %v3297 = vsel %vm422, %v3285, 0.0
        %v3298 = vsel %vm423, %v3295, 0.0
        %vm3299 = vcmask 1041408
        %v3300 = vsel %vm3299, %v3297, 0.0
        %vm3301 = vcmask 107520
        %v3302 = vsel %vm3301, %v3298, 0.0
        %v3303 = vadd.f32 %v3300, %v3302
        %3304 = vadd.xlane.f32.xlu0 %v3303
        %v3305 = vpop.xlane.xlu0 %3304
        %v3306 = vrot.slane %v3305, 4
        %v3307 = vadd.f32 %v3305, %v3306
        %v3308 = vrot.slane %v3307, 2
        %v3309 = vadd.f32 %v3307, %v3308
        %v3310 = vrot.slane %v3309, 1
        %v3311 = vadd.f32 %v3309, %v3310
        %s3312 = vtos %v3311
        %s3313 = smul.f32 %s3293, %s3312
        %s3314 = sadd.f32 %s3313, 0.0
        %s3315 = sld [smem:[#allocation8 + $0x1]]
        %v3317 = vcombine.high %v3286, %v3286
        %v3319 = vsel %vm422, %v3286, 0.0
        %v3320 = vsel %vm423, %v3317, 0.0
        %v3321 = vsel %vm3299, %v3319, 0.0
        %v3322 = vsel %vm3301, %v3320, 0.0
        %v3323 = vadd.f32 %v3321, %v3322
        %3324 = vadd.xlane.f32.xlu0 %v3323
        %v3325 = vpop.xlane.xlu0 %3324
        %v3326 = vrot.slane %v3325, 4
        %v3327 = vadd.f32 %v3325, %v3326
        %v3328 = vrot.slane %v3327, 2
        %v3329 = vadd.f32 %v3327, %v3328
        %v3330 = vrot.slane %v3329, 1
        %v3331 = vadd.f32 %v3329, %v3330
        %s3332 = vtos %v3331
        %s3333 = smul.f32 %s3315, %s3332
        %s3334 = sadd.f32 %s3314, %s3333
        %s3335 = sld [smem:[#allocation8 + $0x2]]
        %v3337 = vcombine.high %v3287, %v3287
        %v3339 = vsel %vm422, %v3287, 0.0
        %v3340 = vsel %vm423, %v3337, 0.0
        %v3341 = vsel %vm3299, %v3339, 0.0
        %v3342 = vsel %vm3301, %v3340, 0.0
        %v3343 = vadd.f32 %v3341, %v3342
        %3344 = vadd.xlane.f32.xlu0 %v3343
        %v3345 = vpop.xlane.xlu0 %3344
        %v3346 = vrot.slane %v3345, 4
        %v3347 = vadd.f32 %v3345, %v3346
        %v3348 = vrot.slane %v3347, 2
        %v3349 = vadd.f32 %v3347, %v3348
        %v3350 = vrot.slane %v3349, 1
        %v3351 = vadd.f32 %v3349, %v3350
        %s3352 = vtos %v3351
        %s3353 = smul.f32 %s3335, %s3352
        %s3354 = sadd.f32 %s3334, %s3353
        %s3355 = sld [smem:[#allocation8 + $0x3]]
        %v3357 = vcombine.high %v3288, %v3288
        %v3359 = vsel %vm422, %v3288, 0.0
        %v3360 = vsel %vm423, %v3357, 0.0
        %v3361 = vsel %vm3299, %v3359, 0.0
        %v3362 = vsel %vm3301, %v3360, 0.0
        %v3363 = vadd.f32 %v3361, %v3362
        %3364 = vadd.xlane.f32.xlu0 %v3363
        %v3365 = vpop.xlane.xlu0 %3364
        %v3366 = vrot.slane %v3365, 4
        %v3367 = vadd.f32 %v3365, %v3366
        %v3368 = vrot.slane %v3367, 2
        %v3369 = vadd.f32 %v3367, %v3368
        %v3370 = vrot.slane %v3369, 1
        %v3371 = vadd.f32 %v3369, %v3370
        %s3372 = vtos %v3371
        %s3373 = smul.f32 %s3355, %s3372
        %s3374 = sadd.f32 %s3354, %s3373
        %s3375 = sld [smem:[#allocation8 + $0x4]]
        %v3377 = vcombine.high %v3289, %v3289
        %v3379 = vsel %vm422, %v3289, 0.0
        %v3380 = vsel %vm423, %v3377, 0.0
        %v3381 = vsel %vm3299, %v3379, 0.0
        %v3382 = vsel %vm3301, %v3380, 0.0
        %v3383 = vadd.f32 %v3381, %v3382
        %3384 = vadd.xlane.f32.xlu0 %v3383
        %v3385 = vpop.xlane.xlu0 %3384
        %v3386 = vrot.slane %v3385, 4
        %v3387 = vadd.f32 %v3385, %v3386
        %v3388 = vrot.slane %v3387, 2
        %v3389 = vadd.f32 %v3387, %v3388
        %v3390 = vrot.slane %v3389, 1
        %v3391 = vadd.f32 %v3389, %v3390
        %s3392 = vtos %v3391
        %s3393 = smul.f32 %s3375, %s3392
        %s3394 = sadd.f32 %s3374, %s3393
        %s3395 = sld [smem:[#allocation8 + $0x5]]
        %v3397 = vcombine.high %v3290, %v3290
        %v3399 = vsel %vm422, %v3290, 0.0
        %v3400 = vsel %vm423, %v3397, 0.0
        %v3401 = vsel %vm3299, %v3399, 0.0
        %v3402 = vsel %vm3301, %v3400, 0.0
        %v3403 = vadd.f32 %v3401, %v3402
        %3404 = vadd.xlane.f32.xlu0 %v3403
        %v3405 = vpop.xlane.xlu0 %3404
        %v3406 = vrot.slane %v3405, 4
        %v3407 = vadd.f32 %v3405, %v3406
        %v3408 = vrot.slane %v3407, 2
        %v3409 = vadd.f32 %v3407, %v3408
        %v3410 = vrot.slane %v3409, 1
        %v3411 = vadd.f32 %v3409, %v3410
        %s3412 = vtos %v3411
        %s3413 = smul.f32 %s3395, %s3412
        %s3414 = sadd.f32 %s3394, %s3413
        %s3415 = sld [smem:[#allocation8 + $0x6]]
        %v3417 = vcombine.high %v3291, %v3291
        %v3419 = vsel %vm422, %v3291, 0.0
        %v3420 = vsel %vm423, %v3417, 0.0
        %v3421 = vsel %vm3299, %v3419, 0.0
        %v3422 = vsel %vm3301, %v3420, 0.0
        %v3423 = vadd.f32 %v3421, %v3422
        %3424 = vadd.xlane.f32.xlu0 %v3423
        %v3425 = vpop.xlane.xlu0 %3424
        %v3426 = vrot.slane %v3425, 4
        %v3427 = vadd.f32 %v3425, %v3426
        %v3428 = vrot.slane %v3427, 2
        %v3429 = vadd.f32 %v3427, %v3428
        %v3430 = vrot.slane %v3429, 1
        %v3431 = vadd.f32 %v3429, %v3430
        %s3432 = vtos %v3431
        %s3433 = smul.f32 %s3415, %s3432
        %s3434 = sadd.f32 %s3414, %s3433
        %s3435 = sld [smem:[#allocation8 + $0x7]]
        %v3437 = vcombine.high %v3292, %v3292
        %v3439 = vsel %vm422, %v3292, 0.0
        %v3440 = vsel %vm423, %v3437, 0.0
        %v3441 = vsel %vm3299, %v3439, 0.0
        %v3442 = vsel %vm3301, %v3440, 0.0
        %v3443 = vadd.f32 %v3441, %v3442
        %3444 = vadd.xlane.f32.xlu0 %v3443
        %v3445 = vpop.xlane.xlu0 %3444
        %v3446 = vrot.slane %v3445, 4
        %v3447 = vadd.f32 %v3445, %v3446
        %v3448 = vrot.slane %v3447, 2
        %v3449 = vadd.f32 %v3447, %v3448
        %v3450 = vrot.slane %v3449, 1
        %v3451 = vadd.f32 %v3449, %v3450
        %s3452 = vtos %v3451
        %s3453 = smul.f32 %s3435, %s3452
        %s3454 = sadd.f32 %s3434, %s3453
        %v3455 = vstv %s3454
        %vm3456 = vcmask 0
        %3457 = vst.msk [vmem:[%s377] sm:$0x1] %vm3456, %v3455
        %s3458 = sld [smem:[#allocation5 + $0x8]]
        %v3459 = vstv %s3458
        %s3460 = sld [smem:[#allocation5 + $0x9]]
        %v3461 = vstv %s3460
        %s3462 = sld [smem:[#allocation5 + $0xa]]
        %v3463 = vstv %s3462
        %s3464 = sld [smem:[#allocation5 + $0xb]]
        %v3465 = vstv %s3464
        %s3466 = sld [smem:[#allocation5 + $0xc]]
        %v3467 = vstv %s3466
        %s3468 = sld [smem:[#allocation5 + $0xd]]
        %v3469 = vstv %s3468
        %s3470 = sld [smem:[#allocation5 + $0xe]]
        %v3471 = vstv %s3470
        %s3472 = sld [smem:[#allocation5 + $0xf]]
        %v3473 = vstv %s3472
        %v3474 = vld [vmem:[%s371] sm:$0x5]
        %v3475 = vunpack.c.l.bf16 %v3474
        %s3476 = sld [smem:[#allocation3 + $0x400]]
        %v3477 = vstv %s3476
        %v3478 = vmul.f32 %v3477, %v3475
        %v3479 = vadd.f32 %v3459, %v3478
        %s3480 = sld [smem:[#allocation3 + $0x480]]
        %v3481 = vstv %s3480
        %v3482 = vmul.f32 %v3481, %v3475
        %v3483 = vadd.f32 %v3461, %v3482
        %s3484 = sld [smem:[#allocation3 + $0x500]]
        %v3485 = vstv %s3484
        %v3486 = vmul.f32 %v3485, %v3475
        %v3487 = vadd.f32 %v3463, %v3486
        %s3488 = sld [smem:[#allocation3 + $0x580]]
        %v3489 = vstv %s3488
        %v3490 = vmul.f32 %v3489, %v3475
        %v3491 = vadd.f32 %v3465, %v3490
        %s3492 = sld [smem:[#allocation3 + $0x600]]
        %v3493 = vstv %s3492
        %v3494 = vmul.f32 %v3493, %v3475
        %v3495 = vadd.f32 %v3467, %v3494
        %s3496 = sld [smem:[#allocation3 + $0x680]]
        %v3497 = vstv %s3496
        %v3498 = vmul.f32 %v3497, %v3475
        %v3499 = vadd.f32 %v3469, %v3498
        %s3500 = sld [smem:[#allocation3 + $0x700]]
        %v3501 = vstv %s3500
        %v3502 = vmul.f32 %v3501, %v3475
        %v3503 = vadd.f32 %v3471, %v3502
        %s3504 = sld [smem:[#allocation3 + $0x780]]
        %v3505 = vstv %s3504
        %v3506 = vmul.f32 %v3505, %v3475
        %v3507 = vadd.f32 %v3473, %v3506
        %s3508 = sld [smem:[#allocation3 + $0x401]]
        %v3509 = vstv %s3508
        %v3510 = vmul.f32 %v3509, %v3475
        %3512 = vrot.lane.b32.xlu0 %v3510, 127
        %v3513 = vpop.permute.xlu0 %3512
        %v3514 = vrot.slane %v3513, 4
        %v3515 = vsel %vm481, %v3513, %v3514
        %v3517 = vadd.f32 %v3479, %v3515
        %s3518 = sld [smem:[#allocation3 + $0x481]]
        %v3519 = vstv %s3518
        %v3520 = vmul.f32 %v3519, %v3475
        %3522 = vrot.lane.b32.xlu0 %v3520, 127
        %v3523 = vpop.permute.xlu0 %3522
        %v3524 = vrot.slane %v3523, 4
        %v3525 = vsel %vm481, %v3523, %v3524
        %v3527 = vadd.f32 %v3483, %v3525
        %s3528 = sld [smem:[#allocation3 + $0x501]]
        %v3529 = vstv %s3528
        %v3530 = vmul.f32 %v3529, %v3475
        %3532 = vrot.lane.b32.xlu0 %v3530, 127
        %v3533 = vpop.permute.xlu0 %3532
        %v3534 = vrot.slane %v3533, 4
        %v3535 = vsel %vm481, %v3533, %v3534
        %v3537 = vadd.f32 %v3487, %v3535
        %s3538 = sld [smem:[#allocation3 + $0x581]]
        %v3539 = vstv %s3538
        %v3540 = vmul.f32 %v3539, %v3475
        %3542 = vrot.lane.b32.xlu0 %v3540, 127
        %v3543 = vpop.permute.xlu0 %3542
        %v3544 = vrot.slane %v3543, 4
        %v3545 = vsel %vm481, %v3543, %v3544
        %v3547 = vadd.f32 %v3491, %v3545
        %s3548 = sld [smem:[#allocation3 + $0x601]]
        %v3549 = vstv %s3548
        %v3550 = vmul.f32 %v3549, %v3475
        %3552 = vrot.lane.b32.xlu0 %v3550, 127
        %v3553 = vpop.permute.xlu0 %3552
        %v3554 = vrot.slane %v3553, 4
        %v3555 = vsel %vm481, %v3553, %v3554
        %v3557 = vadd.f32 %v3495, %v3555
        %s3558 = sld [smem:[#allocation3 + $0x681]]
        %v3559 = vstv %s3558
        %v3560 = vmul.f32 %v3559, %v3475
        %3562 = vrot.lane.b32.xlu0 %v3560, 127
        %v3563 = vpop.permute.xlu0 %3562
        %v3564 = vrot.slane %v3563, 4
        %v3565 = vsel %vm481, %v3563, %v3564
        %v3567 = vadd.f32 %v3499, %v3565
        %s3568 = sld [smem:[#allocation3 + $0x701]]
        %v3569 = vstv %s3568
        %v3570 = vmul.f32 %v3569, %v3475
        %3572 = vrot.lane.b32.xlu0 %v3570, 127
        %v3573 = vpop.permute.xlu0 %3572
        %v3574 = vrot.slane %v3573, 4
        %v3575 = vsel %vm481, %v3573, %v3574
        %v3577 = vadd.f32 %v3503, %v3575
        %s3578 = sld [smem:[#allocation3 + $0x781]]
        %v3579 = vstv %s3578
        %v3580 = vmul.f32 %v3579, %v3475
        %3582 = vrot.lane.b32.xlu0 %v3580, 127
        %v3583 = vpop.permute.xlu0 %3582
        %v3584 = vrot.slane %v3583, 4
        %v3585 = vsel %vm481, %v3583, %v3584
        %v3587 = vadd.f32 %v3507, %v3585
        %s3588 = sld [smem:[#allocation3 + $0x402]]
        %v3589 = vstv %s3588
        %v3590 = vmul.f32 %v3589, %v3475
        %3592 = vrot.lane.b32.xlu0 %v3590, 126
        %v3593 = vpop.permute.xlu0 %3592
        %v3594 = vrot.slane %v3593, 4
        %v3595 = vsel %vm562, %v3593, %v3594
        %v3597 = vadd.f32 %v3517, %v3595
        %s3598 = sld [smem:[#allocation3 + $0x482]]
        %v3599 = vstv %s3598
        %v3600 = vmul.f32 %v3599, %v3475
        %3602 = vrot.lane.b32.xlu0 %v3600, 126
        %v3603 = vpop.permute.xlu0 %3602
        %v3604 = vrot.slane %v3603, 4
        %v3605 = vsel %vm562, %v3603, %v3604
        %v3607 = vadd.f32 %v3527, %v3605
        %s3608 = sld [smem:[#allocation3 + $0x502]]
        %v3609 = vstv %s3608
        %v3610 = vmul.f32 %v3609, %v3475
        %3612 = vrot.lane.b32.xlu0 %v3610, 126
        %v3613 = vpop.permute.xlu0 %3612
        %v3614 = vrot.slane %v3613, 4
        %v3615 = vsel %vm562, %v3613, %v3614
        %v3617 = vadd.f32 %v3537, %v3615
        %s3618 = sld [smem:[#allocation3 + $0x582]]
        %v3619 = vstv %s3618
        %v3620 = vmul.f32 %v3619, %v3475
        %3622 = vrot.lane.b32.xlu0 %v3620, 126
        %v3623 = vpop.permute.xlu0 %3622
        %v3624 = vrot.slane %v3623, 4
        %v3625 = vsel %vm562, %v3623, %v3624
        %v3627 = vadd.f32 %v3547, %v3625
        %s3628 = sld [smem:[#allocation3 + $0x602]]
        %v3629 = vstv %s3628
        %v3630 = vmul.f32 %v3629, %v3475
        %3632 = vrot.lane.b32.xlu0 %v3630, 126
        %v3633 = vpop.permute.xlu0 %3632
        %v3634 = vrot.slane %v3633, 4
        %v3635 = vsel %vm562, %v3633, %v3634
        %v3637 = vadd.f32 %v3557, %v3635
        %s3638 = sld [smem:[#allocation3 + $0x682]]
        %v3639 = vstv %s3638
        %v3640 = vmul.f32 %v3639, %v3475
        %3642 = vrot.lane.b32.xlu0 %v3640, 126
        %v3643 = vpop.permute.xlu0 %3642
        %v3644 = vrot.slane %v3643, 4
        %v3645 = vsel %vm562, %v3643, %v3644
        %v3647 = vadd.f32 %v3567, %v3645
        %s3648 = sld [smem:[#allocation3 + $0x702]]
        %v3649 = vstv %s3648
        %v3650 = vmul.f32 %v3649, %v3475
        %3652 = vrot.lane.b32.xlu0 %v3650, 126
        %v3653 = vpop.permute.xlu0 %3652
        %v3654 = vrot.slane %v3653, 4
        %v3655 = vsel %vm562, %v3653, %v3654
        %v3657 = vadd.f32 %v3577, %v3655
        %s3658 = sld [smem:[#allocation3 + $0x782]]
        %v3659 = vstv %s3658
        %v3660 = vmul.f32 %v3659, %v3475
        %3662 = vrot.lane.b32.xlu0 %v3660, 126
        %v3663 = vpop.permute.xlu0 %3662
        %v3664 = vrot.slane %v3663, 4
        %v3665 = vsel %vm562, %v3663, %v3664
        %v3667 = vadd.f32 %v3587, %v3665
        %v3668 = vld [vmem:[%s371] sm:$0xf]
        %v3669 = vunpack.c.l.bf16 %v3668
        %s3670 = sld [smem:[#allocation3 + $0x403]]
        %v3671 = vstv %s3670
        %v3672 = vmul.f32 %v3671, %v3669
        %v3674 = vrot.slane %v3672, 5
        %v3675 = vrot.slane %v3674, 4
        %v3677 = vadd.f32 %v3597, %v3675
        %s3678 = sld [smem:[#allocation3 + $0x483]]
        %v3679 = vstv %s3678
        %v3680 = vmul.f32 %v3679, %v3669
        %v3682 = vrot.slane %v3680, 5
        %v3683 = vrot.slane %v3682, 4
        %v3685 = vadd.f32 %v3607, %v3683
        %s3686 = sld [smem:[#allocation3 + $0x503]]
        %v3687 = vstv %s3686
        %v3688 = vmul.f32 %v3687, %v3669
        %v3690 = vrot.slane %v3688, 5
        %v3691 = vrot.slane %v3690, 4
        %v3693 = vadd.f32 %v3617, %v3691
        %s3694 = sld [smem:[#allocation3 + $0x583]]
        %v3695 = vstv %s3694
        %v3696 = vmul.f32 %v3695, %v3669
        %v3698 = vrot.slane %v3696, 5
        %v3699 = vrot.slane %v3698, 4
        %v3701 = vadd.f32 %v3627, %v3699
        %s3702 = sld [smem:[#allocation3 + $0x603]]
        %v3703 = vstv %s3702
        %v3704 = vmul.f32 %v3703, %v3669
        %v3706 = vrot.slane %v3704, 5
        %v3707 = vrot.slane %v3706, 4
        %v3709 = vadd.f32 %v3637, %v3707
        %s3710 = sld [smem:[#allocation3 + $0x683]]
        %v3711 = vstv %s3710
        %v3712 = vmul.f32 %v3711, %v3669
        %v3714 = vrot.slane %v3712, 5
        %v3715 = vrot.slane %v3714, 4
        %v3717 = vadd.f32 %v3647, %v3715
        %s3718 = sld [smem:[#allocation3 + $0x703]]
        %v3719 = vstv %s3718
        %v3720 = vmul.f32 %v3719, %v3669
        %v3722 = vrot.slane %v3720, 5
        %v3723 = vrot.slane %v3722, 4
        %v3725 = vadd.f32 %v3657, %v3723
        %s3726 = sld [smem:[#allocation3 + $0x783]]
        %v3727 = vstv %s3726
        %v3728 = vmul.f32 %v3727, %v3669
        %v3730 = vrot.slane %v3728, 5
        %v3731 = vrot.slane %v3730, 4
        %v3733 = vadd.f32 %v3667, %v3731
        %s3734 = sld [smem:[#allocation3 + $0x404]]
        %v3735 = vstv %s3734
        %v3736 = vmul.f32 %v3735, %v3669
        %v3738 = vrot.slane %v3736, 5
        %v3739 = vrot.slane %v3738, 4
        %3740 = vrot.lane.b32.xlu0 %v3739, 127
        %v3741 = vpop.permute.xlu0 %3740
        %v3742 = vrot.slane %v3741, 4
        %v3743 = vsel %vm481, %v3741, %v3742
        %v3745 = vadd.f32 %v3677, %v3743
        %s3746 = sld [smem:[#allocation3 + $0x484]]
        %v3747 = vstv %s3746
        %v3748 = vmul.f32 %v3747, %v3669
        %v3750 = vrot.slane %v3748, 5
        %v3751 = vrot.slane %v3750, 4
        %3752 = vrot.lane.b32.xlu0 %v3751, 127
        %v3753 = vpop.permute.xlu0 %3752
        %v3754 = vrot.slane %v3753, 4
        %v3755 = vsel %vm481, %v3753, %v3754
        %v3757 = vadd.f32 %v3685, %v3755
        %s3758 = sld [smem:[#allocation3 + $0x504]]
        %v3759 = vstv %s3758
        %v3760 = vmul.f32 %v3759, %v3669
        %v3762 = vrot.slane %v3760, 5
        %v3763 = vrot.slane %v3762, 4
        %3764 = vrot.lane.b32.xlu0 %v3763, 127
        %v3765 = vpop.permute.xlu0 %3764
        %v3766 = vrot.slane %v3765, 4
        %v3767 = vsel %vm481, %v3765, %v3766
        %v3769 = vadd.f32 %v3693, %v3767
        %s3770 = sld [smem:[#allocation3 + $0x584]]
        %v3771 = vstv %s3770
        %v3772 = vmul.f32 %v3771, %v3669
        %v3774 = vrot.slane %v3772, 5
        %v3775 = vrot.slane %v3774, 4
        %3776 = vrot.lane.b32.xlu0 %v3775, 127
        %v3777 = vpop.permute.xlu0 %3776
        %v3778 = vrot.slane %v3777, 4
        %v3779 = vsel %vm481, %v3777, %v3778
        %v3781 = vadd.f32 %v3701, %v3779
        %s3782 = sld [smem:[#allocation3 + $0x604]]
        %v3783 = vstv %s3782
        %v3784 = vmul.f32 %v3783, %v3669
        %v3786 = vrot.slane %v3784, 5
        %v3787 = vrot.slane %v3786, 4
        %3788 = vrot.lane.b32.xlu0 %v3787, 127
        %v3789 = vpop.permute.xlu0 %3788
        %v3790 = vrot.slane %v3789, 4
        %v3791 = vsel %vm481, %v3789, %v3790
        %v3793 = vadd.f32 %v3709, %v3791
        %s3794 = sld [smem:[#allocation3 + $0x684]]
        %v3795 = vstv %s3794
        %v3796 = vmul.f32 %v3795, %v3669
        %v3798 = vrot.slane %v3796, 5
        %v3799 = vrot.slane %v3798, 4
        %3800 = vrot.lane.b32.xlu0 %v3799, 127
        %v3801 = vpop.permute.xlu0 %3800
        %v3802 = vrot.slane %v3801, 4
        %v3803 = vsel %vm481, %v3801, %v3802
        %v3805 = vadd.f32 %v3717, %v3803
        %s3806 = sld [smem:[#allocation3 + $0x704]]
        %v3807 = vstv %s3806
        %v3808 = vmul.f32 %v3807, %v3669
        %v3810 = vrot.slane %v3808, 5
        %v3811 = vrot.slane %v3810, 4
        %3812 = vrot.lane.b32.xlu0 %v3811, 127
        %v3813 = vpop.permute.xlu0 %3812
        %v3814 = vrot.slane %v3813, 4
        %v3815 = vsel %vm481, %v3813, %v3814
        %v3817 = vadd.f32 %v3725, %v3815
        %s3818 = sld [smem:[#allocation3 + $0x784]]
        %v3819 = vstv %s3818
        %v3820 = vmul.f32 %v3819, %v3669
        %v3822 = vrot.slane %v3820, 5
        %v3823 = vrot.slane %v3822, 4
        %3824 = vrot.lane.b32.xlu0 %v3823, 127
        %v3825 = vpop.permute.xlu0 %3824
        %v3826 = vrot.slane %v3825, 4
        %v3827 = vsel %vm481, %v3825, %v3826
        %v3829 = vadd.f32 %v3733, %v3827
        %s3830 = sld [smem:[#allocation3 + $0x405]]
        %v3831 = vstv %s3830
        %v3832 = vmul.f32 %v3831, %v3669
        %v3834 = vrot.slane %v3832, 5
        %v3835 = vrot.slane %v3834, 4
        %3836 = vrot.lane.b32.xlu0 %v3835, 126
        %v3837 = vpop.permute.xlu0 %3836
        %v3838 = vrot.slane %v3837, 4
        %v3839 = vsel %vm562, %v3837, %v3838
        %v3841 = vadd.f32 %v3745, %v3839
        %s3842 = sld [smem:[#allocation3 + $0x485]]
        %v3843 = vstv %s3842
        %v3844 = vmul.f32 %v3843, %v3669
        %v3846 = vrot.slane %v3844, 5
        %v3847 = vrot.slane %v3846, 4
        %3848 = vrot.lane.b32.xlu0 %v3847, 126
        %v3849 = vpop.permute.xlu0 %3848
        %v3850 = vrot.slane %v3849, 4
        %v3851 = vsel %vm562, %v3849, %v3850
        %v3853 = vadd.f32 %v3757, %v3851
        %s3854 = sld [smem:[#allocation3 + $0x505]]
        %v3855 = vstv %s3854
        %v3856 = vmul.f32 %v3855, %v3669
        %v3858 = vrot.slane %v3856, 5
        %v3859 = vrot.slane %v3858, 4
        %3860 = vrot.lane.b32.xlu0 %v3859, 126
        %v3861 = vpop.permute.xlu0 %3860
        %v3862 = vrot.slane %v3861, 4
        %v3863 = vsel %vm562, %v3861, %v3862
        %v3865 = vadd.f32 %v3769, %v3863
        %s3866 = sld [smem:[#allocation3 + $0x585]]
        %v3867 = vstv %s3866
        %v3868 = vmul.f32 %v3867, %v3669
        %v3870 = vrot.slane %v3868, 5
        %v3871 = vrot.slane %v3870, 4
        %3872 = vrot.lane.b32.xlu0 %v3871, 126
        %v3873 = vpop.permute.xlu0 %3872
        %v3874 = vrot.slane %v3873, 4
        %v3875 = vsel %vm562, %v3873, %v3874
        %v3877 = vadd.f32 %v3781, %v3875
        %s3878 = sld [smem:[#allocation3 + $0x605]]
        %v3879 = vstv %s3878
        %v3880 = vmul.f32 %v3879, %v3669
        %v3882 = vrot.slane %v3880, 5
        %v3883 = vrot.slane %v3882, 4
        %3884 = vrot.lane.b32.xlu0 %v3883, 126
        %v3885 = vpop.permute.xlu0 %3884
        %v3886 = vrot.slane %v3885, 4
        %v3887 = vsel %vm562, %v3885, %v3886
        %v3889 = vadd.f32 %v3793, %v3887
        %s3890 = sld [smem:[#allocation3 + $0x685]]
        %v3891 = vstv %s3890
        %v3892 = vmul.f32 %v3891, %v3669
        %v3894 = vrot.slane %v3892, 5
        %v3895 = vrot.slane %v3894, 4
        %3896 = vrot.lane.b32.xlu0 %v3895, 126
        %v3897 = vpop.permute.xlu0 %3896
        %v3898 = vrot.slane %v3897, 4
        %v3899 = vsel %vm562, %v3897, %v3898
        %v3901 = vadd.f32 %v3805, %v3899
        %s3902 = sld [smem:[#allocation3 + $0x705]]
        %v3903 = vstv %s3902
        %v3904 = vmul.f32 %v3903, %v3669
        %v3906 = vrot.slane %v3904, 5
        %v3907 = vrot.slane %v3906, 4
        %3908 = vrot.lane.b32.xlu0 %v3907, 126
        %v3909 = vpop.permute.xlu0 %3908
        %v3910 = vrot.slane %v3909, 4
        %v3911 = vsel %vm562, %v3909, %v3910
        %v3913 = vadd.f32 %v3817, %v3911
        %s3914 = sld [smem:[#allocation3 + $0x785]]
        %v3915 = vstv %s3914
        %v3916 = vmul.f32 %v3915, %v3669
        %v3918 = vrot.slane %v3916, 5
        %v3919 = vrot.slane %v3918, 4
        %3920 = vrot.lane.b32.xlu0 %v3919, 126
        %v3921 = vpop.permute.xlu0 %3920
        %v3922 = vrot.slane %v3921, 4
        %v3923 = vsel %vm562, %v3921, %v3922
        %v3925 = vadd.f32 %v3829, %v3923
        %v3926 = vld [vmem:[%s371] sm:$0xa]
        %v3927 = vunpack.c.l.bf16 %v3926
        %s3928 = sld [smem:[#allocation3 + $0x406]]
        %v3929 = vstv %s3928
        %v3930 = vmul.f32 %v3929, %v3927
        %v3932 = vrot.slane %v3930, 6
        %v3933 = vrot.slane %v3932, 4
        %v3935 = vadd.f32 %v3841, %v3933
        %s3936 = sld [smem:[#allocation3 + $0x486]]
        %v3937 = vstv %s3936
        %v3938 = vmul.f32 %v3937, %v3927
        %v3940 = vrot.slane %v3938, 6
        %v3941 = vrot.slane %v3940, 4
        %v3943 = vadd.f32 %v3853, %v3941
        %s3944 = sld [smem:[#allocation3 + $0x506]]
        %v3945 = vstv %s3944
        %v3946 = vmul.f32 %v3945, %v3927
        %v3948 = vrot.slane %v3946, 6
        %v3949 = vrot.slane %v3948, 4
        %v3951 = vadd.f32 %v3865, %v3949
        %s3952 = sld [smem:[#allocation3 + $0x586]]
        %v3953 = vstv %s3952
        %v3954 = vmul.f32 %v3953, %v3927
        %v3956 = vrot.slane %v3954, 6
        %v3957 = vrot.slane %v3956, 4
        %v3959 = vadd.f32 %v3877, %v3957
        %s3960 = sld [smem:[#allocation3 + $0x606]]
        %v3961 = vstv %s3960
        %v3962 = vmul.f32 %v3961, %v3927
        %v3964 = vrot.slane %v3962, 6
        %v3965 = vrot.slane %v3964, 4
        %v3967 = vadd.f32 %v3889, %v3965
        %s3968 = sld [smem:[#allocation3 + $0x686]]
        %v3969 = vstv %s3968
        %v3970 = vmul.f32 %v3969, %v3927
        %v3972 = vrot.slane %v3970, 6
        %v3973 = vrot.slane %v3972, 4
        %v3975 = vadd.f32 %v3901, %v3973
        %s3976 = sld [smem:[#allocation3 + $0x706]]
        %v3977 = vstv %s3976
        %v3978 = vmul.f32 %v3977, %v3927
        %v3980 = vrot.slane %v3978, 6
        %v3981 = vrot.slane %v3980, 4
        %v3983 = vadd.f32 %v3913, %v3981
        %s3984 = sld [smem:[#allocation3 + $0x786]]
        %v3985 = vstv %s3984
        %v3986 = vmul.f32 %v3985, %v3927
        %v3988 = vrot.slane %v3986, 6
        %v3989 = vrot.slane %v3988, 4
        %v3991 = vadd.f32 %v3925, %v3989
        %s3992 = sld [smem:[#allocation3 + $0x407]]
        %v3993 = vstv %s3992
        %v3994 = vmul.f32 %v3993, %v3927
        %v3996 = vrot.slane %v3994, 6
        %v3997 = vrot.slane %v3996, 4
        %3998 = vrot.lane.b32.xlu0 %v3997, 127
        %v3999 = vpop.permute.xlu0 %3998
        %v4000 = vrot.slane %v3999, 4
        %v4001 = vsel %vm481, %v3999, %v4000
        %v4003 = vadd.f32 %v3935, %v4001
        %s4004 = sld [smem:[#allocation3 + $0x487]]
        %v4005 = vstv %s4004
        %v4006 = vmul.f32 %v4005, %v3927
        %v4008 = vrot.slane %v4006, 6
        %v4009 = vrot.slane %v4008, 4
        %4010 = vrot.lane.b32.xlu0 %v4009, 127
        %v4011 = vpop.permute.xlu0 %4010
        %v4012 = vrot.slane %v4011, 4
        %v4013 = vsel %vm481, %v4011, %v4012
        %v4015 = vadd.f32 %v3943, %v4013
        %s4016 = sld [smem:[#allocation3 + $0x507]]
        %v4017 = vstv %s4016
        %v4018 = vmul.f32 %v4017, %v3927
        %v4020 = vrot.slane %v4018, 6
        %v4021 = vrot.slane %v4020, 4
        %4022 = vrot.lane.b32.xlu0 %v4021, 127
        %v4023 = vpop.permute.xlu0 %4022
        %v4024 = vrot.slane %v4023, 4
        %v4025 = vsel %vm481, %v4023, %v4024
        %v4027 = vadd.f32 %v3951, %v4025
        %s4028 = sld [smem:[#allocation3 + $0x587]]
        %v4029 = vstv %s4028
        %v4030 = vmul.f32 %v4029, %v3927
        %v4032 = vrot.slane %v4030, 6
        %v4033 = vrot.slane %v4032, 4
        %4034 = vrot.lane.b32.xlu0 %v4033, 127
        %v4035 = vpop.permute.xlu0 %4034
        %v4036 = vrot.slane %v4035, 4
        %v4037 = vsel %vm481, %v4035, %v4036
        %v4039 = vadd.f32 %v3959, %v4037
        %s4040 = sld [smem:[#allocation3 + $0x607]]
        %v4041 = vstv %s4040
        %v4042 = vmul.f32 %v4041, %v3927
        %v4044 = vrot.slane %v4042, 6
        %v4045 = vrot.slane %v4044, 4
        %4046 = vrot.lane.b32.xlu0 %v4045, 127
        %v4047 = vpop.permute.xlu0 %4046
        %v4048 = vrot.slane %v4047, 4
        %v4049 = vsel %vm481, %v4047, %v4048
        %v4051 = vadd.f32 %v3967, %v4049
        %s4052 = sld [smem:[#allocation3 + $0x687]]
        %v4053 = vstv %s4052
        %v4054 = vmul.f32 %v4053, %v3927
        %v4056 = vrot.slane %v4054, 6
        %v4057 = vrot.slane %v4056, 4
        %4058 = vrot.lane.b32.xlu0 %v4057, 127
        %v4059 = vpop.permute.xlu0 %4058
        %v4060 = vrot.slane %v4059, 4
        %v4061 = vsel %vm481, %v4059, %v4060
        %v4063 = vadd.f32 %v3975, %v4061
        %s4064 = sld [smem:[#allocation3 + $0x707]]
        %v4065 = vstv %s4064
        %v4066 = vmul.f32 %v4065, %v3927
        %v4068 = vrot.slane %v4066, 6
        %v4069 = vrot.slane %v4068, 4
        %4070 = vrot.lane.b32.xlu0 %v4069, 127
        %v4071 = vpop.permute.xlu0 %4070
        %v4072 = vrot.slane %v4071, 4
        %v4073 = vsel %vm481, %v4071, %v4072
        %v4075 = vadd.f32 %v3983, %v4073
        %s4076 = sld [smem:[#allocation3 + $0x787]]
        %v4077 = vstv %s4076
        %v4078 = vmul.f32 %v4077, %v3927
        %v4080 = vrot.slane %v4078, 6
        %v4081 = vrot.slane %v4080, 4
        %4082 = vrot.lane.b32.xlu0 %v4081, 127
        %v4083 = vpop.permute.xlu0 %4082
        %v4084 = vrot.slane %v4083, 4
        %v4085 = vsel %vm481, %v4083, %v4084
        %v4087 = vadd.f32 %v3991, %v4085
        %s4088 = sld [smem:[#allocation3 + $0x408]]
        %v4089 = vstv %s4088
        %v4090 = vmul.f32 %v4089, %v3927
        %v4092 = vrot.slane %v4090, 6
        %v4093 = vrot.slane %v4092, 4
        %4094 = vrot.lane.b32.xlu0 %v4093, 126
        %v4095 = vpop.permute.xlu0 %4094
        %v4096 = vrot.slane %v4095, 4
        %v4097 = vsel %vm562, %v4095, %v4096
        %v4099 = vadd.f32 %v4003, %v4097
        %s4100 = sld [smem:[#allocation3 + $0x488]]
        %v4101 = vstv %s4100
        %v4102 = vmul.f32 %v4101, %v3927
        %v4104 = vrot.slane %v4102, 6
        %v4105 = vrot.slane %v4104, 4
        %4106 = vrot.lane.b32.xlu0 %v4105, 126
        %v4107 = vpop.permute.xlu0 %4106
        %v4108 = vrot.slane %v4107, 4
        %v4109 = vsel %vm562, %v4107, %v4108
        %v4111 = vadd.f32 %v4015, %v4109
        %s4112 = sld [smem:[#allocation3 + $0x508]]
        %v4113 = vstv %s4112
        %v4114 = vmul.f32 %v4113, %v3927
        %v4116 = vrot.slane %v4114, 6
        %v4117 = vrot.slane %v4116, 4
        %4118 = vrot.lane.b32.xlu0 %v4117, 126
        %v4119 = vpop.permute.xlu0 %4118
        %v4120 = vrot.slane %v4119, 4
        %v4121 = vsel %vm562, %v4119, %v4120
        %v4123 = vadd.f32 %v4027, %v4121
        %s4124 = sld [smem:[#allocation3 + $0x588]]
        %v4125 = vstv %s4124
        %v4126 = vmul.f32 %v4125, %v3927
        %v4128 = vrot.slane %v4126, 6
        %v4129 = vrot.slane %v4128, 4
        %4130 = vrot.lane.b32.xlu0 %v4129, 126
        %v4131 = vpop.permute.xlu0 %4130
        %v4132 = vrot.slane %v4131, 4
        %v4133 = vsel %vm562, %v4131, %v4132
        %v4135 = vadd.f32 %v4039, %v4133
        %s4136 = sld [smem:[#allocation3 + $0x608]]
        %v4137 = vstv %s4136
        %v4138 = vmul.f32 %v4137, %v3927
        %v4140 = vrot.slane %v4138, 6
        %v4141 = vrot.slane %v4140, 4
        %4142 = vrot.lane.b32.xlu0 %v4141, 126
        %v4143 = vpop.permute.xlu0 %4142
        %v4144 = vrot.slane %v4143, 4
        %v4145 = vsel %vm562, %v4143, %v4144
        %v4147 = vadd.f32 %v4051, %v4145
        %s4148 = sld [smem:[#allocation3 + $0x688]]
        %v4149 = vstv %s4148
        %v4150 = vmul.f32 %v4149, %v3927
        %v4152 = vrot.slane %v4150, 6
        %v4153 = vrot.slane %v4152, 4
        %4154 = vrot.lane.b32.xlu0 %v4153, 126
        %v4155 = vpop.permute.xlu0 %4154
        %v4156 = vrot.slane %v4155, 4
        %v4157 = vsel %vm562, %v4155, %v4156
        %v4159 = vadd.f32 %v4063, %v4157
        %s4160 = sld [smem:[#allocation3 + $0x708]]
        %v4161 = vstv %s4160
        %v4162 = vmul.f32 %v4161, %v3927
        %v4164 = vrot.slane %v4162, 6
        %v4165 = vrot.slane %v4164, 4
        %4166 = vrot.lane.b32.xlu0 %v4165, 126
        %v4167 = vpop.permute.xlu0 %4166
        %v4168 = vrot.slane %v4167, 4
        %v4169 = vsel %vm562, %v4167, %v4168
        %v4171 = vadd.f32 %v4075, %v4169
        %s4172 = sld [smem:[#allocation3 + $0x788]]
        %v4173 = vstv %s4172
        %v4174 = vmul.f32 %v4173, %v3927
        %v4176 = vrot.slane %v4174, 6
        %v4177 = vrot.slane %v4176, 4
        %4178 = vrot.lane.b32.xlu0 %v4177, 126
        %v4179 = vpop.permute.xlu0 %4178
        %v4180 = vrot.slane %v4179, 4
        %v4181 = vsel %vm562, %v4179, %v4180
        %v4183 = vadd.f32 %v4087, %v4181
        %v4184 = vld [vmem:[%s1152] sm:$0x5]
        %v4185 = vunpack.c.l.bf16 %v4184
        %s4186 = sld [smem:[#allocation3 + $0x409]]
        %v4187 = vstv %s4186
        %v4188 = vmul.f32 %v4187, %v4185
        %v4189 = vadd.f32 %v4099, %v4188
        %s4190 = sld [smem:[#allocation3 + $0x489]]
        %v4191 = vstv %s4190
        %v4192 = vmul.f32 %v4191, %v4185
        %v4193 = vadd.f32 %v4111, %v4192
        %s4194 = sld [smem:[#allocation3 + $0x509]]
        %v4195 = vstv %s4194
        %v4196 = vmul.f32 %v4195, %v4185
        %v4197 = vadd.f32 %v4123, %v4196
        %s4198 = sld [smem:[#allocation3 + $0x589]]
        %v4199 = vstv %s4198
        %v4200 = vmul.f32 %v4199, %v4185
        %v4201 = vadd.f32 %v4135, %v4200
        %s4202 = sld [smem:[#allocation3 + $0x609]]
        %v4203 = vstv %s4202
        %v4204 = vmul.f32 %v4203, %v4185
        %v4205 = vadd.f32 %v4147, %v4204
        %s4206 = sld [smem:[#allocation3 + $0x689]]
        %v4207 = vstv %s4206
        %v4208 = vmul.f32 %v4207, %v4185
        %v4209 = vadd.f32 %v4159, %v4208
        %s4210 = sld [smem:[#allocation3 + $0x709]]
        %v4211 = vstv %s4210
        %v4212 = vmul.f32 %v4211, %v4185
        %v4213 = vadd.f32 %v4171, %v4212
        %s4214 = sld [smem:[#allocation3 + $0x789]]
        %v4215 = vstv %s4214
        %v4216 = vmul.f32 %v4215, %v4185
        %v4217 = vadd.f32 %v4183, %v4216
        %s4218 = sld [smem:[#allocation3 + $0x40a]]
        %v4219 = vstv %s4218
        %v4220 = vmul.f32 %v4219, %v4185
        %4222 = vrot.lane.b32.xlu0 %v4220, 127
        %v4223 = vpop.permute.xlu0 %4222
        %v4224 = vrot.slane %v4223, 4
        %v4225 = vsel %vm481, %v4223, %v4224
        %v4227 = vadd.f32 %v4189, %v4225
        %s4228 = sld [smem:[#allocation3 + $0x48a]]
        %v4229 = vstv %s4228
        %v4230 = vmul.f32 %v4229, %v4185
        %4232 = vrot.lane.b32.xlu0 %v4230, 127
        %v4233 = vpop.permute.xlu0 %4232
        %v4234 = vrot.slane %v4233, 4
        %v4235 = vsel %vm481, %v4233, %v4234
        %v4237 = vadd.f32 %v4193, %v4235
        %s4238 = sld [smem:[#allocation3 + $0x50a]]
        %v4239 = vstv %s4238
        %v4240 = vmul.f32 %v4239, %v4185
        %4242 = vrot.lane.b32.xlu0 %v4240, 127
        %v4243 = vpop.permute.xlu0 %4242
        %v4244 = vrot.slane %v4243, 4
        %v4245 = vsel %vm481, %v4243, %v4244
        %v4247 = vadd.f32 %v4197, %v4245
        %s4248 = sld [smem:[#allocation3 + $0x58a]]
        %v4249 = vstv %s4248
        %v4250 = vmul.f32 %v4249, %v4185
        %4252 = vrot.lane.b32.xlu0 %v4250, 127
        %v4253 = vpop.permute.xlu0 %4252
        %v4254 = vrot.slane %v4253, 4
        %v4255 = vsel %vm481, %v4253, %v4254
        %v4257 = vadd.f32 %v4201, %v4255
        %s4258 = sld [smem:[#allocation3 + $0x60a]]
        %v4259 = vstv %s4258
        %v4260 = vmul.f32 %v4259, %v4185
        %4262 = vrot.lane.b32.xlu0 %v4260, 127
        %v4263 = vpop.permute.xlu0 %4262
        %v4264 = vrot.slane %v4263, 4
        %v4265 = vsel %vm481, %v4263, %v4264
        %v4267 = vadd.f32 %v4205, %v4265
        %s4268 = sld [smem:[#allocation3 + $0x68a]]
        %v4269 = vstv %s4268
        %v4270 = vmul.f32 %v4269, %v4185
        %4272 = vrot.lane.b32.xlu0 %v4270, 127
        %v4273 = vpop.permute.xlu0 %4272
        %v4274 = vrot.slane %v4273, 4
        %v4275 = vsel %vm481, %v4273, %v4274
        %v4277 = vadd.f32 %v4209, %v4275
        %s4278 = sld [smem:[#allocation3 + $0x70a]]
        %v4279 = vstv %s4278
        %v4280 = vmul.f32 %v4279, %v4185
        %4282 = vrot.lane.b32.xlu0 %v4280, 127
        %v4283 = vpop.permute.xlu0 %4282
        %v4284 = vrot.slane %v4283, 4
        %v4285 = vsel %vm481, %v4283, %v4284
        %v4287 = vadd.f32 %v4213, %v4285
        %s4288 = sld [smem:[#allocation3 + $0x78a]]
        %v4289 = vstv %s4288
        %v4290 = vmul.f32 %v4289, %v4185
        %4292 = vrot.lane.b32.xlu0 %v4290, 127
        %v4293 = vpop.permute.xlu0 %4292
        %v4294 = vrot.slane %v4293, 4
        %v4295 = vsel %vm481, %v4293, %v4294
        %v4297 = vadd.f32 %v4217, %v4295
        %s4298 = sld [smem:[#allocation3 + $0x40b]]
        %v4299 = vstv %s4298
        %v4300 = vmul.f32 %v4299, %v4185
        %4302 = vrot.lane.b32.xlu0 %v4300, 126
        %v4303 = vpop.permute.xlu0 %4302
        %v4304 = vrot.slane %v4303, 4
        %v4305 = vsel %vm562, %v4303, %v4304
        %v4307 = vadd.f32 %v4227, %v4305
        %s4308 = sld [smem:[#allocation3 + $0x48b]]
        %v4309 = vstv %s4308
        %v4310 = vmul.f32 %v4309, %v4185
        %4312 = vrot.lane.b32.xlu0 %v4310, 126
        %v4313 = vpop.permute.xlu0 %4312
        %v4314 = vrot.slane %v4313, 4
        %v4315 = vsel %vm562, %v4313, %v4314
        %v4317 = vadd.f32 %v4237, %v4315
        %s4318 = sld [smem:[#allocation3 + $0x50b]]
        %v4319 = vstv %s4318
        %v4320 = vmul.f32 %v4319, %v4185
        %4322 = vrot.lane.b32.xlu0 %v4320, 126
        %v4323 = vpop.permute.xlu0 %4322
        %v4324 = vrot.slane %v4323, 4
        %v4325 = vsel %vm562, %v4323, %v4324
        %v4327 = vadd.f32 %v4247, %v4325
        %s4328 = sld [smem:[#allocation3 + $0x58b]]
        %v4329 = vstv %s4328
        %v4330 = vmul.f32 %v4329, %v4185
        %4332 = vrot.lane.b32.xlu0 %v4330, 126
        %v4333 = vpop.permute.xlu0 %4332
        %v4334 = vrot.slane %v4333, 4
        %v4335 = vsel %vm562, %v4333, %v4334
        %v4337 = vadd.f32 %v4257, %v4335
        %s4338 = sld [smem:[#allocation3 + $0x60b]]
        %v4339 = vstv %s4338
        %v4340 = vmul.f32 %v4339, %v4185
        %4342 = vrot.lane.b32.xlu0 %v4340, 126
        %v4343 = vpop.permute.xlu0 %4342
        %v4344 = vrot.slane %v4343, 4
        %v4345 = vsel %vm562, %v4343, %v4344
        %v4347 = vadd.f32 %v4267, %v4345
        %s4348 = sld [smem:[#allocation3 + $0x68b]]
        %v4349 = vstv %s4348
        %v4350 = vmul.f32 %v4349, %v4185
        %4352 = vrot.lane.b32.xlu0 %v4350, 126
        %v4353 = vpop.permute.xlu0 %4352
        %v4354 = vrot.slane %v4353, 4
        %v4355 = vsel %vm562, %v4353, %v4354
        %v4357 = vadd.f32 %v4277, %v4355
        %s4358 = sld [smem:[#allocation3 + $0x70b]]
        %v4359 = vstv %s4358
        %v4360 = vmul.f32 %v4359, %v4185
        %4362 = vrot.lane.b32.xlu0 %v4360, 126
        %v4363 = vpop.permute.xlu0 %4362
        %v4364 = vrot.slane %v4363, 4
        %v4365 = vsel %vm562, %v4363, %v4364
        %v4367 = vadd.f32 %v4287, %v4365
        %s4368 = sld [smem:[#allocation3 + $0x78b]]
        %v4369 = vstv %s4368
        %v4370 = vmul.f32 %v4369, %v4185
        %4372 = vrot.lane.b32.xlu0 %v4370, 126
        %v4373 = vpop.permute.xlu0 %4372
        %v4374 = vrot.slane %v4373, 4
        %v4375 = vsel %vm562, %v4373, %v4374
        %v4377 = vadd.f32 %v4297, %v4375
        %v4378 = vld [vmem:[%s1152] sm:$0xf]
        %v4379 = vunpack.c.l.bf16 %v4378
        %s4380 = sld [smem:[#allocation3 + $0x40c]]
        %v4381 = vstv %s4380
        %v4382 = vmul.f32 %v4381, %v4379
        %v4384 = vrot.slane %v4382, 5
        %v4385 = vrot.slane %v4384, 4
        %v4387 = vadd.f32 %v4307, %v4385
        %s4388 = sld [smem:[#allocation3 + $0x48c]]
        %v4389 = vstv %s4388
        %v4390 = vmul.f32 %v4389, %v4379
        %v4392 = vrot.slane %v4390, 5
        %v4393 = vrot.slane %v4392, 4
        %v4395 = vadd.f32 %v4317, %v4393
        %s4396 = sld [smem:[#allocation3 + $0x50c]]
        %v4397 = vstv %s4396
        %v4398 = vmul.f32 %v4397, %v4379
        %v4400 = vrot.slane %v4398, 5
        %v4401 = vrot.slane %v4400, 4
        %v4403 = vadd.f32 %v4327, %v4401
        %s4404 = sld [smem:[#allocation3 + $0x58c]]
        %v4405 = vstv %s4404
        %v4406 = vmul.f32 %v4405, %v4379
        %v4408 = vrot.slane %v4406, 5
        %v4409 = vrot.slane %v4408, 4
        %v4411 = vadd.f32 %v4337, %v4409
        %s4412 = sld [smem:[#allocation3 + $0x60c]]
        %v4413 = vstv %s4412
        %v4414 = vmul.f32 %v4413, %v4379
        %v4416 = vrot.slane %v4414, 5
        %v4417 = vrot.slane %v4416, 4
        %v4419 = vadd.f32 %v4347, %v4417
        %s4420 = sld [smem:[#allocation3 + $0x68c]]
        %v4421 = vstv %s4420
        %v4422 = vmul.f32 %v4421, %v4379
        %v4424 = vrot.slane %v4422, 5
        %v4425 = vrot.slane %v4424, 4
        %v4427 = vadd.f32 %v4357, %v4425
        %s4428 = sld [smem:[#allocation3 + $0x70c]]
        %v4429 = vstv %s4428
        %v4430 = vmul.f32 %v4429, %v4379
        %v4432 = vrot.slane %v4430, 5
        %v4433 = vrot.slane %v4432, 4
        %v4435 = vadd.f32 %v4367, %v4433
        %s4436 = sld [smem:[#allocation3 + $0x78c]]
        %v4437 = vstv %s4436
        %v4438 = vmul.f32 %v4437, %v4379
        %v4440 = vrot.slane %v4438, 5
        %v4441 = vrot.slane %v4440, 4
        %v4443 = vadd.f32 %v4377, %v4441
        %s4444 = sld [smem:[#allocation3 + $0x40d]]
        %v4445 = vstv %s4444
        %v4446 = vmul.f32 %v4445, %v4379
        %v4448 = vrot.slane %v4446, 5
        %v4449 = vrot.slane %v4448, 4
        %4450 = vrot.lane.b32.xlu0 %v4449, 127
        %v4451 = vpop.permute.xlu0 %4450
        %v4452 = vrot.slane %v4451, 4
        %v4453 = vsel %vm481, %v4451, %v4452
        %v4455 = vadd.f32 %v4387, %v4453
        %s4456 = sld [smem:[#allocation3 + $0x48d]]
        %v4457 = vstv %s4456
        %v4458 = vmul.f32 %v4457, %v4379
        %v4460 = vrot.slane %v4458, 5
        %v4461 = vrot.slane %v4460, 4
        %4462 = vrot.lane.b32.xlu0 %v4461, 127
        %v4463 = vpop.permute.xlu0 %4462
        %v4464 = vrot.slane %v4463, 4
        %v4465 = vsel %vm481, %v4463, %v4464
        %v4467 = vadd.f32 %v4395, %v4465
        %s4468 = sld [smem:[#allocation3 + $0x50d]]
        %v4469 = vstv %s4468
        %v4470 = vmul.f32 %v4469, %v4379
        %v4472 = vrot.slane %v4470, 5
        %v4473 = vrot.slane %v4472, 4
        %4474 = vrot.lane.b32.xlu0 %v4473, 127
        %v4475 = vpop.permute.xlu0 %4474
        %v4476 = vrot.slane %v4475, 4
        %v4477 = vsel %vm481, %v4475, %v4476
        %v4479 = vadd.f32 %v4403, %v4477
        %s4480 = sld [smem:[#allocation3 + $0x58d]]
        %v4481 = vstv %s4480
        %v4482 = vmul.f32 %v4481, %v4379
        %v4484 = vrot.slane %v4482, 5
        %v4485 = vrot.slane %v4484, 4
        %4486 = vrot.lane.b32.xlu0 %v4485, 127
        %v4487 = vpop.permute.xlu0 %4486
        %v4488 = vrot.slane %v4487, 4
        %v4489 = vsel %vm481, %v4487, %v4488
        %v4491 = vadd.f32 %v4411, %v4489
        %s4492 = sld [smem:[#allocation3 + $0x60d]]
        %v4493 = vstv %s4492
        %v4494 = vmul.f32 %v4493, %v4379
        %v4496 = vrot.slane %v4494, 5
        %v4497 = vrot.slane %v4496, 4
        %4498 = vrot.lane.b32.xlu0 %v4497, 127
        %v4499 = vpop.permute.xlu0 %4498
        %v4500 = vrot.slane %v4499, 4
        %v4501 = vsel %vm481, %v4499, %v4500
        %v4503 = vadd.f32 %v4419, %v4501
        %s4504 = sld [smem:[#allocation3 + $0x68d]]
        %v4505 = vstv %s4504
        %v4506 = vmul.f32 %v4505, %v4379
        %v4508 = vrot.slane %v4506, 5
        %v4509 = vrot.slane %v4508, 4
        %4510 = vrot.lane.b32.xlu0 %v4509, 127
        %v4511 = vpop.permute.xlu0 %4510
        %v4512 = vrot.slane %v4511, 4
        %v4513 = vsel %vm481, %v4511, %v4512
        %v4515 = vadd.f32 %v4427, %v4513
        %s4516 = sld [smem:[#allocation3 + $0x70d]]
        %v4517 = vstv %s4516
        %v4518 = vmul.f32 %v4517, %v4379
        %v4520 = vrot.slane %v4518, 5
        %v4521 = vrot.slane %v4520, 4
        %4522 = vrot.lane.b32.xlu0 %v4521, 127
        %v4523 = vpop.permute.xlu0 %4522
        %v4524 = vrot.slane %v4523, 4
        %v4525 = vsel %vm481, %v4523, %v4524
        %v4527 = vadd.f32 %v4435, %v4525
        %s4528 = sld [smem:[#allocation3 + $0x78d]]
        %v4529 = vstv %s4528
        %v4530 = vmul.f32 %v4529, %v4379
        %v4532 = vrot.slane %v4530, 5
        %v4533 = vrot.slane %v4532, 4
        %4534 = vrot.lane.b32.xlu0 %v4533, 127
        %v4535 = vpop.permute.xlu0 %4534
        %v4536 = vrot.slane %v4535, 4
        %v4537 = vsel %vm481, %v4535, %v4536
        %v4539 = vadd.f32 %v4443, %v4537
        %s4540 = sld [smem:[#allocation3 + $0x40e]]
        %v4541 = vstv %s4540
        %v4542 = vmul.f32 %v4541, %v4379
        %v4544 = vrot.slane %v4542, 5
        %v4545 = vrot.slane %v4544, 4
        %4546 = vrot.lane.b32.xlu0 %v4545, 126
        %v4547 = vpop.permute.xlu0 %4546
        %v4548 = vrot.slane %v4547, 4
        %v4549 = vsel %vm562, %v4547, %v4548
        %v4551 = vadd.f32 %v4455, %v4549
        %s4552 = sld [smem:[#allocation3 + $0x48e]]
        %v4553 = vstv %s4552
        %v4554 = vmul.f32 %v4553, %v4379
        %v4556 = vrot.slane %v4554, 5
        %v4557 = vrot.slane %v4556, 4
        %4558 = vrot.lane.b32.xlu0 %v4557, 126
        %v4559 = vpop.permute.xlu0 %4558
        %v4560 = vrot.slane %v4559, 4
        %v4561 = vsel %vm562, %v4559, %v4560
        %v4563 = vadd.f32 %v4467, %v4561
        %s4564 = sld [smem:[#allocation3 + $0x50e]]
        %v4565 = vstv %s4564
        %v4566 = vmul.f32 %v4565, %v4379
        %v4568 = vrot.slane %v4566, 5
        %v4569 = vrot.slane %v4568, 4
        %4570 = vrot.lane.b32.xlu0 %v4569, 126
        %v4571 = vpop.permute.xlu0 %4570
        %v4572 = vrot.slane %v4571, 4
        %v4573 = vsel %vm562, %v4571, %v4572
        %v4575 = vadd.f32 %v4479, %v4573
        %s4576 = sld [smem:[#allocation3 + $0x58e]]
        %v4577 = vstv %s4576
        %v4578 = vmul.f32 %v4577, %v4379
        %v4580 = vrot.slane %v4578, 5
        %v4581 = vrot.slane %v4580, 4
        %4582 = vrot.lane.b32.xlu0 %v4581, 126
        %v4583 = vpop.permute.xlu0 %4582
        %v4584 = vrot.slane %v4583, 4
        %v4585 = vsel %vm562, %v4583, %v4584
        %v4587 = vadd.f32 %v4491, %v4585
        %s4588 = sld [smem:[#allocation3 + $0x60e]]
        %v4589 = vstv %s4588
        %v4590 = vmul.f32 %v4589, %v4379
        %v4592 = vrot.slane %v4590, 5
        %v4593 = vrot.slane %v4592, 4
        %4594 = vrot.lane.b32.xlu0 %v4593, 126
        %v4595 = vpop.permute.xlu0 %4594
        %v4596 = vrot.slane %v4595, 4
        %v4597 = vsel %vm562, %v4595, %v4596
        %v4599 = vadd.f32 %v4503, %v4597
        %s4600 = sld [smem:[#allocation3 + $0x68e]]
        %v4601 = vstv %s4600
        %v4602 = vmul.f32 %v4601, %v4379
        %v4604 = vrot.slane %v4602, 5
        %v4605 = vrot.slane %v4604, 4
        %4606 = vrot.lane.b32.xlu0 %v4605, 126
        %v4607 = vpop.permute.xlu0 %4606
        %v4608 = vrot.slane %v4607, 4
        %v4609 = vsel %vm562, %v4607, %v4608
        %v4611 = vadd.f32 %v4515, %v4609
        %s4612 = sld [smem:[#allocation3 + $0x70e]]
        %v4613 = vstv %s4612
        %v4614 = vmul.f32 %v4613, %v4379
        %v4616 = vrot.slane %v4614, 5
        %v4617 = vrot.slane %v4616, 4
        %4618 = vrot.lane.b32.xlu0 %v4617, 126
        %v4619 = vpop.permute.xlu0 %4618
        %v4620 = vrot.slane %v4619, 4
        %v4621 = vsel %vm562, %v4619, %v4620
        %v4623 = vadd.f32 %v4527, %v4621
        %s4624 = sld [smem:[#allocation3 + $0x78e]]
        %v4625 = vstv %s4624
        %v4626 = vmul.f32 %v4625, %v4379
        %v4628 = vrot.slane %v4626, 5
        %v4629 = vrot.slane %v4628, 4
        %4630 = vrot.lane.b32.xlu0 %v4629, 126
        %v4631 = vpop.permute.xlu0 %4630
        %v4632 = vrot.slane %v4631, 4
        %v4633 = vsel %vm562, %v4631, %v4632
        %v4635 = vadd.f32 %v4539, %v4633
        %v4636 = vld [vmem:[%s1152] sm:$0xa]
        %v4637 = vunpack.c.l.bf16 %v4636
        %s4638 = sld [smem:[#allocation3 + $0x40f]]
        %v4639 = vstv %s4638
        %v4640 = vmul.f32 %v4639, %v4637
        %v4642 = vrot.slane %v4640, 6
        %v4643 = vrot.slane %v4642, 4
        %v4645 = vadd.f32 %v4551, %v4643
        %s4646 = sld [smem:[#allocation3 + $0x48f]]
        %v4647 = vstv %s4646
        %v4648 = vmul.f32 %v4647, %v4637
        %v4650 = vrot.slane %v4648, 6
        %v4651 = vrot.slane %v4650, 4
        %v4653 = vadd.f32 %v4563, %v4651
        %s4654 = sld [smem:[#allocation3 + $0x50f]]
        %v4655 = vstv %s4654
        %v4656 = vmul.f32 %v4655, %v4637
        %v4658 = vrot.slane %v4656, 6
        %v4659 = vrot.slane %v4658, 4
        %v4661 = vadd.f32 %v4575, %v4659
        %s4662 = sld [smem:[#allocation3 + $0x58f]]
        %v4663 = vstv %s4662
        %v4664 = vmul.f32 %v4663, %v4637
        %v4666 = vrot.slane %v4664, 6
        %v4667 = vrot.slane %v4666, 4
        %v4669 = vadd.f32 %v4587, %v4667
        %s4670 = sld [smem:[#allocation3 + $0x60f]]
        %v4671 = vstv %s4670
        %v4672 = vmul.f32 %v4671, %v4637
        %v4674 = vrot.slane %v4672, 6
        %v4675 = vrot.slane %v4674, 4
        %v4677 = vadd.f32 %v4599, %v4675
        %s4678 = sld [smem:[#allocation3 + $0x68f]]
        %v4679 = vstv %s4678
        %v4680 = vmul.f32 %v4679, %v4637
        %v4682 = vrot.slane %v4680, 6
        %v4683 = vrot.slane %v4682, 4
        %v4685 = vadd.f32 %v4611, %v4683
        %s4686 = sld [smem:[#allocation3 + $0x70f]]
        %v4687 = vstv %s4686
        %v4688 = vmul.f32 %v4687, %v4637
        %v4690 = vrot.slane %v4688, 6
        %v4691 = vrot.slane %v4690, 4
        %v4693 = vadd.f32 %v4623, %v4691
        %s4694 = sld [smem:[#allocation3 + $0x78f]]
        %v4695 = vstv %s4694
        %v4696 = vmul.f32 %v4695, %v4637
        %v4698 = vrot.slane %v4696, 6
        %v4699 = vrot.slane %v4698, 4
        %v4701 = vadd.f32 %v4635, %v4699
        %s4702 = sld [smem:[#allocation3 + $0x410]]
        %v4703 = vstv %s4702
        %v4704 = vmul.f32 %v4703, %v4637
        %v4706 = vrot.slane %v4704, 6
        %v4707 = vrot.slane %v4706, 4
        %4708 = vrot.lane.b32.xlu0 %v4707, 127
        %v4709 = vpop.permute.xlu0 %4708
        %v4710 = vrot.slane %v4709, 4
        %v4711 = vsel %vm481, %v4709, %v4710
        %v4713 = vadd.f32 %v4645, %v4711
        %s4714 = sld [smem:[#allocation3 + $0x490]]
        %v4715 = vstv %s4714
        %v4716 = vmul.f32 %v4715, %v4637
        %v4718 = vrot.slane %v4716, 6
        %v4719 = vrot.slane %v4718, 4
        %4720 = vrot.lane.b32.xlu0 %v4719, 127
        %v4721 = vpop.permute.xlu0 %4720
        %v4722 = vrot.slane %v4721, 4
        %v4723 = vsel %vm481, %v4721, %v4722
        %v4725 = vadd.f32 %v4653, %v4723
        %s4726 = sld [smem:[#allocation3 + $0x510]]
        %v4727 = vstv %s4726
        %v4728 = vmul.f32 %v4727, %v4637
        %v4730 = vrot.slane %v4728, 6
        %v4731 = vrot.slane %v4730, 4
        %4732 = vrot.lane.b32.xlu0 %v4731, 127
        %v4733 = vpop.permute.xlu0 %4732
        %v4734 = vrot.slane %v4733, 4
        %v4735 = vsel %vm481, %v4733, %v4734
        %v4737 = vadd.f32 %v4661, %v4735
        %s4738 = sld [smem:[#allocation3 + $0x590]]
        %v4739 = vstv %s4738
        %v4740 = vmul.f32 %v4739, %v4637
        %v4742 = vrot.slane %v4740, 6
        %v4743 = vrot.slane %v4742, 4
        %4744 = vrot.lane.b32.xlu0 %v4743, 127
        %v4745 = vpop.permute.xlu0 %4744
        %v4746 = vrot.slane %v4745, 4
        %v4747 = vsel %vm481, %v4745, %v4746
        %v4749 = vadd.f32 %v4669, %v4747
        %s4750 = sld [smem:[#allocation3 + $0x610]]
        %v4751 = vstv %s4750
        %v4752 = vmul.f32 %v4751, %v4637
        %v4754 = vrot.slane %v4752, 6
        %v4755 = vrot.slane %v4754, 4
        %4756 = vrot.lane.b32.xlu0 %v4755, 127
        %v4757 = vpop.permute.xlu0 %4756
        %v4758 = vrot.slane %v4757, 4
        %v4759 = vsel %vm481, %v4757, %v4758
        %v4761 = vadd.f32 %v4677, %v4759
        %s4762 = sld [smem:[#allocation3 + $0x690]]
        %v4763 = vstv %s4762
        %v4764 = vmul.f32 %v4763, %v4637
        %v4766 = vrot.slane %v4764, 6
        %v4767 = vrot.slane %v4766, 4
        %4768 = vrot.lane.b32.xlu0 %v4767, 127
        %v4769 = vpop.permute.xlu0 %4768
        %v4770 = vrot.slane %v4769, 4
        %v4771 = vsel %vm481, %v4769, %v4770
        %v4773 = vadd.f32 %v4685, %v4771
        %s4774 = sld [smem:[#allocation3 + $0x710]]
        %v4775 = vstv %s4774
        %v4776 = vmul.f32 %v4775, %v4637
        %v4778 = vrot.slane %v4776, 6
        %v4779 = vrot.slane %v4778, 4
        %4780 = vrot.lane.b32.xlu0 %v4779, 127
        %v4781 = vpop.permute.xlu0 %4780
        %v4782 = vrot.slane %v4781, 4
        %v4783 = vsel %vm481, %v4781, %v4782
        %v4785 = vadd.f32 %v4693, %v4783
        %s4786 = sld [smem:[#allocation3 + $0x790]]
        %v4787 = vstv %s4786
        %v4788 = vmul.f32 %v4787, %v4637
        %v4790 = vrot.slane %v4788, 6
        %v4791 = vrot.slane %v4790, 4
        %4792 = vrot.lane.b32.xlu0 %v4791, 127
        %v4793 = vpop.permute.xlu0 %4792
        %v4794 = vrot.slane %v4793, 4
        %v4795 = vsel %vm481, %v4793, %v4794
        %v4797 = vadd.f32 %v4701, %v4795
        %s4798 = sld [smem:[#allocation3 + $0x411]]
        %v4799 = vstv %s4798
        %v4800 = vmul.f32 %v4799, %v4637
        %v4802 = vrot.slane %v4800, 6
        %v4803 = vrot.slane %v4802, 4
        %4804 = vrot.lane.b32.xlu0 %v4803, 126
        %v4805 = vpop.permute.xlu0 %4804
        %v4806 = vrot.slane %v4805, 4
        %v4807 = vsel %vm562, %v4805, %v4806
        %v4809 = vadd.f32 %v4713, %v4807
        %s4810 = sld [smem:[#allocation3 + $0x491]]
        %v4811 = vstv %s4810
        %v4812 = vmul.f32 %v4811, %v4637
        %v4814 = vrot.slane %v4812, 6
        %v4815 = vrot.slane %v4814, 4
        %4816 = vrot.lane.b32.xlu0 %v4815, 126
        %v4817 = vpop.permute.xlu0 %4816
        %v4818 = vrot.slane %v4817, 4
        %v4819 = vsel %vm562, %v4817, %v4818
        %v4821 = vadd.f32 %v4725, %v4819
        %s4822 = sld [smem:[#allocation3 + $0x511]]
        %v4823 = vstv %s4822
        %v4824 = vmul.f32 %v4823, %v4637
        %v4826 = vrot.slane %v4824, 6
        %v4827 = vrot.slane %v4826, 4
        %4828 = vrot.lane.b32.xlu0 %v4827, 126
        %v4829 = vpop.permute.xlu0 %4828
        %v4830 = vrot.slane %v4829, 4
        %v4831 = vsel %vm562, %v4829, %v4830
        %v4833 = vadd.f32 %v4737, %v4831
        %s4834 = sld [smem:[#allocation3 + $0x591]]
        %v4835 = vstv %s4834
        %v4836 = vmul.f32 %v4835, %v4637
        %v4838 = vrot.slane %v4836, 6
        %v4839 = vrot.slane %v4838, 4
        %4840 = vrot.lane.b32.xlu0 %v4839, 126
        %v4841 = vpop.permute.xlu0 %4840
        %v4842 = vrot.slane %v4841, 4
        %v4843 = vsel %vm562, %v4841, %v4842
        %v4845 = vadd.f32 %v4749, %v4843
        %s4846 = sld [smem:[#allocation3 + $0x611]]
        %v4847 = vstv %s4846
        %v4848 = vmul.f32 %v4847, %v4637
        %v4850 = vrot.slane %v4848, 6
        %v4851 = vrot.slane %v4850, 4
        %4852 = vrot.lane.b32.xlu0 %v4851, 126
        %v4853 = vpop.permute.xlu0 %4852
        %v4854 = vrot.slane %v4853, 4
        %v4855 = vsel %vm562, %v4853, %v4854
        %v4857 = vadd.f32 %v4761, %v4855
        %s4858 = sld [smem:[#allocation3 + $0x691]]
        %v4859 = vstv %s4858
        %v4860 = vmul.f32 %v4859, %v4637
        %v4862 = vrot.slane %v4860, 6
        %v4863 = vrot.slane %v4862, 4
        %4864 = vrot.lane.b32.xlu0 %v4863, 126
        %v4865 = vpop.permute.xlu0 %4864
        %v4866 = vrot.slane %v4865, 4
        %v4867 = vsel %vm562, %v4865, %v4866
        %v4869 = vadd.f32 %v4773, %v4867
        %s4870 = sld [smem:[#allocation3 + $0x711]]
        %v4871 = vstv %s4870
        %v4872 = vmul.f32 %v4871, %v4637
        %v4874 = vrot.slane %v4872, 6
        %v4875 = vrot.slane %v4874, 4
        %4876 = vrot.lane.b32.xlu0 %v4875, 126
        %v4877 = vpop.permute.xlu0 %4876
        %v4878 = vrot.slane %v4877, 4
        %v4879 = vsel %vm562, %v4877, %v4878
        %v4881 = vadd.f32 %v4785, %v4879
        %s4882 = sld [smem:[#allocation3 + $0x791]]
        %v4883 = vstv %s4882
        %v4884 = vmul.f32 %v4883, %v4637
        %v4886 = vrot.slane %v4884, 6
        %v4887 = vrot.slane %v4886, 4
        %4888 = vrot.lane.b32.xlu0 %v4887, 126
        %v4889 = vpop.permute.xlu0 %4888
        %v4890 = vrot.slane %v4889, 4
        %v4891 = vsel %vm562, %v4889, %v4890
        %v4893 = vadd.f32 %v4797, %v4891
        %v4894 = vld [vmem:[%s1863] sm:$0x5]
        %v4895 = vunpack.c.l.bf16 %v4894
        %s4896 = sld [smem:[#allocation3 + $0x412]]
        %v4897 = vstv %s4896
        %v4898 = vmul.f32 %v4897, %v4895
        %v4899 = vadd.f32 %v4809, %v4898
        %s4900 = sld [smem:[#allocation3 + $0x492]]
        %v4901 = vstv %s4900
        %v4902 = vmul.f32 %v4901, %v4895
        %v4903 = vadd.f32 %v4821, %v4902
        %s4904 = sld [smem:[#allocation3 + $0x512]]
        %v4905 = vstv %s4904
        %v4906 = vmul.f32 %v4905, %v4895
        %v4907 = vadd.f32 %v4833, %v4906
        %s4908 = sld [smem:[#allocation3 + $0x592]]
        %v4909 = vstv %s4908
        %v4910 = vmul.f32 %v4909, %v4895
        %v4911 = vadd.f32 %v4845, %v4910
        %s4912 = sld [smem:[#allocation3 + $0x612]]
        %v4913 = vstv %s4912
        %v4914 = vmul.f32 %v4913, %v4895
        %v4915 = vadd.f32 %v4857, %v4914
        %s4916 = sld [smem:[#allocation3 + $0x692]]
        %v4917 = vstv %s4916
        %v4918 = vmul.f32 %v4917, %v4895
        %v4919 = vadd.f32 %v4869, %v4918
        %s4920 = sld [smem:[#allocation3 + $0x712]]
        %v4921 = vstv %s4920
        %v4922 = vmul.f32 %v4921, %v4895
        %v4923 = vadd.f32 %v4881, %v4922
        %s4924 = sld [smem:[#allocation3 + $0x792]]
        %v4925 = vstv %s4924
        %v4926 = vmul.f32 %v4925, %v4895
        %v4927 = vadd.f32 %v4893, %v4926
        %s4928 = sld [smem:[#allocation3 + $0x413]]
        %v4929 = vstv %s4928
        %v4930 = vmul.f32 %v4929, %v4895
        %4932 = vrot.lane.b32.xlu0 %v4930, 127
        %v4933 = vpop.permute.xlu0 %4932
        %v4934 = vrot.slane %v4933, 4
        %v4935 = vsel %vm481, %v4933, %v4934
        %v4937 = vadd.f32 %v4899, %v4935
        %s4938 = sld [smem:[#allocation3 + $0x493]]
        %v4939 = vstv %s4938
        %v4940 = vmul.f32 %v4939, %v4895
        %4942 = vrot.lane.b32.xlu0 %v4940, 127
        %v4943 = vpop.permute.xlu0 %4942
        %v4944 = vrot.slane %v4943, 4
        %v4945 = vsel %vm481, %v4943, %v4944
        %v4947 = vadd.f32 %v4903, %v4945
        %s4948 = sld [smem:[#allocation3 + $0x513]]
        %v4949 = vstv %s4948
        %v4950 = vmul.f32 %v4949, %v4895
        %4952 = vrot.lane.b32.xlu0 %v4950, 127
        %v4953 = vpop.permute.xlu0 %4952
        %v4954 = vrot.slane %v4953, 4
        %v4955 = vsel %vm481, %v4953, %v4954
        %v4957 = vadd.f32 %v4907, %v4955
        %s4958 = sld [smem:[#allocation3 + $0x593]]
        %v4959 = vstv %s4958
        %v4960 = vmul.f32 %v4959, %v4895
        %4962 = vrot.lane.b32.xlu0 %v4960, 127
        %v4963 = vpop.permute.xlu0 %4962
        %v4964 = vrot.slane %v4963, 4
        %v4965 = vsel %vm481, %v4963, %v4964
        %v4967 = vadd.f32 %v4911, %v4965
        %s4968 = sld [smem:[#allocation3 + $0x613]]
        %v4969 = vstv %s4968
        %v4970 = vmul.f32 %v4969, %v4895
        %4972 = vrot.lane.b32.xlu0 %v4970, 127
        %v4973 = vpop.permute.xlu0 %4972
        %v4974 = vrot.slane %v4973, 4
        %v4975 = vsel %vm481, %v4973, %v4974
        %v4977 = vadd.f32 %v4915, %v4975
        %s4978 = sld [smem:[#allocation3 + $0x693]]
        %v4979 = vstv %s4978
        %v4980 = vmul.f32 %v4979, %v4895
        %4982 = vrot.lane.b32.xlu0 %v4980, 127
        %v4983 = vpop.permute.xlu0 %4982
        %v4984 = vrot.slane %v4983, 4
        %v4985 = vsel %vm481, %v4983, %v4984
        %v4987 = vadd.f32 %v4919, %v4985
        %s4988 = sld [smem:[#allocation3 + $0x713]]
        %v4989 = vstv %s4988
        %v4990 = vmul.f32 %v4989, %v4895
        %4992 = vrot.lane.b32.xlu0 %v4990, 127
        %v4993 = vpop.permute.xlu0 %4992
        %v4994 = vrot.slane %v4993, 4
        %v4995 = vsel %vm481, %v4993, %v4994
        %v4997 = vadd.f32 %v4923, %v4995
        %s4998 = sld [smem:[#allocation3 + $0x793]]
        %v4999 = vstv %s4998
        %v5000 = vmul.f32 %v4999, %v4895
        %5002 = vrot.lane.b32.xlu0 %v5000, 127
        %v5003 = vpop.permute.xlu0 %5002
        %v5004 = vrot.slane %v5003, 4
        %v5005 = vsel %vm481, %v5003, %v5004
        %v5007 = vadd.f32 %v4927, %v5005
        %s5008 = sld [smem:[#allocation3 + $0x414]]
        %v5009 = vstv %s5008
        %v5010 = vmul.f32 %v5009, %v4895
        %5012 = vrot.lane.b32.xlu0 %v5010, 126
        %v5013 = vpop.permute.xlu0 %5012
        %v5014 = vrot.slane %v5013, 4
        %v5015 = vsel %vm562, %v5013, %v5014
        %v5017 = vadd.f32 %v4937, %v5015
        %s5018 = sld [smem:[#allocation3 + $0x494]]
        %v5019 = vstv %s5018
        %v5020 = vmul.f32 %v5019, %v4895
        %5022 = vrot.lane.b32.xlu0 %v5020, 126
        %v5023 = vpop.permute.xlu0 %5022
        %v5024 = vrot.slane %v5023, 4
        %v5025 = vsel %vm562, %v5023, %v5024
        %v5027 = vadd.f32 %v4947, %v5025
        %s5028 = sld [smem:[#allocation3 + $0x514]]
        %v5029 = vstv %s5028
        %v5030 = vmul.f32 %v5029, %v4895
        %5032 = vrot.lane.b32.xlu0 %v5030, 126
        %v5033 = vpop.permute.xlu0 %5032
        %v5034 = vrot.slane %v5033, 4
        %v5035 = vsel %vm562, %v5033, %v5034
        %v5037 = vadd.f32 %v4957, %v5035
        %s5038 = sld [smem:[#allocation3 + $0x594]]
        %v5039 = vstv %s5038
        %v5040 = vmul.f32 %v5039, %v4895
        %5042 = vrot.lane.b32.xlu0 %v5040, 126
        %v5043 = vpop.permute.xlu0 %5042
        %v5044 = vrot.slane %v5043, 4
        %v5045 = vsel %vm562, %v5043, %v5044
        %v5047 = vadd.f32 %v4967, %v5045
        %s5048 = sld [smem:[#allocation3 + $0x614]]
        %v5049 = vstv %s5048
        %v5050 = vmul.f32 %v5049, %v4895
        %5052 = vrot.lane.b32.xlu0 %v5050, 126
        %v5053 = vpop.permute.xlu0 %5052
        %v5054 = vrot.slane %v5053, 4
        %v5055 = vsel %vm562, %v5053, %v5054
        %v5057 = vadd.f32 %v4977, %v5055
        %s5058 = sld [smem:[#allocation3 + $0x694]]
        %v5059 = vstv %s5058
        %v5060 = vmul.f32 %v5059, %v4895
        %5062 = vrot.lane.b32.xlu0 %v5060, 126
        %v5063 = vpop.permute.xlu0 %5062
        %v5064 = vrot.slane %v5063, 4
        %v5065 = vsel %vm562, %v5063, %v5064
        %v5067 = vadd.f32 %v4987, %v5065
        %s5068 = sld [smem:[#allocation3 + $0x714]]
        %v5069 = vstv %s5068
        %v5070 = vmul.f32 %v5069, %v4895
        %5072 = vrot.lane.b32.xlu0 %v5070, 126
        %v5073 = vpop.permute.xlu0 %5072
        %v5074 = vrot.slane %v5073, 4
        %v5075 = vsel %vm562, %v5073, %v5074
        %v5077 = vadd.f32 %v4997, %v5075
        %s5078 = sld [smem:[#allocation3 + $0x794]]
        %v5079 = vstv %s5078
        %v5080 = vmul.f32 %v5079, %v4895
        %5082 = vrot.lane.b32.xlu0 %v5080, 126
        %v5083 = vpop.permute.xlu0 %5082
        %v5084 = vrot.slane %v5083, 4
        %v5085 = vsel %vm562, %v5083, %v5084
        %v5087 = vadd.f32 %v5007, %v5085
        %v5088 = vld [vmem:[%s1863] sm:$0xf]
        %v5089 = vunpack.c.l.bf16 %v5088
        %s5090 = sld [smem:[#allocation3 + $0x415]]
        %v5091 = vstv %s5090
        %v5092 = vmul.f32 %v5091, %v5089
        %v5094 = vrot.slane %v5092, 5
        %v5095 = vrot.slane %v5094, 4
        %v5097 = vadd.f32 %v5017, %v5095
        %s5098 = sld [smem:[#allocation3 + $0x495]]
        %v5099 = vstv %s5098
        %v5100 = vmul.f32 %v5099, %v5089
        %v5102 = vrot.slane %v5100, 5
        %v5103 = vrot.slane %v5102, 4
        %v5105 = vadd.f32 %v5027, %v5103
        %s5106 = sld [smem:[#allocation3 + $0x515]]
        %v5107 = vstv %s5106
        %v5108 = vmul.f32 %v5107, %v5089
        %v5110 = vrot.slane %v5108, 5
        %v5111 = vrot.slane %v5110, 4
        %v5113 = vadd.f32 %v5037, %v5111
        %s5114 = sld [smem:[#allocation3 + $0x595]]
        %v5115 = vstv %s5114
        %v5116 = vmul.f32 %v5115, %v5089
        %v5118 = vrot.slane %v5116, 5
        %v5119 = vrot.slane %v5118, 4
        %v5121 = vadd.f32 %v5047, %v5119
        %s5122 = sld [smem:[#allocation3 + $0x615]]
        %v5123 = vstv %s5122
        %v5124 = vmul.f32 %v5123, %v5089
        %v5126 = vrot.slane %v5124, 5
        %v5127 = vrot.slane %v5126, 4
        %v5129 = vadd.f32 %v5057, %v5127
        %s5130 = sld [smem:[#allocation3 + $0x695]]
        %v5131 = vstv %s5130
        %v5132 = vmul.f32 %v5131, %v5089
        %v5134 = vrot.slane %v5132, 5
        %v5135 = vrot.slane %v5134, 4
        %v5137 = vadd.f32 %v5067, %v5135
        %s5138 = sld [smem:[#allocation3 + $0x715]]
        %v5139 = vstv %s5138
        %v5140 = vmul.f32 %v5139, %v5089
        %v5142 = vrot.slane %v5140, 5
        %v5143 = vrot.slane %v5142, 4
        %v5145 = vadd.f32 %v5077, %v5143
        %s5146 = sld [smem:[#allocation3 + $0x795]]
        %v5147 = vstv %s5146
        %v5148 = vmul.f32 %v5147, %v5089
        %v5150 = vrot.slane %v5148, 5
        %v5151 = vrot.slane %v5150, 4
        %v5153 = vadd.f32 %v5087, %v5151
        %s5154 = sld [smem:[#allocation3 + $0x416]]
        %v5155 = vstv %s5154
        %v5156 = vmul.f32 %v5155, %v5089
        %v5158 = vrot.slane %v5156, 5
        %v5159 = vrot.slane %v5158, 4
        %5160 = vrot.lane.b32.xlu0 %v5159, 127
        %v5161 = vpop.permute.xlu0 %5160
        %v5162 = vrot.slane %v5161, 4
        %v5163 = vsel %vm481, %v5161, %v5162
        %v5165 = vadd.f32 %v5097, %v5163
        %s5166 = sld [smem:[#allocation3 + $0x496]]
        %v5167 = vstv %s5166
        %v5168 = vmul.f32 %v5167, %v5089
        %v5170 = vrot.slane %v5168, 5
        %v5171 = vrot.slane %v5170, 4
        %5172 = vrot.lane.b32.xlu0 %v5171, 127
        %v5173 = vpop.permute.xlu0 %5172
        %v5174 = vrot.slane %v5173, 4
        %v5175 = vsel %vm481, %v5173, %v5174
        %v5177 = vadd.f32 %v5105, %v5175
        %s5178 = sld [smem:[#allocation3 + $0x516]]
        %v5179 = vstv %s5178
        %v5180 = vmul.f32 %v5179, %v5089
        %v5182 = vrot.slane %v5180, 5
        %v5183 = vrot.slane %v5182, 4
        %5184 = vrot.lane.b32.xlu0 %v5183, 127
        %v5185 = vpop.permute.xlu0 %5184
        %v5186 = vrot.slane %v5185, 4
        %v5187 = vsel %vm481, %v5185, %v5186
        %v5189 = vadd.f32 %v5113, %v5187
        %s5190 = sld [smem:[#allocation3 + $0x596]]
        %v5191 = vstv %s5190
        %v5192 = vmul.f32 %v5191, %v5089
        %v5194 = vrot.slane %v5192, 5
        %v5195 = vrot.slane %v5194, 4
        %5196 = vrot.lane.b32.xlu0 %v5195, 127
        %v5197 = vpop.permute.xlu0 %5196
        %v5198 = vrot.slane %v5197, 4
        %v5199 = vsel %vm481, %v5197, %v5198
        %v5201 = vadd.f32 %v5121, %v5199
        %s5202 = sld [smem:[#allocation3 + $0x616]]
        %v5203 = vstv %s5202
        %v5204 = vmul.f32 %v5203, %v5089
        %v5206 = vrot.slane %v5204, 5
        %v5207 = vrot.slane %v5206, 4
        %5208 = vrot.lane.b32.xlu0 %v5207, 127
        %v5209 = vpop.permute.xlu0 %5208
        %v5210 = vrot.slane %v5209, 4
        %v5211 = vsel %vm481, %v5209, %v5210
        %v5213 = vadd.f32 %v5129, %v5211
        %s5214 = sld [smem:[#allocation3 + $0x696]]
        %v5215 = vstv %s5214
        %v5216 = vmul.f32 %v5215, %v5089
        %v5218 = vrot.slane %v5216, 5
        %v5219 = vrot.slane %v5218, 4
        %5220 = vrot.lane.b32.xlu0 %v5219, 127
        %v5221 = vpop.permute.xlu0 %5220
        %v5222 = vrot.slane %v5221, 4
        %v5223 = vsel %vm481, %v5221, %v5222
        %v5225 = vadd.f32 %v5137, %v5223
        %s5226 = sld [smem:[#allocation3 + $0x716]]
        %v5227 = vstv %s5226
        %v5228 = vmul.f32 %v5227, %v5089
        %v5230 = vrot.slane %v5228, 5
        %v5231 = vrot.slane %v5230, 4
        %5232 = vrot.lane.b32.xlu0 %v5231, 127
        %v5233 = vpop.permute.xlu0 %5232
        %v5234 = vrot.slane %v5233, 4
        %v5235 = vsel %vm481, %v5233, %v5234
        %v5237 = vadd.f32 %v5145, %v5235
        %s5238 = sld [smem:[#allocation3 + $0x796]]
        %v5239 = vstv %s5238
        %v5240 = vmul.f32 %v5239, %v5089
        %v5242 = vrot.slane %v5240, 5
        %v5243 = vrot.slane %v5242, 4
        %5244 = vrot.lane.b32.xlu0 %v5243, 127
        %v5245 = vpop.permute.xlu0 %5244
        %v5246 = vrot.slane %v5245, 4
        %v5247 = vsel %vm481, %v5245, %v5246
        %v5249 = vadd.f32 %v5153, %v5247
        %s5250 = sld [smem:[#allocation3 + $0x417]]
        %v5251 = vstv %s5250
        %v5252 = vmul.f32 %v5251, %v5089
        %v5254 = vrot.slane %v5252, 5
        %v5255 = vrot.slane %v5254, 4
        %5256 = vrot.lane.b32.xlu0 %v5255, 126
        %v5257 = vpop.permute.xlu0 %5256
        %v5258 = vrot.slane %v5257, 4
        %v5259 = vsel %vm562, %v5257, %v5258
        %v5261 = vadd.f32 %v5165, %v5259
        %s5262 = sld [smem:[#allocation3 + $0x497]]
        %v5263 = vstv %s5262
        %v5264 = vmul.f32 %v5263, %v5089
        %v5266 = vrot.slane %v5264, 5
        %v5267 = vrot.slane %v5266, 4
        %5268 = vrot.lane.b32.xlu0 %v5267, 126
        %v5269 = vpop.permute.xlu0 %5268
        %v5270 = vrot.slane %v5269, 4
        %v5271 = vsel %vm562, %v5269, %v5270
        %v5273 = vadd.f32 %v5177, %v5271
        %s5274 = sld [smem:[#allocation3 + $0x517]]
        %v5275 = vstv %s5274
        %v5276 = vmul.f32 %v5275, %v5089
        %v5278 = vrot.slane %v5276, 5
        %v5279 = vrot.slane %v5278, 4
        %5280 = vrot.lane.b32.xlu0 %v5279, 126
        %v5281 = vpop.permute.xlu0 %5280
        %v5282 = vrot.slane %v5281, 4
        %v5283 = vsel %vm562, %v5281, %v5282
        %v5285 = vadd.f32 %v5189, %v5283
        %s5286 = sld [smem:[#allocation3 + $0x597]]
        %v5287 = vstv %s5286
        %v5288 = vmul.f32 %v5287, %v5089
        %v5290 = vrot.slane %v5288, 5
        %v5291 = vrot.slane %v5290, 4
        %5292 = vrot.lane.b32.xlu0 %v5291, 126
        %v5293 = vpop.permute.xlu0 %5292
        %v5294 = vrot.slane %v5293, 4
        %v5295 = vsel %vm562, %v5293, %v5294
        %v5297 = vadd.f32 %v5201, %v5295
        %s5298 = sld [smem:[#allocation3 + $0x617]]
        %v5299 = vstv %s5298
        %v5300 = vmul.f32 %v5299, %v5089
        %v5302 = vrot.slane %v5300, 5
        %v5303 = vrot.slane %v5302, 4
        %5304 = vrot.lane.b32.xlu0 %v5303, 126
        %v5305 = vpop.permute.xlu0 %5304
        %v5306 = vrot.slane %v5305, 4
        %v5307 = vsel %vm562, %v5305, %v5306
        %v5309 = vadd.f32 %v5213, %v5307
        %s5310 = sld [smem:[#allocation3 + $0x697]]
        %v5311 = vstv %s5310
        %v5312 = vmul.f32 %v5311, %v5089
        %v5314 = vrot.slane %v5312, 5
        %v5315 = vrot.slane %v5314, 4
        %5316 = vrot.lane.b32.xlu0 %v5315, 126
        %v5317 = vpop.permute.xlu0 %5316
        %v5318 = vrot.slane %v5317, 4
        %v5319 = vsel %vm562, %v5317, %v5318
        %v5321 = vadd.f32 %v5225, %v5319
        %s5322 = sld [smem:[#allocation3 + $0x717]]
        %v5323 = vstv %s5322
        %v5324 = vmul.f32 %v5323, %v5089
        %v5326 = vrot.slane %v5324, 5
        %v5327 = vrot.slane %v5326, 4
        %5328 = vrot.lane.b32.xlu0 %v5327, 126
        %v5329 = vpop.permute.xlu0 %5328
        %v5330 = vrot.slane %v5329, 4
        %v5331 = vsel %vm562, %v5329, %v5330
        %v5333 = vadd.f32 %v5237, %v5331
        %s5334 = sld [smem:[#allocation3 + $0x797]]
        %v5335 = vstv %s5334
        %v5336 = vmul.f32 %v5335, %v5089
        %v5338 = vrot.slane %v5336, 5
        %v5339 = vrot.slane %v5338, 4
        %5340 = vrot.lane.b32.xlu0 %v5339, 126
        %v5341 = vpop.permute.xlu0 %5340
        %v5342 = vrot.slane %v5341, 4
        %v5343 = vsel %vm562, %v5341, %v5342
        %v5345 = vadd.f32 %v5249, %v5343
        %v5346 = vld [vmem:[%s1863] sm:$0xa]
        %v5347 = vunpack.c.l.bf16 %v5346
        %s5348 = sld [smem:[#allocation3 + $0x418]]
        %v5349 = vstv %s5348
        %v5350 = vmul.f32 %v5349, %v5347
        %v5352 = vrot.slane %v5350, 6
        %v5353 = vrot.slane %v5352, 4
        %v5355 = vadd.f32 %v5261, %v5353
        %s5356 = sld [smem:[#allocation3 + $0x498]]
        %v5357 = vstv %s5356
        %v5358 = vmul.f32 %v5357, %v5347
        %v5360 = vrot.slane %v5358, 6
        %v5361 = vrot.slane %v5360, 4
        %v5363 = vadd.f32 %v5273, %v5361
        %s5364 = sld [smem:[#allocation3 + $0x518]]
        %v5365 = vstv %s5364
        %v5366 = vmul.f32 %v5365, %v5347
        %v5368 = vrot.slane %v5366, 6
        %v5369 = vrot.slane %v5368, 4
        %v5371 = vadd.f32 %v5285, %v5369
        %s5372 = sld [smem:[#allocation3 + $0x598]]
        %v5373 = vstv %s5372
        %v5374 = vmul.f32 %v5373, %v5347
        %v5376 = vrot.slane %v5374, 6
        %v5377 = vrot.slane %v5376, 4
        %v5379 = vadd.f32 %v5297, %v5377
        %s5380 = sld [smem:[#allocation3 + $0x618]]
        %v5381 = vstv %s5380
        %v5382 = vmul.f32 %v5381, %v5347
        %v5384 = vrot.slane %v5382, 6
        %v5385 = vrot.slane %v5384, 4
        %v5387 = vadd.f32 %v5309, %v5385
        %s5388 = sld [smem:[#allocation3 + $0x698]]
        %v5389 = vstv %s5388
        %v5390 = vmul.f32 %v5389, %v5347
        %v5392 = vrot.slane %v5390, 6
        %v5393 = vrot.slane %v5392, 4
        %v5395 = vadd.f32 %v5321, %v5393
        %s5396 = sld [smem:[#allocation3 + $0x718]]
        %v5397 = vstv %s5396
        %v5398 = vmul.f32 %v5397, %v5347
        %v5400 = vrot.slane %v5398, 6
        %v5401 = vrot.slane %v5400, 4
        %v5403 = vadd.f32 %v5333, %v5401
        %s5404 = sld [smem:[#allocation3 + $0x798]]
        %v5405 = vstv %s5404
        %v5406 = vmul.f32 %v5405, %v5347
        %v5408 = vrot.slane %v5406, 6
        %v5409 = vrot.slane %v5408, 4
        %v5411 = vadd.f32 %v5345, %v5409
        %s5412 = sld [smem:[#allocation3 + $0x419]]
        %v5413 = vstv %s5412
        %v5414 = vmul.f32 %v5413, %v5347
        %v5416 = vrot.slane %v5414, 6
        %v5417 = vrot.slane %v5416, 4
        %5418 = vrot.lane.b32.xlu0 %v5417, 127
        %v5419 = vpop.permute.xlu0 %5418
        %v5420 = vrot.slane %v5419, 4
        %v5421 = vsel %vm481, %v5419, %v5420
        %v5423 = vadd.f32 %v5355, %v5421
        %s5424 = sld [smem:[#allocation3 + $0x499]]
        %v5425 = vstv %s5424
        %v5426 = vmul.f32 %v5425, %v5347
        %v5428 = vrot.slane %v5426, 6
        %v5429 = vrot.slane %v5428, 4
        %5430 = vrot.lane.b32.xlu0 %v5429, 127
        %v5431 = vpop.permute.xlu0 %5430
        %v5432 = vrot.slane %v5431, 4
        %v5433 = vsel %vm481, %v5431, %v5432
        %v5435 = vadd.f32 %v5363, %v5433
        %s5436 = sld [smem:[#allocation3 + $0x519]]
        %v5437 = vstv %s5436
        %v5438 = vmul.f32 %v5437, %v5347
        %v5440 = vrot.slane %v5438, 6
        %v5441 = vrot.slane %v5440, 4
        %5442 = vrot.lane.b32.xlu0 %v5441, 127
        %v5443 = vpop.permute.xlu0 %5442
        %v5444 = vrot.slane %v5443, 4
        %v5445 = vsel %vm481, %v5443, %v5444
        %v5447 = vadd.f32 %v5371, %v5445
        %s5448 = sld [smem:[#allocation3 + $0x599]]
        %v5449 = vstv %s5448
        %v5450 = vmul.f32 %v5449, %v5347
        %v5452 = vrot.slane %v5450, 6
        %v5453 = vrot.slane %v5452, 4
        %5454 = vrot.lane.b32.xlu0 %v5453, 127
        %v5455 = vpop.permute.xlu0 %5454
        %v5456 = vrot.slane %v5455, 4
        %v5457 = vsel %vm481, %v5455, %v5456
        %v5459 = vadd.f32 %v5379, %v5457
        %s5460 = sld [smem:[#allocation3 + $0x619]]
        %v5461 = vstv %s5460
        %v5462 = vmul.f32 %v5461, %v5347
        %v5464 = vrot.slane %v5462, 6
        %v5465 = vrot.slane %v5464, 4
        %5466 = vrot.lane.b32.xlu0 %v5465, 127
        %v5467 = vpop.permute.xlu0 %5466
        %v5468 = vrot.slane %v5467, 4
        %v5469 = vsel %vm481, %v5467, %v5468
        %v5471 = vadd.f32 %v5387, %v5469
        %s5472 = sld [smem:[#allocation3 + $0x699]]
        %v5473 = vstv %s5472
        %v5474 = vmul.f32 %v5473, %v5347
        %v5476 = vrot.slane %v5474, 6
        %v5477 = vrot.slane %v5476, 4
        %5478 = vrot.lane.b32.xlu0 %v5477, 127
        %v5479 = vpop.permute.xlu0 %5478
        %v5480 = vrot.slane %v5479, 4
        %v5481 = vsel %vm481, %v5479, %v5480
        %v5483 = vadd.f32 %v5395, %v5481
        %s5484 = sld [smem:[#allocation3 + $0x719]]
        %v5485 = vstv %s5484
        %v5486 = vmul.f32 %v5485, %v5347
        %v5488 = vrot.slane %v5486, 6
        %v5489 = vrot.slane %v5488, 4
        %5490 = vrot.lane.b32.xlu0 %v5489, 127
        %v5491 = vpop.permute.xlu0 %5490
        %v5492 = vrot.slane %v5491, 4
        %v5493 = vsel %vm481, %v5491, %v5492
        %v5495 = vadd.f32 %v5403, %v5493
        %s5496 = sld [smem:[#allocation3 + $0x799]]
        %v5497 = vstv %s5496
        %v5498 = vmul.f32 %v5497, %v5347
        %v5500 = vrot.slane %v5498, 6
        %v5501 = vrot.slane %v5500, 4
        %5502 = vrot.lane.b32.xlu0 %v5501, 127
        %v5503 = vpop.permute.xlu0 %5502
        %v5504 = vrot.slane %v5503, 4
        %v5505 = vsel %vm481, %v5503, %v5504
        %v5507 = vadd.f32 %v5411, %v5505
        %s5508 = sld [smem:[#allocation3 + $0x41a]]
        %v5509 = vstv %s5508
        %v5510 = vmul.f32 %v5509, %v5347
        %v5512 = vrot.slane %v5510, 6
        %v5513 = vrot.slane %v5512, 4
        %5514 = vrot.lane.b32.xlu0 %v5513, 126
        %v5515 = vpop.permute.xlu0 %5514
        %v5516 = vrot.slane %v5515, 4
        %v5517 = vsel %vm562, %v5515, %v5516
        %v5519 = vadd.f32 %v5423, %v5517
        %s5520 = sld [smem:[#allocation3 + $0x49a]]
        %v5521 = vstv %s5520
        %v5522 = vmul.f32 %v5521, %v5347
        %v5524 = vrot.slane %v5522, 6
        %v5525 = vrot.slane %v5524, 4
        %5526 = vrot.lane.b32.xlu0 %v5525, 126
        %v5527 = vpop.permute.xlu0 %5526
        %v5528 = vrot.slane %v5527, 4
        %v5529 = vsel %vm562, %v5527, %v5528
        %v5531 = vadd.f32 %v5435, %v5529
        %s5532 = sld [smem:[#allocation3 + $0x51a]]
        %v5533 = vstv %s5532
        %v5534 = vmul.f32 %v5533, %v5347
        %v5536 = vrot.slane %v5534, 6
        %v5537 = vrot.slane %v5536, 4
        %5538 = vrot.lane.b32.xlu0 %v5537, 126
        %v5539 = vpop.permute.xlu0 %5538
        %v5540 = vrot.slane %v5539, 4
        %v5541 = vsel %vm562, %v5539, %v5540
        %v5543 = vadd.f32 %v5447, %v5541
        %s5544 = sld [smem:[#allocation3 + $0x59a]]
        %v5545 = vstv %s5544
        %v5546 = vmul.f32 %v5545, %v5347
        %v5548 = vrot.slane %v5546, 6
        %v5549 = vrot.slane %v5548, 4
        %5550 = vrot.lane.b32.xlu0 %v5549, 126
        %v5551 = vpop.permute.xlu0 %5550
        %v5552 = vrot.slane %v5551, 4
        %v5553 = vsel %vm562, %v5551, %v5552
        %v5555 = vadd.f32 %v5459, %v5553
        %s5556 = sld [smem:[#allocation3 + $0x61a]]
        %v5557 = vstv %s5556
        %v5558 = vmul.f32 %v5557, %v5347
        %v5560 = vrot.slane %v5558, 6
        %v5561 = vrot.slane %v5560, 4
        %5562 = vrot.lane.b32.xlu0 %v5561, 126
        %v5563 = vpop.permute.xlu0 %5562
        %v5564 = vrot.slane %v5563, 4
        %v5565 = vsel %vm562, %v5563, %v5564
        %v5567 = vadd.f32 %v5471, %v5565
        %s5568 = sld [smem:[#allocation3 + $0x69a]]
        %v5569 = vstv %s5568
        %v5570 = vmul.f32 %v5569, %v5347
        %v5572 = vrot.slane %v5570, 6
        %v5573 = vrot.slane %v5572, 4
        %5574 = vrot.lane.b32.xlu0 %v5573, 126
        %v5575 = vpop.permute.xlu0 %5574
        %v5576 = vrot.slane %v5575, 4
        %v5577 = vsel %vm562, %v5575, %v5576
        %v5579 = vadd.f32 %v5483, %v5577
        %s5580 = sld [smem:[#allocation3 + $0x71a]]
        %v5581 = vstv %s5580
        %v5582 = vmul.f32 %v5581, %v5347
        %v5584 = vrot.slane %v5582, 6
        %v5585 = vrot.slane %v5584, 4
        %5586 = vrot.lane.b32.xlu0 %v5585, 126
        %v5587 = vpop.permute.xlu0 %5586
        %v5588 = vrot.slane %v5587, 4
        %v5589 = vsel %vm562, %v5587, %v5588
        %v5591 = vadd.f32 %v5495, %v5589
        %s5592 = sld [smem:[#allocation3 + $0x79a]]
        %v5593 = vstv %s5592
        %v5594 = vmul.f32 %v5593, %v5347
        %v5596 = vrot.slane %v5594, 6
        %v5597 = vrot.slane %v5596, 4
        %5598 = vrot.lane.b32.xlu0 %v5597, 126
        %v5599 = vpop.permute.xlu0 %5598
        %v5600 = vrot.slane %v5599, 4
        %v5601 = vsel %vm562, %v5599, %v5600
        %v5603 = vadd.f32 %v5507, %v5601
        %v5604 = vld [vmem:[%s2574] sm:$0x5]
        %v5605 = vunpack.c.l.bf16 %v5604
        %s5606 = sld [smem:[#allocation3 + $0x41b]]
        %v5607 = vstv %s5606
        %v5608 = vmul.f32 %v5607, %v5605
        %v5609 = vadd.f32 %v5519, %v5608
        %s5610 = sld [smem:[#allocation3 + $0x49b]]
        %v5611 = vstv %s5610
        %v5612 = vmul.f32 %v5611, %v5605
        %v5613 = vadd.f32 %v5531, %v5612
        %s5614 = sld [smem:[#allocation3 + $0x51b]]
        %v5615 = vstv %s5614
        %v5616 = vmul.f32 %v5615, %v5605
        %v5617 = vadd.f32 %v5543, %v5616
        %s5618 = sld [smem:[#allocation3 + $0x59b]]
        %v5619 = vstv %s5618
        %v5620 = vmul.f32 %v5619, %v5605
        %v5621 = vadd.f32 %v5555, %v5620
        %s5622 = sld [smem:[#allocation3 + $0x61b]]
        %v5623 = vstv %s5622
        %v5624 = vmul.f32 %v5623, %v5605
        %v5625 = vadd.f32 %v5567, %v5624
        %s5626 = sld [smem:[#allocation3 + $0x69b]]
        %v5627 = vstv %s5626
        %v5628 = vmul.f32 %v5627, %v5605
        %v5629 = vadd.f32 %v5579, %v5628
        %s5630 = sld [smem:[#allocation3 + $0x71b]]
        %v5631 = vstv %s5630
        %v5632 = vmul.f32 %v5631, %v5605
        %v5633 = vadd.f32 %v5591, %v5632
        %s5634 = sld [smem:[#allocation3 + $0x79b]]
        %v5635 = vstv %s5634
        %v5636 = vmul.f32 %v5635, %v5605
        %v5637 = vadd.f32 %v5603, %v5636
        %s5638 = sld [smem:[#allocation3 + $0x41c]]
        %v5639 = vstv %s5638
        %v5640 = vmul.f32 %v5639, %v5605
        %5642 = vrot.lane.b32.xlu0 %v5640, 127
        %v5643 = vpop.permute.xlu0 %5642
        %v5644 = vrot.slane %v5643, 4
        %v5645 = vsel %vm481, %v5643, %v5644
        %v5647 = vadd.f32 %v5609, %v5645
        %s5648 = sld [smem:[#allocation3 + $0x49c]]
        %v5649 = vstv %s5648
        %v5650 = vmul.f32 %v5649, %v5605
        %5652 = vrot.lane.b32.xlu0 %v5650, 127
        %v5653 = vpop.permute.xlu0 %5652
        %v5654 = vrot.slane %v5653, 4
        %v5655 = vsel %vm481, %v5653, %v5654
        %v5657 = vadd.f32 %v5613, %v5655
        %s5658 = sld [smem:[#allocation3 + $0x51c]]
        %v5659 = vstv %s5658
        %v5660 = vmul.f32 %v5659, %v5605
        %5662 = vrot.lane.b32.xlu0 %v5660, 127
        %v5663 = vpop.permute.xlu0 %5662
        %v5664 = vrot.slane %v5663, 4
        %v5665 = vsel %vm481, %v5663, %v5664
        %v5667 = vadd.f32 %v5617, %v5665
        %s5668 = sld [smem:[#allocation3 + $0x59c]]
        %v5669 = vstv %s5668
        %v5670 = vmul.f32 %v5669, %v5605
        %5672 = vrot.lane.b32.xlu0 %v5670, 127
        %v5673 = vpop.permute.xlu0 %5672
        %v5674 = vrot.slane %v5673, 4
        %v5675 = vsel %vm481, %v5673, %v5674
        %v5677 = vadd.f32 %v5621, %v5675
        %s5678 = sld [smem:[#allocation3 + $0x61c]]
        %v5679 = vstv %s5678
        %v5680 = vmul.f32 %v5679, %v5605
        %5682 = vrot.lane.b32.xlu0 %v5680, 127
        %v5683 = vpop.permute.xlu0 %5682
        %v5684 = vrot.slane %v5683, 4
        %v5685 = vsel %vm481, %v5683, %v5684
        %v5687 = vadd.f32 %v5625, %v5685
        %s5688 = sld [smem:[#allocation3 + $0x69c]]
        %v5689 = vstv %s5688
        %v5690 = vmul.f32 %v5689, %v5605
        %5692 = vrot.lane.b32.xlu0 %v5690, 127
        %v5693 = vpop.permute.xlu0 %5692
        %v5694 = vrot.slane %v5693, 4
        %v5695 = vsel %vm481, %v5693, %v5694
        %v5697 = vadd.f32 %v5629, %v5695
        %s5698 = sld [smem:[#allocation3 + $0x71c]]
        %v5699 = vstv %s5698
        %v5700 = vmul.f32 %v5699, %v5605
        %5702 = vrot.lane.b32.xlu0 %v5700, 127
        %v5703 = vpop.permute.xlu0 %5702
        %v5704 = vrot.slane %v5703, 4
        %v5705 = vsel %vm481, %v5703, %v5704
        %v5707 = vadd.f32 %v5633, %v5705
        %s5708 = sld [smem:[#allocation3 + $0x79c]]
        %v5709 = vstv %s5708
        %v5710 = vmul.f32 %v5709, %v5605
        %5712 = vrot.lane.b32.xlu0 %v5710, 127
        %v5713 = vpop.permute.xlu0 %5712
        %v5714 = vrot.slane %v5713, 4
        %v5715 = vsel %vm481, %v5713, %v5714
        %v5717 = vadd.f32 %v5637, %v5715
        %s5718 = sld [smem:[#allocation3 + $0x41d]]
        %v5719 = vstv %s5718
        %v5720 = vmul.f32 %v5719, %v5605
        %5722 = vrot.lane.b32.xlu0 %v5720, 126
        %v5723 = vpop.permute.xlu0 %5722
        %v5724 = vrot.slane %v5723, 4
        %v5725 = vsel %vm562, %v5723, %v5724
        %v5727 = vadd.f32 %v5647, %v5725
        %s5728 = sld [smem:[#allocation3 + $0x49d]]
        %v5729 = vstv %s5728
        %v5730 = vmul.f32 %v5729, %v5605
        %5732 = vrot.lane.b32.xlu0 %v5730, 126
        %v5733 = vpop.permute.xlu0 %5732
        %v5734 = vrot.slane %v5733, 4
        %v5735 = vsel %vm562, %v5733, %v5734
        %v5737 = vadd.f32 %v5657, %v5735
        %s5738 = sld [smem:[#allocation3 + $0x51d]]
        %v5739 = vstv %s5738
        %v5740 = vmul.f32 %v5739, %v5605
        %5742 = vrot.lane.b32.xlu0 %v5740, 126
        %v5743 = vpop.permute.xlu0 %5742
        %v5744 = vrot.slane %v5743, 4
        %v5745 = vsel %vm562, %v5743, %v5744
        %v5747 = vadd.f32 %v5667, %v5745
        %s5748 = sld [smem:[#allocation3 + $0x59d]]
        %v5749 = vstv %s5748
        %v5750 = vmul.f32 %v5749, %v5605
        %5752 = vrot.lane.b32.xlu0 %v5750, 126
        %v5753 = vpop.permute.xlu0 %5752
        %v5754 = vrot.slane %v5753, 4
        %v5755 = vsel %vm562, %v5753, %v5754
        %v5757 = vadd.f32 %v5677, %v5755
        %s5758 = sld [smem:[#allocation3 + $0x61d]]
        %v5759 = vstv %s5758
        %v5760 = vmul.f32 %v5759, %v5605
        %5762 = vrot.lane.b32.xlu0 %v5760, 126
        %v5763 = vpop.permute.xlu0 %5762
        %v5764 = vrot.slane %v5763, 4
        %v5765 = vsel %vm562, %v5763, %v5764
        %v5767 = vadd.f32 %v5687, %v5765
        %s5768 = sld [smem:[#allocation3 + $0x69d]]
        %v5769 = vstv %s5768
        %v5770 = vmul.f32 %v5769, %v5605
        %5772 = vrot.lane.b32.xlu0 %v5770, 126
        %v5773 = vpop.permute.xlu0 %5772
        %v5774 = vrot.slane %v5773, 4
        %v5775 = vsel %vm562, %v5773, %v5774
        %v5777 = vadd.f32 %v5697, %v5775
        %s5778 = sld [smem:[#allocation3 + $0x71d]]
        %v5779 = vstv %s5778
        %v5780 = vmul.f32 %v5779, %v5605
        %5782 = vrot.lane.b32.xlu0 %v5780, 126
        %v5783 = vpop.permute.xlu0 %5782
        %v5784 = vrot.slane %v5783, 4
        %v5785 = vsel %vm562, %v5783, %v5784
        %v5787 = vadd.f32 %v5707, %v5785
        %s5788 = sld [smem:[#allocation3 + $0x79d]]
        %v5789 = vstv %s5788
        %v5790 = vmul.f32 %v5789, %v5605
        %5792 = vrot.lane.b32.xlu0 %v5790, 126
        %v5793 = vpop.permute.xlu0 %5792
        %v5794 = vrot.slane %v5793, 4
        %v5795 = vsel %vm562, %v5793, %v5794
        %v5797 = vadd.f32 %v5717, %v5795
        %v5798 = vld [vmem:[%s2574] sm:$0xf]
        %v5799 = vunpack.c.l.bf16 %v5798
        %s5800 = sld [smem:[#allocation3 + $0x41e]]
        %v5801 = vstv %s5800
        %v5802 = vmul.f32 %v5801, %v5799
        %v5804 = vrot.slane %v5802, 5
        %v5805 = vrot.slane %v5804, 4
        %v5807 = vadd.f32 %v5727, %v5805
        %s5808 = sld [smem:[#allocation3 + $0x49e]]
        %v5809 = vstv %s5808
        %v5810 = vmul.f32 %v5809, %v5799
        %v5812 = vrot.slane %v5810, 5
        %v5813 = vrot.slane %v5812, 4
        %v5815 = vadd.f32 %v5737, %v5813
        %s5816 = sld [smem:[#allocation3 + $0x51e]]
        %v5817 = vstv %s5816
        %v5818 = vmul.f32 %v5817, %v5799
        %v5820 = vrot.slane %v5818, 5
        %v5821 = vrot.slane %v5820, 4
        %v5823 = vadd.f32 %v5747, %v5821
        %s5824 = sld [smem:[#allocation3 + $0x59e]]
        %v5825 = vstv %s5824
        %v5826 = vmul.f32 %v5825, %v5799
        %v5828 = vrot.slane %v5826, 5
        %v5829 = vrot.slane %v5828, 4
        %v5831 = vadd.f32 %v5757, %v5829
        %s5832 = sld [smem:[#allocation3 + $0x61e]]
        %v5833 = vstv %s5832
        %v5834 = vmul.f32 %v5833, %v5799
        %v5836 = vrot.slane %v5834, 5
        %v5837 = vrot.slane %v5836, 4
        %v5839 = vadd.f32 %v5767, %v5837
        %s5840 = sld [smem:[#allocation3 + $0x69e]]
        %v5841 = vstv %s5840
        %v5842 = vmul.f32 %v5841, %v5799
        %v5844 = vrot.slane %v5842, 5
        %v5845 = vrot.slane %v5844, 4
        %v5847 = vadd.f32 %v5777, %v5845
        %s5848 = sld [smem:[#allocation3 + $0x71e]]
        %v5849 = vstv %s5848
        %v5850 = vmul.f32 %v5849, %v5799
        %v5852 = vrot.slane %v5850, 5
        %v5853 = vrot.slane %v5852, 4
        %v5855 = vadd.f32 %v5787, %v5853
        %s5856 = sld [smem:[#allocation3 + $0x79e]]
        %v5857 = vstv %s5856
        %v5858 = vmul.f32 %v5857, %v5799
        %v5860 = vrot.slane %v5858, 5
        %v5861 = vrot.slane %v5860, 4
        %v5863 = vadd.f32 %v5797, %v5861
        %s5864 = sld [smem:[#allocation3 + $0x41f]]
        %v5865 = vstv %s5864
        %v5866 = vmul.f32 %v5865, %v5799
        %v5868 = vrot.slane %v5866, 5
        %v5869 = vrot.slane %v5868, 4
        %5870 = vrot.lane.b32.xlu0 %v5869, 127
        %v5871 = vpop.permute.xlu0 %5870
        %v5872 = vrot.slane %v5871, 4
        %v5873 = vsel %vm481, %v5871, %v5872
        %v5875 = vadd.f32 %v5807, %v5873
        %s5876 = sld [smem:[#allocation3 + $0x49f]]
        %v5877 = vstv %s5876
        %v5878 = vmul.f32 %v5877, %v5799
        %v5880 = vrot.slane %v5878, 5
        %v5881 = vrot.slane %v5880, 4
        %5882 = vrot.lane.b32.xlu0 %v5881, 127
        %v5883 = vpop.permute.xlu0 %5882
        %v5884 = vrot.slane %v5883, 4
        %v5885 = vsel %vm481, %v5883, %v5884
        %v5887 = vadd.f32 %v5815, %v5885
        %s5888 = sld [smem:[#allocation3 + $0x51f]]
        %v5889 = vstv %s5888
        %v5890 = vmul.f32 %v5889, %v5799
        %v5892 = vrot.slane %v5890, 5
        %v5893 = vrot.slane %v5892, 4
        %5894 = vrot.lane.b32.xlu0 %v5893, 127
        %v5895 = vpop.permute.xlu0 %5894
        %v5896 = vrot.slane %v5895, 4
        %v5897 = vsel %vm481, %v5895, %v5896
        %v5899 = vadd.f32 %v5823, %v5897
        %s5900 = sld [smem:[#allocation3 + $0x59f]]
        %v5901 = vstv %s5900
        %v5902 = vmul.f32 %v5901, %v5799
        %v5904 = vrot.slane %v5902, 5
        %v5905 = vrot.slane %v5904, 4
        %5906 = vrot.lane.b32.xlu0 %v5905, 127
        %v5907 = vpop.permute.xlu0 %5906
        %v5908 = vrot.slane %v5907, 4
        %v5909 = vsel %vm481, %v5907, %v5908
        %v5911 = vadd.f32 %v5831, %v5909
        %s5912 = sld [smem:[#allocation3 + $0x61f]]
        %v5913 = vstv %s5912
        %v5914 = vmul.f32 %v5913, %v5799
        %v5916 = vrot.slane %v5914, 5
        %v5917 = vrot.slane %v5916, 4
        %5918 = vrot.lane.b32.xlu0 %v5917, 127
        %v5919 = vpop.permute.xlu0 %5918
        %v5920 = vrot.slane %v5919, 4
        %v5921 = vsel %vm481, %v5919, %v5920
        %v5923 = vadd.f32 %v5839, %v5921
        %s5924 = sld [smem:[#allocation3 + $0x69f]]
        %v5925 = vstv %s5924
        %v5926 = vmul.f32 %v5925, %v5799
        %v5928 = vrot.slane %v5926, 5
        %v5929 = vrot.slane %v5928, 4
        %5930 = vrot.lane.b32.xlu0 %v5929, 127
        %v5931 = vpop.permute.xlu0 %5930
        %v5932 = vrot.slane %v5931, 4
        %v5933 = vsel %vm481, %v5931, %v5932
        %v5935 = vadd.f32 %v5847, %v5933
        %s5936 = sld [smem:[#allocation3 + $0x71f]]
        %v5937 = vstv %s5936
        %v5938 = vmul.f32 %v5937, %v5799
        %v5940 = vrot.slane %v5938, 5
        %v5941 = vrot.slane %v5940, 4
        %5942 = vrot.lane.b32.xlu0 %v5941, 127
        %v5943 = vpop.permute.xlu0 %5942
        %v5944 = vrot.slane %v5943, 4
        %v5945 = vsel %vm481, %v5943, %v5944
        %v5947 = vadd.f32 %v5855, %v5945
        %s5948 = sld [smem:[#allocation3 + $0x79f]]
        %v5949 = vstv %s5948
        %v5950 = vmul.f32 %v5949, %v5799
        %v5952 = vrot.slane %v5950, 5
        %v5953 = vrot.slane %v5952, 4
        %5954 = vrot.lane.b32.xlu0 %v5953, 127
        %v5955 = vpop.permute.xlu0 %5954
        %v5956 = vrot.slane %v5955, 4
        %v5957 = vsel %vm481, %v5955, %v5956
        %v5959 = vadd.f32 %v5863, %v5957
        %s5960 = sld [smem:[#allocation3 + $0x420]]
        %v5961 = vstv %s5960
        %v5962 = vmul.f32 %v5961, %v5799
        %v5964 = vrot.slane %v5962, 5
        %v5965 = vrot.slane %v5964, 4
        %5966 = vrot.lane.b32.xlu0 %v5965, 126
        %v5967 = vpop.permute.xlu0 %5966
        %v5968 = vrot.slane %v5967, 4
        %v5969 = vsel %vm562, %v5967, %v5968
        %v5971 = vadd.f32 %v5875, %v5969
        %s5972 = sld [smem:[#allocation3 + $0x4a0]]
        %v5973 = vstv %s5972
        %v5974 = vmul.f32 %v5973, %v5799
        %v5976 = vrot.slane %v5974, 5
        %v5977 = vrot.slane %v5976, 4
        %5978 = vrot.lane.b32.xlu0 %v5977, 126
        %v5979 = vpop.permute.xlu0 %5978
        %v5980 = vrot.slane %v5979, 4
        %v5981 = vsel %vm562, %v5979, %v5980
        %v5983 = vadd.f32 %v5887, %v5981
        %s5984 = sld [smem:[#allocation3 + $0x520]]
        %v5985 = vstv %s5984
        %v5986 = vmul.f32 %v5985, %v5799
        %v5988 = vrot.slane %v5986, 5
        %v5989 = vrot.slane %v5988, 4
        %5990 = vrot.lane.b32.xlu0 %v5989, 126
        %v5991 = vpop.permute.xlu0 %5990
        %v5992 = vrot.slane %v5991, 4
        %v5993 = vsel %vm562, %v5991, %v5992
        %v5995 = vadd.f32 %v5899, %v5993
        %s5996 = sld [smem:[#allocation3 + $0x5a0]]
        %v5997 = vstv %s5996
        %v5998 = vmul.f32 %v5997, %v5799
        %v6000 = vrot.slane %v5998, 5
        %v6001 = vrot.slane %v6000, 4
        %6002 = vrot.lane.b32.xlu0 %v6001, 126
        %v6003 = vpop.permute.xlu0 %6002
        %v6004 = vrot.slane %v6003, 4
        %v6005 = vsel %vm562, %v6003, %v6004
        %v6007 = vadd.f32 %v5911, %v6005
        %s6008 = sld [smem:[#allocation3 + $0x620]]
        %v6009 = vstv %s6008
        %v6010 = vmul.f32 %v6009, %v5799
        %v6012 = vrot.slane %v6010, 5
        %v6013 = vrot.slane %v6012, 4
        %6014 = vrot.lane.b32.xlu0 %v6013, 126
        %v6015 = vpop.permute.xlu0 %6014
        %v6016 = vrot.slane %v6015, 4
        %v6017 = vsel %vm562, %v6015, %v6016
        %v6019 = vadd.f32 %v5923, %v6017
        %s6020 = sld [smem:[#allocation3 + $0x6a0]]
        %v6021 = vstv %s6020
        %v6022 = vmul.f32 %v6021, %v5799
        %v6024 = vrot.slane %v6022, 5
        %v6025 = vrot.slane %v6024, 4
        %6026 = vrot.lane.b32.xlu0 %v6025, 126
        %v6027 = vpop.permute.xlu0 %6026
        %v6028 = vrot.slane %v6027, 4
        %v6029 = vsel %vm562, %v6027, %v6028
        %v6031 = vadd.f32 %v5935, %v6029
        %s6032 = sld [smem:[#allocation3 + $0x720]]
        %v6033 = vstv %s6032
        %v6034 = vmul.f32 %v6033, %v5799
        %v6036 = vrot.slane %v6034, 5
        %v6037 = vrot.slane %v6036, 4
        %6038 = vrot.lane.b32.xlu0 %v6037, 126
        %v6039 = vpop.permute.xlu0 %6038
        %v6040 = vrot.slane %v6039, 4
        %v6041 = vsel %vm562, %v6039, %v6040
        %v6043 = vadd.f32 %v5947, %v6041
        %s6044 = sld [smem:[#allocation3 + $0x7a0]]
        %v6045 = vstv %s6044
        %v6046 = vmul.f32 %v6045, %v5799
        %v6048 = vrot.slane %v6046, 5
        %v6049 = vrot.slane %v6048, 4
        %6050 = vrot.lane.b32.xlu0 %v6049, 126
        %v6051 = vpop.permute.xlu0 %6050
        %v6052 = vrot.slane %v6051, 4
        %v6053 = vsel %vm562, %v6051, %v6052
        %v6055 = vadd.f32 %v5959, %v6053
        %v6056 = vld [vmem:[%s2574] sm:$0xa]
        %v6057 = vunpack.c.l.bf16 %v6056
        %s6058 = sld [smem:[#allocation3 + $0x421]]
        %v6059 = vstv %s6058
        %v6060 = vmul.f32 %v6059, %v6057
        %v6062 = vrot.slane %v6060, 6
        %v6063 = vrot.slane %v6062, 4
        %v6065 = vadd.f32 %v5971, %v6063
        %s6066 = sld [smem:[#allocation3 + $0x4a1]]
        %v6067 = vstv %s6066
        %v6068 = vmul.f32 %v6067, %v6057
        %v6070 = vrot.slane %v6068, 6
        %v6071 = vrot.slane %v6070, 4
        %v6073 = vadd.f32 %v5983, %v6071
        %s6074 = sld [smem:[#allocation3 + $0x521]]
        %v6075 = vstv %s6074
        %v6076 = vmul.f32 %v6075, %v6057
        %v6078 = vrot.slane %v6076, 6
        %v6079 = vrot.slane %v6078, 4
        %v6081 = vadd.f32 %v5995, %v6079
        %s6082 = sld [smem:[#allocation3 + $0x5a1]]
        %v6083 = vstv %s6082
        %v6084 = vmul.f32 %v6083, %v6057
        %v6086 = vrot.slane %v6084, 6
        %v6087 = vrot.slane %v6086, 4
        %v6089 = vadd.f32 %v6007, %v6087
        %s6090 = sld [smem:[#allocation3 + $0x621]]
        %v6091 = vstv %s6090
        %v6092 = vmul.f32 %v6091, %v6057
        %v6094 = vrot.slane %v6092, 6
        %v6095 = vrot.slane %v6094, 4
        %v6097 = vadd.f32 %v6019, %v6095
        %s6098 = sld [smem:[#allocation3 + $0x6a1]]
        %v6099 = vstv %s6098
        %v6100 = vmul.f32 %v6099, %v6057
        %v6102 = vrot.slane %v6100, 6
        %v6103 = vrot.slane %v6102, 4
        %v6105 = vadd.f32 %v6031, %v6103
        %s6106 = sld [smem:[#allocation3 + $0x721]]
        %v6107 = vstv %s6106
        %v6108 = vmul.f32 %v6107, %v6057
        %v6110 = vrot.slane %v6108, 6
        %v6111 = vrot.slane %v6110, 4
        %v6113 = vadd.f32 %v6043, %v6111
        %s6114 = sld [smem:[#allocation3 + $0x7a1]]
        %v6115 = vstv %s6114
        %v6116 = vmul.f32 %v6115, %v6057
        %v6118 = vrot.slane %v6116, 6
        %v6119 = vrot.slane %v6118, 4
        %v6121 = vadd.f32 %v6055, %v6119
        %s6122 = sld [smem:[#allocation3 + $0x422]]
        %v6123 = vstv %s6122
        %v6124 = vmul.f32 %v6123, %v6057
        %v6126 = vrot.slane %v6124, 6
        %v6127 = vrot.slane %v6126, 4
        %6128 = vrot.lane.b32.xlu0 %v6127, 127
        %v6129 = vpop.permute.xlu0 %6128
        %v6130 = vrot.slane %v6129, 4
        %v6131 = vsel %vm481, %v6129, %v6130
        %v6133 = vadd.f32 %v6065, %v6131
        %s6134 = sld [smem:[#allocation3 + $0x4a2]]
        %v6135 = vstv %s6134
        %v6136 = vmul.f32 %v6135, %v6057
        %v6138 = vrot.slane %v6136, 6
        %v6139 = vrot.slane %v6138, 4
        %6140 = vrot.lane.b32.xlu0 %v6139, 127
        %v6141 = vpop.permute.xlu0 %6140
        %v6142 = vrot.slane %v6141, 4
        %v6143 = vsel %vm481, %v6141, %v6142
        %v6145 = vadd.f32 %v6073, %v6143
        %s6146 = sld [smem:[#allocation3 + $0x522]]
        %v6147 = vstv %s6146
        %v6148 = vmul.f32 %v6147, %v6057
        %v6150 = vrot.slane %v6148, 6
        %v6151 = vrot.slane %v6150, 4
        %6152 = vrot.lane.b32.xlu0 %v6151, 127
        %v6153 = vpop.permute.xlu0 %6152
        %v6154 = vrot.slane %v6153, 4
        %v6155 = vsel %vm481, %v6153, %v6154
        %v6157 = vadd.f32 %v6081, %v6155
        %s6158 = sld [smem:[#allocation3 + $0x5a2]]
        %v6159 = vstv %s6158
        %v6160 = vmul.f32 %v6159, %v6057
        %v6162 = vrot.slane %v6160, 6
        %v6163 = vrot.slane %v6162, 4
        %6164 = vrot.lane.b32.xlu0 %v6163, 127
        %v6165 = vpop.permute.xlu0 %6164
        %v6166 = vrot.slane %v6165, 4
        %v6167 = vsel %vm481, %v6165, %v6166
        %v6169 = vadd.f32 %v6089, %v6167
        %s6170 = sld [smem:[#allocation3 + $0x622]]
        %v6171 = vstv %s6170
        %v6172 = vmul.f32 %v6171, %v6057
        %v6174 = vrot.slane %v6172, 6
        %v6175 = vrot.slane %v6174, 4
        %6176 = vrot.lane.b32.xlu0 %v6175, 127
        %v6177 = vpop.permute.xlu0 %6176
        %v6178 = vrot.slane %v6177, 4
        %v6179 = vsel %vm481, %v6177, %v6178
        %v6181 = vadd.f32 %v6097, %v6179
        %s6182 = sld [smem:[#allocation3 + $0x6a2]]
        %v6183 = vstv %s6182
        %v6184 = vmul.f32 %v6183, %v6057
        %v6186 = vrot.slane %v6184, 6
        %v6187 = vrot.slane %v6186, 4
        %6188 = vrot.lane.b32.xlu0 %v6187, 127
        %v6189 = vpop.permute.xlu0 %6188
        %v6190 = vrot.slane %v6189, 4
        %v6191 = vsel %vm481, %v6189, %v6190
        %v6193 = vadd.f32 %v6105, %v6191
        %s6194 = sld [smem:[#allocation3 + $0x722]]
        %v6195 = vstv %s6194
        %v6196 = vmul.f32 %v6195, %v6057
        %v6198 = vrot.slane %v6196, 6
        %v6199 = vrot.slane %v6198, 4
        %6200 = vrot.lane.b32.xlu0 %v6199, 127
        %v6201 = vpop.permute.xlu0 %6200
        %v6202 = vrot.slane %v6201, 4
        %v6203 = vsel %vm481, %v6201, %v6202
        %v6205 = vadd.f32 %v6113, %v6203
        %s6206 = sld [smem:[#allocation3 + $0x7a2]]
        %v6207 = vstv %s6206
        %v6208 = vmul.f32 %v6207, %v6057
        %v6210 = vrot.slane %v6208, 6
        %v6211 = vrot.slane %v6210, 4
        %6212 = vrot.lane.b32.xlu0 %v6211, 127
        %v6213 = vpop.permute.xlu0 %6212
        %v6214 = vrot.slane %v6213, 4
        %v6215 = vsel %vm481, %v6213, %v6214
        %v6217 = vadd.f32 %v6121, %v6215
        %s6218 = sld [smem:[#allocation3 + $0x423]]
        %v6219 = vstv %s6218
        %v6220 = vmul.f32 %v6219, %v6057
        %v6222 = vrot.slane %v6220, 6
        %v6223 = vrot.slane %v6222, 4
        %6224 = vrot.lane.b32.xlu0 %v6223, 126
        %v6225 = vpop.permute.xlu0 %6224
        %v6226 = vrot.slane %v6225, 4
        %v6227 = vsel %vm562, %v6225, %v6226
        %v6229 = vadd.f32 %v6133, %v6227
        %s6230 = sld [smem:[#allocation3 + $0x4a3]]
        %v6231 = vstv %s6230
        %v6232 = vmul.f32 %v6231, %v6057
        %v6234 = vrot.slane %v6232, 6
        %v6235 = vrot.slane %v6234, 4
        %6236 = vrot.lane.b32.xlu0 %v6235, 126
        %v6237 = vpop.permute.xlu0 %6236
        %v6238 = vrot.slane %v6237, 4
        %v6239 = vsel %vm562, %v6237, %v6238
        %v6241 = vadd.f32 %v6145, %v6239
        %s6242 = sld [smem:[#allocation3 + $0x523]]
        %v6243 = vstv %s6242
        %v6244 = vmul.f32 %v6243, %v6057
        %v6246 = vrot.slane %v6244, 6
        %v6247 = vrot.slane %v6246, 4
        %6248 = vrot.lane.b32.xlu0 %v6247, 126
        %v6249 = vpop.permute.xlu0 %6248
        %v6250 = vrot.slane %v6249, 4
        %v6251 = vsel %vm562, %v6249, %v6250
        %v6253 = vadd.f32 %v6157, %v6251
        %s6254 = sld [smem:[#allocation3 + $0x5a3]]
        %v6255 = vstv %s6254
        %v6256 = vmul.f32 %v6255, %v6057
        %v6258 = vrot.slane %v6256, 6
        %v6259 = vrot.slane %v6258, 4
        %6260 = vrot.lane.b32.xlu0 %v6259, 126
        %v6261 = vpop.permute.xlu0 %6260
        %v6262 = vrot.slane %v6261, 4
        %v6263 = vsel %vm562, %v6261, %v6262
        %v6265 = vadd.f32 %v6169, %v6263
        %s6266 = sld [smem:[#allocation3 + $0x623]]
        %v6267 = vstv %s6266
        %v6268 = vmul.f32 %v6267, %v6057
        %v6270 = vrot.slane %v6268, 6
        %v6271 = vrot.slane %v6270, 4
        %6272 = vrot.lane.b32.xlu0 %v6271, 126
        %v6273 = vpop.permute.xlu0 %6272
        %v6274 = vrot.slane %v6273, 4
        %v6275 = vsel %vm562, %v6273, %v6274
        %v6277 = vadd.f32 %v6181, %v6275
        %s6278 = sld [smem:[#allocation3 + $0x6a3]]
        %v6279 = vstv %s6278
        %v6280 = vmul.f32 %v6279, %v6057
        %v6282 = vrot.slane %v6280, 6
        %v6283 = vrot.slane %v6282, 4
        %6284 = vrot.lane.b32.xlu0 %v6283, 126
        %v6285 = vpop.permute.xlu0 %6284
        %v6286 = vrot.slane %v6285, 4
        %v6287 = vsel %vm562, %v6285, %v6286
        %v6289 = vadd.f32 %v6193, %v6287
        %s6290 = sld [smem:[#allocation3 + $0x723]]
        %v6291 = vstv %s6290
        %v6292 = vmul.f32 %v6291, %v6057
        %v6294 = vrot.slane %v6292, 6
        %v6295 = vrot.slane %v6294, 4
        %6296 = vrot.lane.b32.xlu0 %v6295, 126
        %v6297 = vpop.permute.xlu0 %6296
        %v6298 = vrot.slane %v6297, 4
        %v6299 = vsel %vm562, %v6297, %v6298
        %v6301 = vadd.f32 %v6205, %v6299
        %s6302 = sld [smem:[#allocation3 + $0x7a3]]
        %v6303 = vstv %s6302
        %v6304 = vmul.f32 %v6303, %v6057
        %v6306 = vrot.slane %v6304, 6
        %v6307 = vrot.slane %v6306, 4
        %6308 = vrot.lane.b32.xlu0 %v6307, 126
        %v6309 = vpop.permute.xlu0 %6308
        %v6310 = vrot.slane %v6309, 4
        %v6311 = vsel %vm562, %v6309, %v6310
        %v6313 = vadd.f32 %v6217, %v6311
        %v6314 = vmax.f32 %v6229, 0.0
        %v6315 = vmax.f32 %v6241, 0.0
        %v6316 = vmax.f32 %v6253, 0.0
        %v6317 = vmax.f32 %v6265, 0.0
        %v6318 = vmax.f32 %v6277, 0.0
        %v6319 = vmax.f32 %v6289, 0.0
        %v6320 = vmax.f32 %v6301, 0.0
        %v6321 = vmax.f32 %v6313, 0.0
        %s6322 = sld [smem:[#allocation2]]
        %v6323 = vstv %s6322
        %s6324 = sld [smem:[#allocation7]]
        %v6325 = vstv %s6324
        %v6326 = vmul.f32 %v6325, %v6314
        %v6327 = vadd.f32 %v6323, %v6326
        %s6328 = sld [smem:[#allocation7 + $0x1]]
        %v6329 = vstv %s6328
        %v6330 = vmul.f32 %v6329, %v6315
        %v6331 = vadd.f32 %v6327, %v6330
        %s6332 = sld [smem:[#allocation7 + $0x2]]
        %v6333 = vstv %s6332
        %v6334 = vmul.f32 %v6333, %v6316
        %v6335 = vadd.f32 %v6331, %v6334
        %s6336 = sld [smem:[#allocation7 + $0x3]]
        %v6337 = vstv %s6336
        %v6338 = vmul.f32 %v6337, %v6317
        %v6339 = vadd.f32 %v6335, %v6338
        %s6340 = sld [smem:[#allocation7 + $0x4]]
        %v6341 = vstv %s6340
        %v6342 = vmul.f32 %v6341, %v6318
        %v6343 = vadd.f32 %v6339, %v6342
        %s6344 = sld [smem:[#allocation7 + $0x5]]
        %v6345 = vstv %s6344
        %v6346 = vmul.f32 %v6345, %v6319
        %v6347 = vadd.f32 %v6343, %v6346
        %s6348 = sld [smem:[#allocation7 + $0x6]]
        %v6349 = vstv %s6348
        %v6350 = vmul.f32 %v6349, %v6320
        %v6351 = vadd.f32 %v6347, %v6350
        %s6352 = sld [smem:[#allocation7 + $0x7]]
        %v6353 = vstv %s6352
        %v6354 = vmul.f32 %v6353, %v6321
        %v6355 = vadd.f32 %v6351, %v6354
        %v6358 = vunpack.c.l.s4 1983009808
        %v6359 = vunpack.c.0.s8 %v6358
        %v6360 = vlaneseq
        %v6361 = vshrl.u32 %v6360, 7
        %v6362 = vsub.s32 %v6359, %v6361
        %v6363 = vrot.slane %v6355, %v6362
        %vm6365 = vcmask 109570
        %vm6366 = vmor %vm6365, %vm3299
        %6367 = vst.msk [vmem:[%s386] sm:$0xf] %vm6366, %v6363
        %p6368 = scmp.lt.s32.totalorder %s27, 1
        %s6369 = scalar_select %p6368, %s27, 1
        %p6370 = scmp.lt.s32.totalorder %s28, 0
        %s6371 = scalar_select %p6370, %s28, 0
        %s6372 = sadd.s32 %s6371, %s6369
        %s6373 = scalar_lea.vmem %s6, %s6372
        %p6374 = scmp.lt.s32.totalorder %s27, 1
        %s6375 = scalar_select %p6374, %s27, 1
        %p6376 = scmp.lt.s32.totalorder %s28, 0
        %s6377 = scalar_select %p6376, %s28, 0
        %s6378 = smul.addr %s6377, 2
        %s6379 = smul.addr %s6375, 2
        %s6380 = sadd.s32 %s6378, %s6379
        %s6381 = smul.addr %s6380, 2
        %s6382 = scalar_lea.vmem %s7, %s6381
        // Predicated region
        $region61: #{combined_model_forward.1} parent=43 // pred_check
          %p6383 = pneg %p188
        $region62: #{combined_model_forward.1} parent=43 // pred_check_branch
          %6385 = sbr.rel (%p6383) target = $region64
        $region63: #{combined_model_forward.1} parent=43 // pred_region
          _
        $region64: #{combined_model_forward.1} parent=43 // pred_fallthru
          _
        // Predicated region
        $region65: #{combined_model_forward.1} parent=43 // pred_check
          %p6386 = pneg %p216
        $region66: #{combined_model_forward.1} parent=43 // pred_check_branch
          %6388 = sbr.rel (%p6386) target = $region68
        $region67: #{combined_model_forward.1} parent=43 // pred_region
          _
        $region68: #{combined_model_forward.1} parent=43 // pred_fallthru
          _
      $region44: #{combined_model_forward.1} parent=5 // pred_fallthru
        _
      %p6389 = scmp.le.s32.totalorder 2, %s18
      // Predicated region
      $region69: #{combined_model_forward.1} parent=5 // pred_check
        %p6390 = pneg %p6389
      $region70: #{combined_model_forward.1} parent=5 // pred_check_branch
        %6392 = sbr.rel (%p6390) target = $region72
      $region71: #{combined_model_forward.1} parent=5 // pred_region
        %s6393 = ssub.s32 %s18, 2
        // Predicated region
        $region73: #{combined_model_forward.1} parent=71 // pred_check
          %p6394 = pneg %p194
        $region74: #{combined_model_forward.1} parent=71 // pred_check_branch
          %6396 = sbr.rel (%p6394) target = $region76
        $region75: #{combined_model_forward.1} parent=71 // pred_region
          %p6397 = scmp.lt.s32.totalorder %s29, 1
          %s6398 = scalar_select %p6397, %s29, 1
          %p6399 = scmp.lt.s32.totalorder %s30, 0
          %s6400 = scalar_select %p6399, %s30, 0
          %s6401 = sadd.s32 %s6400, %s6398
          %s6402 = scalar_lea.vmem %s6, %s6401
        $region76: #{combined_model_forward.1} parent=71 // pred_fallthru
          _
        // Predicated region
        $region77: #{combined_model_forward.1} parent=71 // pred_check
          %p6403 = pneg %p222
        $region78: #{combined_model_forward.1} parent=71 // pred_check_branch
          %6405 = sbr.rel (%p6403) target = $region80
        $region79: #{combined_model_forward.1} parent=71 // pred_region
          %p6406 = scmp.lt.s32.totalorder %s29, 1
          %s6407 = scalar_select %p6406, %s29, 1
          %p6408 = scmp.lt.s32.totalorder %s30, 0
          %s6409 = scalar_select %p6408, %s30, 0
          %s6410 = smul.addr %s6409, 2
          %s6411 = smul.addr %s6407, 2
          %s6412 = sadd.s32 %s6410, %s6411
          %s6413 = smul.addr %s6412, 2
          %s6414 = scalar_lea.vmem %s7, %s6413
        $region80: #{combined_model_forward.1} parent=71 // pred_fallthru
          _
      $region72: #{combined_model_forward.1} parent=5 // pred_fallthru
        _
    $region6: #{combined_model_forward.1} parent=1 // loop_footer
      %s22 = sadd.s32 1, %s18
    $region7: #{combined_model_forward.1} parent=1 // loop_footer_branch
      %17 = sbr.rel target = $region3
    $region8: #{combined_model_forward.1} parent=1 // loop_exit
      _
    %6415 = vsyncpa [#allocation4], 1
    %s6416 = scalar_lea.sflag [#allocation4], 1
    %6417 = vsyncpa %s6416, 1
    %6418 = vsyncpa [#allocation6], 1
    %6419 = vsyncpa [#allocation9], 1

</llo_original>
